<compile_context>
chip_gen: v5e
topology: v5e:2x2
jax: 0.10.0
libtpu: 0.0.40
codegen_flags: <defaults>
</compile_context>

<pallas_src>
import functools

import jax
import jax.numpy as jnp
from jax import lax
from jax.experimental import pallas as pl
from jax.experimental.pallas import tpu as pltpu


def _pick_row_tile(n):
    # Prefer 256-wide tiles (full v6e/v7x MXU), fall back to smaller divisors.
    for t in (256, 128, 64, 32, 16, 8):
        if n % t == 0:
            return t
    return n  # whole-array block (block dims == full dims is always legal)


def _attention_walk_kernel(attn_ref, transit_t_ref, adj_ref, left_ref,
                           right_ref, rowsum_ref, *, tile_m, window_size):
    """One row tile of the loss: per-row sum of
       | wtm.T * logsig(ldr) + (1 - adj) * (logsig(ldr) - ldr) |.

    attn_ref    : SMEM (W,)        softmax(attention*T) * degree*n_walks*n_nodes
    transit_t_ref: VMEM (n, n)     transit_mat.T, resident across grid steps
    adj_ref     : VMEM (tile_m, n) adjacency row tile
    left_ref    : VMEM (tile_m, d) left embedding row tile
    right_ref   : VMEM (n, d)      right embedding, resident
    rowsum_ref  : VMEM (tile_m, 1) per-row partial sums (output)
    """
    i = pl.program_id(0)
    row_start = pl.multiple_of(i * tile_m, tile_m)

    transit_t = transit_t_ref[...]                           # (n, n), resident

    # wtm.T row tile = sum_k attn_scaled[k] * (transit.T)^k [rows, :]
    # power chain: P_1 = transit.T[rows, :];  P_k = P_{k-1} @ transit.T
    power = transit_t_ref[pl.ds(row_start, tile_m), :]       # (tile_m, n)
    wtm_t = attn_ref[0] * power
    for k in range(1, window_size):                          # static, small W
        power = jnp.dot(power, transit_t, preferred_element_type=jnp.float32)
        wtm_t = wtm_t + attn_ref[k] * power

    # left_dot_right row tile = left_emb[rows, :] @ right_emb.T  -> (tile_m, n)
    ldr = lax.dot_general(
        left_ref[...], right_ref[...],
        dimension_numbers=(((1,), (1,)), ((), ())),
        preferred_element_type=jnp.float32)

    # numerically stable log-sigmoid(x) = min(x, 0) - log1p(exp(-|x|))
    logsig = jnp.minimum(ldr, 0.0) - jnp.log1p(jnp.exp(-jnp.abs(ldr)))

    # fused epilogue; leading minus signs dropped under abs()
    fused = jnp.abs(wtm_t * logsig + (1.0 - adj_ref[...]) * (logsig - ldr))

    # reduce as we go: per-row partial sums for this tile
    rowsum_ref[...] = jnp.sum(fused, axis=1, keepdims=True)


def attention_walk_loss_matrices(attn_scaled, transit_t, adj_mat, left_emb,
                                 right_emb, *, window_size, row_tile=None):
    n = adj_mat.shape[0]
    d = left_emb.shape[1]
    tile_m = row_tile if row_tile is not None else _pick_row_tile(n)
    assert n % tile_m == 0, (n, tile_m)
    grid = (n // tile_m,)

    # Explicit VMEM budget: resident transit.T + right_emb, double-buffered row
    # tiles of adj/left/output, plus live (tile_m, n) temps; 2x headroom.
    f32b = 4
    vmem_est = (2 * n * n + 2 * n * d            # resident (conservatively x2)
                + 2 * tile_m * n + 2 * tile_m * d + 2 * tile_m   # streamed
                + 6 * tile_m * n) * f32b                         # temps
    vmem_limit = int(min(max(2 * vmem_est, 4 * 1024 * 1024),
                         48 * 1024 * 1024))

    kernel = functools.partial(_attention_walk_kernel, tile_m=tile_m,
                               window_size=window_size)
    rowsums = pl.pallas_call(
        kernel,
        out_shape=jax.ShapeDtypeStruct((n, 1), jnp.float32),
        grid_spec=pltpu.PrefetchScalarGridSpec(
            num_scalar_prefetch=0,
            grid=grid,
            in_specs=[
                pl.BlockSpec(memory_space=pltpu.MemorySpace.SMEM),   # attn (W,)
                pl.BlockSpec((n, n), lambda i: (0, 0)),              # transit.T
                pl.BlockSpec((tile_m, n), lambda i: (i, 0)),         # adj tile
                pl.BlockSpec((tile_m, d), lambda i: (i, 0)),         # left tile
                pl.BlockSpec((n, d), lambda i: (0, 0)),              # right
            ],
            out_specs=pl.BlockSpec((tile_m, 1), lambda i: (i, 0)),   # row sums
        ),
        compiler_params=pltpu.CompilerParams(
            dimension_semantics=("parallel",),
            vmem_limit_bytes=vmem_limit),
    )(attn_scaled, transit_t, adj_mat, left_emb, right_emb)

    return jnp.sum(rowsums) / (n * n)


def attention_walk_forward(params, adj_mat, transit_mat, degree, *,
                           n_nodes, window_size, n_walks, beta, gamma,
                           temperature, row_tile=None):
    """Mirrors AttentionWalkLayer.forward for attention='global_vector',
    normalize='softmax', shared=False (q/k/theta/a/b/c/d are None)."""
    attention = params["attention"]                       # (window_size,)
    left_emb = params["left_emb"].astype(jnp.float32)     # (n, emb_dim // 2)
    right_emb = params["right_emb"].astype(jnp.float32)   # (n, emb_dim // 2)

    # update_attention() is a no-op for 'global_vector'.
    attention_probs = jax.nn.softmax(attention * temperature, axis=0)

    # Fold degree * n_walks * n_nodes into the length-W attention vector.
    scale = (degree * n_walks * n_nodes).astype(jnp.float32)
    attn_scaled = (attention_probs * scale).astype(jnp.float32)

    # Pass transit.T so the kernel builds wtm already transposed.
    transit_t = jnp.transpose(transit_mat.astype(jnp.float32))

    loss_on_matrices = attention_walk_loss_matrices(
        attn_scaled, transit_t, adj_mat.astype(jnp.float32),
        left_emb, right_emb, window_size=window_size, row_tile=row_tile)

    # tiny parameter regularization — glue in plain JAX
    loss_on_regularization = (beta * jnp.mean(attention ** 2)
                              + gamma * (jnp.mean(left_emb ** 2)
                                         + jnp.mean(right_emb ** 2)))
    return loss_on_matrices + loss_on_regularization


def reference_forward(params, adj_mat, transit_mat, degree, *,
                      n_nodes, window_size, n_walks, beta, gamma, temperature):
    """Pure-JAX reference replicating the PyTorch forward exactly."""
    attention = params["attention"]
    left_emb = params["left_emb"]
    right_emb = params["right_emb"]
    attention_probs = jax.nn.softmax(attention * temperature, axis=0)
    power = jnp.eye(n_nodes, dtype=jnp.float32)
    wtm = jnp.zeros((n_nodes, n_nodes), dtype=jnp.float32)
    for i in range(window_size):
        power = power @ transit_mat
        wtm = wtm + attention_probs[i] * power
    wtm = wtm * (degree * n_walks * n_nodes)
    ldr = left_emb @ right_emb.T
    logsig = jax.nn.log_sigmoid(ldr)
    loss_on_target = -wtm.T * logsig
    loss_on_opposite = -(1.0 - adj_mat) * (-ldr + logsig)
    loss_on_matrices = jnp.mean(jnp.abs(loss_on_target + loss_on_opposite))
    loss_on_regularization = (beta * jnp.mean(attention ** 2)
                              + gamma * (jnp.mean(left_emb ** 2)
                                         + jnp.mean(right_emb ** 2)))
    return loss_on_matrices + loss_on_regularization


if __name__ == "__main__":
    # Module config (small; large enough to exercise the row-tiled grid:
    # n_nodes=512, row tile=256 -> grid=(2,)).
    n_nodes = 512
    emb_dim = 32           # -> embeddings (n_nodes, 16)
    window_size = 4
    n_walks = 80
    beta = 0.5
    gamma = 0.5
    temperature = 1.0

    key = jax.random.PRNGKey(0)
    k_adj, k_left, k_right = jax.random.split(key, 3)

    # Deterministic parameter init (matches nn.init.uniform_(-0.1, 0.1) /
    # torch.ones(window_size) for 'global_vector').
    left_emb = jax.random.uniform(k_left, (n_nodes, emb_dim // 2),
                                  minval=-0.1, maxval=0.1, dtype=jnp.float32)
    right_emb = jax.random.uniform(k_right, (n_nodes, emb_dim // 2),
                                   minval=-0.1, maxval=0.1, dtype=jnp.float32)
    attention = jnp.ones((window_size,), dtype=jnp.float32)
    params = {"attention": attention, "left_emb": left_emb, "right_emb": right_emb}

    # Synthetic symmetric adjacency with self-loops, row-normalized transit matrix.
    rnd = jax.random.uniform(k_adj, (n_nodes, n_nodes))
    adj_mat = (rnd < 0.1).astype(jnp.float32)
    adj_mat = jnp.maximum(adj_mat, adj_mat.T)
    adj_mat = jnp.maximum(adj_mat, jnp.eye(n_nodes, dtype=jnp.float32))
    row_sums = jnp.sum(adj_mat, axis=1, keepdims=True)
    transit_mat = adj_mat / row_sums
    degree = jnp.mean(jnp.sum(adj_mat, axis=1)).astype(jnp.float32)

    fwd = functools.partial(attention_walk_forward,
                            n_nodes=n_nodes, window_size=window_size,
                            n_walks=n_walks, beta=beta, gamma=gamma,
                            temperature=temperature)
    ref = functools.partial(reference_forward,
                            n_nodes=n_nodes, window_size=window_size,
                            n_walks=n_walks, beta=beta, gamma=gamma,
                            temperature=temperature)

    loss = jax.jit(fwd)(params, adj_mat, transit_mat, degree)
    jax.block_until_ready(loss)

    loss_ref = jax.jit(ref)(params, adj_mat, transit_mat, degree)
    jax.block_until_ready(loss_ref)

    assert jnp.allclose(loss, loss_ref, rtol=2e-3, atol=1e-2), (loss, loss_ref)
    print("KERNEL_OK")
</pallas_src>

<mosaic_0001>
module attributes {stable_mosaic.version = 11 : i64} {
  func.func @_attention_walk_kernel(%arg0: i32, %arg1: memref<4xf32, #tpu.memory_space<smem>>, %arg2: memref<512x512xf32, #tpu.memory_space<vmem>>, %arg3: memref<256x512xf32, #tpu.memory_space<vmem>>, %arg4: memref<256x16xf32, #tpu.memory_space<vmem>>, %arg5: memref<512x16xf32, #tpu.memory_space<vmem>>, %arg6: memref<256x1xf32, #tpu.memory_space<vmem>>) attributes {dimension_semantics = [#tpu.dimension_semantics<parallel>], iteration_bounds = array<i64: 2>, scalar_prefetch = 0 : i64, scratch_operands = 0 : i64, tpu.core_type = #tpu.core_type<tc>, window_params = [{transform_indices = @transform_0, window_bounds = array<i64: 4>}, {pipeline_mode = #tpu.pipeline_mode<synchronous>, transform_indices = @transform_1, window_bounds = array<i64: 512, 512>}, {transform_indices = @transform_2, window_bounds = array<i64: 256, 512>}, {transform_indices = @transform_3, window_bounds = array<i64: 256, 16>}, {pipeline_mode = #tpu.pipeline_mode<synchronous>, transform_indices = @transform_4, window_bounds = array<i64: 512, 16>}, {transform_indices = @transform_5, window_bounds = array<i64: 256, 1>}]} {
    %c256_i32 = arith.constant 256 : i32
    %0 = arith.muli %arg0, %c256_i32 : i32
    %1 = tpu.assume_multiple %0, 256 : i32
    %c0 = arith.constant 0 : index
    %c0_0 = arith.constant 0 : index
    %2 = vector.load %arg2[%c0, %c0_0] : memref<512x512xf32, #tpu.memory_space<vmem>>, vector<512x512xf32>
    %3 = arith.index_cast %1 : i32 to index
    %c0_1 = arith.constant 0 : index
    %4 = vector.load %arg2[%3, %c0_1] : memref<512x512xf32, #tpu.memory_space<vmem>>, vector<256x512xf32>
    %c0_2 = arith.constant 0 : index
    %5 = memref.load %arg1[%c0_2] : memref<4xf32, #tpu.memory_space<smem>>
    %6 = vector.broadcast %5 : f32 to vector<256x512xf32>
    %7 = arith.mulf %6, %4 : vector<256x512xf32>
    %cst = arith.constant dense<0.000000e+00> : vector<256x512xf32>
    %8 = tpu.matmul %4, %2, %cst {dimension_numbers = #tpu.dot_dimension_numbers<[1], [0], [0], [1], [0, 0, 1, 1], [], []>} : vector<256x512xf32>, vector<512x512xf32>, vector<256x512xf32> -> vector<256x512xf32>
    %c1 = arith.constant 1 : index
    %9 = memref.load %arg1[%c1] : memref<4xf32, #tpu.memory_space<smem>>
    %10 = vector.broadcast %9 : f32 to vector<256x512xf32>
    %11 = arith.mulf %10, %8 : vector<256x512xf32>
    %12 = arith.addf %7, %11 : vector<256x512xf32>
    %cst_3 = arith.constant dense<0.000000e+00> : vector<256x512xf32>
    %13 = tpu.matmul %8, %2, %cst_3 {dimension_numbers = #tpu.dot_dimension_numbers<[1], [0], [0], [1], [0, 0, 1, 1], [], []>} : vector<256x512xf32>, vector<512x512xf32>, vector<256x512xf32> -> vector<256x512xf32>
    %c2 = arith.constant 2 : index
    %14 = memref.load %arg1[%c2] : memref<4xf32, #tpu.memory_space<smem>>
    %15 = vector.broadcast %14 : f32 to vector<256x512xf32>
    %16 = arith.mulf %15, %13 : vector<256x512xf32>
    %17 = arith.addf %12, %16 : vector<256x512xf32>
    %cst_4 = arith.constant dense<0.000000e+00> : vector<256x512xf32>
    %18 = tpu.matmul %13, %2, %cst_4 {dimension_numbers = #tpu.dot_dimension_numbers<[1], [0], [0], [1], [0, 0, 1, 1], [], []>} : vector<256x512xf32>, vector<512x512xf32>, vector<256x512xf32> -> vector<256x512xf32>
    %c3 = arith.constant 3 : index
    %19 = memref.load %arg1[%c3] : memref<4xf32, #tpu.memory_space<smem>>
    %20 = vector.broadcast %19 : f32 to vector<256x512xf32>
    %21 = arith.mulf %20, %18 : vector<256x512xf32>
    %22 = arith.addf %17, %21 : vector<256x512xf32>
    %c0_5 = arith.constant 0 : index
    %c0_6 = arith.constant 0 : index
    %23 = vector.load %arg4[%c0_5, %c0_6] : memref<256x16xf32, #tpu.memory_space<vmem>>, vector<256x16xf32>
    %c0_7 = arith.constant 0 : index
    %c0_8 = arith.constant 0 : index
    %24 = vector.load %arg5[%c0_7, %c0_8] : memref<512x16xf32, #tpu.memory_space<vmem>>, vector<512x16xf32>
    %cst_9 = arith.constant dense<0.000000e+00> : vector<256x512xf32>
    %25 = tpu.matmul %23, %24, %cst_9 {dimension_numbers = #tpu.dot_dimension_numbers<[1], [1], [0], [0], [0, 0, 1, 0], [], []>} : vector<256x16xf32>, vector<512x16xf32>, vector<256x512xf32> -> vector<256x512xf32>
    %cst_10 = arith.constant 0.000000e+00 : f32
    %26 = vector.broadcast %cst_10 : f32 to vector<256x512xf32>
    %27 = arith.minimumf %25, %26 : vector<256x512xf32>
    %28 = math.absf %25 : vector<256x512xf32>
    %cst_11 = arith.constant 0.000000e+00 : f32
    %29 = vector.broadcast %cst_11 : f32 to vector<256x512xf32>
    %30 = arith.subf %29, %28 : vector<256x512xf32>
    %31 = math.exp %30 : vector<256x512xf32>
    %32 = math.log1p %31 : vector<256x512xf32>
    %33 = arith.subf %27, %32 : vector<256x512xf32>
    %34 = arith.mulf %22, %33 : vector<256x512xf32>
    %c0_12 = arith.constant 0 : index
    %c0_13 = arith.constant 0 : index
    %35 = vector.load %arg3[%c0_12, %c0_13] : memref<256x512xf32, #tpu.memory_space<vmem>>, vector<256x512xf32>
    %cst_14 = arith.constant 1.000000e+00 : f32
    %36 = vector.broadcast %cst_14 : f32 to vector<256x512xf32>
    %37 = arith.subf %36, %35 : vector<256x512xf32>
    %38 = arith.subf %33, %25 : vector<256x512xf32>
    %39 = arith.mulf %37, %38 : vector<256x512xf32>
    %40 = arith.addf %34, %39 : vector<256x512xf32>
    %41 = math.absf %40 : vector<256x512xf32>
    %cst_15 = arith.constant dense<0.000000e+00> : vector<256xf32>
    %42 = vector.multi_reduction <add>, %41, %cst_15 [1] : vector<256x512xf32> to vector<256xf32>
    %43 = vector.shape_cast %42 : vector<256xf32> to vector<256x1xf32>
    %c0_16 = arith.constant 0 : index
    %c0_17 = arith.constant 0 : index
    %44 = vector.load %arg6[%c0_16, %c0_17] : memref<256x1xf32, #tpu.memory_space<vmem>>, vector<256x1xf32>
    tpu.vector_store %arg6[%c0_16, %c0_17], %43 {strides = array<i32>} : memref<256x1xf32, #tpu.memory_space<vmem>>, vector<256x1xf32>,
    return
  }
  func.func @transform_0(%arg0: i32) -> i32 {
    %c0_i32 = arith.constant 0 : i32
    %c0_i32_0 = arith.constant 0 : i32
    return %c0_i32 : i32
  }
  func.func @transform_1(%arg0: i32) -> (i32, i32) {
    %c0_i32 = arith.constant 0 : i32
    %c0_i32_0 = arith.constant 0 : i32
    %c0_i32_1 = arith.constant 0 : i32
    return %c0_i32, %c0_i32_0 : i32, i32
  }
  func.func @transform_2(%arg0: i32) -> (i32, i32) {
    %c0_i32 = arith.constant 0 : i32
    %c0_i32_0 = arith.constant 0 : i32
    return %arg0, %c0_i32 : i32, i32
  }
  func.func @transform_3(%arg0: i32) -> (i32, i32) {
    %c0_i32 = arith.constant 0 : i32
    %c0_i32_0 = arith.constant 0 : i32
    return %arg0, %c0_i32 : i32, i32
  }
  func.func @transform_4(%arg0: i32) -> (i32, i32) {
    %c0_i32 = arith.constant 0 : i32
    %c0_i32_0 = arith.constant 0 : i32
    %c0_i32_1 = arith.constant 0 : i32
    return %c0_i32, %c0_i32_0 : i32, i32
  }
  func.func @transform_5(%arg0: i32) -> (i32, i32) {
    %c0_i32 = arith.constant 0 : i32
    %c0_i32_0 = arith.constant 0 : i32
    return %arg0, %c0_i32 : i32, i32
  }
}

</mosaic_0001>

<llo_original>
// kernel: attention_walk_forward.1
$region0: #{attention_walk_forward.1}
  #allocation0 [shape = 'u32[]', space=smem, size = 0x4, offset = 0x4, fixed_abs, tag = 'smem constant byte address 0x4 - core index']
  #allocation1 [shape = 'u32[72,128]{1,0:T(1,128)}', space=vmem, size = 0x9000, scoped, tag = 'internal scratch']
  %s0 = inlined_call_operand.vmem [shape: f32[4], index: 0, kind: input, shape index: {}]
  %s1 = inlined_call_operand.vmem [shape: f32[512,512], index: 1, kind: input, shape index: {}]
  %s2 = inlined_call_operand.vmem [shape: f32[512,512], index: 2, kind: input, shape index: {}]
  %s3 = inlined_call_operand.vmem [shape: f32[512,16], index: 3, kind: input, shape index: {}]
  %s4 = inlined_call_operand.vmem [shape: f32[512,16], index: 4, kind: input, shape index: {}]
  %s5 = inlined_call_operand.vmem [shape: f32[512,1], index: 5, kind: output, shape index: {}]
  %s6 = sld [smem:[#allocation0]]
  $region57: #{attention_walk_forward.1} parent=0
    _
  %s8 = ssub.s32 1, %s6
  %s9 = scalar_select 0, %s8, %s6
  $region1: #{attention_walk_forward.1} parent=0
    #allocation2 [shape = 'u8[512]{0}', space=smem, size = 0x200, scoped, tag = 'input window, operand 0, single buffered']
    #allocation3 [shape = 's32[2]{0}', space=sflag, size = 0x8, scoped, tag = 'scoped memory for attention_walk_forward.1']
    %10 = vsyncpa [#allocation3], 0
    loop: start=0, step=1, limit=4
    $region2: #{attention_walk_forward.1} parent=1 // loop_pre_header
      _
    $region3: #{attention_walk_forward.1} parent=1 // loop_header
      %s12 = sphi 0, %s16
      %p13 = scmp.ge.s32.totalorder %s12, 4
      %s20 = sphi 0, %s20
      %s22 = sphi 0, %s20
      %s23 = sphi 0, %s22
      %s37 = sphi 0, %s23
      %s41 = sphi 0, %s41
      %s43 = sphi 0, %s41
      %s44 = sphi 0, %s43
      %s58 = sphi 0, %s44
      %s64 = sphi 0, %s66
      %s67 = sphi 0, %s64
      %s68 = sphi 0, %s67
      %s84 = sphi 0, %s68
      %s90 = sphi 0, %s92
      %s93 = sphi 0, %s90
      %s94 = sphi 0, %s93
      %s110 = sphi 0, %s94
      %s114 = sphi 0, %s114
      %s116 = sphi 0, %s114
      %s117 = sphi 0, %s116
      %s131 = sphi 0, %s117
      %s137 = sphi 0, %s139
      %s140 = sphi 0, %s137
      %s141 = sphi 0, %s140
      %s157 = sphi 0, %s141
    $region4: #{attention_walk_forward.1} parent=1 // loop_header_branch
      %15 = sbr.rel (%p13) target = $region8
    $region5: #{attention_walk_forward.1} parent=1 // loop_body
      %s17 = ssub.s32 %s12, 1
      %s18 = ssub.s32 %s12, 2
      %s19 = sadd.s32 %s12, 1
      %s21 = sadd.s32 %s20, 1
      %p24 = scmp.eq.s32.totalorder %s12, 1
      %p25 = scmp.ne.s32.totalorder %s20, %s22
      %p26 = scmp.eq.s32.totalorder %s12, 0
      %p27 = por %p25, %p26
      %p28 = scmp.ne.s32.totalorder %s20, %s22
      %p29 = scmp.eq.s32.totalorder %s17, 1
      %p30 = por %p28, %p29
      %p31 = scmp.ne.s32.totalorder %s22, %s23
      %p32 = scmp.eq.s32.totalorder %s17, 0
      %p33 = por %p31, %p32
      %p34 = scmp.ne.s32.totalorder %s22, %s23
      %p35 = scmp.eq.s32.totalorder %s18, 1
      %p36 = por %p34, %p35
      %p38 = scmp.ne.s32.totalorder %s23, %s37
      %p39 = scmp.eq.s32.totalorder %s18, 0
      %p40 = por %p38, %p39
      %s42 = sadd.s32 %s41, 1
      %p45 = scmp.eq.s32.totalorder %s12, 1
      %p46 = scmp.ne.s32.totalorder %s41, %s43
      %p47 = scmp.eq.s32.totalorder %s12, 0
      %p48 = por %p46, %p47
      %p49 = scmp.ne.s32.totalorder %s41, %s43
      %p50 = scmp.eq.s32.totalorder %s17, 1
      %p51 = por %p49, %p50
      %p52 = scmp.ne.s32.totalorder %s43, %s44
      %p53 = scmp.eq.s32.totalorder %s17, 0
      %p54 = por %p52, %p53
      %p55 = scmp.ne.s32.totalorder %s43, %s44
      %p56 = scmp.eq.s32.totalorder %s18, 1
      %p57 = por %p55, %p56
      %p59 = scmp.ne.s32.totalorder %s44, %s58
      %p60 = scmp.eq.s32.totalorder %s18, 0
      %p61 = por %p59, %p60
      %s62 = ssub.s32 %s12, %s19
      %p63 = scmp.eq.s32.totalorder %s62, 0
      %s65 = sadd.s32 %s64, 1
      %s66 = scalar_select %p63, %s64, %s65
      %p69 = pneg %p63
      %p70 = scmp.eq.s32.totalorder %s12, 1
      %p71 = por %p69, %p70
      %p72 = scmp.ne.s32.totalorder %s64, %s67
      %p73 = scmp.eq.s32.totalorder %s12, 0
      %p74 = por %p72, %p73
      %p75 = scmp.ne.s32.totalorder %s64, %s67
      %p76 = scmp.eq.s32.totalorder %s17, 1
      %p77 = por %p75, %p76
      %p78 = scmp.ne.s32.totalorder %s67, %s68
      %p79 = scmp.eq.s32.totalorder %s17, 0
      %p80 = por %p78, %p79
      %p81 = scmp.ne.s32.totalorder %s67, %s68
      %p82 = scmp.eq.s32.totalorder %s18, 1
      %p83 = por %p81, %p82
      %p85 = scmp.ne.s32.totalorder %s68, %s84
      %p86 = scmp.eq.s32.totalorder %s18, 0
      %p87 = por %p85, %p86
      %s88 = ssub.s32 %s12, %s19
      %p89 = scmp.eq.s32.totalorder %s88, 0
      %s91 = sadd.s32 %s90, 1
      %s92 = scalar_select %p89, %s90, %s91
      %p95 = pneg %p89
      %p96 = scmp.eq.s32.totalorder %s12, 1
      %p97 = por %p95, %p96
      %p98 = scmp.ne.s32.totalorder %s90, %s93
      %p99 = scmp.eq.s32.totalorder %s12, 0
      %p100 = por %p98, %p99
      %p101 = scmp.ne.s32.totalorder %s90, %s93
      %p102 = scmp.eq.s32.totalorder %s17, 1
      %p103 = por %p101, %p102
      %p104 = scmp.ne.s32.totalorder %s93, %s94
      %p105 = scmp.eq.s32.totalorder %s17, 0
      %p106 = por %p104, %p105
      %p107 = scmp.ne.s32.totalorder %s93, %s94
      %p108 = scmp.eq.s32.totalorder %s18, 1
      %p109 = por %p107, %p108
      %p111 = scmp.ne.s32.totalorder %s94, %s110
      %p112 = scmp.eq.s32.totalorder %s18, 0
      %p113 = por %p111, %p112
      %s115 = sadd.s32 %s114, 1
      %p118 = scmp.eq.s32.totalorder %s12, 1
      %p119 = scmp.ne.s32.totalorder %s114, %s116
      %p120 = scmp.eq.s32.totalorder %s12, 0
      %p121 = por %p119, %p120
      %p122 = scmp.ne.s32.totalorder %s114, %s116
      %p123 = scmp.eq.s32.totalorder %s17, 1
      %p124 = por %p122, %p123
      %p125 = scmp.ne.s32.totalorder %s116, %s117
      %p126 = scmp.eq.s32.totalorder %s17, 0
      %p127 = por %p125, %p126
      %p128 = scmp.ne.s32.totalorder %s116, %s117
      %p129 = scmp.eq.s32.totalorder %s18, 1
      %p130 = por %p128, %p129
      %p132 = scmp.ne.s32.totalorder %s117, %s131
      %p133 = scmp.eq.s32.totalorder %s18, 0
      %p134 = por %p132, %p133
      %s135 = ssub.s32 %s12, %s19
      %p136 = scmp.eq.s32.totalorder %s135, 0
      %s138 = sadd.s32 %s137, 1
      %s139 = scalar_select %p136, %s137, %s138
      %p142 = pneg %p136
      %p143 = scmp.eq.s32.totalorder %s12, 1
      %p144 = por %p142, %p143
      %p145 = scmp.ne.s32.totalorder %s137, %s140
      %p146 = scmp.eq.s32.totalorder %s12, 0
      %p147 = por %p145, %p146
      %p148 = scmp.ne.s32.totalorder %s137, %s140
      %p149 = scmp.eq.s32.totalorder %s17, 1
      %p150 = por %p148, %p149
      %p151 = scmp.ne.s32.totalorder %s140, %s141
      %p152 = scmp.eq.s32.totalorder %s17, 0
      %p153 = por %p151, %p152
      %p154 = scmp.ne.s32.totalorder %s140, %s141
      %p155 = scmp.eq.s32.totalorder %s18, 1
      %p156 = por %p154, %p155
      %p158 = scmp.ne.s32.totalorder %s141, %s157
      %p159 = scmp.eq.s32.totalorder %s18, 0
      %p160 = por %p158, %p159
      %p161 = scmp.le.s32.totalorder 1, %s12
      %p162 = scmp.lt.s32.totalorder %s12, 3
      %p163 = pnand %p161, %p162
      %p164 = pneg %p163
      // Predicated region
      $region9: #{attention_walk_forward.1} parent=5 // pred_check
        _
      $region10: #{attention_walk_forward.1} parent=5 // pred_check_branch
        %166 = sbr.rel (%p163) target = $region12
      $region11: #{attention_walk_forward.1} parent=5 // pred_region
        %s167 = ssub.s32 %s12, 1
        // Predicated region
        $region13: #{attention_walk_forward.1} parent=11 // pred_check
          %p168 = pneg %p33
        $region14: #{attention_walk_forward.1} parent=11 // pred_check_branch
          %170 = sbr.rel (%p168) target = $region16
        $region15: #{attention_walk_forward.1} parent=11 // pred_region
          %172 = vsyncadd [#allocation3], 0
          %s174 = sshll.u32 %s0, 4
          %s175 = int_to_ptr.vmem [resolvable:$true] %s174
          %177 = dma.vmem_to_smem %s175, 16, [#allocation2], [#allocation3]
        $region16: #{attention_walk_forward.1} parent=11 // pred_fallthru
          _
        // Predicated region
        $region17: #{attention_walk_forward.1} parent=11 // pred_check
          %p178 = pneg %p54
        $region18: #{attention_walk_forward.1} parent=11 // pred_check_branch
          %180 = sbr.rel (%p178) target = $region20
        $region19: #{attention_walk_forward.1} parent=11 // pred_region
          _
        $region20: #{attention_walk_forward.1} parent=11 // pred_fallthru
          _
        // Predicated region
        $region21: #{attention_walk_forward.1} parent=11 // pred_check
          %p181 = pneg %p127
        $region22: #{attention_walk_forward.1} parent=11 // pred_check_branch
          %183 = sbr.rel (%p181) target = $region24
        $region23: #{attention_walk_forward.1} parent=11 // pred_region
          _
        $region24: #{attention_walk_forward.1} parent=11 // pred_fallthru
          _
      $region12: #{attention_walk_forward.1} parent=5 // pred_fallthru
        _
      %p184 = scmp.lt.s32.totalorder %s12, 2
      // Predicated region
      $region25: #{attention_walk_forward.1} parent=5 // pred_check
        %p185 = pneg %p184
      $region26: #{attention_walk_forward.1} parent=5 // pred_check_branch
        %187 = sbr.rel (%p185) target = $region28
      $region27: #{attention_walk_forward.1} parent=5 // pred_region
        // Predicated region
        $region29: #{attention_walk_forward.1} parent=27 // pred_check
          %p188 = pneg %p74
        $region30: #{attention_walk_forward.1} parent=27 // pred_check_branch
          %190 = sbr.rel (%p188) target = $region32
        $region31: #{attention_walk_forward.1} parent=27 // pred_region
          %s191 = smul.u32 32, %s12
          %p192 = scmp.lt.s32.totalorder %s191, 63
          %s193 = scalar_select %p192, %s191, 63
          %s194 = smul.addr %s193, 4
          %s195 = smul.addr %s194, 8
          %s196 = scalar_lea.vmem %s2, %s195
          %s197 = smul.u32 32, %s12
        $region32: #{attention_walk_forward.1} parent=27 // pred_fallthru
          _
        // Predicated region
        $region33: #{attention_walk_forward.1} parent=27 // pred_check
          %p198 = pneg %p100
        $region34: #{attention_walk_forward.1} parent=27 // pred_check_branch
          %200 = sbr.rel (%p198) target = $region36
        $region35: #{attention_walk_forward.1} parent=27 // pred_region
          %s201 = smul.u32 32, %s12
          %p202 = scmp.lt.s32.totalorder %s201, 63
          %s203 = scalar_select %p202, %s201, 63
          %s204 = smul.addr %s203, 8
          %s205 = scalar_lea.vmem %s3, %s204
          %s206 = smul.u32 32, %s12
        $region36: #{attention_walk_forward.1} parent=27 // pred_fallthru
          _
      $region28: #{attention_walk_forward.1} parent=5 // pred_fallthru
        _
      %p207 = scmp.le.s32.totalorder 1, %s12
      %p208 = scmp.lt.s32.totalorder %s12, 3
      %p209 = pnand %p207, %p208
      %p210 = pneg %p209
      // Predicated region
      $region37: #{attention_walk_forward.1} parent=5 // pred_check
        _
      $region38: #{attention_walk_forward.1} parent=5 // pred_check_branch
        %212 = sbr.rel (%p209) target = $region40
      $region39: #{attention_walk_forward.1} parent=5 // pred_region
        %s213 = ssub.s32 %s12, 1
        // Predicated region
        $region41: #{attention_walk_forward.1} parent=39 // pred_check
          %p214 = pneg %p33
        $region42: #{attention_walk_forward.1} parent=39 // pred_check_branch
          %216 = sbr.rel (%p214) target = $region44
        $region43: #{attention_walk_forward.1} parent=39 // pred_region
          %218 = dma.done [#allocation3], 16
        $region44: #{attention_walk_forward.1} parent=39 // pred_fallthru
          _
        %219 = sfence
        %p220 = pneg %p33
        %p221 = pneg %p30
        %p222 = pneg %p54
        %p223 = pneg %p51
        %s224 = smul.u32 32, %s17
        %p225 = scmp.lt.s32.totalorder %s224, 63
        %s226 = scalar_select %p225, %s224, 63
        %s227 = smul.addr %s226, 4
        %s228 = smul.addr %s227, 8
        %s229 = scalar_lea.vmem %s2, %s228
        %p230 = pneg %p80
        %p231 = pneg %p77
        %s232 = smul.u32 32, %s17
        %p233 = scmp.lt.s32.totalorder %s232, 63
        %s234 = scalar_select %p233, %s232, 63
        %s235 = smul.addr %s234, 8
        %s236 = scalar_lea.vmem %s3, %s235
        %p237 = pneg %p106
        %p238 = pneg %p103
        %p239 = pneg %p127
        %p240 = pneg %p124
        %p241 = pneg %p153
        %p242 = pneg %p150
        %s243 = smul.u32 32, %s17
        %p244 = scmp.lt.s32.totalorder %s243, 63
        %s245 = scalar_select %p244, %s243, 63
        %s246 = smul.addr %s245, 8
        %s247 = scalar_lea.vmem %s5, %s246
        %s248 = smul.u32 32, %s17
        %p249 = scmp.lt.s32.totalorder %s248, 63
        %s250 = scalar_select %p249, %s248, 63
        %s251 = smul.addr %s250, 4
        %s252 = smul.addr %s251, 8
        %s253 = scalar_lea.vmem %s2, %s252
        %s254 = smul.u32 32, %s17
        %s255 = smul.u32 32, %s17
        %p256 = scmp.lt.s32.totalorder %s255, 63
        %s257 = scalar_select %p256, %s255, 63
        %s258 = smul.addr %s257, 8
        %s259 = scalar_lea.vmem %s3, %s258
        %s260 = smul.u32 32, %s17
        %s261 = smul.u32 32, %s17
        %p262 = scmp.lt.s32.totalorder %s261, 63
        %s263 = scalar_select %p262, %s261, 63
        %s264 = smul.addr %s263, 8
        %s265 = scalar_lea.vmem %s5, %s264
        %s266 = smul.u32 32, %s17
        %s267 = smul.u32 %s17, 256
        %v268 = vld [vmem:[%s1] sm:$0xff]
        %v269 = vld [vmem:[%s1 + $0x8] sm:$0xff]
        %v270 = vld [vmem:[%s1 + $0x10] sm:$0xff]
        %v271 = vld [vmem:[%s1 + $0x18] sm:$0xff]
        %v272 = vld [vmem:[%s1 + $0x20] sm:$0xff]
        %v273 = vld [vmem:[%s1 + $0x28] sm:$0xff]
        %v274 = vld [vmem:[%s1 + $0x30] sm:$0xff]
        %v275 = vld [vmem:[%s1 + $0x38] sm:$0xff]
        %v276 = vld [vmem:[%s1 + $0x40] sm:$0xff]
        %v277 = vld [vmem:[%s1 + $0x48] sm:$0xff]
        %v278 = vld [vmem:[%s1 + $0x50] sm:$0xff]
        %v279 = vld [vmem:[%s1 + $0x58] sm:$0xff]
        %v280 = vld [vmem:[%s1 + $0x60] sm:$0xff]
        %v281 = vld [vmem:[%s1 + $0x68] sm:$0xff]
        %v282 = vld [vmem:[%s1 + $0x70] sm:$0xff]
        %v283 = vld [vmem:[%s1 + $0x78] sm:$0xff]
        %v284 = vld [vmem:[%s1 + $0x80] sm:$0xff]
        %v285 = vld [vmem:[%s1 + $0x88] sm:$0xff]
        %v286 = vld [vmem:[%s1 + $0x90] sm:$0xff]
        %v287 = vld [vmem:[%s1 + $0x98] sm:$0xff]
        %v288 = vld [vmem:[%s1 + $0xa0] sm:$0xff]
        %v289 = vld [vmem:[%s1 + $0xa8] sm:$0xff]
        %v290 = vld [vmem:[%s1 + $0xb0] sm:$0xff]
        %v291 = vld [vmem:[%s1 + $0xb8] sm:$0xff]
        %v292 = vld [vmem:[%s1 + $0xc0] sm:$0xff]
        %v293 = vld [vmem:[%s1 + $0xc8] sm:$0xff]
        %v294 = vld [vmem:[%s1 + $0xd0] sm:$0xff]
        %v295 = vld [vmem:[%s1 + $0xd8] sm:$0xff]
        %v296 = vld [vmem:[%s1 + $0xe0] sm:$0xff]
        %v297 = vld [vmem:[%s1 + $0xe8] sm:$0xff]
        %v298 = vld [vmem:[%s1 + $0xf0] sm:$0xff]
        %v299 = vld [vmem:[%s1 + $0xf8] sm:$0xff]
        %v300 = vld [vmem:[%s1 + $0x100] sm:$0xff]
        %v301 = vld [vmem:[%s1 + $0x108] sm:$0xff]
        %v302 = vld [vmem:[%s1 + $0x110] sm:$0xff]
        %v303 = vld [vmem:[%s1 + $0x118] sm:$0xff]
        %v304 = vld [vmem:[%s1 + $0x120] sm:$0xff]
        %v305 = vld [vmem:[%s1 + $0x128] sm:$0xff]
        %v306 = vld [vmem:[%s1 + $0x130] sm:$0xff]
        %v307 = vld [vmem:[%s1 + $0x138] sm:$0xff]
        %v308 = vld [vmem:[%s1 + $0x140] sm:$0xff]
        %v309 = vld [vmem:[%s1 + $0x148] sm:$0xff]
        %v310 = vld [vmem:[%s1 + $0x150] sm:$0xff]
        %v311 = vld [vmem:[%s1 + $0x158] sm:$0xff]
        %v312 = vld [vmem:[%s1 + $0x160] sm:$0xff]
        %v313 = vld [vmem:[%s1 + $0x168] sm:$0xff]
        %v314 = vld [vmem:[%s1 + $0x170] sm:$0xff]
        %v315 = vld [vmem:[%s1 + $0x178] sm:$0xff]
        %v316 = vld [vmem:[%s1 + $0x180] sm:$0xff]
        %v317 = vld [vmem:[%s1 + $0x188] sm:$0xff]
        %v318 = vld [vmem:[%s1 + $0x190] sm:$0xff]
        %v319 = vld [vmem:[%s1 + $0x198] sm:$0xff]
        %v320 = vld [vmem:[%s1 + $0x1a0] sm:$0xff]
        %v321 = vld [vmem:[%s1 + $0x1a8] sm:$0xff]
        %v322 = vld [vmem:[%s1 + $0x1b0] sm:$0xff]
        %v323 = vld [vmem:[%s1 + $0x1b8] sm:$0xff]
        %v324 = vld [vmem:[%s1 + $0x1c0] sm:$0xff]
        %v325 = vld [vmem:[%s1 + $0x1c8] sm:$0xff]
        %v326 = vld [vmem:[%s1 + $0x1d0] sm:$0xff]
        %v327 = vld [vmem:[%s1 + $0x1d8] sm:$0xff]
        %v328 = vld [vmem:[%s1 + $0x1e0] sm:$0xff]
        %v329 = vld [vmem:[%s1 + $0x1e8] sm:$0xff]
        %v330 = vld [vmem:[%s1 + $0x1f0] sm:$0xff]
        %v331 = vld [vmem:[%s1 + $0x1f8] sm:$0xff]
        %v332 = vld [vmem:[%s1 + $0x200] sm:$0xff]
        %v333 = vld [vmem:[%s1 + $0x208] sm:$0xff]
        %v334 = vld [vmem:[%s1 + $0x210] sm:$0xff]
        %v335 = vld [vmem:[%s1 + $0x218] sm:$0xff]
        %v336 = vld [vmem:[%s1 + $0x220] sm:$0xff]
        %v337 = vld [vmem:[%s1 + $0x228] sm:$0xff]
        %v338 = vld [vmem:[%s1 + $0x230] sm:$0xff]
        %v339 = vld [vmem:[%s1 + $0x238] sm:$0xff]
        %v340 = vld [vmem:[%s1 + $0x240] sm:$0xff]
        %v341 = vld [vmem:[%s1 + $0x248] sm:$0xff]
        %v342 = vld [vmem:[%s1 + $0x250] sm:$0xff]
        %v343 = vld [vmem:[%s1 + $0x258] sm:$0xff]
        %v344 = vld [vmem:[%s1 + $0x260] sm:$0xff]
        %v345 = vld [vmem:[%s1 + $0x268] sm:$0xff]
        %v346 = vld [vmem:[%s1 + $0x270] sm:$0xff]
        %v347 = vld [vmem:[%s1 + $0x278] sm:$0xff]
        %v348 = vld [vmem:[%s1 + $0x280] sm:$0xff]
        %v349 = vld [vmem:[%s1 + $0x288] sm:$0xff]
        %v350 = vld [vmem:[%s1 + $0x290] sm:$0xff]
        %v351 = vld [vmem:[%s1 + $0x298] sm:$0xff]
        %v352 = vld [vmem:[%s1 + $0x2a0] sm:$0xff]
        %v353 = vld [vmem:[%s1 + $0x2a8] sm:$0xff]
        %v354 = vld [vmem:[%s1 + $0x2b0] sm:$0xff]
        %v355 = vld [vmem:[%s1 + $0x2b8] sm:$0xff]
        %v356 = vld [vmem:[%s1 + $0x2c0] sm:$0xff]
        %v357 = vld [vmem:[%s1 + $0x2c8] sm:$0xff]
        %v358 = vld [vmem:[%s1 + $0x2d0] sm:$0xff]
        %v359 = vld [vmem:[%s1 + $0x2d8] sm:$0xff]
        %v360 = vld [vmem:[%s1 + $0x2e0] sm:$0xff]
        %v361 = vld [vmem:[%s1 + $0x2e8] sm:$0xff]
        %v362 = vld [vmem:[%s1 + $0x2f0] sm:$0xff]
        %v363 = vld [vmem:[%s1 + $0x2f8] sm:$0xff]
        %v364 = vld [vmem:[%s1 + $0x300] sm:$0xff]
        %v365 = vld [vmem:[%s1 + $0x308] sm:$0xff]
        %v366 = vld [vmem:[%s1 + $0x310] sm:$0xff]
        %v367 = vld [vmem:[%s1 + $0x318] sm:$0xff]
        %v368 = vld [vmem:[%s1 + $0x320] sm:$0xff]
        %v369 = vld [vmem:[%s1 + $0x328] sm:$0xff]
        %v370 = vld [vmem:[%s1 + $0x330] sm:$0xff]
        %v371 = vld [vmem:[%s1 + $0x338] sm:$0xff]
        %v372 = vld [vmem:[%s1 + $0x340] sm:$0xff]
        %v373 = vld [vmem:[%s1 + $0x348] sm:$0xff]
        %v374 = vld [vmem:[%s1 + $0x350] sm:$0xff]
        %v375 = vld [vmem:[%s1 + $0x358] sm:$0xff]
        %v376 = vld [vmem:[%s1 + $0x360] sm:$0xff]
        %v377 = vld [vmem:[%s1 + $0x368] sm:$0xff]
        %v378 = vld [vmem:[%s1 + $0x370] sm:$0xff]
        %v379 = vld [vmem:[%s1 + $0x378] sm:$0xff]
        %v380 = vld [vmem:[%s1 + $0x380] sm:$0xff]
        %v381 = vld [vmem:[%s1 + $0x388] sm:$0xff]
        %v382 = vld [vmem:[%s1 + $0x390] sm:$0xff]
        %v383 = vld [vmem:[%s1 + $0x398] sm:$0xff]
        %v384 = vld [vmem:[%s1 + $0x3a0] sm:$0xff]
        %v385 = vld [vmem:[%s1 + $0x3a8] sm:$0xff]
        %v386 = vld [vmem:[%s1 + $0x3b0] sm:$0xff]
        %v387 = vld [vmem:[%s1 + $0x3b8] sm:$0xff]
        %v388 = vld [vmem:[%s1 + $0x3c0] sm:$0xff]
        %v389 = vld [vmem:[%s1 + $0x3c8] sm:$0xff]
        %v390 = vld [vmem:[%s1 + $0x3d0] sm:$0xff]
        %v391 = vld [vmem:[%s1 + $0x3d8] sm:$0xff]
        %v392 = vld [vmem:[%s1 + $0x3e0] sm:$0xff]
        %v393 = vld [vmem:[%s1 + $0x3e8] sm:$0xff]
        %v394 = vld [vmem:[%s1 + $0x3f0] sm:$0xff]
        %v395 = vld [vmem:[%s1 + $0x3f8] sm:$0xff]
        %v396 = vld [vmem:[%s1 + $0x400] sm:$0xff]
        %v397 = vld [vmem:[%s1 + $0x408] sm:$0xff]
        %v398 = vld [vmem:[%s1 + $0x410] sm:$0xff]
        %v399 = vld [vmem:[%s1 + $0x418] sm:$0xff]
        %v400 = vld [vmem:[%s1 + $0x420] sm:$0xff]
        %v401 = vld [vmem:[%s1 + $0x428] sm:$0xff]
        %v402 = vld [vmem:[%s1 + $0x430] sm:$0xff]
        %v403 = vld [vmem:[%s1 + $0x438] sm:$0xff]
        %v404 = vld [vmem:[%s1 + $0x440] sm:$0xff]
        %v405 = vld [vmem:[%s1 + $0x448] sm:$0xff]
        %v406 = vld [vmem:[%s1 + $0x450] sm:$0xff]
        %v407 = vld [vmem:[%s1 + $0x458] sm:$0xff]
        %v408 = vld [vmem:[%s1 + $0x460] sm:$0xff]
        %v409 = vld [vmem:[%s1 + $0x468] sm:$0xff]
        %v410 = vld [vmem:[%s1 + $0x470] sm:$0xff]
        %v411 = vld [vmem:[%s1 + $0x478] sm:$0xff]
        %v412 = vld [vmem:[%s1 + $0x480] sm:$0xff]
        %v413 = vld [vmem:[%s1 + $0x488] sm:$0xff]
        %v414 = vld [vmem:[%s1 + $0x490] sm:$0xff]
        %v415 = vld [vmem:[%s1 + $0x498] sm:$0xff]
        %v416 = vld [vmem:[%s1 + $0x4a0] sm:$0xff]
        %v417 = vld [vmem:[%s1 + $0x4a8] sm:$0xff]
        %v418 = vld [vmem:[%s1 + $0x4b0] sm:$0xff]
        %v419 = vld [vmem:[%s1 + $0x4b8] sm:$0xff]
        %v420 = vld [vmem:[%s1 + $0x4c0] sm:$0xff]
        %v421 = vld [vmem:[%s1 + $0x4c8] sm:$0xff]
        %v422 = vld [vmem:[%s1 + $0x4d0] sm:$0xff]
        %v423 = vld [vmem:[%s1 + $0x4d8] sm:$0xff]
        %v424 = vld [vmem:[%s1 + $0x4e0] sm:$0xff]
        %v425 = vld [vmem:[%s1 + $0x4e8] sm:$0xff]
        %v426 = vld [vmem:[%s1 + $0x4f0] sm:$0xff]
        %v427 = vld [vmem:[%s1 + $0x4f8] sm:$0xff]
        %v428 = vld [vmem:[%s1 + $0x500] sm:$0xff]
        %v429 = vld [vmem:[%s1 + $0x508] sm:$0xff]
        %v430 = vld [vmem:[%s1 + $0x510] sm:$0xff]
        %v431 = vld [vmem:[%s1 + $0x518] sm:$0xff]
        %v432 = vld [vmem:[%s1 + $0x520] sm:$0xff]
        %v433 = vld [vmem:[%s1 + $0x528] sm:$0xff]
        %v434 = vld [vmem:[%s1 + $0x530] sm:$0xff]
        %v435 = vld [vmem:[%s1 + $0x538] sm:$0xff]
        %v436 = vld [vmem:[%s1 + $0x540] sm:$0xff]
        %v437 = vld [vmem:[%s1 + $0x548] sm:$0xff]
        %v438 = vld [vmem:[%s1 + $0x550] sm:$0xff]
        %v439 = vld [vmem:[%s1 + $0x558] sm:$0xff]
        %v440 = vld [vmem:[%s1 + $0x560] sm:$0xff]
        %v441 = vld [vmem:[%s1 + $0x568] sm:$0xff]
        %v442 = vld [vmem:[%s1 + $0x570] sm:$0xff]
        %v443 = vld [vmem:[%s1 + $0x578] sm:$0xff]
        %v444 = vld [vmem:[%s1 + $0x580] sm:$0xff]
        %v445 = vld [vmem:[%s1 + $0x588] sm:$0xff]
        %v446 = vld [vmem:[%s1 + $0x590] sm:$0xff]
        %v447 = vld [vmem:[%s1 + $0x598] sm:$0xff]
        %v448 = vld [vmem:[%s1 + $0x5a0] sm:$0xff]
        %v449 = vld [vmem:[%s1 + $0x5a8] sm:$0xff]
        %v450 = vld [vmem:[%s1 + $0x5b0] sm:$0xff]
        %v451 = vld [vmem:[%s1 + $0x5b8] sm:$0xff]
        %v452 = vld [vmem:[%s1 + $0x5c0] sm:$0xff]
        %v453 = vld [vmem:[%s1 + $0x5c8] sm:$0xff]
        %v454 = vld [vmem:[%s1 + $0x5d0] sm:$0xff]
        %v455 = vld [vmem:[%s1 + $0x5d8] sm:$0xff]
        %v456 = vld [vmem:[%s1 + $0x5e0] sm:$0xff]
        %v457 = vld [vmem:[%s1 + $0x5e8] sm:$0xff]
        %v458 = vld [vmem:[%s1 + $0x5f0] sm:$0xff]
        %v459 = vld [vmem:[%s1 + $0x5f8] sm:$0xff]
        %v460 = vld [vmem:[%s1 + $0x600] sm:$0xff]
        %v461 = vld [vmem:[%s1 + $0x608] sm:$0xff]
        %v462 = vld [vmem:[%s1 + $0x610] sm:$0xff]
        %v463 = vld [vmem:[%s1 + $0x618] sm:$0xff]
        %v464 = vld [vmem:[%s1 + $0x620] sm:$0xff]
        %v465 = vld [vmem:[%s1 + $0x628] sm:$0xff]
        %v466 = vld [vmem:[%s1 + $0x630] sm:$0xff]
        %v467 = vld [vmem:[%s1 + $0x638] sm:$0xff]
        %v468 = vld [vmem:[%s1 + $0x640] sm:$0xff]
        %v469 = vld [vmem:[%s1 + $0x648] sm:$0xff]
        %v470 = vld [vmem:[%s1 + $0x650] sm:$0xff]
        %v471 = vld [vmem:[%s1 + $0x658] sm:$0xff]
        %v472 = vld [vmem:[%s1 + $0x660] sm:$0xff]
        %v473 = vld [vmem:[%s1 + $0x668] sm:$0xff]
        %v474 = vld [vmem:[%s1 + $0x670] sm:$0xff]
        %v475 = vld [vmem:[%s1 + $0x678] sm:$0xff]
        %v476 = vld [vmem:[%s1 + $0x680] sm:$0xff]
        %v477 = vld [vmem:[%s1 + $0x688] sm:$0xff]
        %v478 = vld [vmem:[%s1 + $0x690] sm:$0xff]
        %v479 = vld [vmem:[%s1 + $0x698] sm:$0xff]
        %v480 = vld [vmem:[%s1 + $0x6a0] sm:$0xff]
        %v481 = vld [vmem:[%s1 + $0x6a8] sm:$0xff]
        %v482 = vld [vmem:[%s1 + $0x6b0] sm:$0xff]
        %v483 = vld [vmem:[%s1 + $0x6b8] sm:$0xff]
        %v484 = vld [vmem:[%s1 + $0x6c0] sm:$0xff]
        %v485 = vld [vmem:[%s1 + $0x6c8] sm:$0xff]
        %v486 = vld [vmem:[%s1 + $0x6d0] sm:$0xff]
        %v487 = vld [vmem:[%s1 + $0x6d8] sm:$0xff]
        %v488 = vld [vmem:[%s1 + $0x6e0] sm:$0xff]
        %v489 = vld [vmem:[%s1 + $0x6e8] sm:$0xff]
        %v490 = vld [vmem:[%s1 + $0x6f0] sm:$0xff]
        %v491 = vld [vmem:[%s1 + $0x6f8] sm:$0xff]
        %v492 = vld [vmem:[%s1 + $0x700] sm:$0xff]
        %v493 = vld [vmem:[%s1 + $0x708] sm:$0xff]
        %v494 = vld [vmem:[%s1 + $0x710] sm:$0xff]
        %v495 = vld [vmem:[%s1 + $0x718] sm:$0xff]
        %v496 = vld [vmem:[%s1 + $0x720] sm:$0xff]
        %v497 = vld [vmem:[%s1 + $0x728] sm:$0xff]
        %v498 = vld [vmem:[%s1 + $0x730] sm:$0xff]
        %v499 = vld [vmem:[%s1 + $0x738] sm:$0xff]
        %v500 = vld [vmem:[%s1 + $0x740] sm:$0xff]
        %v501 = vld [vmem:[%s1 + $0x748] sm:$0xff]
        %v502 = vld [vmem:[%s1 + $0x750] sm:$0xff]
        %v503 = vld [vmem:[%s1 + $0x758] sm:$0xff]
        %v504 = vld [vmem:[%s1 + $0x760] sm:$0xff]
        %v505 = vld [vmem:[%s1 + $0x768] sm:$0xff]
        %v506 = vld [vmem:[%s1 + $0x770] sm:$0xff]
        %v507 = vld [vmem:[%s1 + $0x778] sm:$0xff]
        %v508 = vld [vmem:[%s1 + $0x780] sm:$0xff]
        %v509 = vld [vmem:[%s1 + $0x788] sm:$0xff]
        %v510 = vld [vmem:[%s1 + $0x790] sm:$0xff]
        %v511 = vld [vmem:[%s1 + $0x798] sm:$0xff]
        %v512 = vld [vmem:[%s1 + $0x7a0] sm:$0xff]
        %v513 = vld [vmem:[%s1 + $0x7a8] sm:$0xff]
        %v514 = vld [vmem:[%s1 + $0x7b0] sm:$0xff]
        %v515 = vld [vmem:[%s1 + $0x7b8] sm:$0xff]
        %v516 = vld [vmem:[%s1 + $0x7c0] sm:$0xff]
        %v517 = vld [vmem:[%s1 + $0x7c8] sm:$0xff]
        %v518 = vld [vmem:[%s1 + $0x7d0] sm:$0xff]
        %v519 = vld [vmem:[%s1 + $0x7d8] sm:$0xff]
        %v520 = vld [vmem:[%s1 + $0x7e0] sm:$0xff]
        %v521 = vld [vmem:[%s1 + $0x7e8] sm:$0xff]
        %v522 = vld [vmem:[%s1 + $0x7f0] sm:$0xff]
        %v523 = vld [vmem:[%s1 + $0x7f8] sm:$0xff]
        %s524 = sshra.s32 %s267, 3
        %s525 = sand.u32 %s267, 7
        %s526 = smul.u32 %s524, 4
        %s527 = smul.addr %s526, 8
        %s528 = scalar_lea.vmem %s1, %s527
        %v529 = vld [vmem:[%s528] sm:$0xff]
        %v530 = vld [vmem:[%s528 + $0x8] sm:$0xff]
        %v531 = vld [vmem:[%s528 + $0x10] sm:$0xff]
        %v532 = vld [vmem:[%s528 + $0x18] sm:$0xff]
        %v533 = vld [vmem:[%s528 + $0x20] sm:$0xff]
        %v534 = vld [vmem:[%s528 + $0x28] sm:$0xff]
        %v535 = vld [vmem:[%s528 + $0x30] sm:$0xff]
        %v536 = vld [vmem:[%s528 + $0x38] sm:$0xff]
        %v537 = vld [vmem:[%s528 + $0x40] sm:$0xff]
        %v538 = vld [vmem:[%s528 + $0x48] sm:$0xff]
        %v539 = vld [vmem:[%s528 + $0x50] sm:$0xff]
        %v540 = vld [vmem:[%s528 + $0x58] sm:$0xff]
        %v541 = vld [vmem:[%s528 + $0x60] sm:$0xff]
        %v542 = vld [vmem:[%s528 + $0x68] sm:$0xff]
        %v543 = vld [vmem:[%s528 + $0x70] sm:$0xff]
        %v544 = vld [vmem:[%s528 + $0x78] sm:$0xff]
        %v545 = vld [vmem:[%s528 + $0x80] sm:$0xff]
        %v546 = vld [vmem:[%s528 + $0x88] sm:$0xff]
        %v547 = vld [vmem:[%s528 + $0x90] sm:$0xff]
        %v548 = vld [vmem:[%s528 + $0x98] sm:$0xff]
        %v549 = vld [vmem:[%s528 + $0xa0] sm:$0xff]
        %v550 = vld [vmem:[%s528 + $0xa8] sm:$0xff]
        %v551 = vld [vmem:[%s528 + $0xb0] sm:$0xff]
        %v552 = vld [vmem:[%s528 + $0xb8] sm:$0xff]
        %v553 = vld [vmem:[%s528 + $0xc0] sm:$0xff]
        %v554 = vld [vmem:[%s528 + $0xc8] sm:$0xff]
        %v555 = vld [vmem:[%s528 + $0xd0] sm:$0xff]
        %v556 = vld [vmem:[%s528 + $0xd8] sm:$0xff]
        %v557 = vld [vmem:[%s528 + $0xe0] sm:$0xff]
        %v558 = vld [vmem:[%s528 + $0xe8] sm:$0xff]
        %v559 = vld [vmem:[%s528 + $0xf0] sm:$0xff]
        %v560 = vld [vmem:[%s528 + $0xf8] sm:$0xff]
        %v561 = vld [vmem:[%s528 + $0x100] sm:$0xff]
        %v562 = vld [vmem:[%s528 + $0x108] sm:$0xff]
        %v563 = vld [vmem:[%s528 + $0x110] sm:$0xff]
        %v564 = vld [vmem:[%s528 + $0x118] sm:$0xff]
        %v565 = vld [vmem:[%s528 + $0x120] sm:$0xff]
        %v566 = vld [vmem:[%s528 + $0x128] sm:$0xff]
        %v567 = vld [vmem:[%s528 + $0x130] sm:$0xff]
        %v568 = vld [vmem:[%s528 + $0x138] sm:$0xff]
        %v569 = vld [vmem:[%s528 + $0x140] sm:$0xff]
        %v570 = vld [vmem:[%s528 + $0x148] sm:$0xff]
        %v571 = vld [vmem:[%s528 + $0x150] sm:$0xff]
        %v572 = vld [vmem:[%s528 + $0x158] sm:$0xff]
        %v573 = vld [vmem:[%s528 + $0x160] sm:$0xff]
        %v574 = vld [vmem:[%s528 + $0x168] sm:$0xff]
        %v575 = vld [vmem:[%s528 + $0x170] sm:$0xff]
        %v576 = vld [vmem:[%s528 + $0x178] sm:$0xff]
        %v577 = vld [vmem:[%s528 + $0x180] sm:$0xff]
        %v578 = vld [vmem:[%s528 + $0x188] sm:$0xff]
        %v579 = vld [vmem:[%s528 + $0x190] sm:$0xff]
        %v580 = vld [vmem:[%s528 + $0x198] sm:$0xff]
        %v581 = vld [vmem:[%s528 + $0x1a0] sm:$0xff]
        %v582 = vld [vmem:[%s528 + $0x1a8] sm:$0xff]
        %v583 = vld [vmem:[%s528 + $0x1b0] sm:$0xff]
        %v584 = vld [vmem:[%s528 + $0x1b8] sm:$0xff]
        %v585 = vld [vmem:[%s528 + $0x1c0] sm:$0xff]
        %v586 = vld [vmem:[%s528 + $0x1c8] sm:$0xff]
        %v587 = vld [vmem:[%s528 + $0x1d0] sm:$0xff]
        %v588 = vld [vmem:[%s528 + $0x1d8] sm:$0xff]
        %v589 = vld [vmem:[%s528 + $0x1e0] sm:$0xff]
        %v590 = vld [vmem:[%s528 + $0x1e8] sm:$0xff]
        %v591 = vld [vmem:[%s528 + $0x1f0] sm:$0xff]
        %v592 = vld [vmem:[%s528 + $0x1f8] sm:$0xff]
        %v593 = vld [vmem:[%s528 + $0x200] sm:$0xff]
        %v594 = vld [vmem:[%s528 + $0x208] sm:$0xff]
        %v595 = vld [vmem:[%s528 + $0x210] sm:$0xff]
        %v596 = vld [vmem:[%s528 + $0x218] sm:$0xff]
        %v597 = vld [vmem:[%s528 + $0x220] sm:$0xff]
        %v598 = vld [vmem:[%s528 + $0x228] sm:$0xff]
        %v599 = vld [vmem:[%s528 + $0x230] sm:$0xff]
        %v600 = vld [vmem:[%s528 + $0x238] sm:$0xff]
        %v601 = vld [vmem:[%s528 + $0x240] sm:$0xff]
        %v602 = vld [vmem:[%s528 + $0x248] sm:$0xff]
        %v603 = vld [vmem:[%s528 + $0x250] sm:$0xff]
        %v604 = vld [vmem:[%s528 + $0x258] sm:$0xff]
        %v605 = vld [vmem:[%s528 + $0x260] sm:$0xff]
        %v606 = vld [vmem:[%s528 + $0x268] sm:$0xff]
        %v607 = vld [vmem:[%s528 + $0x270] sm:$0xff]
        %v608 = vld [vmem:[%s528 + $0x278] sm:$0xff]
        %v609 = vld [vmem:[%s528 + $0x280] sm:$0xff]
        %v610 = vld [vmem:[%s528 + $0x288] sm:$0xff]
        %v611 = vld [vmem:[%s528 + $0x290] sm:$0xff]
        %v612 = vld [vmem:[%s528 + $0x298] sm:$0xff]
        %v613 = vld [vmem:[%s528 + $0x2a0] sm:$0xff]
        %v614 = vld [vmem:[%s528 + $0x2a8] sm:$0xff]
        %v615 = vld [vmem:[%s528 + $0x2b0] sm:$0xff]
        %v616 = vld [vmem:[%s528 + $0x2b8] sm:$0xff]
        %v617 = vld [vmem:[%s528 + $0x2c0] sm:$0xff]
        %v618 = vld [vmem:[%s528 + $0x2c8] sm:$0xff]
        %v619 = vld [vmem:[%s528 + $0x2d0] sm:$0xff]
        %v620 = vld [vmem:[%s528 + $0x2d8] sm:$0xff]
        %v621 = vld [vmem:[%s528 + $0x2e0] sm:$0xff]
        %v622 = vld [vmem:[%s528 + $0x2e8] sm:$0xff]
        %v623 = vld [vmem:[%s528 + $0x2f0] sm:$0xff]
        %v624 = vld [vmem:[%s528 + $0x2f8] sm:$0xff]
        %v625 = vld [vmem:[%s528 + $0x300] sm:$0xff]
        %v626 = vld [vmem:[%s528 + $0x308] sm:$0xff]
        %v627 = vld [vmem:[%s528 + $0x310] sm:$0xff]
        %v628 = vld [vmem:[%s528 + $0x318] sm:$0xff]
        %v629 = vld [vmem:[%s528 + $0x320] sm:$0xff]
        %v630 = vld [vmem:[%s528 + $0x328] sm:$0xff]
        %v631 = vld [vmem:[%s528 + $0x330] sm:$0xff]
        %v632 = vld [vmem:[%s528 + $0x338] sm:$0xff]
        %v633 = vld [vmem:[%s528 + $0x340] sm:$0xff]
        %v634 = vld [vmem:[%s528 + $0x348] sm:$0xff]
        %v635 = vld [vmem:[%s528 + $0x350] sm:$0xff]
        %v636 = vld [vmem:[%s528 + $0x358] sm:$0xff]
        %v637 = vld [vmem:[%s528 + $0x360] sm:$0xff]
        %v638 = vld [vmem:[%s528 + $0x368] sm:$0xff]
        %v639 = vld [vmem:[%s528 + $0x370] sm:$0xff]
        %v640 = vld [vmem:[%s528 + $0x378] sm:$0xff]
        %v641 = vld [vmem:[%s528 + $0x380] sm:$0xff]
        %v642 = vld [vmem:[%s528 + $0x388] sm:$0xff]
        %v643 = vld [vmem:[%s528 + $0x390] sm:$0xff]
        %v644 = vld [vmem:[%s528 + $0x398] sm:$0xff]
        %v645 = vld [vmem:[%s528 + $0x3a0] sm:$0xff]
        %v646 = vld [vmem:[%s528 + $0x3a8] sm:$0xff]
        %v647 = vld [vmem:[%s528 + $0x3b0] sm:$0xff]
        %v648 = vld [vmem:[%s528 + $0x3b8] sm:$0xff]
        %v649 = vld [vmem:[%s528 + $0x3c0] sm:$0xff]
        %v650 = vld [vmem:[%s528 + $0x3c8] sm:$0xff]
        %v651 = vld [vmem:[%s528 + $0x3d0] sm:$0xff]
        %v652 = vld [vmem:[%s528 + $0x3d8] sm:$0xff]
        %v653 = vld [vmem:[%s528 + $0x3e0] sm:$0xff]
        %v654 = vld [vmem:[%s528 + $0x3e8] sm:$0xff]
        %v655 = vld [vmem:[%s528 + $0x3f0] sm:$0xff]
        %v656 = vld [vmem:[%s528 + $0x3f8] sm:$0xff]
        %s657 = sld [smem:[#allocation2]]
        %v658 = vstv %s657
        %v659 = vmul.f32 %v658, %v529
        %v660 = vmul.f32 %v658, %v530
        %v661 = vmul.f32 %v658, %v531
        %v662 = vmul.f32 %v658, %v532
        %v663 = vmul.f32 %v658, %v533
        %v664 = vmul.f32 %v658, %v534
        %v665 = vmul.f32 %v658, %v535
        %v666 = vmul.f32 %v658, %v536
        %v667 = vmul.f32 %v658, %v537
        %v668 = vmul.f32 %v658, %v538
        %v669 = vmul.f32 %v658, %v539
        %v670 = vmul.f32 %v658, %v540
        %v671 = vmul.f32 %v658, %v541
        %v672 = vmul.f32 %v658, %v542
        %v673 = vmul.f32 %v658, %v543
        %v674 = vmul.f32 %v658, %v544
        %v675 = vmul.f32 %v658, %v545
        %v676 = vmul.f32 %v658, %v546
        %v677 = vmul.f32 %v658, %v547
        %v678 = vmul.f32 %v658, %v548
        %v679 = vmul.f32 %v658, %v549
        %v680 = vmul.f32 %v658, %v550
        %v681 = vmul.f32 %v658, %v551
        %v682 = vmul.f32 %v658, %v552
        %v683 = vmul.f32 %v658, %v553
        %v684 = vmul.f32 %v658, %v554
        %v685 = vmul.f32 %v658, %v555
        %v686 = vmul.f32 %v658, %v556
        %v687 = vmul.f32 %v658, %v557
        %v688 = vmul.f32 %v658, %v558
        %v689 = vmul.f32 %v658, %v559
        %v690 = vmul.f32 %v658, %v560
        %v691 = vmul.f32 %v658, %v561
        %v692 = vmul.f32 %v658, %v562
        %v693 = vmul.f32 %v658, %v563
        %v694 = vmul.f32 %v658, %v564
        %v695 = vmul.f32 %v658, %v565
        %v696 = vmul.f32 %v658, %v566
        %v697 = vmul.f32 %v658, %v567
        %v698 = vmul.f32 %v658, %v568
        %v699 = vmul.f32 %v658, %v569
        %v700 = vmul.f32 %v658, %v570
        %v701 = vmul.f32 %v658, %v571
        %v702 = vmul.f32 %v658, %v572
        %v703 = vmul.f32 %v658, %v573
        %v704 = vmul.f32 %v658, %v574
        %v705 = vmul.f32 %v658, %v575
        %v706 = vmul.f32 %v658, %v576
        %v707 = vmul.f32 %v658, %v577
        %v708 = vmul.f32 %v658, %v578
        %v709 = vmul.f32 %v658, %v579
        %v710 = vmul.f32 %v658, %v580
        %v711 = vmul.f32 %v658, %v581
        %v712 = vmul.f32 %v658, %v582
        %v713 = vmul.f32 %v658, %v583
        %v714 = vmul.f32 %v658, %v584
        %v715 = vmul.f32 %v658, %v585
        %v716 = vmul.f32 %v658, %v586
        %v717 = vmul.f32 %v658, %v587
        %v718 = vmul.f32 %v658, %v588
        %v719 = vmul.f32 %v658, %v589
        %v720 = vmul.f32 %v658, %v590
        %v721 = vmul.f32 %v658, %v591
        %v722 = vmul.f32 %v658, %v592
        %v723 = vmul.f32 %v658, %v593
        %v724 = vmul.f32 %v658, %v594
        %v725 = vmul.f32 %v658, %v595
        %v726 = vmul.f32 %v658, %v596
        %v727 = vmul.f32 %v658, %v597
        %v728 = vmul.f32 %v658, %v598
        %v729 = vmul.f32 %v658, %v599
        %v730 = vmul.f32 %v658, %v600
        %v731 = vmul.f32 %v658, %v601
        %v732 = vmul.f32 %v658, %v602
        %v733 = vmul.f32 %v658, %v603
        %v734 = vmul.f32 %v658, %v604
        %v735 = vmul.f32 %v658, %v605
        %v736 = vmul.f32 %v658, %v606
        %v737 = vmul.f32 %v658, %v607
        %v738 = vmul.f32 %v658, %v608
        %v739 = vmul.f32 %v658, %v609
        %v740 = vmul.f32 %v658, %v610
        %v741 = vmul.f32 %v658, %v611
        %v742 = vmul.f32 %v658, %v612
        %v743 = vmul.f32 %v658, %v613
        %v744 = vmul.f32 %v658, %v614
        %v745 = vmul.f32 %v658, %v615
        %v746 = vmul.f32 %v658, %v616
        %v747 = vmul.f32 %v658, %v617
        %v748 = vmul.f32 %v658, %v618
        %v749 = vmul.f32 %v658, %v619
        %v750 = vmul.f32 %v658, %v620
        %v751 = vmul.f32 %v658, %v621
        %v752 = vmul.f32 %v658, %v622
        %v753 = vmul.f32 %v658, %v623
        %v754 = vmul.f32 %v658, %v624
        %v755 = vmul.f32 %v658, %v625
        %v756 = vmul.f32 %v658, %v626
        %v757 = vmul.f32 %v658, %v627
        %v758 = vmul.f32 %v658, %v628
        %v759 = vmul.f32 %v658, %v629
        %v760 = vmul.f32 %v658, %v630
        %v761 = vmul.f32 %v658, %v631
        %v762 = vmul.f32 %v658, %v632
        %v763 = vmul.f32 %v658, %v633
        %v764 = vmul.f32 %v658, %v634
        %v765 = vmul.f32 %v658, %v635
        %v766 = vmul.f32 %v658, %v636
        %v767 = vmul.f32 %v658, %v637
        %v768 = vmul.f32 %v658, %v638
        %v769 = vmul.f32 %v658, %v639
        %v770 = vmul.f32 %v658, %v640
        %v771 = vmul.f32 %v658, %v641
        %v772 = vmul.f32 %v658, %v642
        %v773 = vmul.f32 %v658, %v643
        %v774 = vmul.f32 %v658, %v644
        %v775 = vmul.f32 %v658, %v645
        %v776 = vmul.f32 %v658, %v646
        %v777 = vmul.f32 %v658, %v647
        %v778 = vmul.f32 %v658, %v648
        %v779 = vmul.f32 %v658, %v649
        %v780 = vmul.f32 %v658, %v650
        %v781 = vmul.f32 %v658, %v651
        %v782 = vmul.f32 %v658, %v652
        %v783 = vmul.f32 %v658, %v653
        %v784 = vmul.f32 %v658, %v654
        %v785 = vmul.f32 %v658, %v655
        %v786 = vmul.f32 %v658, %v656
        %787 = vmatpush.msra.mxu0 %v328
        %788 = vmatpush.msra.mxu0 %v324
        %789 = vmatpush.msra.mxu0 %v320
        %790 = vmatpush.msra.mxu0 %v316
        %791 = vmatpush.msra.mxu0 %v312
        %792 = vmatpush.msra.mxu0 %v308
        %793 = vmatpush.msra.mxu0 %v304
        %794 = vmatpush.msra.mxu0 %v300
        %795 = vmatpush.msra.mxu0 %v296
        %796 = vmatpush.msra.mxu0 %v292
        %797 = vmatpush.msra.mxu0 %v288
        %798 = vmatpush.msra.mxu0 %v284
        %799 = vmatpush.msra.mxu0 %v280
        %800 = vmatpush.msra.mxu0 %v276
        %801 = vmatpush.msra.mxu0 %v272
        %802 = vmatpush.msra.mxu0 %v268
        %803 = vmatmul.f32.gmra.mxu0 %v529
        %v804 = vpop.f32.mrf.mxu0
        %v805 = vadd.f32 0.0, %v804
        %806 = vmatmul.f32.gmra.mxu0 %v533
        %v807 = vpop.f32.mrf.mxu0
        %v808 = vadd.f32 0.0, %v807
        %809 = vmatmul.f32.gmra.mxu0 %v537
        %v810 = vpop.f32.mrf.mxu0
        %v811 = vadd.f32 0.0, %v810
        %812 = vmatmul.f32.gmra.mxu0 %v541
        %v813 = vpop.f32.mrf.mxu0
        %v814 = vadd.f32 0.0, %v813
        %815 = vmatmul.f32.gmra.mxu0 %v545
        %v816 = vpop.f32.mrf.mxu0
        %v817 = vadd.f32 0.0, %v816
        %818 = vmatmul.f32.gmra.mxu0 %v549
        %v819 = vpop.f32.mrf.mxu0
        %v820 = vadd.f32 0.0, %v819
        %821 = vmatmul.f32.gmra.mxu0 %v553
        %v822 = vpop.f32.mrf.mxu0
        %v823 = vadd.f32 0.0, %v822
        %824 = vmatmul.f32.gmra.mxu0 %v557
        %v825 = vpop.f32.mrf.mxu0
        %v826 = vadd.f32 0.0, %v825
        %827 = vmatmul.f32.gmra.mxu0 %v561
        %v828 = vpop.f32.mrf.mxu0
        %v829 = vadd.f32 0.0, %v828
        %830 = vmatmul.f32.gmra.mxu0 %v565
        %v831 = vpop.f32.mrf.mxu0
        %v832 = vadd.f32 0.0, %v831
        %833 = vmatmul.f32.gmra.mxu0 %v569
        %v834 = vpop.f32.mrf.mxu0
        %v835 = vadd.f32 0.0, %v834
        %836 = vmatmul.f32.gmra.mxu0 %v573
        %v837 = vpop.f32.mrf.mxu0
        %v838 = vadd.f32 0.0, %v837
        %839 = vmatmul.f32.gmra.mxu0 %v577
        %v840 = vpop.f32.mrf.mxu0
        %v841 = vadd.f32 0.0, %v840
        %842 = vmatmul.f32.gmra.mxu0 %v581
        %v843 = vpop.f32.mrf.mxu0
        %v844 = vadd.f32 0.0, %v843
        %845 = vmatmul.f32.gmra.mxu0 %v585
        %v846 = vpop.f32.mrf.mxu0
        %v847 = vadd.f32 0.0, %v846
        %848 = vmatmul.f32.gmra.mxu0 %v589
        %v849 = vpop.f32.mrf.mxu0
        %v850 = vadd.f32 0.0, %v849
        %851 = vmatmul.f32.gmra.mxu0 %v593
        %v852 = vpop.f32.mrf.mxu0
        %v853 = vadd.f32 0.0, %v852
        %854 = vmatmul.f32.gmra.mxu0 %v597
        %v855 = vpop.f32.mrf.mxu0
        %v856 = vadd.f32 0.0, %v855
        %857 = vmatmul.f32.gmra.mxu0 %v601
        %v858 = vpop.f32.mrf.mxu0
        %v859 = vadd.f32 0.0, %v858
        %860 = vmatmul.f32.gmra.mxu0 %v605
        %v861 = vpop.f32.mrf.mxu0
        %v862 = vadd.f32 0.0, %v861
        %863 = vmatmul.f32.gmra.mxu0 %v609
        %v864 = vpop.f32.mrf.mxu0
        %v865 = vadd.f32 0.0, %v864
        %866 = vmatmul.f32.gmra.mxu0 %v613
        %v867 = vpop.f32.mrf.mxu0
        %v868 = vadd.f32 0.0, %v867
        %869 = vmatmul.f32.gmra.mxu0 %v617
        %v870 = vpop.f32.mrf.mxu0
        %v871 = vadd.f32 0.0, %v870
        %872 = vmatmul.f32.gmra.mxu0 %v621
        %v873 = vpop.f32.mrf.mxu0
        %v874 = vadd.f32 0.0, %v873
        %875 = vmatmul.f32.gmra.mxu0 %v625
        %v876 = vpop.f32.mrf.mxu0
        %v877 = vadd.f32 0.0, %v876
        %878 = vmatmul.f32.gmra.mxu0 %v629
        %v879 = vpop.f32.mrf.mxu0
        %v880 = vadd.f32 0.0, %v879
        %881 = vmatmul.f32.gmra.mxu0 %v633
        %v882 = vpop.f32.mrf.mxu0
        %v883 = vadd.f32 0.0, %v882
        %884 = vmatmul.f32.gmra.mxu0 %v637
        %v885 = vpop.f32.mrf.mxu0
        %v886 = vadd.f32 0.0, %v885
        %887 = vmatmul.f32.gmra.mxu0 %v641
        %v888 = vpop.f32.mrf.mxu0
        %v889 = vadd.f32 0.0, %v888
        %890 = vmatmul.f32.gmra.mxu0 %v645
        %v891 = vpop.f32.mrf.mxu0
        %v892 = vadd.f32 0.0, %v891
        %893 = vmatmul.f32.gmra.mxu0 %v649
        %v894 = vpop.f32.mrf.mxu0
        %v895 = vadd.f32 0.0, %v894
        %896 = vmatmul.f32.gmra.mxu0 %v653
        %v897 = vpop.f32.mrf.mxu0
        %v898 = vadd.f32 0.0, %v897
        %899 = vdwg.mxu0
        %900 = vmatpush.msra.mxu0 %v392
        %901 = vmatpush.msra.mxu0 %v388
        %902 = vmatpush.msra.mxu0 %v384
        %903 = vmatpush.msra.mxu0 %v380
        %904 = vmatpush.msra.mxu0 %v376
        %905 = vmatpush.msra.mxu0 %v372
        %906 = vmatpush.msra.mxu0 %v368
        %907 = vmatpush.msra.mxu0 %v364
        %908 = vmatpush.msra.mxu0 %v360
        %909 = vmatpush.msra.mxu0 %v356
        %910 = vmatpush.msra.mxu0 %v352
        %911 = vmatpush.msra.mxu0 %v348
        %912 = vmatpush.msra.mxu0 %v344
        %913 = vmatpush.msra.mxu0 %v340
        %914 = vmatpush.msra.mxu0 %v336
        %915 = vmatpush.msra.mxu0 %v332
        %916 = vmatmul.f32.gmra.mxu0 %v530
        %v917 = vpop.f32.mrf.mxu0
        %v918 = vadd.f32 %v805, %v917
        %919 = vmatmul.f32.gmra.mxu0 %v534
        %v920 = vpop.f32.mrf.mxu0
        %v921 = vadd.f32 %v808, %v920
        %922 = vmatmul.f32.gmra.mxu0 %v538
        %v923 = vpop.f32.mrf.mxu0
        %v924 = vadd.f32 %v811, %v923
        %925 = vmatmul.f32.gmra.mxu0 %v542
        %v926 = vpop.f32.mrf.mxu0
        %v927 = vadd.f32 %v814, %v926
        %928 = vmatmul.f32.gmra.mxu0 %v546
        %v929 = vpop.f32.mrf.mxu0
        %v930 = vadd.f32 %v817, %v929
        %931 = vmatmul.f32.gmra.mxu0 %v550
        %v932 = vpop.f32.mrf.mxu0
        %v933 = vadd.f32 %v820, %v932
        %934 = vmatmul.f32.gmra.mxu0 %v554
        %v935 = vpop.f32.mrf.mxu0
        %v936 = vadd.f32 %v823, %v935
        %937 = vmatmul.f32.gmra.mxu0 %v558
        %v938 = vpop.f32.mrf.mxu0
        %v939 = vadd.f32 %v826, %v938
        %940 = vmatmul.f32.gmra.mxu0 %v562
        %v941 = vpop.f32.mrf.mxu0
        %v942 = vadd.f32 %v829, %v941
        %943 = vmatmul.f32.gmra.mxu0 %v566
        %v944 = vpop.f32.mrf.mxu0
        %v945 = vadd.f32 %v832, %v944
        %946 = vmatmul.f32.gmra.mxu0 %v570
        %v947 = vpop.f32.mrf.mxu0
        %v948 = vadd.f32 %v835, %v947
        %949 = vmatmul.f32.gmra.mxu0 %v574
        %v950 = vpop.f32.mrf.mxu0
        %v951 = vadd.f32 %v838, %v950
        %952 = vmatmul.f32.gmra.mxu0 %v578
        %v953 = vpop.f32.mrf.mxu0
        %v954 = vadd.f32 %v841, %v953
        %955 = vmatmul.f32.gmra.mxu0 %v582
        %v956 = vpop.f32.mrf.mxu0
        %v957 = vadd.f32 %v844, %v956
        %958 = vmatmul.f32.gmra.mxu0 %v586
        %v959 = vpop.f32.mrf.mxu0
        %v960 = vadd.f32 %v847, %v959
        %961 = vmatmul.f32.gmra.mxu0 %v590
        %v962 = vpop.f32.mrf.mxu0
        %v963 = vadd.f32 %v850, %v962
        %964 = vmatmul.f32.gmra.mxu0 %v594
        %v965 = vpop.f32.mrf.mxu0
        %v966 = vadd.f32 %v853, %v965
        %967 = vmatmul.f32.gmra.mxu0 %v598
        %v968 = vpop.f32.mrf.mxu0
        %v969 = vadd.f32 %v856, %v968
        %970 = vmatmul.f32.gmra.mxu0 %v602
        %v971 = vpop.f32.mrf.mxu0
        %v972 = vadd.f32 %v859, %v971
        %973 = vmatmul.f32.gmra.mxu0 %v606
        %v974 = vpop.f32.mrf.mxu0
        %v975 = vadd.f32 %v862, %v974
        %976 = vmatmul.f32.gmra.mxu0 %v610
        %v977 = vpop.f32.mrf.mxu0
        %v978 = vadd.f32 %v865, %v977
        %979 = vmatmul.f32.gmra.mxu0 %v614
        %v980 = vpop.f32.mrf.mxu0
        %v981 = vadd.f32 %v868, %v980
        %982 = vmatmul.f32.gmra.mxu0 %v618
        %v983 = vpop.f32.mrf.mxu0
        %v984 = vadd.f32 %v871, %v983
        %985 = vmatmul.f32.gmra.mxu0 %v622
        %v986 = vpop.f32.mrf.mxu0
        %v987 = vadd.f32 %v874, %v986
        %988 = vmatmul.f32.gmra.mxu0 %v626
        %v989 = vpop.f32.mrf.mxu0
        %v990 = vadd.f32 %v877, %v989
        %991 = vmatmul.f32.gmra.mxu0 %v630
        %v992 = vpop.f32.mrf.mxu0
        %v993 = vadd.f32 %v880, %v992
        %994 = vmatmul.f32.gmra.mxu0 %v634
        %v995 = vpop.f32.mrf.mxu0
        %v996 = vadd.f32 %v883, %v995
        %997 = vmatmul.f32.gmra.mxu0 %v638
        %v998 = vpop.f32.mrf.mxu0
        %v999 = vadd.f32 %v886, %v998
        %1000 = vmatmul.f32.gmra.mxu0 %v642
        %v1001 = vpop.f32.mrf.mxu0
        %v1002 = vadd.f32 %v889, %v1001
        %1003 = vmatmul.f32.gmra.mxu0 %v646
        %v1004 = vpop.f32.mrf.mxu0
        %v1005 = vadd.f32 %v892, %v1004
        %1006 = vmatmul.f32.gmra.mxu0 %v650
        %v1007 = vpop.f32.mrf.mxu0
        %v1008 = vadd.f32 %v895, %v1007
        %1009 = vmatmul.f32.gmra.mxu0 %v654
        %v1010 = vpop.f32.mrf.mxu0
        %v1011 = vadd.f32 %v898, %v1010
        %1012 = vdwg.mxu0
        %1013 = vmatpush.msra.mxu0 %v456
        %1014 = vmatpush.msra.mxu0 %v452
        %1015 = vmatpush.msra.mxu0 %v448
        %1016 = vmatpush.msra.mxu0 %v444
        %1017 = vmatpush.msra.mxu0 %v440
        %1018 = vmatpush.msra.mxu0 %v436
        %1019 = vmatpush.msra.mxu0 %v432
        %1020 = vmatpush.msra.mxu0 %v428
        %1021 = vmatpush.msra.mxu0 %v424
        %1022 = vmatpush.msra.mxu0 %v420
        %1023 = vmatpush.msra.mxu0 %v416
        %1024 = vmatpush.msra.mxu0 %v412
        %1025 = vmatpush.msra.mxu0 %v408
        %1026 = vmatpush.msra.mxu0 %v404
        %1027 = vmatpush.msra.mxu0 %v400
        %1028 = vmatpush.msra.mxu0 %v396
        %1029 = vmatmul.f32.gmra.mxu0 %v531
        %v1030 = vpop.f32.mrf.mxu0
        %v1031 = vadd.f32 %v918, %v1030
        %1032 = vmatmul.f32.gmra.mxu0 %v535
        %v1033 = vpop.f32.mrf.mxu0
        %v1034 = vadd.f32 %v921, %v1033
        %1035 = vmatmul.f32.gmra.mxu0 %v539
        %v1036 = vpop.f32.mrf.mxu0
        %v1037 = vadd.f32 %v924, %v1036
        %1038 = vmatmul.f32.gmra.mxu0 %v543
        %v1039 = vpop.f32.mrf.mxu0
        %v1040 = vadd.f32 %v927, %v1039
        %1041 = vmatmul.f32.gmra.mxu0 %v547
        %v1042 = vpop.f32.mrf.mxu0
        %v1043 = vadd.f32 %v930, %v1042
        %1044 = vmatmul.f32.gmra.mxu0 %v551
        %v1045 = vpop.f32.mrf.mxu0
        %v1046 = vadd.f32 %v933, %v1045
        %1047 = vmatmul.f32.gmra.mxu0 %v555
        %v1048 = vpop.f32.mrf.mxu0
        %v1049 = vadd.f32 %v936, %v1048
        %1050 = vmatmul.f32.gmra.mxu0 %v559
        %v1051 = vpop.f32.mrf.mxu0
        %v1052 = vadd.f32 %v939, %v1051
        %1053 = vmatmul.f32.gmra.mxu0 %v563
        %v1054 = vpop.f32.mrf.mxu0
        %v1055 = vadd.f32 %v942, %v1054
        %1056 = vmatmul.f32.gmra.mxu0 %v567
        %v1057 = vpop.f32.mrf.mxu0
        %v1058 = vadd.f32 %v945, %v1057
        %1059 = vmatmul.f32.gmra.mxu0 %v571
        %v1060 = vpop.f32.mrf.mxu0
        %v1061 = vadd.f32 %v948, %v1060
        %1062 = vmatmul.f32.gmra.mxu0 %v575
        %v1063 = vpop.f32.mrf.mxu0
        %v1064 = vadd.f32 %v951, %v1063
        %1065 = vmatmul.f32.gmra.mxu0 %v579
        %v1066 = vpop.f32.mrf.mxu0
        %v1067 = vadd.f32 %v954, %v1066
        %1068 = vmatmul.f32.gmra.mxu0 %v583
        %v1069 = vpop.f32.mrf.mxu0
        %v1070 = vadd.f32 %v957, %v1069
        %1071 = vmatmul.f32.gmra.mxu0 %v587
        %v1072 = vpop.f32.mrf.mxu0
        %v1073 = vadd.f32 %v960, %v1072
        %1074 = vmatmul.f32.gmra.mxu0 %v591
        %v1075 = vpop.f32.mrf.mxu0
        %v1076 = vadd.f32 %v963, %v1075
        %1077 = vmatmul.f32.gmra.mxu0 %v595
        %v1078 = vpop.f32.mrf.mxu0
        %v1079 = vadd.f32 %v966, %v1078
        %1080 = vmatmul.f32.gmra.mxu0 %v599
        %v1081 = vpop.f32.mrf.mxu0
        %v1082 = vadd.f32 %v969, %v1081
        %1083 = vmatmul.f32.gmra.mxu0 %v603
        %v1084 = vpop.f32.mrf.mxu0
        %v1085 = vadd.f32 %v972, %v1084
        %1086 = vmatmul.f32.gmra.mxu0 %v607
        %v1087 = vpop.f32.mrf.mxu0
        %v1088 = vadd.f32 %v975, %v1087
        %1089 = vmatmul.f32.gmra.mxu0 %v611
        %v1090 = vpop.f32.mrf.mxu0
        %v1091 = vadd.f32 %v978, %v1090
        %1092 = vmatmul.f32.gmra.mxu0 %v615
        %v1093 = vpop.f32.mrf.mxu0
        %v1094 = vadd.f32 %v981, %v1093
        %1095 = vmatmul.f32.gmra.mxu0 %v619
        %v1096 = vpop.f32.mrf.mxu0
        %v1097 = vadd.f32 %v984, %v1096
        %1098 = vmatmul.f32.gmra.mxu0 %v623
        %v1099 = vpop.f32.mrf.mxu0
        %v1100 = vadd.f32 %v987, %v1099
        %1101 = vmatmul.f32.gmra.mxu0 %v627
        %v1102 = vpop.f32.mrf.mxu0
        %v1103 = vadd.f32 %v990, %v1102
        %1104 = vmatmul.f32.gmra.mxu0 %v631
        %v1105 = vpop.f32.mrf.mxu0
        %v1106 = vadd.f32 %v993, %v1105
        %1107 = vmatmul.f32.gmra.mxu0 %v635
        %v1108 = vpop.f32.mrf.mxu0
        %v1109 = vadd.f32 %v996, %v1108
        %1110 = vmatmul.f32.gmra.mxu0 %v639
        %v1111 = vpop.f32.mrf.mxu0
        %v1112 = vadd.f32 %v999, %v1111
        %1113 = vmatmul.f32.gmra.mxu0 %v643
        %v1114 = vpop.f32.mrf.mxu0
        %v1115 = vadd.f32 %v1002, %v1114
        %1116 = vmatmul.f32.gmra.mxu0 %v647
        %v1117 = vpop.f32.mrf.mxu0
        %v1118 = vadd.f32 %v1005, %v1117
        %1119 = vmatmul.f32.gmra.mxu0 %v651
        %v1120 = vpop.f32.mrf.mxu0
        %v1121 = vadd.f32 %v1008, %v1120
        %1122 = vmatmul.f32.gmra.mxu0 %v655
        %v1123 = vpop.f32.mrf.mxu0
        %v1124 = vadd.f32 %v1011, %v1123
        %1125 = vdwg.mxu0
        %1126 = vmatpush.msra.mxu0 %v520
        %1127 = vmatpush.msra.mxu0 %v516
        %1128 = vmatpush.msra.mxu0 %v512
        %1129 = vmatpush.msra.mxu0 %v508
        %1130 = vmatpush.msra.mxu0 %v504
        %1131 = vmatpush.msra.mxu0 %v500
        %1132 = vmatpush.msra.mxu0 %v496
        %1133 = vmatpush.msra.mxu0 %v492
        %1134 = vmatpush.msra.mxu0 %v488
        %1135 = vmatpush.msra.mxu0 %v484
        %1136 = vmatpush.msra.mxu0 %v480
        %1137 = vmatpush.msra.mxu0 %v476
        %1138 = vmatpush.msra.mxu0 %v472
        %1139 = vmatpush.msra.mxu0 %v468
        %1140 = vmatpush.msra.mxu0 %v464
        %1141 = vmatpush.msra.mxu0 %v460
        %1142 = vmatmul.f32.gmra.mxu0 %v532
        %v1143 = vpop.f32.mrf.mxu0
        %v1144 = vadd.f32 %v1031, %v1143
        %1145 = vmatmul.f32.gmra.mxu0 %v536
        %v1146 = vpop.f32.mrf.mxu0
        %v1147 = vadd.f32 %v1034, %v1146
        %1148 = vmatmul.f32.gmra.mxu0 %v540
        %v1149 = vpop.f32.mrf.mxu0
        %v1150 = vadd.f32 %v1037, %v1149
        %1151 = vmatmul.f32.gmra.mxu0 %v544
        %v1152 = vpop.f32.mrf.mxu0
        %v1153 = vadd.f32 %v1040, %v1152
        %1154 = vmatmul.f32.gmra.mxu0 %v548
        %v1155 = vpop.f32.mrf.mxu0
        %v1156 = vadd.f32 %v1043, %v1155
        %1157 = vmatmul.f32.gmra.mxu0 %v552
        %v1158 = vpop.f32.mrf.mxu0
        %v1159 = vadd.f32 %v1046, %v1158
        %1160 = vmatmul.f32.gmra.mxu0 %v556
        %v1161 = vpop.f32.mrf.mxu0
        %v1162 = vadd.f32 %v1049, %v1161
        %1163 = vmatmul.f32.gmra.mxu0 %v560
        %v1164 = vpop.f32.mrf.mxu0
        %v1165 = vadd.f32 %v1052, %v1164
        %1166 = vmatmul.f32.gmra.mxu0 %v564
        %v1167 = vpop.f32.mrf.mxu0
        %v1168 = vadd.f32 %v1055, %v1167
        %1169 = vmatmul.f32.gmra.mxu0 %v568
        %v1170 = vpop.f32.mrf.mxu0
        %v1171 = vadd.f32 %v1058, %v1170
        %1172 = vmatmul.f32.gmra.mxu0 %v572
        %v1173 = vpop.f32.mrf.mxu0
        %v1174 = vadd.f32 %v1061, %v1173
        %1175 = vmatmul.f32.gmra.mxu0 %v576
        %v1176 = vpop.f32.mrf.mxu0
        %v1177 = vadd.f32 %v1064, %v1176
        %1178 = vmatmul.f32.gmra.mxu0 %v580
        %v1179 = vpop.f32.mrf.mxu0
        %v1180 = vadd.f32 %v1067, %v1179
        %1181 = vmatmul.f32.gmra.mxu0 %v584
        %v1182 = vpop.f32.mrf.mxu0
        %v1183 = vadd.f32 %v1070, %v1182
        %1184 = vmatmul.f32.gmra.mxu0 %v588
        %v1185 = vpop.f32.mrf.mxu0
        %v1186 = vadd.f32 %v1073, %v1185
        %1187 = vmatmul.f32.gmra.mxu0 %v592
        %v1188 = vpop.f32.mrf.mxu0
        %v1189 = vadd.f32 %v1076, %v1188
        %1190 = vmatmul.f32.gmra.mxu0 %v596
        %v1191 = vpop.f32.mrf.mxu0
        %v1192 = vadd.f32 %v1079, %v1191
        %1193 = vmatmul.f32.gmra.mxu0 %v600
        %v1194 = vpop.f32.mrf.mxu0
        %v1195 = vadd.f32 %v1082, %v1194
        %1196 = vmatmul.f32.gmra.mxu0 %v604
        %v1197 = vpop.f32.mrf.mxu0
        %v1198 = vadd.f32 %v1085, %v1197
        %1199 = vmatmul.f32.gmra.mxu0 %v608
        %v1200 = vpop.f32.mrf.mxu0
        %v1201 = vadd.f32 %v1088, %v1200
        %1202 = vmatmul.f32.gmra.mxu0 %v612
        %v1203 = vpop.f32.mrf.mxu0
        %v1204 = vadd.f32 %v1091, %v1203
        %1205 = vmatmul.f32.gmra.mxu0 %v616
        %v1206 = vpop.f32.mrf.mxu0
        %v1207 = vadd.f32 %v1094, %v1206
        %1208 = vmatmul.f32.gmra.mxu0 %v620
        %v1209 = vpop.f32.mrf.mxu0
        %v1210 = vadd.f32 %v1097, %v1209
        %1211 = vmatmul.f32.gmra.mxu0 %v624
        %v1212 = vpop.f32.mrf.mxu0
        %v1213 = vadd.f32 %v1100, %v1212
        %1214 = vmatmul.f32.gmra.mxu0 %v628
        %v1215 = vpop.f32.mrf.mxu0
        %v1216 = vadd.f32 %v1103, %v1215
        %1217 = vmatmul.f32.gmra.mxu0 %v632
        %v1218 = vpop.f32.mrf.mxu0
        %v1219 = vadd.f32 %v1106, %v1218
        %1220 = vmatmul.f32.gmra.mxu0 %v636
        %v1221 = vpop.f32.mrf.mxu0
        %v1222 = vadd.f32 %v1109, %v1221
        %1223 = vmatmul.f32.gmra.mxu0 %v640
        %v1224 = vpop.f32.mrf.mxu0
        %v1225 = vadd.f32 %v1112, %v1224
        %1226 = vmatmul.f32.gmra.mxu0 %v644
        %v1227 = vpop.f32.mrf.mxu0
        %v1228 = vadd.f32 %v1115, %v1227
        %1229 = vmatmul.f32.gmra.mxu0 %v648
        %v1230 = vpop.f32.mrf.mxu0
        %v1231 = vadd.f32 %v1118, %v1230
        %1232 = vmatmul.f32.gmra.mxu0 %v652
        %v1233 = vpop.f32.mrf.mxu0
        %v1234 = vadd.f32 %v1121, %v1233
        %1235 = vmatmul.f32.gmra.mxu0 %v656
        %v1236 = vpop.f32.mrf.mxu0
        %v1237 = vadd.f32 %v1124, %v1236
        %1238 = vdwg.mxu0
        %1239 = vmatpush.msra.mxu0 %v329
        %1240 = vmatpush.msra.mxu0 %v325
        %1241 = vmatpush.msra.mxu0 %v321
        %1242 = vmatpush.msra.mxu0 %v317
        %1243 = vmatpush.msra.mxu0 %v313
        %1244 = vmatpush.msra.mxu0 %v309
        %1245 = vmatpush.msra.mxu0 %v305
        %1246 = vmatpush.msra.mxu0 %v301
        %1247 = vmatpush.msra.mxu0 %v297
        %1248 = vmatpush.msra.mxu0 %v293
        %1249 = vmatpush.msra.mxu0 %v289
        %1250 = vmatpush.msra.mxu0 %v285
        %1251 = vmatpush.msra.mxu0 %v281
        %1252 = vmatpush.msra.mxu0 %v277
        %1253 = vmatpush.msra.mxu0 %v273
        %1254 = vmatpush.msra.mxu0 %v269
        %1255 = vmatmul.f32.gmra.mxu0 %v529
        %v1256 = vpop.f32.mrf.mxu0
        %v1257 = vadd.f32 0.0, %v1256
        %1258 = vmatmul.f32.gmra.mxu0 %v533
        %v1259 = vpop.f32.mrf.mxu0
        %v1260 = vadd.f32 0.0, %v1259
        %1261 = vmatmul.f32.gmra.mxu0 %v537
        %v1262 = vpop.f32.mrf.mxu0
        %v1263 = vadd.f32 0.0, %v1262
        %1264 = vmatmul.f32.gmra.mxu0 %v541
        %v1265 = vpop.f32.mrf.mxu0
        %v1266 = vadd.f32 0.0, %v1265
        %1267 = vmatmul.f32.gmra.mxu0 %v545
        %v1268 = vpop.f32.mrf.mxu0
        %v1269 = vadd.f32 0.0, %v1268
        %1270 = vmatmul.f32.gmra.mxu0 %v549
        %v1271 = vpop.f32.mrf.mxu0
        %v1272 = vadd.f32 0.0, %v1271
        %1273 = vmatmul.f32.gmra.mxu0 %v553
        %v1274 = vpop.f32.mrf.mxu0
        %v1275 = vadd.f32 0.0, %v1274
        %1276 = vmatmul.f32.gmra.mxu0 %v557
        %v1277 = vpop.f32.mrf.mxu0
        %v1278 = vadd.f32 0.0, %v1277
        %1279 = vmatmul.f32.gmra.mxu0 %v561
        %v1280 = vpop.f32.mrf.mxu0
        %v1281 = vadd.f32 0.0, %v1280
        %1282 = vmatmul.f32.gmra.mxu0 %v565
        %v1283 = vpop.f32.mrf.mxu0
        %v1284 = vadd.f32 0.0, %v1283
        %1285 = vmatmul.f32.gmra.mxu0 %v569
        %v1286 = vpop.f32.mrf.mxu0
        %v1287 = vadd.f32 0.0, %v1286
        %1288 = vmatmul.f32.gmra.mxu0 %v573
        %v1289 = vpop.f32.mrf.mxu0
        %v1290 = vadd.f32 0.0, %v1289
        %1291 = vmatmul.f32.gmra.mxu0 %v577
        %v1292 = vpop.f32.mrf.mxu0
        %v1293 = vadd.f32 0.0, %v1292
        %1294 = vmatmul.f32.gmra.mxu0 %v581
        %v1295 = vpop.f32.mrf.mxu0
        %v1296 = vadd.f32 0.0, %v1295
        %1297 = vmatmul.f32.gmra.mxu0 %v585
        %v1298 = vpop.f32.mrf.mxu0
        %v1299 = vadd.f32 0.0, %v1298
        %1300 = vmatmul.f32.gmra.mxu0 %v589
        %v1301 = vpop.f32.mrf.mxu0
        %v1302 = vadd.f32 0.0, %v1301
        %1303 = vmatmul.f32.gmra.mxu0 %v593
        %v1304 = vpop.f32.mrf.mxu0
        %v1305 = vadd.f32 0.0, %v1304
        %1306 = vmatmul.f32.gmra.mxu0 %v597
        %v1307 = vpop.f32.mrf.mxu0
        %v1308 = vadd.f32 0.0, %v1307
        %1309 = vmatmul.f32.gmra.mxu0 %v601
        %v1310 = vpop.f32.mrf.mxu0
        %v1311 = vadd.f32 0.0, %v1310
        %1312 = vmatmul.f32.gmra.mxu0 %v605
        %v1313 = vpop.f32.mrf.mxu0
        %v1314 = vadd.f32 0.0, %v1313
        %1315 = vmatmul.f32.gmra.mxu0 %v609
        %v1316 = vpop.f32.mrf.mxu0
        %v1317 = vadd.f32 0.0, %v1316
        %1318 = vmatmul.f32.gmra.mxu0 %v613
        %v1319 = vpop.f32.mrf.mxu0
        %v1320 = vadd.f32 0.0, %v1319
        %1321 = vmatmul.f32.gmra.mxu0 %v617
        %v1322 = vpop.f32.mrf.mxu0
        %v1323 = vadd.f32 0.0, %v1322
        %1324 = vmatmul.f32.gmra.mxu0 %v621
        %v1325 = vpop.f32.mrf.mxu0
        %v1326 = vadd.f32 0.0, %v1325
        %1327 = vmatmul.f32.gmra.mxu0 %v625
        %v1328 = vpop.f32.mrf.mxu0
        %v1329 = vadd.f32 0.0, %v1328
        %1330 = vmatmul.f32.gmra.mxu0 %v629
        %v1331 = vpop.f32.mrf.mxu0
        %v1332 = vadd.f32 0.0, %v1331
        %1333 = vmatmul.f32.gmra.mxu0 %v633
        %v1334 = vpop.f32.mrf.mxu0
        %v1335 = vadd.f32 0.0, %v1334
        %1336 = vmatmul.f32.gmra.mxu0 %v637
        %v1337 = vpop.f32.mrf.mxu0
        %v1338 = vadd.f32 0.0, %v1337
        %1339 = vmatmul.f32.gmra.mxu0 %v641
        %v1340 = vpop.f32.mrf.mxu0
        %v1341 = vadd.f32 0.0, %v1340
        %1342 = vmatmul.f32.gmra.mxu0 %v645
        %v1343 = vpop.f32.mrf.mxu0
        %v1344 = vadd.f32 0.0, %v1343
        %1345 = vmatmul.f32.gmra.mxu0 %v649
        %v1346 = vpop.f32.mrf.mxu0
        %v1347 = vadd.f32 0.0, %v1346
        %1348 = vmatmul.f32.gmra.mxu0 %v653
        %v1349 = vpop.f32.mrf.mxu0
        %v1350 = vadd.f32 0.0, %v1349
        %1351 = vdwg.mxu0
        %1352 = vmatpush.msra.mxu0 %v393
        %1353 = vmatpush.msra.mxu0 %v389
        %1354 = vmatpush.msra.mxu0 %v385
        %1355 = vmatpush.msra.mxu0 %v381
        %1356 = vmatpush.msra.mxu0 %v377
        %1357 = vmatpush.msra.mxu0 %v373
        %1358 = vmatpush.msra.mxu0 %v369
        %1359 = vmatpush.msra.mxu0 %v365
        %1360 = vmatpush.msra.mxu0 %v361
        %1361 = vmatpush.msra.mxu0 %v357
        %1362 = vmatpush.msra.mxu0 %v353
        %1363 = vmatpush.msra.mxu0 %v349
        %1364 = vmatpush.msra.mxu0 %v345
        %1365 = vmatpush.msra.mxu0 %v341
        %1366 = vmatpush.msra.mxu0 %v337
        %1367 = vmatpush.msra.mxu0 %v333
        %1368 = vmatmul.f32.gmra.mxu0 %v530
        %v1369 = vpop.f32.mrf.mxu0
        %v1370 = vadd.f32 %v1257, %v1369
        %1371 = vmatmul.f32.gmra.mxu0 %v534
        %v1372 = vpop.f32.mrf.mxu0
        %v1373 = vadd.f32 %v1260, %v1372
        %1374 = vmatmul.f32.gmra.mxu0 %v538
        %v1375 = vpop.f32.mrf.mxu0
        %v1376 = vadd.f32 %v1263, %v1375
        %1377 = vmatmul.f32.gmra.mxu0 %v542
        %v1378 = vpop.f32.mrf.mxu0
        %v1379 = vadd.f32 %v1266, %v1378
        %1380 = vmatmul.f32.gmra.mxu0 %v546
        %v1381 = vpop.f32.mrf.mxu0
        %v1382 = vadd.f32 %v1269, %v1381
        %1383 = vmatmul.f32.gmra.mxu0 %v550
        %v1384 = vpop.f32.mrf.mxu0
        %v1385 = vadd.f32 %v1272, %v1384
        %1386 = vmatmul.f32.gmra.mxu0 %v554
        %v1387 = vpop.f32.mrf.mxu0
        %v1388 = vadd.f32 %v1275, %v1387
        %1389 = vmatmul.f32.gmra.mxu0 %v558
        %v1390 = vpop.f32.mrf.mxu0
        %v1391 = vadd.f32 %v1278, %v1390
        %1392 = vmatmul.f32.gmra.mxu0 %v562
        %v1393 = vpop.f32.mrf.mxu0
        %v1394 = vadd.f32 %v1281, %v1393
        %1395 = vmatmul.f32.gmra.mxu0 %v566
        %v1396 = vpop.f32.mrf.mxu0
        %v1397 = vadd.f32 %v1284, %v1396
        %1398 = vmatmul.f32.gmra.mxu0 %v570
        %v1399 = vpop.f32.mrf.mxu0
        %v1400 = vadd.f32 %v1287, %v1399
        %1401 = vmatmul.f32.gmra.mxu0 %v574
        %v1402 = vpop.f32.mrf.mxu0
        %v1403 = vadd.f32 %v1290, %v1402
        %1404 = vmatmul.f32.gmra.mxu0 %v578
        %v1405 = vpop.f32.mrf.mxu0
        %v1406 = vadd.f32 %v1293, %v1405
        %1407 = vmatmul.f32.gmra.mxu0 %v582
        %v1408 = vpop.f32.mrf.mxu0
        %v1409 = vadd.f32 %v1296, %v1408
        %1410 = vmatmul.f32.gmra.mxu0 %v586
        %v1411 = vpop.f32.mrf.mxu0
        %v1412 = vadd.f32 %v1299, %v1411
        %1413 = vmatmul.f32.gmra.mxu0 %v590
        %v1414 = vpop.f32.mrf.mxu0
        %v1415 = vadd.f32 %v1302, %v1414
        %1416 = vmatmul.f32.gmra.mxu0 %v594
        %v1417 = vpop.f32.mrf.mxu0
        %v1418 = vadd.f32 %v1305, %v1417
        %1419 = vmatmul.f32.gmra.mxu0 %v598
        %v1420 = vpop.f32.mrf.mxu0
        %v1421 = vadd.f32 %v1308, %v1420
        %1422 = vmatmul.f32.gmra.mxu0 %v602
        %v1423 = vpop.f32.mrf.mxu0
        %v1424 = vadd.f32 %v1311, %v1423
        %1425 = vmatmul.f32.gmra.mxu0 %v606
        %v1426 = vpop.f32.mrf.mxu0
        %v1427 = vadd.f32 %v1314, %v1426
        %1428 = vmatmul.f32.gmra.mxu0 %v610
        %v1429 = vpop.f32.mrf.mxu0
        %v1430 = vadd.f32 %v1317, %v1429
        %1431 = vmatmul.f32.gmra.mxu0 %v614
        %v1432 = vpop.f32.mrf.mxu0
        %v1433 = vadd.f32 %v1320, %v1432
        %1434 = vmatmul.f32.gmra.mxu0 %v618
        %v1435 = vpop.f32.mrf.mxu0
        %v1436 = vadd.f32 %v1323, %v1435
        %1437 = vmatmul.f32.gmra.mxu0 %v622
        %v1438 = vpop.f32.mrf.mxu0
        %v1439 = vadd.f32 %v1326, %v1438
        %1440 = vmatmul.f32.gmra.mxu0 %v626
        %v1441 = vpop.f32.mrf.mxu0
        %v1442 = vadd.f32 %v1329, %v1441
        %1443 = vmatmul.f32.gmra.mxu0 %v630
        %v1444 = vpop.f32.mrf.mxu0
        %v1445 = vadd.f32 %v1332, %v1444
        %1446 = vmatmul.f32.gmra.mxu0 %v634
        %v1447 = vpop.f32.mrf.mxu0
        %v1448 = vadd.f32 %v1335, %v1447
        %1449 = vmatmul.f32.gmra.mxu0 %v638
        %v1450 = vpop.f32.mrf.mxu0
        %v1451 = vadd.f32 %v1338, %v1450
        %1452 = vmatmul.f32.gmra.mxu0 %v642
        %v1453 = vpop.f32.mrf.mxu0
        %v1454 = vadd.f32 %v1341, %v1453
        %1455 = vmatmul.f32.gmra.mxu0 %v646
        %v1456 = vpop.f32.mrf.mxu0
        %v1457 = vadd.f32 %v1344, %v1456
        %1458 = vmatmul.f32.gmra.mxu0 %v650
        %v1459 = vpop.f32.mrf.mxu0
        %v1460 = vadd.f32 %v1347, %v1459
        %1461 = vmatmul.f32.gmra.mxu0 %v654
        %v1462 = vpop.f32.mrf.mxu0
        %v1463 = vadd.f32 %v1350, %v1462
        %1464 = vdwg.mxu0
        %1465 = vmatpush.msra.mxu0 %v457
        %1466 = vmatpush.msra.mxu0 %v453
        %1467 = vmatpush.msra.mxu0 %v449
        %1468 = vmatpush.msra.mxu0 %v445
        %1469 = vmatpush.msra.mxu0 %v441
        %1470 = vmatpush.msra.mxu0 %v437
        %1471 = vmatpush.msra.mxu0 %v433
        %1472 = vmatpush.msra.mxu0 %v429
        %1473 = vmatpush.msra.mxu0 %v425
        %1474 = vmatpush.msra.mxu0 %v421
        %1475 = vmatpush.msra.mxu0 %v417
        %1476 = vmatpush.msra.mxu0 %v413
        %1477 = vmatpush.msra.mxu0 %v409
        %1478 = vmatpush.msra.mxu0 %v405
        %1479 = vmatpush.msra.mxu0 %v401
        %1480 = vmatpush.msra.mxu0 %v397
        %1481 = vmatmul.f32.gmra.mxu0 %v531
        %v1482 = vpop.f32.mrf.mxu0
        %v1483 = vadd.f32 %v1370, %v1482
        %1484 = vmatmul.f32.gmra.mxu0 %v535
        %v1485 = vpop.f32.mrf.mxu0
        %v1486 = vadd.f32 %v1373, %v1485
        %1487 = vmatmul.f32.gmra.mxu0 %v539
        %v1488 = vpop.f32.mrf.mxu0
        %v1489 = vadd.f32 %v1376, %v1488
        %1490 = vmatmul.f32.gmra.mxu0 %v543
        %v1491 = vpop.f32.mrf.mxu0
        %v1492 = vadd.f32 %v1379, %v1491
        %1493 = vmatmul.f32.gmra.mxu0 %v547
        %v1494 = vpop.f32.mrf.mxu0
        %v1495 = vadd.f32 %v1382, %v1494
        %1496 = vmatmul.f32.gmra.mxu0 %v551
        %v1497 = vpop.f32.mrf.mxu0
        %v1498 = vadd.f32 %v1385, %v1497
        %1499 = vmatmul.f32.gmra.mxu0 %v555
        %v1500 = vpop.f32.mrf.mxu0
        %v1501 = vadd.f32 %v1388, %v1500
        %1502 = vmatmul.f32.gmra.mxu0 %v559
        %v1503 = vpop.f32.mrf.mxu0
        %v1504 = vadd.f32 %v1391, %v1503
        %1505 = vmatmul.f32.gmra.mxu0 %v563
        %v1506 = vpop.f32.mrf.mxu0
        %v1507 = vadd.f32 %v1394, %v1506
        %1508 = vmatmul.f32.gmra.mxu0 %v567
        %v1509 = vpop.f32.mrf.mxu0
        %v1510 = vadd.f32 %v1397, %v1509
        %1511 = vmatmul.f32.gmra.mxu0 %v571
        %v1512 = vpop.f32.mrf.mxu0
        %v1513 = vadd.f32 %v1400, %v1512
        %1514 = vmatmul.f32.gmra.mxu0 %v575
        %v1515 = vpop.f32.mrf.mxu0
        %v1516 = vadd.f32 %v1403, %v1515
        %1517 = vmatmul.f32.gmra.mxu0 %v579
        %v1518 = vpop.f32.mrf.mxu0
        %v1519 = vadd.f32 %v1406, %v1518
        %1520 = vmatmul.f32.gmra.mxu0 %v583
        %v1521 = vpop.f32.mrf.mxu0
        %v1522 = vadd.f32 %v1409, %v1521
        %1523 = vmatmul.f32.gmra.mxu0 %v587
        %v1524 = vpop.f32.mrf.mxu0
        %v1525 = vadd.f32 %v1412, %v1524
        %1526 = vmatmul.f32.gmra.mxu0 %v591
        %v1527 = vpop.f32.mrf.mxu0
        %v1528 = vadd.f32 %v1415, %v1527
        %1529 = vmatmul.f32.gmra.mxu0 %v595
        %v1530 = vpop.f32.mrf.mxu0
        %v1531 = vadd.f32 %v1418, %v1530
        %1532 = vmatmul.f32.gmra.mxu0 %v599
        %v1533 = vpop.f32.mrf.mxu0
        %v1534 = vadd.f32 %v1421, %v1533
        %1535 = vmatmul.f32.gmra.mxu0 %v603
        %v1536 = vpop.f32.mrf.mxu0
        %v1537 = vadd.f32 %v1424, %v1536
        %1538 = vmatmul.f32.gmra.mxu0 %v607
        %v1539 = vpop.f32.mrf.mxu0
        %v1540 = vadd.f32 %v1427, %v1539
        %1541 = vmatmul.f32.gmra.mxu0 %v611
        %v1542 = vpop.f32.mrf.mxu0
        %v1543 = vadd.f32 %v1430, %v1542
        %1544 = vmatmul.f32.gmra.mxu0 %v615
        %v1545 = vpop.f32.mrf.mxu0
        %v1546 = vadd.f32 %v1433, %v1545
        %1547 = vmatmul.f32.gmra.mxu0 %v619
        %v1548 = vpop.f32.mrf.mxu0
        %v1549 = vadd.f32 %v1436, %v1548
        %1550 = vmatmul.f32.gmra.mxu0 %v623
        %v1551 = vpop.f32.mrf.mxu0
        %v1552 = vadd.f32 %v1439, %v1551
        %1553 = vmatmul.f32.gmra.mxu0 %v627
        %v1554 = vpop.f32.mrf.mxu0
        %v1555 = vadd.f32 %v1442, %v1554
        %1556 = vmatmul.f32.gmra.mxu0 %v631
        %v1557 = vpop.f32.mrf.mxu0
        %v1558 = vadd.f32 %v1445, %v1557
        %1559 = vmatmul.f32.gmra.mxu0 %v635
        %v1560 = vpop.f32.mrf.mxu0
        %v1561 = vadd.f32 %v1448, %v1560
        %1562 = vmatmul.f32.gmra.mxu0 %v639
        %v1563 = vpop.f32.mrf.mxu0
        %v1564 = vadd.f32 %v1451, %v1563
        %1565 = vmatmul.f32.gmra.mxu0 %v643
        %v1566 = vpop.f32.mrf.mxu0
        %v1567 = vadd.f32 %v1454, %v1566
        %1568 = vmatmul.f32.gmra.mxu0 %v647
        %v1569 = vpop.f32.mrf.mxu0
        %v1570 = vadd.f32 %v1457, %v1569
        %1571 = vmatmul.f32.gmra.mxu0 %v651
        %v1572 = vpop.f32.mrf.mxu0
        %v1573 = vadd.f32 %v1460, %v1572
        %1574 = vmatmul.f32.gmra.mxu0 %v655
        %v1575 = vpop.f32.mrf.mxu0
        %v1576 = vadd.f32 %v1463, %v1575
        %1577 = vdwg.mxu0
        %1578 = vmatpush.msra.mxu0 %v521
        %1579 = vmatpush.msra.mxu0 %v517
        %1580 = vmatpush.msra.mxu0 %v513
        %1581 = vmatpush.msra.mxu0 %v509
        %1582 = vmatpush.msra.mxu0 %v505
        %1583 = vmatpush.msra.mxu0 %v501
        %1584 = vmatpush.msra.mxu0 %v497
        %1585 = vmatpush.msra.mxu0 %v493
        %1586 = vmatpush.msra.mxu0 %v489
        %1587 = vmatpush.msra.mxu0 %v485
        %1588 = vmatpush.msra.mxu0 %v481
        %1589 = vmatpush.msra.mxu0 %v477
        %1590 = vmatpush.msra.mxu0 %v473
        %1591 = vmatpush.msra.mxu0 %v469
        %1592 = vmatpush.msra.mxu0 %v465
        %1593 = vmatpush.msra.mxu0 %v461
        %1594 = vmatmul.f32.gmra.mxu0 %v532
        %v1595 = vpop.f32.mrf.mxu0
        %v1596 = vadd.f32 %v1483, %v1595
        %1597 = vmatmul.f32.gmra.mxu0 %v536
        %v1598 = vpop.f32.mrf.mxu0
        %v1599 = vadd.f32 %v1486, %v1598
        %1600 = vmatmul.f32.gmra.mxu0 %v540
        %v1601 = vpop.f32.mrf.mxu0
        %v1602 = vadd.f32 %v1489, %v1601
        %1603 = vmatmul.f32.gmra.mxu0 %v544
        %v1604 = vpop.f32.mrf.mxu0
        %v1605 = vadd.f32 %v1492, %v1604
        %1606 = vmatmul.f32.gmra.mxu0 %v548
        %v1607 = vpop.f32.mrf.mxu0
        %v1608 = vadd.f32 %v1495, %v1607
        %1609 = vmatmul.f32.gmra.mxu0 %v552
        %v1610 = vpop.f32.mrf.mxu0
        %v1611 = vadd.f32 %v1498, %v1610
        %1612 = vmatmul.f32.gmra.mxu0 %v556
        %v1613 = vpop.f32.mrf.mxu0
        %v1614 = vadd.f32 %v1501, %v1613
        %1615 = vmatmul.f32.gmra.mxu0 %v560
        %v1616 = vpop.f32.mrf.mxu0
        %v1617 = vadd.f32 %v1504, %v1616
        %1618 = vmatmul.f32.gmra.mxu0 %v564
        %v1619 = vpop.f32.mrf.mxu0
        %v1620 = vadd.f32 %v1507, %v1619
        %1621 = vmatmul.f32.gmra.mxu0 %v568
        %v1622 = vpop.f32.mrf.mxu0
        %v1623 = vadd.f32 %v1510, %v1622
        %1624 = vmatmul.f32.gmra.mxu0 %v572
        %v1625 = vpop.f32.mrf.mxu0
        %v1626 = vadd.f32 %v1513, %v1625
        %1627 = vmatmul.f32.gmra.mxu0 %v576
        %v1628 = vpop.f32.mrf.mxu0
        %v1629 = vadd.f32 %v1516, %v1628
        %1630 = vmatmul.f32.gmra.mxu0 %v580
        %v1631 = vpop.f32.mrf.mxu0
        %v1632 = vadd.f32 %v1519, %v1631
        %1633 = vmatmul.f32.gmra.mxu0 %v584
        %v1634 = vpop.f32.mrf.mxu0
        %v1635 = vadd.f32 %v1522, %v1634
        %1636 = vmatmul.f32.gmra.mxu0 %v588
        %v1637 = vpop.f32.mrf.mxu0
        %v1638 = vadd.f32 %v1525, %v1637
        %1639 = vmatmul.f32.gmra.mxu0 %v592
        %v1640 = vpop.f32.mrf.mxu0
        %v1641 = vadd.f32 %v1528, %v1640
        %1642 = vmatmul.f32.gmra.mxu0 %v596
        %v1643 = vpop.f32.mrf.mxu0
        %v1644 = vadd.f32 %v1531, %v1643
        %1645 = vmatmul.f32.gmra.mxu0 %v600
        %v1646 = vpop.f32.mrf.mxu0
        %v1647 = vadd.f32 %v1534, %v1646
        %1648 = vmatmul.f32.gmra.mxu0 %v604
        %v1649 = vpop.f32.mrf.mxu0
        %v1650 = vadd.f32 %v1537, %v1649
        %1651 = vmatmul.f32.gmra.mxu0 %v608
        %v1652 = vpop.f32.mrf.mxu0
        %v1653 = vadd.f32 %v1540, %v1652
        %1654 = vmatmul.f32.gmra.mxu0 %v612
        %v1655 = vpop.f32.mrf.mxu0
        %v1656 = vadd.f32 %v1543, %v1655
        %1657 = vmatmul.f32.gmra.mxu0 %v616
        %v1658 = vpop.f32.mrf.mxu0
        %v1659 = vadd.f32 %v1546, %v1658
        %1660 = vmatmul.f32.gmra.mxu0 %v620
        %v1661 = vpop.f32.mrf.mxu0
        %v1662 = vadd.f32 %v1549, %v1661
        %1663 = vmatmul.f32.gmra.mxu0 %v624
        %v1664 = vpop.f32.mrf.mxu0
        %v1665 = vadd.f32 %v1552, %v1664
        %1666 = vmatmul.f32.gmra.mxu0 %v628
        %v1667 = vpop.f32.mrf.mxu0
        %v1668 = vadd.f32 %v1555, %v1667
        %1669 = vmatmul.f32.gmra.mxu0 %v632
        %v1670 = vpop.f32.mrf.mxu0
        %v1671 = vadd.f32 %v1558, %v1670
        %1672 = vmatmul.f32.gmra.mxu0 %v636
        %v1673 = vpop.f32.mrf.mxu0
        %v1674 = vadd.f32 %v1561, %v1673
        %1675 = vmatmul.f32.gmra.mxu0 %v640
        %v1676 = vpop.f32.mrf.mxu0
        %v1677 = vadd.f32 %v1564, %v1676
        %1678 = vmatmul.f32.gmra.mxu0 %v644
        %v1679 = vpop.f32.mrf.mxu0
        %v1680 = vadd.f32 %v1567, %v1679
        %1681 = vmatmul.f32.gmra.mxu0 %v648
        %v1682 = vpop.f32.mrf.mxu0
        %v1683 = vadd.f32 %v1570, %v1682
        %1684 = vmatmul.f32.gmra.mxu0 %v652
        %v1685 = vpop.f32.mrf.mxu0
        %v1686 = vadd.f32 %v1573, %v1685
        %1687 = vmatmul.f32.gmra.mxu0 %v656
        %v1688 = vpop.f32.mrf.mxu0
        %v1689 = vadd.f32 %v1576, %v1688
        %1690 = vdwg.mxu0
        %1691 = vmatpush.msra.mxu0 %v330
        %1692 = vmatpush.msra.mxu0 %v326
        %1693 = vmatpush.msra.mxu0 %v322
        %1694 = vmatpush.msra.mxu0 %v318
        %1695 = vmatpush.msra.mxu0 %v314
        %1696 = vmatpush.msra.mxu0 %v310
        %1697 = vmatpush.msra.mxu0 %v306
        %1698 = vmatpush.msra.mxu0 %v302
        %1699 = vmatpush.msra.mxu0 %v298
        %1700 = vmatpush.msra.mxu0 %v294
        %1701 = vmatpush.msra.mxu0 %v290
        %1702 = vmatpush.msra.mxu0 %v286
        %1703 = vmatpush.msra.mxu0 %v282
        %1704 = vmatpush.msra.mxu0 %v278
        %1705 = vmatpush.msra.mxu0 %v274
        %1706 = vmatpush.msra.mxu0 %v270
        %1707 = vmatmul.f32.gmra.mxu0 %v529
        %v1708 = vpop.f32.mrf.mxu0
        %v1709 = vadd.f32 0.0, %v1708
        %1710 = vmatmul.f32.gmra.mxu0 %v533
        %v1711 = vpop.f32.mrf.mxu0
        %v1712 = vadd.f32 0.0, %v1711
        %1713 = vmatmul.f32.gmra.mxu0 %v537
        %v1714 = vpop.f32.mrf.mxu0
        %v1715 = vadd.f32 0.0, %v1714
        %1716 = vmatmul.f32.gmra.mxu0 %v541
        %v1717 = vpop.f32.mrf.mxu0
        %v1718 = vadd.f32 0.0, %v1717
        %1719 = vmatmul.f32.gmra.mxu0 %v545
        %v1720 = vpop.f32.mrf.mxu0
        %v1721 = vadd.f32 0.0, %v1720
        %1722 = vmatmul.f32.gmra.mxu0 %v549
        %v1723 = vpop.f32.mrf.mxu0
        %v1724 = vadd.f32 0.0, %v1723
        %1725 = vmatmul.f32.gmra.mxu0 %v553
        %v1726 = vpop.f32.mrf.mxu0
        %v1727 = vadd.f32 0.0, %v1726
        %1728 = vmatmul.f32.gmra.mxu0 %v557
        %v1729 = vpop.f32.mrf.mxu0
        %v1730 = vadd.f32 0.0, %v1729
        %1731 = vmatmul.f32.gmra.mxu0 %v561
        %v1732 = vpop.f32.mrf.mxu0
        %v1733 = vadd.f32 0.0, %v1732
        %1734 = vmatmul.f32.gmra.mxu0 %v565
        %v1735 = vpop.f32.mrf.mxu0
        %v1736 = vadd.f32 0.0, %v1735
        %1737 = vmatmul.f32.gmra.mxu0 %v569
        %v1738 = vpop.f32.mrf.mxu0
        %v1739 = vadd.f32 0.0, %v1738
        %1740 = vmatmul.f32.gmra.mxu0 %v573
        %v1741 = vpop.f32.mrf.mxu0
        %v1742 = vadd.f32 0.0, %v1741
        %1743 = vmatmul.f32.gmra.mxu0 %v577
        %v1744 = vpop.f32.mrf.mxu0
        %v1745 = vadd.f32 0.0, %v1744
        %1746 = vmatmul.f32.gmra.mxu0 %v581
        %v1747 = vpop.f32.mrf.mxu0
        %v1748 = vadd.f32 0.0, %v1747
        %1749 = vmatmul.f32.gmra.mxu0 %v585
        %v1750 = vpop.f32.mrf.mxu0
        %v1751 = vadd.f32 0.0, %v1750
        %1752 = vmatmul.f32.gmra.mxu0 %v589
        %v1753 = vpop.f32.mrf.mxu0
        %v1754 = vadd.f32 0.0, %v1753
        %1755 = vmatmul.f32.gmra.mxu0 %v593
        %v1756 = vpop.f32.mrf.mxu0
        %v1757 = vadd.f32 0.0, %v1756
        %1758 = vmatmul.f32.gmra.mxu0 %v597
        %v1759 = vpop.f32.mrf.mxu0
        %v1760 = vadd.f32 0.0, %v1759
        %1761 = vmatmul.f32.gmra.mxu0 %v601
        %v1762 = vpop.f32.mrf.mxu0
        %v1763 = vadd.f32 0.0, %v1762
        %1764 = vmatmul.f32.gmra.mxu0 %v605
        %v1765 = vpop.f32.mrf.mxu0
        %v1766 = vadd.f32 0.0, %v1765
        %1767 = vmatmul.f32.gmra.mxu0 %v609
        %v1768 = vpop.f32.mrf.mxu0
        %v1769 = vadd.f32 0.0, %v1768
        %1770 = vmatmul.f32.gmra.mxu0 %v613
        %v1771 = vpop.f32.mrf.mxu0
        %v1772 = vadd.f32 0.0, %v1771
        %1773 = vmatmul.f32.gmra.mxu0 %v617
        %v1774 = vpop.f32.mrf.mxu0
        %v1775 = vadd.f32 0.0, %v1774
        %1776 = vmatmul.f32.gmra.mxu0 %v621
        %v1777 = vpop.f32.mrf.mxu0
        %v1778 = vadd.f32 0.0, %v1777
        %1779 = vmatmul.f32.gmra.mxu0 %v625
        %v1780 = vpop.f32.mrf.mxu0
        %v1781 = vadd.f32 0.0, %v1780
        %1782 = vmatmul.f32.gmra.mxu0 %v629
        %v1783 = vpop.f32.mrf.mxu0
        %v1784 = vadd.f32 0.0, %v1783
        %1785 = vmatmul.f32.gmra.mxu0 %v633
        %v1786 = vpop.f32.mrf.mxu0
        %v1787 = vadd.f32 0.0, %v1786
        %1788 = vmatmul.f32.gmra.mxu0 %v637
        %v1789 = vpop.f32.mrf.mxu0
        %v1790 = vadd.f32 0.0, %v1789
        %1791 = vmatmul.f32.gmra.mxu0 %v641
        %v1792 = vpop.f32.mrf.mxu0
        %v1793 = vadd.f32 0.0, %v1792
        %1794 = vmatmul.f32.gmra.mxu0 %v645
        %v1795 = vpop.f32.mrf.mxu0
        %v1796 = vadd.f32 0.0, %v1795
        %1797 = vmatmul.f32.gmra.mxu0 %v649
        %v1798 = vpop.f32.mrf.mxu0
        %v1799 = vadd.f32 0.0, %v1798
        %1800 = vmatmul.f32.gmra.mxu0 %v653
        %v1801 = vpop.f32.mrf.mxu0
        %v1802 = vadd.f32 0.0, %v1801
        %1803 = vdwg.mxu0
        %1804 = vmatpush.msra.mxu0 %v394
        %1805 = vmatpush.msra.mxu0 %v390
        %1806 = vmatpush.msra.mxu0 %v386
        %1807 = vmatpush.msra.mxu0 %v382
        %1808 = vmatpush.msra.mxu0 %v378
        %1809 = vmatpush.msra.mxu0 %v374
        %1810 = vmatpush.msra.mxu0 %v370
        %1811 = vmatpush.msra.mxu0 %v366
        %1812 = vmatpush.msra.mxu0 %v362
        %1813 = vmatpush.msra.mxu0 %v358
        %1814 = vmatpush.msra.mxu0 %v354
        %1815 = vmatpush.msra.mxu0 %v350
        %1816 = vmatpush.msra.mxu0 %v346
        %1817 = vmatpush.msra.mxu0 %v342
        %1818 = vmatpush.msra.mxu0 %v338
        %1819 = vmatpush.msra.mxu0 %v334
        %1820 = vmatmul.f32.gmra.mxu0 %v530
        %v1821 = vpop.f32.mrf.mxu0
        %v1822 = vadd.f32 %v1709, %v1821
        %1823 = vmatmul.f32.gmra.mxu0 %v534
        %v1824 = vpop.f32.mrf.mxu0
        %v1825 = vadd.f32 %v1712, %v1824
        %1826 = vmatmul.f32.gmra.mxu0 %v538
        %v1827 = vpop.f32.mrf.mxu0
        %v1828 = vadd.f32 %v1715, %v1827
        %1829 = vmatmul.f32.gmra.mxu0 %v542
        %v1830 = vpop.f32.mrf.mxu0
        %v1831 = vadd.f32 %v1718, %v1830
        %1832 = vmatmul.f32.gmra.mxu0 %v546
        %v1833 = vpop.f32.mrf.mxu0
        %v1834 = vadd.f32 %v1721, %v1833
        %1835 = vmatmul.f32.gmra.mxu0 %v550
        %v1836 = vpop.f32.mrf.mxu0
        %v1837 = vadd.f32 %v1724, %v1836
        %1838 = vmatmul.f32.gmra.mxu0 %v554
        %v1839 = vpop.f32.mrf.mxu0
        %v1840 = vadd.f32 %v1727, %v1839
        %1841 = vmatmul.f32.gmra.mxu0 %v558
        %v1842 = vpop.f32.mrf.mxu0
        %v1843 = vadd.f32 %v1730, %v1842
        %1844 = vmatmul.f32.gmra.mxu0 %v562
        %v1845 = vpop.f32.mrf.mxu0
        %v1846 = vadd.f32 %v1733, %v1845
        %1847 = vmatmul.f32.gmra.mxu0 %v566
        %v1848 = vpop.f32.mrf.mxu0
        %v1849 = vadd.f32 %v1736, %v1848
        %1850 = vmatmul.f32.gmra.mxu0 %v570
        %v1851 = vpop.f32.mrf.mxu0
        %v1852 = vadd.f32 %v1739, %v1851
        %1853 = vmatmul.f32.gmra.mxu0 %v574
        %v1854 = vpop.f32.mrf.mxu0
        %v1855 = vadd.f32 %v1742, %v1854
        %1856 = vmatmul.f32.gmra.mxu0 %v578
        %v1857 = vpop.f32.mrf.mxu0
        %v1858 = vadd.f32 %v1745, %v1857
        %1859 = vmatmul.f32.gmra.mxu0 %v582
        %v1860 = vpop.f32.mrf.mxu0
        %v1861 = vadd.f32 %v1748, %v1860
        %1862 = vmatmul.f32.gmra.mxu0 %v586
        %v1863 = vpop.f32.mrf.mxu0
        %v1864 = vadd.f32 %v1751, %v1863
        %1865 = vmatmul.f32.gmra.mxu0 %v590
        %v1866 = vpop.f32.mrf.mxu0
        %v1867 = vadd.f32 %v1754, %v1866
        %1868 = vmatmul.f32.gmra.mxu0 %v594
        %v1869 = vpop.f32.mrf.mxu0
        %v1870 = vadd.f32 %v1757, %v1869
        %1871 = vmatmul.f32.gmra.mxu0 %v598
        %v1872 = vpop.f32.mrf.mxu0
        %v1873 = vadd.f32 %v1760, %v1872
        %1874 = vmatmul.f32.gmra.mxu0 %v602
        %v1875 = vpop.f32.mrf.mxu0
        %v1876 = vadd.f32 %v1763, %v1875
        %1877 = vmatmul.f32.gmra.mxu0 %v606
        %v1878 = vpop.f32.mrf.mxu0
        %v1879 = vadd.f32 %v1766, %v1878
        %1880 = vmatmul.f32.gmra.mxu0 %v610
        %v1881 = vpop.f32.mrf.mxu0
        %v1882 = vadd.f32 %v1769, %v1881
        %1883 = vmatmul.f32.gmra.mxu0 %v614
        %v1884 = vpop.f32.mrf.mxu0
        %v1885 = vadd.f32 %v1772, %v1884
        %1886 = vmatmul.f32.gmra.mxu0 %v618
        %v1887 = vpop.f32.mrf.mxu0
        %v1888 = vadd.f32 %v1775, %v1887
        %1889 = vmatmul.f32.gmra.mxu0 %v622
        %v1890 = vpop.f32.mrf.mxu0
        %v1891 = vadd.f32 %v1778, %v1890
        %1892 = vmatmul.f32.gmra.mxu0 %v626
        %v1893 = vpop.f32.mrf.mxu0
        %v1894 = vadd.f32 %v1781, %v1893
        %1895 = vmatmul.f32.gmra.mxu0 %v630
        %v1896 = vpop.f32.mrf.mxu0
        %v1897 = vadd.f32 %v1784, %v1896
        %1898 = vmatmul.f32.gmra.mxu0 %v634
        %v1899 = vpop.f32.mrf.mxu0
        %v1900 = vadd.f32 %v1787, %v1899
        %1901 = vmatmul.f32.gmra.mxu0 %v638
        %v1902 = vpop.f32.mrf.mxu0
        %v1903 = vadd.f32 %v1790, %v1902
        %1904 = vmatmul.f32.gmra.mxu0 %v642
        %v1905 = vpop.f32.mrf.mxu0
        %v1906 = vadd.f32 %v1793, %v1905
        %1907 = vmatmul.f32.gmra.mxu0 %v646
        %v1908 = vpop.f32.mrf.mxu0
        %v1909 = vadd.f32 %v1796, %v1908
        %1910 = vmatmul.f32.gmra.mxu0 %v650
        %v1911 = vpop.f32.mrf.mxu0
        %v1912 = vadd.f32 %v1799, %v1911
        %1913 = vmatmul.f32.gmra.mxu0 %v654
        %v1914 = vpop.f32.mrf.mxu0
        %v1915 = vadd.f32 %v1802, %v1914
        %1916 = vdwg.mxu0
        %1917 = vmatpush.msra.mxu0 %v458
        %1918 = vmatpush.msra.mxu0 %v454
        %1919 = vmatpush.msra.mxu0 %v450
        %1920 = vmatpush.msra.mxu0 %v446
        %1921 = vmatpush.msra.mxu0 %v442
        %1922 = vmatpush.msra.mxu0 %v438
        %1923 = vmatpush.msra.mxu0 %v434
        %1924 = vmatpush.msra.mxu0 %v430
        %1925 = vmatpush.msra.mxu0 %v426
        %1926 = vmatpush.msra.mxu0 %v422
        %1927 = vmatpush.msra.mxu0 %v418
        %1928 = vmatpush.msra.mxu0 %v414
        %1929 = vmatpush.msra.mxu0 %v410
        %1930 = vmatpush.msra.mxu0 %v406
        %1931 = vmatpush.msra.mxu0 %v402
        %1932 = vmatpush.msra.mxu0 %v398
        %1933 = vmatmul.f32.gmra.mxu0 %v531
        %v1934 = vpop.f32.mrf.mxu0
        %v1935 = vadd.f32 %v1822, %v1934
        %1936 = vmatmul.f32.gmra.mxu0 %v535
        %v1937 = vpop.f32.mrf.mxu0
        %v1938 = vadd.f32 %v1825, %v1937
        %1939 = vmatmul.f32.gmra.mxu0 %v539
        %v1940 = vpop.f32.mrf.mxu0
        %v1941 = vadd.f32 %v1828, %v1940
        %1942 = vmatmul.f32.gmra.mxu0 %v543
        %v1943 = vpop.f32.mrf.mxu0
        %v1944 = vadd.f32 %v1831, %v1943
        %1945 = vmatmul.f32.gmra.mxu0 %v547
        %v1946 = vpop.f32.mrf.mxu0
        %v1947 = vadd.f32 %v1834, %v1946
        %1948 = vmatmul.f32.gmra.mxu0 %v551
        %v1949 = vpop.f32.mrf.mxu0
        %v1950 = vadd.f32 %v1837, %v1949
        %1951 = vmatmul.f32.gmra.mxu0 %v555
        %v1952 = vpop.f32.mrf.mxu0
        %v1953 = vadd.f32 %v1840, %v1952
        %1954 = vmatmul.f32.gmra.mxu0 %v559
        %v1955 = vpop.f32.mrf.mxu0
        %v1956 = vadd.f32 %v1843, %v1955
        %1957 = vmatmul.f32.gmra.mxu0 %v563
        %v1958 = vpop.f32.mrf.mxu0
        %v1959 = vadd.f32 %v1846, %v1958
        %1960 = vmatmul.f32.gmra.mxu0 %v567
        %v1961 = vpop.f32.mrf.mxu0
        %v1962 = vadd.f32 %v1849, %v1961
        %1963 = vmatmul.f32.gmra.mxu0 %v571
        %v1964 = vpop.f32.mrf.mxu0
        %v1965 = vadd.f32 %v1852, %v1964
        %1966 = vmatmul.f32.gmra.mxu0 %v575
        %v1967 = vpop.f32.mrf.mxu0
        %v1968 = vadd.f32 %v1855, %v1967
        %1969 = vmatmul.f32.gmra.mxu0 %v579
        %v1970 = vpop.f32.mrf.mxu0
        %v1971 = vadd.f32 %v1858, %v1970
        %1972 = vmatmul.f32.gmra.mxu0 %v583
        %v1973 = vpop.f32.mrf.mxu0
        %v1974 = vadd.f32 %v1861, %v1973
        %1975 = vmatmul.f32.gmra.mxu0 %v587
        %v1976 = vpop.f32.mrf.mxu0
        %v1977 = vadd.f32 %v1864, %v1976
        %1978 = vmatmul.f32.gmra.mxu0 %v591
        %v1979 = vpop.f32.mrf.mxu0
        %v1980 = vadd.f32 %v1867, %v1979
        %1981 = vmatmul.f32.gmra.mxu0 %v595
        %v1982 = vpop.f32.mrf.mxu0
        %v1983 = vadd.f32 %v1870, %v1982
        %1984 = vmatmul.f32.gmra.mxu0 %v599
        %v1985 = vpop.f32.mrf.mxu0
        %v1986 = vadd.f32 %v1873, %v1985
        %1987 = vmatmul.f32.gmra.mxu0 %v603
        %v1988 = vpop.f32.mrf.mxu0
        %v1989 = vadd.f32 %v1876, %v1988
        %1990 = vmatmul.f32.gmra.mxu0 %v607
        %v1991 = vpop.f32.mrf.mxu0
        %v1992 = vadd.f32 %v1879, %v1991
        %1993 = vmatmul.f32.gmra.mxu0 %v611
        %v1994 = vpop.f32.mrf.mxu0
        %v1995 = vadd.f32 %v1882, %v1994
        %1996 = vmatmul.f32.gmra.mxu0 %v615
        %v1997 = vpop.f32.mrf.mxu0
        %v1998 = vadd.f32 %v1885, %v1997
        %1999 = vmatmul.f32.gmra.mxu0 %v619
        %v2000 = vpop.f32.mrf.mxu0
        %v2001 = vadd.f32 %v1888, %v2000
        %2002 = vmatmul.f32.gmra.mxu0 %v623
        %v2003 = vpop.f32.mrf.mxu0
        %v2004 = vadd.f32 %v1891, %v2003
        %2005 = vmatmul.f32.gmra.mxu0 %v627
        %v2006 = vpop.f32.mrf.mxu0
        %v2007 = vadd.f32 %v1894, %v2006
        %2008 = vmatmul.f32.gmra.mxu0 %v631
        %v2009 = vpop.f32.mrf.mxu0
        %v2010 = vadd.f32 %v1897, %v2009
        %2011 = vmatmul.f32.gmra.mxu0 %v635
        %v2012 = vpop.f32.mrf.mxu0
        %v2013 = vadd.f32 %v1900, %v2012
        %2014 = vmatmul.f32.gmra.mxu0 %v639
        %v2015 = vpop.f32.mrf.mxu0
        %v2016 = vadd.f32 %v1903, %v2015
        %2017 = vmatmul.f32.gmra.mxu0 %v643
        %v2018 = vpop.f32.mrf.mxu0
        %v2019 = vadd.f32 %v1906, %v2018
        %2020 = vmatmul.f32.gmra.mxu0 %v647
        %v2021 = vpop.f32.mrf.mxu0
        %v2022 = vadd.f32 %v1909, %v2021
        %2023 = vmatmul.f32.gmra.mxu0 %v651
        %v2024 = vpop.f32.mrf.mxu0
        %v2025 = vadd.f32 %v1912, %v2024
        %2026 = vmatmul.f32.gmra.mxu0 %v655
        %v2027 = vpop.f32.mrf.mxu0
        %v2028 = vadd.f32 %v1915, %v2027
        %2029 = vdwg.mxu0
        %2030 = vmatpush.msra.mxu0 %v522
        %2031 = vmatpush.msra.mxu0 %v518
        %2032 = vmatpush.msra.mxu0 %v514
        %2033 = vmatpush.msra.mxu0 %v510
        %2034 = vmatpush.msra.mxu0 %v506
        %2035 = vmatpush.msra.mxu0 %v502
        %2036 = vmatpush.msra.mxu0 %v498
        %2037 = vmatpush.msra.mxu0 %v494
        %2038 = vmatpush.msra.mxu0 %v490
        %2039 = vmatpush.msra.mxu0 %v486
        %2040 = vmatpush.msra.mxu0 %v482
        %2041 = vmatpush.msra.mxu0 %v478
        %2042 = vmatpush.msra.mxu0 %v474
        %2043 = vmatpush.msra.mxu0 %v470
        %2044 = vmatpush.msra.mxu0 %v466
        %2045 = vmatpush.msra.mxu0 %v462
        %2046 = vmatmul.f32.gmra.mxu0 %v532
        %v2047 = vpop.f32.mrf.mxu0
        %v2048 = vadd.f32 %v1935, %v2047
        %2049 = vmatmul.f32.gmra.mxu0 %v536
        %v2050 = vpop.f32.mrf.mxu0
        %v2051 = vadd.f32 %v1938, %v2050
        %2052 = vmatmul.f32.gmra.mxu0 %v540
        %v2053 = vpop.f32.mrf.mxu0
        %v2054 = vadd.f32 %v1941, %v2053
        %2055 = vmatmul.f32.gmra.mxu0 %v544
        %v2056 = vpop.f32.mrf.mxu0
        %v2057 = vadd.f32 %v1944, %v2056
        %2058 = vmatmul.f32.gmra.mxu0 %v548
        %v2059 = vpop.f32.mrf.mxu0
        %v2060 = vadd.f32 %v1947, %v2059
        %2061 = vmatmul.f32.gmra.mxu0 %v552
        %v2062 = vpop.f32.mrf.mxu0
        %v2063 = vadd.f32 %v1950, %v2062
        %2064 = vmatmul.f32.gmra.mxu0 %v556
        %v2065 = vpop.f32.mrf.mxu0
        %v2066 = vadd.f32 %v1953, %v2065
        %2067 = vmatmul.f32.gmra.mxu0 %v560
        %v2068 = vpop.f32.mrf.mxu0
        %v2069 = vadd.f32 %v1956, %v2068
        %2070 = vmatmul.f32.gmra.mxu0 %v564
        %v2071 = vpop.f32.mrf.mxu0
        %v2072 = vadd.f32 %v1959, %v2071
        %2073 = vmatmul.f32.gmra.mxu0 %v568
        %v2074 = vpop.f32.mrf.mxu0
        %v2075 = vadd.f32 %v1962, %v2074
        %2076 = vmatmul.f32.gmra.mxu0 %v572
        %v2077 = vpop.f32.mrf.mxu0
        %v2078 = vadd.f32 %v1965, %v2077
        %2079 = vmatmul.f32.gmra.mxu0 %v576
        %v2080 = vpop.f32.mrf.mxu0
        %v2081 = vadd.f32 %v1968, %v2080
        %2082 = vmatmul.f32.gmra.mxu0 %v580
        %v2083 = vpop.f32.mrf.mxu0
        %v2084 = vadd.f32 %v1971, %v2083
        %2085 = vmatmul.f32.gmra.mxu0 %v584
        %v2086 = vpop.f32.mrf.mxu0
        %v2087 = vadd.f32 %v1974, %v2086
        %2088 = vmatmul.f32.gmra.mxu0 %v588
        %v2089 = vpop.f32.mrf.mxu0
        %v2090 = vadd.f32 %v1977, %v2089
        %2091 = vmatmul.f32.gmra.mxu0 %v592
        %v2092 = vpop.f32.mrf.mxu0
        %v2093 = vadd.f32 %v1980, %v2092
        %2094 = vmatmul.f32.gmra.mxu0 %v596
        %v2095 = vpop.f32.mrf.mxu0
        %v2096 = vadd.f32 %v1983, %v2095
        %2097 = vmatmul.f32.gmra.mxu0 %v600
        %v2098 = vpop.f32.mrf.mxu0
        %v2099 = vadd.f32 %v1986, %v2098
        %2100 = vmatmul.f32.gmra.mxu0 %v604
        %v2101 = vpop.f32.mrf.mxu0
        %v2102 = vadd.f32 %v1989, %v2101
        %2103 = vmatmul.f32.gmra.mxu0 %v608
        %v2104 = vpop.f32.mrf.mxu0
        %v2105 = vadd.f32 %v1992, %v2104
        %2106 = vmatmul.f32.gmra.mxu0 %v612
        %v2107 = vpop.f32.mrf.mxu0
        %v2108 = vadd.f32 %v1995, %v2107
        %2109 = vmatmul.f32.gmra.mxu0 %v616
        %v2110 = vpop.f32.mrf.mxu0
        %v2111 = vadd.f32 %v1998, %v2110
        %2112 = vmatmul.f32.gmra.mxu0 %v620
        %v2113 = vpop.f32.mrf.mxu0
        %v2114 = vadd.f32 %v2001, %v2113
        %2115 = vmatmul.f32.gmra.mxu0 %v624
        %v2116 = vpop.f32.mrf.mxu0
        %v2117 = vadd.f32 %v2004, %v2116
        %2118 = vmatmul.f32.gmra.mxu0 %v628
        %v2119 = vpop.f32.mrf.mxu0
        %v2120 = vadd.f32 %v2007, %v2119
        %2121 = vmatmul.f32.gmra.mxu0 %v632
        %v2122 = vpop.f32.mrf.mxu0
        %v2123 = vadd.f32 %v2010, %v2122
        %2124 = vmatmul.f32.gmra.mxu0 %v636
        %v2125 = vpop.f32.mrf.mxu0
        %v2126 = vadd.f32 %v2013, %v2125
        %2127 = vmatmul.f32.gmra.mxu0 %v640
        %v2128 = vpop.f32.mrf.mxu0
        %v2129 = vadd.f32 %v2016, %v2128
        %2130 = vmatmul.f32.gmra.mxu0 %v644
        %v2131 = vpop.f32.mrf.mxu0
        %v2132 = vadd.f32 %v2019, %v2131
        %2133 = vmatmul.f32.gmra.mxu0 %v648
        %v2134 = vpop.f32.mrf.mxu0
        %v2135 = vadd.f32 %v2022, %v2134
        %2136 = vmatmul.f32.gmra.mxu0 %v652
        %v2137 = vpop.f32.mrf.mxu0
        %v2138 = vadd.f32 %v2025, %v2137
        %2139 = vmatmul.f32.gmra.mxu0 %v656
        %v2140 = vpop.f32.mrf.mxu0
        %v2141 = vadd.f32 %v2028, %v2140
        %2142 = vdwg.mxu0
        %2143 = vmatpush.msra.mxu0 %v331
        %2144 = vmatpush.msra.mxu0 %v327
        %2145 = vmatpush.msra.mxu0 %v323
        %2146 = vmatpush.msra.mxu0 %v319
        %2147 = vmatpush.msra.mxu0 %v315
        %2148 = vmatpush.msra.mxu0 %v311
        %2149 = vmatpush.msra.mxu0 %v307
        %2150 = vmatpush.msra.mxu0 %v303
        %2151 = vmatpush.msra.mxu0 %v299
        %2152 = vmatpush.msra.mxu0 %v295
        %2153 = vmatpush.msra.mxu0 %v291
        %2154 = vmatpush.msra.mxu0 %v287
        %2155 = vmatpush.msra.mxu0 %v283
        %2156 = vmatpush.msra.mxu0 %v279
        %2157 = vmatpush.msra.mxu0 %v275
        %2158 = vmatpush.msra.mxu0 %v271
        %2159 = vmatmul.f32.gmra.mxu0 %v529
        %v2160 = vpop.f32.mrf.mxu0
        %v2161 = vadd.f32 0.0, %v2160
        %2162 = vmatmul.f32.gmra.mxu0 %v533
        %v2163 = vpop.f32.mrf.mxu0
        %v2164 = vadd.f32 0.0, %v2163
        %2165 = vmatmul.f32.gmra.mxu0 %v537
        %v2166 = vpop.f32.mrf.mxu0
        %v2167 = vadd.f32 0.0, %v2166
        %2168 = vmatmul.f32.gmra.mxu0 %v541
        %v2169 = vpop.f32.mrf.mxu0
        %v2170 = vadd.f32 0.0, %v2169
        %2171 = vmatmul.f32.gmra.mxu0 %v545
        %v2172 = vpop.f32.mrf.mxu0
        %v2173 = vadd.f32 0.0, %v2172
        %2174 = vmatmul.f32.gmra.mxu0 %v549
        %v2175 = vpop.f32.mrf.mxu0
        %v2176 = vadd.f32 0.0, %v2175
        %2177 = vmatmul.f32.gmra.mxu0 %v553
        %v2178 = vpop.f32.mrf.mxu0
        %v2179 = vadd.f32 0.0, %v2178
        %2180 = vmatmul.f32.gmra.mxu0 %v557
        %v2181 = vpop.f32.mrf.mxu0
        %v2182 = vadd.f32 0.0, %v2181
        %2183 = vmatmul.f32.gmra.mxu0 %v561
        %v2184 = vpop.f32.mrf.mxu0
        %v2185 = vadd.f32 0.0, %v2184
        %2186 = vmatmul.f32.gmra.mxu0 %v565
        %v2187 = vpop.f32.mrf.mxu0
        %v2188 = vadd.f32 0.0, %v2187
        %2189 = vmatmul.f32.gmra.mxu0 %v569
        %v2190 = vpop.f32.mrf.mxu0
        %v2191 = vadd.f32 0.0, %v2190
        %2192 = vmatmul.f32.gmra.mxu0 %v573
        %v2193 = vpop.f32.mrf.mxu0
        %v2194 = vadd.f32 0.0, %v2193
        %2195 = vmatmul.f32.gmra.mxu0 %v577
        %v2196 = vpop.f32.mrf.mxu0
        %v2197 = vadd.f32 0.0, %v2196
        %2198 = vmatmul.f32.gmra.mxu0 %v581
        %v2199 = vpop.f32.mrf.mxu0
        %v2200 = vadd.f32 0.0, %v2199
        %2201 = vmatmul.f32.gmra.mxu0 %v585
        %v2202 = vpop.f32.mrf.mxu0
        %v2203 = vadd.f32 0.0, %v2202
        %2204 = vmatmul.f32.gmra.mxu0 %v589
        %v2205 = vpop.f32.mrf.mxu0
        %v2206 = vadd.f32 0.0, %v2205
        %2207 = vmatmul.f32.gmra.mxu0 %v593
        %v2208 = vpop.f32.mrf.mxu0
        %v2209 = vadd.f32 0.0, %v2208
        %2210 = vmatmul.f32.gmra.mxu0 %v597
        %v2211 = vpop.f32.mrf.mxu0
        %v2212 = vadd.f32 0.0, %v2211
        %2213 = vmatmul.f32.gmra.mxu0 %v601
        %v2214 = vpop.f32.mrf.mxu0
        %v2215 = vadd.f32 0.0, %v2214
        %2216 = vmatmul.f32.gmra.mxu0 %v605
        %v2217 = vpop.f32.mrf.mxu0
        %v2218 = vadd.f32 0.0, %v2217
        %2219 = vmatmul.f32.gmra.mxu0 %v609
        %v2220 = vpop.f32.mrf.mxu0
        %v2221 = vadd.f32 0.0, %v2220
        %2222 = vmatmul.f32.gmra.mxu0 %v613
        %v2223 = vpop.f32.mrf.mxu0
        %v2224 = vadd.f32 0.0, %v2223
        %2225 = vmatmul.f32.gmra.mxu0 %v617
        %v2226 = vpop.f32.mrf.mxu0
        %v2227 = vadd.f32 0.0, %v2226
        %2228 = vmatmul.f32.gmra.mxu0 %v621
        %v2229 = vpop.f32.mrf.mxu0
        %v2230 = vadd.f32 0.0, %v2229
        %2231 = vmatmul.f32.gmra.mxu0 %v625
        %v2232 = vpop.f32.mrf.mxu0
        %v2233 = vadd.f32 0.0, %v2232
        %2234 = vmatmul.f32.gmra.mxu0 %v629
        %v2235 = vpop.f32.mrf.mxu0
        %v2236 = vadd.f32 0.0, %v2235
        %2237 = vmatmul.f32.gmra.mxu0 %v633
        %v2238 = vpop.f32.mrf.mxu0
        %v2239 = vadd.f32 0.0, %v2238
        %2240 = vmatmul.f32.gmra.mxu0 %v637
        %v2241 = vpop.f32.mrf.mxu0
        %v2242 = vadd.f32 0.0, %v2241
        %2243 = vmatmul.f32.gmra.mxu0 %v641
        %v2244 = vpop.f32.mrf.mxu0
        %v2245 = vadd.f32 0.0, %v2244
        %2246 = vmatmul.f32.gmra.mxu0 %v645
        %v2247 = vpop.f32.mrf.mxu0
        %v2248 = vadd.f32 0.0, %v2247
        %2249 = vmatmul.f32.gmra.mxu0 %v649
        %v2250 = vpop.f32.mrf.mxu0
        %v2251 = vadd.f32 0.0, %v2250
        %2252 = vmatmul.f32.gmra.mxu0 %v653
        %v2253 = vpop.f32.mrf.mxu0
        %v2254 = vadd.f32 0.0, %v2253
        %2255 = vdwg.mxu0
        %2256 = vmatpush.msra.mxu0 %v395
        %2257 = vmatpush.msra.mxu0 %v391
        %2258 = vmatpush.msra.mxu0 %v387
        %2259 = vmatpush.msra.mxu0 %v383
        %2260 = vmatpush.msra.mxu0 %v379
        %2261 = vmatpush.msra.mxu0 %v375
        %2262 = vmatpush.msra.mxu0 %v371
        %2263 = vmatpush.msra.mxu0 %v367
        %2264 = vmatpush.msra.mxu0 %v363
        %2265 = vmatpush.msra.mxu0 %v359
        %2266 = vmatpush.msra.mxu0 %v355
        %2267 = vmatpush.msra.mxu0 %v351
        %2268 = vmatpush.msra.mxu0 %v347
        %2269 = vmatpush.msra.mxu0 %v343
        %2270 = vmatpush.msra.mxu0 %v339
        %2271 = vmatpush.msra.mxu0 %v335
        %2272 = vmatmul.f32.gmra.mxu0 %v530
        %v2273 = vpop.f32.mrf.mxu0
        %v2274 = vadd.f32 %v2161, %v2273
        %2275 = vmatmul.f32.gmra.mxu0 %v534
        %v2276 = vpop.f32.mrf.mxu0
        %v2277 = vadd.f32 %v2164, %v2276
        %2278 = vmatmul.f32.gmra.mxu0 %v538
        %v2279 = vpop.f32.mrf.mxu0
        %v2280 = vadd.f32 %v2167, %v2279
        %2281 = vmatmul.f32.gmra.mxu0 %v542
        %v2282 = vpop.f32.mrf.mxu0
        %v2283 = vadd.f32 %v2170, %v2282
        %2284 = vmatmul.f32.gmra.mxu0 %v546
        %v2285 = vpop.f32.mrf.mxu0
        %v2286 = vadd.f32 %v2173, %v2285
        %2287 = vmatmul.f32.gmra.mxu0 %v550
        %v2288 = vpop.f32.mrf.mxu0
        %v2289 = vadd.f32 %v2176, %v2288
        %2290 = vmatmul.f32.gmra.mxu0 %v554
        %v2291 = vpop.f32.mrf.mxu0
        %v2292 = vadd.f32 %v2179, %v2291
        %2293 = vmatmul.f32.gmra.mxu0 %v558
        %v2294 = vpop.f32.mrf.mxu0
        %v2295 = vadd.f32 %v2182, %v2294
        %2296 = vmatmul.f32.gmra.mxu0 %v562
        %v2297 = vpop.f32.mrf.mxu0
        %v2298 = vadd.f32 %v2185, %v2297
        %2299 = vmatmul.f32.gmra.mxu0 %v566
        %v2300 = vpop.f32.mrf.mxu0
        %v2301 = vadd.f32 %v2188, %v2300
        %2302 = vmatmul.f32.gmra.mxu0 %v570
        %v2303 = vpop.f32.mrf.mxu0
        %v2304 = vadd.f32 %v2191, %v2303
        %2305 = vmatmul.f32.gmra.mxu0 %v574
        %v2306 = vpop.f32.mrf.mxu0
        %v2307 = vadd.f32 %v2194, %v2306
        %2308 = vmatmul.f32.gmra.mxu0 %v578
        %v2309 = vpop.f32.mrf.mxu0
        %v2310 = vadd.f32 %v2197, %v2309
        %2311 = vmatmul.f32.gmra.mxu0 %v582
        %v2312 = vpop.f32.mrf.mxu0
        %v2313 = vadd.f32 %v2200, %v2312
        %2314 = vmatmul.f32.gmra.mxu0 %v586
        %v2315 = vpop.f32.mrf.mxu0
        %v2316 = vadd.f32 %v2203, %v2315
        %2317 = vmatmul.f32.gmra.mxu0 %v590
        %v2318 = vpop.f32.mrf.mxu0
        %v2319 = vadd.f32 %v2206, %v2318
        %2320 = vmatmul.f32.gmra.mxu0 %v594
        %v2321 = vpop.f32.mrf.mxu0
        %v2322 = vadd.f32 %v2209, %v2321
        %2323 = vmatmul.f32.gmra.mxu0 %v598
        %v2324 = vpop.f32.mrf.mxu0
        %v2325 = vadd.f32 %v2212, %v2324
        %2326 = vmatmul.f32.gmra.mxu0 %v602
        %v2327 = vpop.f32.mrf.mxu0
        %v2328 = vadd.f32 %v2215, %v2327
        %2329 = vmatmul.f32.gmra.mxu0 %v606
        %v2330 = vpop.f32.mrf.mxu0
        %v2331 = vadd.f32 %v2218, %v2330
        %2332 = vmatmul.f32.gmra.mxu0 %v610
        %v2333 = vpop.f32.mrf.mxu0
        %v2334 = vadd.f32 %v2221, %v2333
        %2335 = vmatmul.f32.gmra.mxu0 %v614
        %v2336 = vpop.f32.mrf.mxu0
        %v2337 = vadd.f32 %v2224, %v2336
        %2338 = vmatmul.f32.gmra.mxu0 %v618
        %v2339 = vpop.f32.mrf.mxu0
        %v2340 = vadd.f32 %v2227, %v2339
        %2341 = vmatmul.f32.gmra.mxu0 %v622
        %v2342 = vpop.f32.mrf.mxu0
        %v2343 = vadd.f32 %v2230, %v2342
        %2344 = vmatmul.f32.gmra.mxu0 %v626
        %v2345 = vpop.f32.mrf.mxu0
        %v2346 = vadd.f32 %v2233, %v2345
        %2347 = vmatmul.f32.gmra.mxu0 %v630
        %v2348 = vpop.f32.mrf.mxu0
        %v2349 = vadd.f32 %v2236, %v2348
        %2350 = vmatmul.f32.gmra.mxu0 %v634
        %v2351 = vpop.f32.mrf.mxu0
        %v2352 = vadd.f32 %v2239, %v2351
        %2353 = vmatmul.f32.gmra.mxu0 %v638
        %v2354 = vpop.f32.mrf.mxu0
        %v2355 = vadd.f32 %v2242, %v2354
        %2356 = vmatmul.f32.gmra.mxu0 %v642
        %v2357 = vpop.f32.mrf.mxu0
        %v2358 = vadd.f32 %v2245, %v2357
        %2359 = vmatmul.f32.gmra.mxu0 %v646
        %v2360 = vpop.f32.mrf.mxu0
        %v2361 = vadd.f32 %v2248, %v2360
        %2362 = vmatmul.f32.gmra.mxu0 %v650
        %v2363 = vpop.f32.mrf.mxu0
        %v2364 = vadd.f32 %v2251, %v2363
        %2365 = vmatmul.f32.gmra.mxu0 %v654
        %v2366 = vpop.f32.mrf.mxu0
        %v2367 = vadd.f32 %v2254, %v2366
        %2368 = vdwg.mxu0
        %2369 = vmatpush.msra.mxu0 %v459
        %2370 = vmatpush.msra.mxu0 %v455
        %2371 = vmatpush.msra.mxu0 %v451
        %2372 = vmatpush.msra.mxu0 %v447
        %2373 = vmatpush.msra.mxu0 %v443
        %2374 = vmatpush.msra.mxu0 %v439
        %2375 = vmatpush.msra.mxu0 %v435
        %2376 = vmatpush.msra.mxu0 %v431
        %2377 = vmatpush.msra.mxu0 %v427
        %2378 = vmatpush.msra.mxu0 %v423
        %2379 = vmatpush.msra.mxu0 %v419
        %2380 = vmatpush.msra.mxu0 %v415
        %2381 = vmatpush.msra.mxu0 %v411
        %2382 = vmatpush.msra.mxu0 %v407
        %2383 = vmatpush.msra.mxu0 %v403
        %2384 = vmatpush.msra.mxu0 %v399
        %2385 = vmatmul.f32.gmra.mxu0 %v531
        %v2386 = vpop.f32.mrf.mxu0
        %v2387 = vadd.f32 %v2274, %v2386
        %2388 = vmatmul.f32.gmra.mxu0 %v535
        %v2389 = vpop.f32.mrf.mxu0
        %v2390 = vadd.f32 %v2277, %v2389
        %2391 = vmatmul.f32.gmra.mxu0 %v539
        %v2392 = vpop.f32.mrf.mxu0
        %v2393 = vadd.f32 %v2280, %v2392
        %2394 = vmatmul.f32.gmra.mxu0 %v543
        %v2395 = vpop.f32.mrf.mxu0
        %v2396 = vadd.f32 %v2283, %v2395
        %2397 = vmatmul.f32.gmra.mxu0 %v547
        %v2398 = vpop.f32.mrf.mxu0
        %v2399 = vadd.f32 %v2286, %v2398
        %2400 = vmatmul.f32.gmra.mxu0 %v551
        %v2401 = vpop.f32.mrf.mxu0
        %v2402 = vadd.f32 %v2289, %v2401
        %2403 = vmatmul.f32.gmra.mxu0 %v555
        %v2404 = vpop.f32.mrf.mxu0
        %v2405 = vadd.f32 %v2292, %v2404
        %2406 = vmatmul.f32.gmra.mxu0 %v559
        %v2407 = vpop.f32.mrf.mxu0
        %v2408 = vadd.f32 %v2295, %v2407
        %2409 = vmatmul.f32.gmra.mxu0 %v563
        %v2410 = vpop.f32.mrf.mxu0
        %v2411 = vadd.f32 %v2298, %v2410
        %2412 = vmatmul.f32.gmra.mxu0 %v567
        %v2413 = vpop.f32.mrf.mxu0
        %v2414 = vadd.f32 %v2301, %v2413
        %2415 = vmatmul.f32.gmra.mxu0 %v571
        %v2416 = vpop.f32.mrf.mxu0
        %v2417 = vadd.f32 %v2304, %v2416
        %2418 = vmatmul.f32.gmra.mxu0 %v575
        %v2419 = vpop.f32.mrf.mxu0
        %v2420 = vadd.f32 %v2307, %v2419
        %2421 = vmatmul.f32.gmra.mxu0 %v579
        %v2422 = vpop.f32.mrf.mxu0
        %v2423 = vadd.f32 %v2310, %v2422
        %2424 = vmatmul.f32.gmra.mxu0 %v583
        %v2425 = vpop.f32.mrf.mxu0
        %v2426 = vadd.f32 %v2313, %v2425
        %2427 = vmatmul.f32.gmra.mxu0 %v587
        %v2428 = vpop.f32.mrf.mxu0
        %v2429 = vadd.f32 %v2316, %v2428
        %2430 = vmatmul.f32.gmra.mxu0 %v591
        %v2431 = vpop.f32.mrf.mxu0
        %v2432 = vadd.f32 %v2319, %v2431
        %2433 = vmatmul.f32.gmra.mxu0 %v595
        %v2434 = vpop.f32.mrf.mxu0
        %v2435 = vadd.f32 %v2322, %v2434
        %2436 = vmatmul.f32.gmra.mxu0 %v599
        %v2437 = vpop.f32.mrf.mxu0
        %v2438 = vadd.f32 %v2325, %v2437
        %2439 = vmatmul.f32.gmra.mxu0 %v603
        %v2440 = vpop.f32.mrf.mxu0
        %v2441 = vadd.f32 %v2328, %v2440
        %2442 = vmatmul.f32.gmra.mxu0 %v607
        %v2443 = vpop.f32.mrf.mxu0
        %v2444 = vadd.f32 %v2331, %v2443
        %2445 = vmatmul.f32.gmra.mxu0 %v611
        %v2446 = vpop.f32.mrf.mxu0
        %v2447 = vadd.f32 %v2334, %v2446
        %2448 = vmatmul.f32.gmra.mxu0 %v615
        %v2449 = vpop.f32.mrf.mxu0
        %v2450 = vadd.f32 %v2337, %v2449
        %2451 = vmatmul.f32.gmra.mxu0 %v619
        %v2452 = vpop.f32.mrf.mxu0
        %v2453 = vadd.f32 %v2340, %v2452
        %2454 = vmatmul.f32.gmra.mxu0 %v623
        %v2455 = vpop.f32.mrf.mxu0
        %v2456 = vadd.f32 %v2343, %v2455
        %2457 = vmatmul.f32.gmra.mxu0 %v627
        %v2458 = vpop.f32.mrf.mxu0
        %v2459 = vadd.f32 %v2346, %v2458
        %2460 = vmatmul.f32.gmra.mxu0 %v631
        %v2461 = vpop.f32.mrf.mxu0
        %v2462 = vadd.f32 %v2349, %v2461
        %2463 = vmatmul.f32.gmra.mxu0 %v635
        %v2464 = vpop.f32.mrf.mxu0
        %v2465 = vadd.f32 %v2352, %v2464
        %2466 = vmatmul.f32.gmra.mxu0 %v639
        %v2467 = vpop.f32.mrf.mxu0
        %v2468 = vadd.f32 %v2355, %v2467
        %2469 = vmatmul.f32.gmra.mxu0 %v643
        %v2470 = vpop.f32.mrf.mxu0
        %v2471 = vadd.f32 %v2358, %v2470
        %2472 = vmatmul.f32.gmra.mxu0 %v647
        %v2473 = vpop.f32.mrf.mxu0
        %v2474 = vadd.f32 %v2361, %v2473
        %2475 = vmatmul.f32.gmra.mxu0 %v651
        %v2476 = vpop.f32.mrf.mxu0
        %v2477 = vadd.f32 %v2364, %v2476
        %2478 = vmatmul.f32.gmra.mxu0 %v655
        %v2479 = vpop.f32.mrf.mxu0
        %v2480 = vadd.f32 %v2367, %v2479
        %2481 = vdwg.mxu0
        %2482 = vmatpush.msra.mxu0 %v523
        %2483 = vmatpush.msra.mxu0 %v519
        %2484 = vmatpush.msra.mxu0 %v515
        %2485 = vmatpush.msra.mxu0 %v511
        %2486 = vmatpush.msra.mxu0 %v507
        %2487 = vmatpush.msra.mxu0 %v503
        %2488 = vmatpush.msra.mxu0 %v499
        %2489 = vmatpush.msra.mxu0 %v495
        %2490 = vmatpush.msra.mxu0 %v491
        %2491 = vmatpush.msra.mxu0 %v487
        %2492 = vmatpush.msra.mxu0 %v483
        %2493 = vmatpush.msra.mxu0 %v479
        %2494 = vmatpush.msra.mxu0 %v475
        %2495 = vmatpush.msra.mxu0 %v471
        %2496 = vmatpush.msra.mxu0 %v467
        %2497 = vmatpush.msra.mxu0 %v463
        %2498 = vmatmul.f32.gmra.mxu0 %v532
        %v2499 = vpop.f32.mrf.mxu0
        %v2500 = vadd.f32 %v2387, %v2499
        %2501 = vmatmul.f32.gmra.mxu0 %v536
        %v2502 = vpop.f32.mrf.mxu0
        %v2503 = vadd.f32 %v2390, %v2502
        %2504 = vmatmul.f32.gmra.mxu0 %v540
        %v2505 = vpop.f32.mrf.mxu0
        %v2506 = vadd.f32 %v2393, %v2505
        %2507 = vmatmul.f32.gmra.mxu0 %v544
        %v2508 = vpop.f32.mrf.mxu0
        %v2509 = vadd.f32 %v2396, %v2508
        %2510 = vmatmul.f32.gmra.mxu0 %v548
        %v2511 = vpop.f32.mrf.mxu0
        %v2512 = vadd.f32 %v2399, %v2511
        %2513 = vmatmul.f32.gmra.mxu0 %v552
        %v2514 = vpop.f32.mrf.mxu0
        %v2515 = vadd.f32 %v2402, %v2514
        %2516 = vmatmul.f32.gmra.mxu0 %v556
        %v2517 = vpop.f32.mrf.mxu0
        %v2518 = vadd.f32 %v2405, %v2517
        %2519 = vmatmul.f32.gmra.mxu0 %v560
        %v2520 = vpop.f32.mrf.mxu0
        %v2521 = vadd.f32 %v2408, %v2520
        %2522 = vmatmul.f32.gmra.mxu0 %v564
        %v2523 = vpop.f32.mrf.mxu0
        %v2524 = vadd.f32 %v2411, %v2523
        %2525 = vmatmul.f32.gmra.mxu0 %v568
        %v2526 = vpop.f32.mrf.mxu0
        %v2527 = vadd.f32 %v2414, %v2526
        %2528 = vmatmul.f32.gmra.mxu0 %v572
        %v2529 = vpop.f32.mrf.mxu0
        %v2530 = vadd.f32 %v2417, %v2529
        %2531 = vmatmul.f32.gmra.mxu0 %v576
        %v2532 = vpop.f32.mrf.mxu0
        %v2533 = vadd.f32 %v2420, %v2532
        %2534 = vmatmul.f32.gmra.mxu0 %v580
        %v2535 = vpop.f32.mrf.mxu0
        %v2536 = vadd.f32 %v2423, %v2535
        %2537 = vmatmul.f32.gmra.mxu0 %v584
        %v2538 = vpop.f32.mrf.mxu0
        %v2539 = vadd.f32 %v2426, %v2538
        %2540 = vmatmul.f32.gmra.mxu0 %v588
        %v2541 = vpop.f32.mrf.mxu0
        %v2542 = vadd.f32 %v2429, %v2541
        %2543 = vmatmul.f32.gmra.mxu0 %v592
        %v2544 = vpop.f32.mrf.mxu0
        %v2545 = vadd.f32 %v2432, %v2544
        %2546 = vmatmul.f32.gmra.mxu0 %v596
        %v2547 = vpop.f32.mrf.mxu0
        %v2548 = vadd.f32 %v2435, %v2547
        %2549 = vmatmul.f32.gmra.mxu0 %v600
        %v2550 = vpop.f32.mrf.mxu0
        %v2551 = vadd.f32 %v2438, %v2550
        %2552 = vmatmul.f32.gmra.mxu0 %v604
        %v2553 = vpop.f32.mrf.mxu0
        %v2554 = vadd.f32 %v2441, %v2553
        %2555 = vmatmul.f32.gmra.mxu0 %v608
        %v2556 = vpop.f32.mrf.mxu0
        %v2557 = vadd.f32 %v2444, %v2556
        %2558 = vmatmul.f32.gmra.mxu0 %v612
        %v2559 = vpop.f32.mrf.mxu0
        %v2560 = vadd.f32 %v2447, %v2559
        %2561 = vmatmul.f32.gmra.mxu0 %v616
        %v2562 = vpop.f32.mrf.mxu0
        %v2563 = vadd.f32 %v2450, %v2562
        %2564 = vmatmul.f32.gmra.mxu0 %v620
        %v2565 = vpop.f32.mrf.mxu0
        %v2566 = vadd.f32 %v2453, %v2565
        %2567 = vmatmul.f32.gmra.mxu0 %v624
        %v2568 = vpop.f32.mrf.mxu0
        %v2569 = vadd.f32 %v2456, %v2568
        %2570 = vmatmul.f32.gmra.mxu0 %v628
        %v2571 = vpop.f32.mrf.mxu0
        %v2572 = vadd.f32 %v2459, %v2571
        %2573 = vmatmul.f32.gmra.mxu0 %v632
        %v2574 = vpop.f32.mrf.mxu0
        %v2575 = vadd.f32 %v2462, %v2574
        %2576 = vmatmul.f32.gmra.mxu0 %v636
        %v2577 = vpop.f32.mrf.mxu0
        %v2578 = vadd.f32 %v2465, %v2577
        %2579 = vmatmul.f32.gmra.mxu0 %v640
        %v2580 = vpop.f32.mrf.mxu0
        %v2581 = vadd.f32 %v2468, %v2580
        %2582 = vmatmul.f32.gmra.mxu0 %v644
        %v2583 = vpop.f32.mrf.mxu0
        %v2584 = vadd.f32 %v2471, %v2583
        %2585 = vmatmul.f32.gmra.mxu0 %v648
        %v2586 = vpop.f32.mrf.mxu0
        %v2587 = vadd.f32 %v2474, %v2586
        %2588 = vmatmul.f32.gmra.mxu0 %v652
        %v2589 = vpop.f32.mrf.mxu0
        %v2590 = vadd.f32 %v2477, %v2589
        %2591 = vmatmul.f32.gmra.mxu0 %v656
        %v2592 = vpop.f32.mrf.mxu0
        %v2593 = vadd.f32 %v2480, %v2592
        %2594 = vdwg.mxu0
        %s2595 = sld [smem:[#allocation2 + $0x1]]
        %v2596 = vstv %s2595
        %v2597 = vmul.f32 %v2596, %v1144
        %v2598 = vmul.f32 %v2596, %v1596
        %v2599 = vmul.f32 %v2596, %v2048
        %v2600 = vmul.f32 %v2596, %v2500
        %v2601 = vmul.f32 %v2596, %v1147
        %v2602 = vmul.f32 %v2596, %v1599
        %v2603 = vmul.f32 %v2596, %v2051
        %v2604 = vmul.f32 %v2596, %v2503
        %v2605 = vmul.f32 %v2596, %v1150
        %v2606 = vmul.f32 %v2596, %v1602
        %v2607 = vmul.f32 %v2596, %v2054
        %v2608 = vmul.f32 %v2596, %v2506
        %v2609 = vmul.f32 %v2596, %v1153
        %v2610 = vmul.f32 %v2596, %v1605
        %v2611 = vmul.f32 %v2596, %v2057
        %v2612 = vmul.f32 %v2596, %v2509
        %v2613 = vmul.f32 %v2596, %v1156
        %v2614 = vmul.f32 %v2596, %v1608
        %v2615 = vmul.f32 %v2596, %v2060
        %v2616 = vmul.f32 %v2596, %v2512
        %v2617 = vmul.f32 %v2596, %v1159
        %v2618 = vmul.f32 %v2596, %v1611
        %v2619 = vmul.f32 %v2596, %v2063
        %v2620 = vmul.f32 %v2596, %v2515
        %v2621 = vmul.f32 %v2596, %v1162
        %v2622 = vmul.f32 %v2596, %v1614
        %v2623 = vmul.f32 %v2596, %v2066
        %v2624 = vmul.f32 %v2596, %v2518
        %v2625 = vmul.f32 %v2596, %v1165
        %v2626 = vmul.f32 %v2596, %v1617
        %v2627 = vmul.f32 %v2596, %v2069
        %v2628 = vmul.f32 %v2596, %v2521
        %v2629 = vmul.f32 %v2596, %v1168
        %v2630 = vmul.f32 %v2596, %v1620
        %v2631 = vmul.f32 %v2596, %v2072
        %v2632 = vmul.f32 %v2596, %v2524
        %v2633 = vmul.f32 %v2596, %v1171
        %v2634 = vmul.f32 %v2596, %v1623
        %v2635 = vmul.f32 %v2596, %v2075
        %v2636 = vmul.f32 %v2596, %v2527
        %v2637 = vmul.f32 %v2596, %v1174
        %v2638 = vmul.f32 %v2596, %v1626
        %v2639 = vmul.f32 %v2596, %v2078
        %v2640 = vmul.f32 %v2596, %v2530
        %v2641 = vmul.f32 %v2596, %v1177
        %v2642 = vmul.f32 %v2596, %v1629
        %v2643 = vmul.f32 %v2596, %v2081
        %v2644 = vmul.f32 %v2596, %v2533
        %v2645 = vmul.f32 %v2596, %v1180
        %v2646 = vmul.f32 %v2596, %v1632
        %v2647 = vmul.f32 %v2596, %v2084
        %v2648 = vmul.f32 %v2596, %v2536
        %v2649 = vmul.f32 %v2596, %v1183
        %v2650 = vmul.f32 %v2596, %v1635
        %v2651 = vmul.f32 %v2596, %v2087
        %v2652 = vmul.f32 %v2596, %v2539
        %v2653 = vmul.f32 %v2596, %v1186
        %v2654 = vmul.f32 %v2596, %v1638
        %v2655 = vmul.f32 %v2596, %v2090
        %v2656 = vmul.f32 %v2596, %v2542
        %v2657 = vmul.f32 %v2596, %v1189
        %v2658 = vmul.f32 %v2596, %v1641
        %v2659 = vmul.f32 %v2596, %v2093
        %v2660 = vmul.f32 %v2596, %v2545
        %v2661 = vmul.f32 %v2596, %v1192
        %v2662 = vmul.f32 %v2596, %v1644
        %v2663 = vmul.f32 %v2596, %v2096
        %v2664 = vmul.f32 %v2596, %v2548
        %v2665 = vmul.f32 %v2596, %v1195
        %v2666 = vmul.f32 %v2596, %v1647
        %v2667 = vmul.f32 %v2596, %v2099
        %v2668 = vmul.f32 %v2596, %v2551
        %v2669 = vmul.f32 %v2596, %v1198
        %v2670 = vmul.f32 %v2596, %v1650
        %v2671 = vmul.f32 %v2596, %v2102
        %v2672 = vmul.f32 %v2596, %v2554
        %v2673 = vmul.f32 %v2596, %v1201
        %v2674 = vmul.f32 %v2596, %v1653
        %v2675 = vmul.f32 %v2596, %v2105
        %v2676 = vmul.f32 %v2596, %v2557
        %v2677 = vmul.f32 %v2596, %v1204
        %v2678 = vmul.f32 %v2596, %v1656
        %v2679 = vmul.f32 %v2596, %v2108
        %v2680 = vmul.f32 %v2596, %v2560
        %v2681 = vmul.f32 %v2596, %v1207
        %v2682 = vmul.f32 %v2596, %v1659
        %v2683 = vmul.f32 %v2596, %v2111
        %v2684 = vmul.f32 %v2596, %v2563
        %v2685 = vmul.f32 %v2596, %v1210
        %v2686 = vmul.f32 %v2596, %v1662
        %v2687 = vmul.f32 %v2596, %v2114
        %v2688 = vmul.f32 %v2596, %v2566
        %v2689 = vmul.f32 %v2596, %v1213
        %v2690 = vmul.f32 %v2596, %v1665
        %v2691 = vmul.f32 %v2596, %v2117
        %v2692 = vmul.f32 %v2596, %v2569
        %v2693 = vmul.f32 %v2596, %v1216
        %v2694 = vmul.f32 %v2596, %v1668
        %v2695 = vmul.f32 %v2596, %v2120
        %v2696 = vmul.f32 %v2596, %v2572
        %v2697 = vmul.f32 %v2596, %v1219
        %v2698 = vmul.f32 %v2596, %v1671
        %v2699 = vmul.f32 %v2596, %v2123
        %v2700 = vmul.f32 %v2596, %v2575
        %v2701 = vmul.f32 %v2596, %v1222
        %v2702 = vmul.f32 %v2596, %v1674
        %v2703 = vmul.f32 %v2596, %v2126
        %v2704 = vmul.f32 %v2596, %v2578
        %v2705 = vmul.f32 %v2596, %v1225
        %v2706 = vmul.f32 %v2596, %v1677
        %v2707 = vmul.f32 %v2596, %v2129
        %v2708 = vmul.f32 %v2596, %v2581
        %v2709 = vmul.f32 %v2596, %v1228
        %v2710 = vmul.f32 %v2596, %v1680
        %v2711 = vmul.f32 %v2596, %v2132
        %v2712 = vmul.f32 %v2596, %v2584
        %v2713 = vmul.f32 %v2596, %v1231
        %v2714 = vmul.f32 %v2596, %v1683
        %v2715 = vmul.f32 %v2596, %v2135
        %v2716 = vmul.f32 %v2596, %v2587
        %v2717 = vmul.f32 %v2596, %v1234
        %v2718 = vmul.f32 %v2596, %v1686
        %v2719 = vmul.f32 %v2596, %v2138
        %v2720 = vmul.f32 %v2596, %v2590
        %v2721 = vmul.f32 %v2596, %v1237
        %v2722 = vmul.f32 %v2596, %v1689
        %v2723 = vmul.f32 %v2596, %v2141
        %v2724 = vmul.f32 %v2596, %v2593
        %v2725 = vadd.f32 %v659, %v2597
        %v2726 = vadd.f32 %v660, %v2598
        %v2727 = vadd.f32 %v661, %v2599
        %v2728 = vadd.f32 %v662, %v2600
        %v2729 = vadd.f32 %v663, %v2601
        %v2730 = vadd.f32 %v664, %v2602
        %v2731 = vadd.f32 %v665, %v2603
        %v2732 = vadd.f32 %v666, %v2604
        %v2733 = vadd.f32 %v667, %v2605
        %v2734 = vadd.f32 %v668, %v2606
        %v2735 = vadd.f32 %v669, %v2607
        %v2736 = vadd.f32 %v670, %v2608
        %v2737 = vadd.f32 %v671, %v2609
        %v2738 = vadd.f32 %v672, %v2610
        %v2739 = vadd.f32 %v673, %v2611
        %v2740 = vadd.f32 %v674, %v2612
        %v2741 = vadd.f32 %v675, %v2613
        %v2742 = vadd.f32 %v676, %v2614
        %v2743 = vadd.f32 %v677, %v2615
        %v2744 = vadd.f32 %v678, %v2616
        %v2745 = vadd.f32 %v679, %v2617
        %v2746 = vadd.f32 %v680, %v2618
        %v2747 = vadd.f32 %v681, %v2619
        %v2748 = vadd.f32 %v682, %v2620
        %v2749 = vadd.f32 %v683, %v2621
        %v2750 = vadd.f32 %v684, %v2622
        %v2751 = vadd.f32 %v685, %v2623
        %v2752 = vadd.f32 %v686, %v2624
        %v2753 = vadd.f32 %v687, %v2625
        %v2754 = vadd.f32 %v688, %v2626
        %v2755 = vadd.f32 %v689, %v2627
        %v2756 = vadd.f32 %v690, %v2628
        %v2757 = vadd.f32 %v691, %v2629
        %v2758 = vadd.f32 %v692, %v2630
        %v2759 = vadd.f32 %v693, %v2631
        %v2760 = vadd.f32 %v694, %v2632
        %v2761 = vadd.f32 %v695, %v2633
        %v2762 = vadd.f32 %v696, %v2634
        %v2763 = vadd.f32 %v697, %v2635
        %v2764 = vadd.f32 %v698, %v2636
        %v2765 = vadd.f32 %v699, %v2637
        %v2766 = vadd.f32 %v700, %v2638
        %v2767 = vadd.f32 %v701, %v2639
        %v2768 = vadd.f32 %v702, %v2640
        %v2769 = vadd.f32 %v703, %v2641
        %v2770 = vadd.f32 %v704, %v2642
        %v2771 = vadd.f32 %v705, %v2643
        %v2772 = vadd.f32 %v706, %v2644
        %v2773 = vadd.f32 %v707, %v2645
        %v2774 = vadd.f32 %v708, %v2646
        %v2775 = vadd.f32 %v709, %v2647
        %v2776 = vadd.f32 %v710, %v2648
        %v2777 = vadd.f32 %v711, %v2649
        %v2778 = vadd.f32 %v712, %v2650
        %v2779 = vadd.f32 %v713, %v2651
        %v2780 = vadd.f32 %v714, %v2652
        %v2781 = vadd.f32 %v715, %v2653
        %v2782 = vadd.f32 %v716, %v2654
        %v2783 = vadd.f32 %v717, %v2655
        %v2784 = vadd.f32 %v718, %v2656
        %v2785 = vadd.f32 %v719, %v2657
        %v2786 = vadd.f32 %v720, %v2658
        %v2787 = vadd.f32 %v721, %v2659
        %v2788 = vadd.f32 %v722, %v2660
        %v2789 = vadd.f32 %v723, %v2661
        %v2790 = vadd.f32 %v724, %v2662
        %v2791 = vadd.f32 %v725, %v2663
        %v2792 = vadd.f32 %v726, %v2664
        %v2793 = vadd.f32 %v727, %v2665
        %v2794 = vadd.f32 %v728, %v2666
        %v2795 = vadd.f32 %v729, %v2667
        %v2796 = vadd.f32 %v730, %v2668
        %v2797 = vadd.f32 %v731, %v2669
        %v2798 = vadd.f32 %v732, %v2670
        %v2799 = vadd.f32 %v733, %v2671
        %v2800 = vadd.f32 %v734, %v2672
        %v2801 = vadd.f32 %v735, %v2673
        %v2802 = vadd.f32 %v736, %v2674
        %v2803 = vadd.f32 %v737, %v2675
        %v2804 = vadd.f32 %v738, %v2676
        %v2805 = vadd.f32 %v739, %v2677
        %v2806 = vadd.f32 %v740, %v2678
        %v2807 = vadd.f32 %v741, %v2679
        %v2808 = vadd.f32 %v742, %v2680
        %v2809 = vadd.f32 %v743, %v2681
        %v2810 = vadd.f32 %v744, %v2682
        %v2811 = vadd.f32 %v745, %v2683
        %v2812 = vadd.f32 %v746, %v2684
        %v2813 = vadd.f32 %v747, %v2685
        %v2814 = vadd.f32 %v748, %v2686
        %v2815 = vadd.f32 %v749, %v2687
        %v2816 = vadd.f32 %v750, %v2688
        %v2817 = vadd.f32 %v751, %v2689
        %v2818 = vadd.f32 %v752, %v2690
        %v2819 = vadd.f32 %v753, %v2691
        %v2820 = vadd.f32 %v754, %v2692
        %v2821 = vadd.f32 %v755, %v2693
        %v2822 = vadd.f32 %v756, %v2694
        %v2823 = vadd.f32 %v757, %v2695
        %v2824 = vadd.f32 %v758, %v2696
        %v2825 = vadd.f32 %v759, %v2697
        %v2826 = vadd.f32 %v760, %v2698
        %v2827 = vadd.f32 %v761, %v2699
        %v2828 = vadd.f32 %v762, %v2700
        %v2829 = vadd.f32 %v763, %v2701
        %v2830 = vadd.f32 %v764, %v2702
        %v2831 = vadd.f32 %v765, %v2703
        %v2832 = vadd.f32 %v766, %v2704
        %v2833 = vadd.f32 %v767, %v2705
        %v2834 = vadd.f32 %v768, %v2706
        %v2835 = vadd.f32 %v769, %v2707
        %v2836 = vadd.f32 %v770, %v2708
        %v2837 = vadd.f32 %v771, %v2709
        %v2838 = vadd.f32 %v772, %v2710
        %v2839 = vadd.f32 %v773, %v2711
        %v2840 = vadd.f32 %v774, %v2712
        %v2841 = vadd.f32 %v775, %v2713
        %v2842 = vadd.f32 %v776, %v2714
        %v2843 = vadd.f32 %v777, %v2715
        %v2844 = vadd.f32 %v778, %v2716
        %v2845 = vadd.f32 %v779, %v2717
        %v2846 = vadd.f32 %v780, %v2718
        %v2847 = vadd.f32 %v781, %v2719
        %v2848 = vadd.f32 %v782, %v2720
        %v2849 = vadd.f32 %v783, %v2721
        %v2850 = vadd.f32 %v784, %v2722
        %v2851 = vadd.f32 %v785, %v2723
        %v2852 = vadd.f32 %v786, %v2724
        %2853 = vmatpush.msra.mxu0 %v328
        %2854 = vmatpush.msra.mxu0 %v324
        %2855 = vmatpush.msra.mxu0 %v320
        %2856 = vmatpush.msra.mxu0 %v316
        %2857 = vmatpush.msra.mxu0 %v312
        %2858 = vmatpush.msra.mxu0 %v308
        %2859 = vmatpush.msra.mxu0 %v304
        %2860 = vmatpush.msra.mxu0 %v300
        %2861 = vmatpush.msra.mxu0 %v296
        %2862 = vmatpush.msra.mxu0 %v292
        %2863 = vmatpush.msra.mxu0 %v288
        %2864 = vmatpush.msra.mxu0 %v284
        %2865 = vmatpush.msra.mxu0 %v280
        %2866 = vmatpush.msra.mxu0 %v276
        %2867 = vmatpush.msra.mxu0 %v272
        %2868 = vmatpush.msra.mxu0 %v268
        %2869 = vmatmul.f32.gmra.mxu0 %v1144
        %v2870 = vpop.f32.mrf.mxu0
        %v2871 = vadd.f32 0.0, %v2870
        %2872 = vmatmul.f32.gmra.mxu0 %v1147
        %v2873 = vpop.f32.mrf.mxu0
        %v2874 = vadd.f32 0.0, %v2873
        %2875 = vmatmul.f32.gmra.mxu0 %v1150
        %v2876 = vpop.f32.mrf.mxu0
        %v2877 = vadd.f32 0.0, %v2876
        %2878 = vmatmul.f32.gmra.mxu0 %v1153
        %v2879 = vpop.f32.mrf.mxu0
        %v2880 = vadd.f32 0.0, %v2879
        %2881 = vmatmul.f32.gmra.mxu0 %v1156
        %v2882 = vpop.f32.mrf.mxu0
        %v2883 = vadd.f32 0.0, %v2882
        %2884 = vmatmul.f32.gmra.mxu0 %v1159
        %v2885 = vpop.f32.mrf.mxu0
        %v2886 = vadd.f32 0.0, %v2885
        %2887 = vmatmul.f32.gmra.mxu0 %v1162
        %v2888 = vpop.f32.mrf.mxu0
        %v2889 = vadd.f32 0.0, %v2888
        %2890 = vmatmul.f32.gmra.mxu0 %v1165
        %v2891 = vpop.f32.mrf.mxu0
        %v2892 = vadd.f32 0.0, %v2891
        %2893 = vmatmul.f32.gmra.mxu0 %v1168
        %v2894 = vpop.f32.mrf.mxu0
        %v2895 = vadd.f32 0.0, %v2894
        %2896 = vmatmul.f32.gmra.mxu0 %v1171
        %v2897 = vpop.f32.mrf.mxu0
        %v2898 = vadd.f32 0.0, %v2897
        %2899 = vmatmul.f32.gmra.mxu0 %v1174
        %v2900 = vpop.f32.mrf.mxu0
        %v2901 = vadd.f32 0.0, %v2900
        %2902 = vmatmul.f32.gmra.mxu0 %v1177
        %v2903 = vpop.f32.mrf.mxu0
        %v2904 = vadd.f32 0.0, %v2903
        %2905 = vmatmul.f32.gmra.mxu0 %v1180
        %v2906 = vpop.f32.mrf.mxu0
        %v2907 = vadd.f32 0.0, %v2906
        %2908 = vmatmul.f32.gmra.mxu0 %v1183
        %v2909 = vpop.f32.mrf.mxu0
        %v2910 = vadd.f32 0.0, %v2909
        %2911 = vmatmul.f32.gmra.mxu0 %v1186
        %v2912 = vpop.f32.mrf.mxu0
        %v2913 = vadd.f32 0.0, %v2912
        %2914 = vmatmul.f32.gmra.mxu0 %v1189
        %v2915 = vpop.f32.mrf.mxu0
        %v2916 = vadd.f32 0.0, %v2915
        %2917 = vmatmul.f32.gmra.mxu0 %v1192
        %v2918 = vpop.f32.mrf.mxu0
        %v2919 = vadd.f32 0.0, %v2918
        %2920 = vmatmul.f32.gmra.mxu0 %v1195
        %v2921 = vpop.f32.mrf.mxu0
        %v2922 = vadd.f32 0.0, %v2921
        %2923 = vmatmul.f32.gmra.mxu0 %v1198
        %v2924 = vpop.f32.mrf.mxu0
        %v2925 = vadd.f32 0.0, %v2924
        %2926 = vmatmul.f32.gmra.mxu0 %v1201
        %v2927 = vpop.f32.mrf.mxu0
        %v2928 = vadd.f32 0.0, %v2927
        %2929 = vmatmul.f32.gmra.mxu0 %v1204
        %v2930 = vpop.f32.mrf.mxu0
        %v2931 = vadd.f32 0.0, %v2930
        %2932 = vmatmul.f32.gmra.mxu0 %v1207
        %v2933 = vpop.f32.mrf.mxu0
        %v2934 = vadd.f32 0.0, %v2933
        %2935 = vmatmul.f32.gmra.mxu0 %v1210
        %v2936 = vpop.f32.mrf.mxu0
        %v2937 = vadd.f32 0.0, %v2936
        %2938 = vmatmul.f32.gmra.mxu0 %v1213
        %v2939 = vpop.f32.mrf.mxu0
        %v2940 = vadd.f32 0.0, %v2939
        %2941 = vmatmul.f32.gmra.mxu0 %v1216
        %v2942 = vpop.f32.mrf.mxu0
        %v2943 = vadd.f32 0.0, %v2942
        %2944 = vmatmul.f32.gmra.mxu0 %v1219
        %v2945 = vpop.f32.mrf.mxu0
        %v2946 = vadd.f32 0.0, %v2945
        %2947 = vmatmul.f32.gmra.mxu0 %v1222
        %v2948 = vpop.f32.mrf.mxu0
        %v2949 = vadd.f32 0.0, %v2948
        %2950 = vmatmul.f32.gmra.mxu0 %v1225
        %v2951 = vpop.f32.mrf.mxu0
        %v2952 = vadd.f32 0.0, %v2951
        %2953 = vmatmul.f32.gmra.mxu0 %v1228
        %v2954 = vpop.f32.mrf.mxu0
        %v2955 = vadd.f32 0.0, %v2954
        %2956 = vmatmul.f32.gmra.mxu0 %v1231
        %v2957 = vpop.f32.mrf.mxu0
        %v2958 = vadd.f32 0.0, %v2957
        %2959 = vmatmul.f32.gmra.mxu0 %v1234
        %v2960 = vpop.f32.mrf.mxu0
        %v2961 = vadd.f32 0.0, %v2960
        %2962 = vmatmul.f32.gmra.mxu0 %v1237
        %v2963 = vpop.f32.mrf.mxu0
        %v2964 = vadd.f32 0.0, %v2963
        %2965 = vdwg.mxu0
        %2966 = vmatpush.msra.mxu0 %v392
        %2967 = vmatpush.msra.mxu0 %v388
        %2968 = vmatpush.msra.mxu0 %v384
        %2969 = vmatpush.msra.mxu0 %v380
        %2970 = vmatpush.msra.mxu0 %v376
        %2971 = vmatpush.msra.mxu0 %v372
        %2972 = vmatpush.msra.mxu0 %v368
        %2973 = vmatpush.msra.mxu0 %v364
        %2974 = vmatpush.msra.mxu0 %v360
        %2975 = vmatpush.msra.mxu0 %v356
        %2976 = vmatpush.msra.mxu0 %v352
        %2977 = vmatpush.msra.mxu0 %v348
        %2978 = vmatpush.msra.mxu0 %v344
        %2979 = vmatpush.msra.mxu0 %v340
        %2980 = vmatpush.msra.mxu0 %v336
        %2981 = vmatpush.msra.mxu0 %v332
        %2982 = vmatmul.f32.gmra.mxu0 %v1596
        %v2983 = vpop.f32.mrf.mxu0
        %v2984 = vadd.f32 %v2871, %v2983
        %2985 = vmatmul.f32.gmra.mxu0 %v1599
        %v2986 = vpop.f32.mrf.mxu0
        %v2987 = vadd.f32 %v2874, %v2986
        %2988 = vmatmul.f32.gmra.mxu0 %v1602
        %v2989 = vpop.f32.mrf.mxu0
        %v2990 = vadd.f32 %v2877, %v2989
        %2991 = vmatmul.f32.gmra.mxu0 %v1605
        %v2992 = vpop.f32.mrf.mxu0
        %v2993 = vadd.f32 %v2880, %v2992
        %2994 = vmatmul.f32.gmra.mxu0 %v1608
        %v2995 = vpop.f32.mrf.mxu0
        %v2996 = vadd.f32 %v2883, %v2995
        %2997 = vmatmul.f32.gmra.mxu0 %v1611
        %v2998 = vpop.f32.mrf.mxu0
        %v2999 = vadd.f32 %v2886, %v2998
        %3000 = vmatmul.f32.gmra.mxu0 %v1614
        %v3001 = vpop.f32.mrf.mxu0
        %v3002 = vadd.f32 %v2889, %v3001
        %3003 = vmatmul.f32.gmra.mxu0 %v1617
        %v3004 = vpop.f32.mrf.mxu0
        %v3005 = vadd.f32 %v2892, %v3004
        %3006 = vmatmul.f32.gmra.mxu0 %v1620
        %v3007 = vpop.f32.mrf.mxu0
        %v3008 = vadd.f32 %v2895, %v3007
        %3009 = vmatmul.f32.gmra.mxu0 %v1623
        %v3010 = vpop.f32.mrf.mxu0
        %v3011 = vadd.f32 %v2898, %v3010
        %3012 = vmatmul.f32.gmra.mxu0 %v1626
        %v3013 = vpop.f32.mrf.mxu0
        %v3014 = vadd.f32 %v2901, %v3013
        %3015 = vmatmul.f32.gmra.mxu0 %v1629
        %v3016 = vpop.f32.mrf.mxu0
        %v3017 = vadd.f32 %v2904, %v3016
        %3018 = vmatmul.f32.gmra.mxu0 %v1632
        %v3019 = vpop.f32.mrf.mxu0
        %v3020 = vadd.f32 %v2907, %v3019
        %3021 = vmatmul.f32.gmra.mxu0 %v1635
        %v3022 = vpop.f32.mrf.mxu0
        %v3023 = vadd.f32 %v2910, %v3022
        %3024 = vmatmul.f32.gmra.mxu0 %v1638
        %v3025 = vpop.f32.mrf.mxu0
        %v3026 = vadd.f32 %v2913, %v3025
        %3027 = vmatmul.f32.gmra.mxu0 %v1641
        %v3028 = vpop.f32.mrf.mxu0
        %v3029 = vadd.f32 %v2916, %v3028
        %3030 = vmatmul.f32.gmra.mxu0 %v1644
        %v3031 = vpop.f32.mrf.mxu0
        %v3032 = vadd.f32 %v2919, %v3031
        %3033 = vmatmul.f32.gmra.mxu0 %v1647
        %v3034 = vpop.f32.mrf.mxu0
        %v3035 = vadd.f32 %v2922, %v3034
        %3036 = vmatmul.f32.gmra.mxu0 %v1650
        %v3037 = vpop.f32.mrf.mxu0
        %v3038 = vadd.f32 %v2925, %v3037
        %3039 = vmatmul.f32.gmra.mxu0 %v1653
        %v3040 = vpop.f32.mrf.mxu0
        %v3041 = vadd.f32 %v2928, %v3040
        %3042 = vmatmul.f32.gmra.mxu0 %v1656
        %v3043 = vpop.f32.mrf.mxu0
        %v3044 = vadd.f32 %v2931, %v3043
        %3045 = vmatmul.f32.gmra.mxu0 %v1659
        %v3046 = vpop.f32.mrf.mxu0
        %v3047 = vadd.f32 %v2934, %v3046
        %3048 = vmatmul.f32.gmra.mxu0 %v1662
        %v3049 = vpop.f32.mrf.mxu0
        %v3050 = vadd.f32 %v2937, %v3049
        %3051 = vmatmul.f32.gmra.mxu0 %v1665
        %v3052 = vpop.f32.mrf.mxu0
        %v3053 = vadd.f32 %v2940, %v3052
        %3054 = vmatmul.f32.gmra.mxu0 %v1668
        %v3055 = vpop.f32.mrf.mxu0
        %v3056 = vadd.f32 %v2943, %v3055
        %3057 = vmatmul.f32.gmra.mxu0 %v1671
        %v3058 = vpop.f32.mrf.mxu0
        %v3059 = vadd.f32 %v2946, %v3058
        %3060 = vmatmul.f32.gmra.mxu0 %v1674
        %v3061 = vpop.f32.mrf.mxu0
        %v3062 = vadd.f32 %v2949, %v3061
        %3063 = vmatmul.f32.gmra.mxu0 %v1677
        %v3064 = vpop.f32.mrf.mxu0
        %v3065 = vadd.f32 %v2952, %v3064
        %3066 = vmatmul.f32.gmra.mxu0 %v1680
        %v3067 = vpop.f32.mrf.mxu0
        %v3068 = vadd.f32 %v2955, %v3067
        %3069 = vmatmul.f32.gmra.mxu0 %v1683
        %v3070 = vpop.f32.mrf.mxu0
        %v3071 = vadd.f32 %v2958, %v3070
        %3072 = vmatmul.f32.gmra.mxu0 %v1686
        %v3073 = vpop.f32.mrf.mxu0
        %v3074 = vadd.f32 %v2961, %v3073
        %3075 = vmatmul.f32.gmra.mxu0 %v1689
        %v3076 = vpop.f32.mrf.mxu0
        %v3077 = vadd.f32 %v2964, %v3076
        %3078 = vdwg.mxu0
        %3079 = vmatpush.msra.mxu0 %v456
        %3080 = vmatpush.msra.mxu0 %v452
        %3081 = vmatpush.msra.mxu0 %v448
        %3082 = vmatpush.msra.mxu0 %v444
        %3083 = vmatpush.msra.mxu0 %v440
        %3084 = vmatpush.msra.mxu0 %v436
        %3085 = vmatpush.msra.mxu0 %v432
        %3086 = vmatpush.msra.mxu0 %v428
        %3087 = vmatpush.msra.mxu0 %v424
        %3088 = vmatpush.msra.mxu0 %v420
        %3089 = vmatpush.msra.mxu0 %v416
        %3090 = vmatpush.msra.mxu0 %v412
        %3091 = vmatpush.msra.mxu0 %v408
        %3092 = vmatpush.msra.mxu0 %v404
        %3093 = vmatpush.msra.mxu0 %v400
        %3094 = vmatpush.msra.mxu0 %v396
        %3095 = vmatmul.f32.gmra.mxu0 %v2048
        %v3096 = vpop.f32.mrf.mxu0
        %v3097 = vadd.f32 %v2984, %v3096
        %3098 = vmatmul.f32.gmra.mxu0 %v2051
        %v3099 = vpop.f32.mrf.mxu0
        %v3100 = vadd.f32 %v2987, %v3099
        %3101 = vmatmul.f32.gmra.mxu0 %v2054
        %v3102 = vpop.f32.mrf.mxu0
        %v3103 = vadd.f32 %v2990, %v3102
        %3104 = vmatmul.f32.gmra.mxu0 %v2057
        %v3105 = vpop.f32.mrf.mxu0
        %v3106 = vadd.f32 %v2993, %v3105
        %3107 = vmatmul.f32.gmra.mxu0 %v2060
        %v3108 = vpop.f32.mrf.mxu0
        %v3109 = vadd.f32 %v2996, %v3108
        %3110 = vmatmul.f32.gmra.mxu0 %v2063
        %v3111 = vpop.f32.mrf.mxu0
        %v3112 = vadd.f32 %v2999, %v3111
        %3113 = vmatmul.f32.gmra.mxu0 %v2066
        %v3114 = vpop.f32.mrf.mxu0
        %v3115 = vadd.f32 %v3002, %v3114
        %3116 = vmatmul.f32.gmra.mxu0 %v2069
        %v3117 = vpop.f32.mrf.mxu0
        %v3118 = vadd.f32 %v3005, %v3117
        %3119 = vmatmul.f32.gmra.mxu0 %v2072
        %v3120 = vpop.f32.mrf.mxu0
        %v3121 = vadd.f32 %v3008, %v3120
        %3122 = vmatmul.f32.gmra.mxu0 %v2075
        %v3123 = vpop.f32.mrf.mxu0
        %v3124 = vadd.f32 %v3011, %v3123
        %3125 = vmatmul.f32.gmra.mxu0 %v2078
        %v3126 = vpop.f32.mrf.mxu0
        %v3127 = vadd.f32 %v3014, %v3126
        %3128 = vmatmul.f32.gmra.mxu0 %v2081
        %v3129 = vpop.f32.mrf.mxu0
        %v3130 = vadd.f32 %v3017, %v3129
        %3131 = vmatmul.f32.gmra.mxu0 %v2084
        %v3132 = vpop.f32.mrf.mxu0
        %v3133 = vadd.f32 %v3020, %v3132
        %3134 = vmatmul.f32.gmra.mxu0 %v2087
        %v3135 = vpop.f32.mrf.mxu0
        %v3136 = vadd.f32 %v3023, %v3135
        %3137 = vmatmul.f32.gmra.mxu0 %v2090
        %v3138 = vpop.f32.mrf.mxu0
        %v3139 = vadd.f32 %v3026, %v3138
        %3140 = vmatmul.f32.gmra.mxu0 %v2093
        %v3141 = vpop.f32.mrf.mxu0
        %v3142 = vadd.f32 %v3029, %v3141
        %3143 = vmatmul.f32.gmra.mxu0 %v2096
        %v3144 = vpop.f32.mrf.mxu0
        %v3145 = vadd.f32 %v3032, %v3144
        %3146 = vmatmul.f32.gmra.mxu0 %v2099
        %v3147 = vpop.f32.mrf.mxu0
        %v3148 = vadd.f32 %v3035, %v3147
        %3149 = vmatmul.f32.gmra.mxu0 %v2102
        %v3150 = vpop.f32.mrf.mxu0
        %v3151 = vadd.f32 %v3038, %v3150
        %3152 = vmatmul.f32.gmra.mxu0 %v2105
        %v3153 = vpop.f32.mrf.mxu0
        %v3154 = vadd.f32 %v3041, %v3153
        %3155 = vmatmul.f32.gmra.mxu0 %v2108
        %v3156 = vpop.f32.mrf.mxu0
        %v3157 = vadd.f32 %v3044, %v3156
        %3158 = vmatmul.f32.gmra.mxu0 %v2111
        %v3159 = vpop.f32.mrf.mxu0
        %v3160 = vadd.f32 %v3047, %v3159
        %3161 = vmatmul.f32.gmra.mxu0 %v2114
        %v3162 = vpop.f32.mrf.mxu0
        %v3163 = vadd.f32 %v3050, %v3162
        %3164 = vmatmul.f32.gmra.mxu0 %v2117
        %v3165 = vpop.f32.mrf.mxu0
        %v3166 = vadd.f32 %v3053, %v3165
        %3167 = vmatmul.f32.gmra.mxu0 %v2120
        %v3168 = vpop.f32.mrf.mxu0
        %v3169 = vadd.f32 %v3056, %v3168
        %3170 = vmatmul.f32.gmra.mxu0 %v2123
        %v3171 = vpop.f32.mrf.mxu0
        %v3172 = vadd.f32 %v3059, %v3171
        %3173 = vmatmul.f32.gmra.mxu0 %v2126
        %v3174 = vpop.f32.mrf.mxu0
        %v3175 = vadd.f32 %v3062, %v3174
        %3176 = vmatmul.f32.gmra.mxu0 %v2129
        %v3177 = vpop.f32.mrf.mxu0
        %v3178 = vadd.f32 %v3065, %v3177
        %3179 = vmatmul.f32.gmra.mxu0 %v2132
        %v3180 = vpop.f32.mrf.mxu0
        %v3181 = vadd.f32 %v3068, %v3180
        %3182 = vmatmul.f32.gmra.mxu0 %v2135
        %v3183 = vpop.f32.mrf.mxu0
        %v3184 = vadd.f32 %v3071, %v3183
        %3185 = vmatmul.f32.gmra.mxu0 %v2138
        %v3186 = vpop.f32.mrf.mxu0
        %v3187 = vadd.f32 %v3074, %v3186
        %3188 = vmatmul.f32.gmra.mxu0 %v2141
        %v3189 = vpop.f32.mrf.mxu0
        %v3190 = vadd.f32 %v3077, %v3189
        %3191 = vdwg.mxu0
        %3192 = vmatpush.msra.mxu0 %v520
        %3193 = vmatpush.msra.mxu0 %v516
        %3194 = vmatpush.msra.mxu0 %v512
        %3195 = vmatpush.msra.mxu0 %v508
        %3196 = vmatpush.msra.mxu0 %v504
        %3197 = vmatpush.msra.mxu0 %v500
        %3198 = vmatpush.msra.mxu0 %v496
        %3199 = vmatpush.msra.mxu0 %v492
        %3200 = vmatpush.msra.mxu0 %v488
        %3201 = vmatpush.msra.mxu0 %v484
        %3202 = vmatpush.msra.mxu0 %v480
        %3203 = vmatpush.msra.mxu0 %v476
        %3204 = vmatpush.msra.mxu0 %v472
        %3205 = vmatpush.msra.mxu0 %v468
        %3206 = vmatpush.msra.mxu0 %v464
        %3207 = vmatpush.msra.mxu0 %v460
        %3208 = vmatmul.f32.gmra.mxu0 %v2500
        %v3209 = vpop.f32.mrf.mxu0
        %v3210 = vadd.f32 %v3097, %v3209
        %3211 = vmatmul.f32.gmra.mxu0 %v2503
        %v3212 = vpop.f32.mrf.mxu0
        %v3213 = vadd.f32 %v3100, %v3212
        %3214 = vmatmul.f32.gmra.mxu0 %v2506
        %v3215 = vpop.f32.mrf.mxu0
        %v3216 = vadd.f32 %v3103, %v3215
        %3217 = vmatmul.f32.gmra.mxu0 %v2509
        %v3218 = vpop.f32.mrf.mxu0
        %v3219 = vadd.f32 %v3106, %v3218
        %3220 = vmatmul.f32.gmra.mxu0 %v2512
        %v3221 = vpop.f32.mrf.mxu0
        %v3222 = vadd.f32 %v3109, %v3221
        %3223 = vmatmul.f32.gmra.mxu0 %v2515
        %v3224 = vpop.f32.mrf.mxu0
        %v3225 = vadd.f32 %v3112, %v3224
        %3226 = vmatmul.f32.gmra.mxu0 %v2518
        %v3227 = vpop.f32.mrf.mxu0
        %v3228 = vadd.f32 %v3115, %v3227
        %3229 = vmatmul.f32.gmra.mxu0 %v2521
        %v3230 = vpop.f32.mrf.mxu0
        %v3231 = vadd.f32 %v3118, %v3230
        %3232 = vmatmul.f32.gmra.mxu0 %v2524
        %v3233 = vpop.f32.mrf.mxu0
        %v3234 = vadd.f32 %v3121, %v3233
        %3235 = vmatmul.f32.gmra.mxu0 %v2527
        %v3236 = vpop.f32.mrf.mxu0
        %v3237 = vadd.f32 %v3124, %v3236
        %3238 = vmatmul.f32.gmra.mxu0 %v2530
        %v3239 = vpop.f32.mrf.mxu0
        %v3240 = vadd.f32 %v3127, %v3239
        %3241 = vmatmul.f32.gmra.mxu0 %v2533
        %v3242 = vpop.f32.mrf.mxu0
        %v3243 = vadd.f32 %v3130, %v3242
        %3244 = vmatmul.f32.gmra.mxu0 %v2536
        %v3245 = vpop.f32.mrf.mxu0
        %v3246 = vadd.f32 %v3133, %v3245
        %3247 = vmatmul.f32.gmra.mxu0 %v2539
        %v3248 = vpop.f32.mrf.mxu0
        %v3249 = vadd.f32 %v3136, %v3248
        %3250 = vmatmul.f32.gmra.mxu0 %v2542
        %v3251 = vpop.f32.mrf.mxu0
        %v3252 = vadd.f32 %v3139, %v3251
        %3253 = vmatmul.f32.gmra.mxu0 %v2545
        %v3254 = vpop.f32.mrf.mxu0
        %v3255 = vadd.f32 %v3142, %v3254
        %3256 = vmatmul.f32.gmra.mxu0 %v2548
        %v3257 = vpop.f32.mrf.mxu0
        %v3258 = vadd.f32 %v3145, %v3257
        %3259 = vmatmul.f32.gmra.mxu0 %v2551
        %v3260 = vpop.f32.mrf.mxu0
        %v3261 = vadd.f32 %v3148, %v3260
        %3262 = vmatmul.f32.gmra.mxu0 %v2554
        %v3263 = vpop.f32.mrf.mxu0
        %v3264 = vadd.f32 %v3151, %v3263
        %3265 = vmatmul.f32.gmra.mxu0 %v2557
        %v3266 = vpop.f32.mrf.mxu0
        %v3267 = vadd.f32 %v3154, %v3266
        %3268 = vmatmul.f32.gmra.mxu0 %v2560
        %v3269 = vpop.f32.mrf.mxu0
        %v3270 = vadd.f32 %v3157, %v3269
        %3271 = vmatmul.f32.gmra.mxu0 %v2563
        %v3272 = vpop.f32.mrf.mxu0
        %v3273 = vadd.f32 %v3160, %v3272
        %3274 = vmatmul.f32.gmra.mxu0 %v2566
        %v3275 = vpop.f32.mrf.mxu0
        %v3276 = vadd.f32 %v3163, %v3275
        %3277 = vmatmul.f32.gmra.mxu0 %v2569
        %v3278 = vpop.f32.mrf.mxu0
        %v3279 = vadd.f32 %v3166, %v3278
        %3280 = vmatmul.f32.gmra.mxu0 %v2572
        %v3281 = vpop.f32.mrf.mxu0
        %v3282 = vadd.f32 %v3169, %v3281
        %3283 = vmatmul.f32.gmra.mxu0 %v2575
        %v3284 = vpop.f32.mrf.mxu0
        %v3285 = vadd.f32 %v3172, %v3284
        %3286 = vmatmul.f32.gmra.mxu0 %v2578
        %v3287 = vpop.f32.mrf.mxu0
        %v3288 = vadd.f32 %v3175, %v3287
        %3289 = vmatmul.f32.gmra.mxu0 %v2581
        %v3290 = vpop.f32.mrf.mxu0
        %v3291 = vadd.f32 %v3178, %v3290
        %3292 = vmatmul.f32.gmra.mxu0 %v2584
        %v3293 = vpop.f32.mrf.mxu0
        %v3294 = vadd.f32 %v3181, %v3293
        %3295 = vmatmul.f32.gmra.mxu0 %v2587
        %v3296 = vpop.f32.mrf.mxu0
        %v3297 = vadd.f32 %v3184, %v3296
        %3298 = vmatmul.f32.gmra.mxu0 %v2590
        %v3299 = vpop.f32.mrf.mxu0
        %v3300 = vadd.f32 %v3187, %v3299
        %3301 = vmatmul.f32.gmra.mxu0 %v2593
        %v3302 = vpop.f32.mrf.mxu0
        %v3303 = vadd.f32 %v3190, %v3302
        %3304 = vdwg.mxu0
        %3305 = vmatpush.msra.mxu0 %v329
        %3306 = vmatpush.msra.mxu0 %v325
        %3307 = vmatpush.msra.mxu0 %v321
        %3308 = vmatpush.msra.mxu0 %v317
        %3309 = vmatpush.msra.mxu0 %v313
        %3310 = vmatpush.msra.mxu0 %v309
        %3311 = vmatpush.msra.mxu0 %v305
        %3312 = vmatpush.msra.mxu0 %v301
        %3313 = vmatpush.msra.mxu0 %v297
        %3314 = vmatpush.msra.mxu0 %v293
        %3315 = vmatpush.msra.mxu0 %v289
        %3316 = vmatpush.msra.mxu0 %v285
        %3317 = vmatpush.msra.mxu0 %v281
        %3318 = vmatpush.msra.mxu0 %v277
        %3319 = vmatpush.msra.mxu0 %v273
        %3320 = vmatpush.msra.mxu0 %v269
        %3321 = vmatmul.f32.gmra.mxu0 %v1144
        %v3322 = vpop.f32.mrf.mxu0
        %v3323 = vadd.f32 0.0, %v3322
        %3324 = vmatmul.f32.gmra.mxu0 %v1147
        %v3325 = vpop.f32.mrf.mxu0
        %v3326 = vadd.f32 0.0, %v3325
        %3327 = vmatmul.f32.gmra.mxu0 %v1150
        %v3328 = vpop.f32.mrf.mxu0
        %v3329 = vadd.f32 0.0, %v3328
        %3330 = vmatmul.f32.gmra.mxu0 %v1153
        %v3331 = vpop.f32.mrf.mxu0
        %v3332 = vadd.f32 0.0, %v3331
        %3333 = vmatmul.f32.gmra.mxu0 %v1156
        %v3334 = vpop.f32.mrf.mxu0
        %v3335 = vadd.f32 0.0, %v3334
        %3336 = vmatmul.f32.gmra.mxu0 %v1159
        %v3337 = vpop.f32.mrf.mxu0
        %v3338 = vadd.f32 0.0, %v3337
        %3339 = vmatmul.f32.gmra.mxu0 %v1162
        %v3340 = vpop.f32.mrf.mxu0
        %v3341 = vadd.f32 0.0, %v3340
        %3342 = vmatmul.f32.gmra.mxu0 %v1165
        %v3343 = vpop.f32.mrf.mxu0
        %v3344 = vadd.f32 0.0, %v3343
        %3345 = vmatmul.f32.gmra.mxu0 %v1168
        %v3346 = vpop.f32.mrf.mxu0
        %v3347 = vadd.f32 0.0, %v3346
        %3348 = vmatmul.f32.gmra.mxu0 %v1171
        %v3349 = vpop.f32.mrf.mxu0
        %v3350 = vadd.f32 0.0, %v3349
        %3351 = vmatmul.f32.gmra.mxu0 %v1174
        %v3352 = vpop.f32.mrf.mxu0
        %v3353 = vadd.f32 0.0, %v3352
        %3354 = vmatmul.f32.gmra.mxu0 %v1177
        %v3355 = vpop.f32.mrf.mxu0
        %v3356 = vadd.f32 0.0, %v3355
        %3357 = vmatmul.f32.gmra.mxu0 %v1180
        %v3358 = vpop.f32.mrf.mxu0
        %v3359 = vadd.f32 0.0, %v3358
        %3360 = vmatmul.f32.gmra.mxu0 %v1183
        %v3361 = vpop.f32.mrf.mxu0
        %v3362 = vadd.f32 0.0, %v3361
        %3363 = vmatmul.f32.gmra.mxu0 %v1186
        %v3364 = vpop.f32.mrf.mxu0
        %v3365 = vadd.f32 0.0, %v3364
        %3366 = vmatmul.f32.gmra.mxu0 %v1189
        %v3367 = vpop.f32.mrf.mxu0
        %v3368 = vadd.f32 0.0, %v3367
        %3369 = vmatmul.f32.gmra.mxu0 %v1192
        %v3370 = vpop.f32.mrf.mxu0
        %v3371 = vadd.f32 0.0, %v3370
        %3372 = vmatmul.f32.gmra.mxu0 %v1195
        %v3373 = vpop.f32.mrf.mxu0
        %v3374 = vadd.f32 0.0, %v3373
        %3375 = vmatmul.f32.gmra.mxu0 %v1198
        %v3376 = vpop.f32.mrf.mxu0
        %v3377 = vadd.f32 0.0, %v3376
        %3378 = vmatmul.f32.gmra.mxu0 %v1201
        %v3379 = vpop.f32.mrf.mxu0
        %v3380 = vadd.f32 0.0, %v3379
        %3381 = vmatmul.f32.gmra.mxu0 %v1204
        %v3382 = vpop.f32.mrf.mxu0
        %v3383 = vadd.f32 0.0, %v3382
        %3384 = vmatmul.f32.gmra.mxu0 %v1207
        %v3385 = vpop.f32.mrf.mxu0
        %v3386 = vadd.f32 0.0, %v3385
        %3387 = vmatmul.f32.gmra.mxu0 %v1210
        %v3388 = vpop.f32.mrf.mxu0
        %v3389 = vadd.f32 0.0, %v3388
        %3390 = vmatmul.f32.gmra.mxu0 %v1213
        %v3391 = vpop.f32.mrf.mxu0
        %v3392 = vadd.f32 0.0, %v3391
        %3393 = vmatmul.f32.gmra.mxu0 %v1216
        %v3394 = vpop.f32.mrf.mxu0
        %v3395 = vadd.f32 0.0, %v3394
        %3396 = vmatmul.f32.gmra.mxu0 %v1219
        %v3397 = vpop.f32.mrf.mxu0
        %v3398 = vadd.f32 0.0, %v3397
        %3399 = vmatmul.f32.gmra.mxu0 %v1222
        %v3400 = vpop.f32.mrf.mxu0
        %v3401 = vadd.f32 0.0, %v3400
        %3402 = vmatmul.f32.gmra.mxu0 %v1225
        %v3403 = vpop.f32.mrf.mxu0
        %v3404 = vadd.f32 0.0, %v3403
        %3405 = vmatmul.f32.gmra.mxu0 %v1228
        %v3406 = vpop.f32.mrf.mxu0
        %v3407 = vadd.f32 0.0, %v3406
        %3408 = vmatmul.f32.gmra.mxu0 %v1231
        %v3409 = vpop.f32.mrf.mxu0
        %v3410 = vadd.f32 0.0, %v3409
        %3411 = vmatmul.f32.gmra.mxu0 %v1234
        %v3412 = vpop.f32.mrf.mxu0
        %v3413 = vadd.f32 0.0, %v3412
        %3414 = vmatmul.f32.gmra.mxu0 %v1237
        %v3415 = vpop.f32.mrf.mxu0
        %v3416 = vadd.f32 0.0, %v3415
        %3417 = vdwg.mxu0
        %3418 = vmatpush.msra.mxu0 %v393
        %3419 = vmatpush.msra.mxu0 %v389
        %3420 = vmatpush.msra.mxu0 %v385
        %3421 = vmatpush.msra.mxu0 %v381
        %3422 = vmatpush.msra.mxu0 %v377
        %3423 = vmatpush.msra.mxu0 %v373
        %3424 = vmatpush.msra.mxu0 %v369
        %3425 = vmatpush.msra.mxu0 %v365
        %3426 = vmatpush.msra.mxu0 %v361
        %3427 = vmatpush.msra.mxu0 %v357
        %3428 = vmatpush.msra.mxu0 %v353
        %3429 = vmatpush.msra.mxu0 %v349
        %3430 = vmatpush.msra.mxu0 %v345
        %3431 = vmatpush.msra.mxu0 %v341
        %3432 = vmatpush.msra.mxu0 %v337
        %3433 = vmatpush.msra.mxu0 %v333
        %3434 = vmatmul.f32.gmra.mxu0 %v1596
        %v3435 = vpop.f32.mrf.mxu0
        %v3436 = vadd.f32 %v3323, %v3435
        %3437 = vmatmul.f32.gmra.mxu0 %v1599
        %v3438 = vpop.f32.mrf.mxu0
        %v3439 = vadd.f32 %v3326, %v3438
        %3440 = vmatmul.f32.gmra.mxu0 %v1602
        %v3441 = vpop.f32.mrf.mxu0
        %v3442 = vadd.f32 %v3329, %v3441
        %3443 = vmatmul.f32.gmra.mxu0 %v1605
        %v3444 = vpop.f32.mrf.mxu0
        %v3445 = vadd.f32 %v3332, %v3444
        %3446 = vmatmul.f32.gmra.mxu0 %v1608
        %v3447 = vpop.f32.mrf.mxu0
        %v3448 = vadd.f32 %v3335, %v3447
        %3449 = vmatmul.f32.gmra.mxu0 %v1611
        %v3450 = vpop.f32.mrf.mxu0
        %v3451 = vadd.f32 %v3338, %v3450
        %3452 = vmatmul.f32.gmra.mxu0 %v1614
        %v3453 = vpop.f32.mrf.mxu0
        %v3454 = vadd.f32 %v3341, %v3453
        %3455 = vmatmul.f32.gmra.mxu0 %v1617
        %v3456 = vpop.f32.mrf.mxu0
        %v3457 = vadd.f32 %v3344, %v3456
        %3458 = vmatmul.f32.gmra.mxu0 %v1620
        %v3459 = vpop.f32.mrf.mxu0
        %v3460 = vadd.f32 %v3347, %v3459
        %3461 = vmatmul.f32.gmra.mxu0 %v1623
        %v3462 = vpop.f32.mrf.mxu0
        %v3463 = vadd.f32 %v3350, %v3462
        %3464 = vmatmul.f32.gmra.mxu0 %v1626
        %v3465 = vpop.f32.mrf.mxu0
        %v3466 = vadd.f32 %v3353, %v3465
        %3467 = vmatmul.f32.gmra.mxu0 %v1629
        %v3468 = vpop.f32.mrf.mxu0
        %v3469 = vadd.f32 %v3356, %v3468
        %3470 = vmatmul.f32.gmra.mxu0 %v1632
        %v3471 = vpop.f32.mrf.mxu0
        %v3472 = vadd.f32 %v3359, %v3471
        %3473 = vmatmul.f32.gmra.mxu0 %v1635
        %v3474 = vpop.f32.mrf.mxu0
        %v3475 = vadd.f32 %v3362, %v3474
        %3476 = vmatmul.f32.gmra.mxu0 %v1638
        %v3477 = vpop.f32.mrf.mxu0
        %v3478 = vadd.f32 %v3365, %v3477
        %3479 = vmatmul.f32.gmra.mxu0 %v1641
        %v3480 = vpop.f32.mrf.mxu0
        %v3481 = vadd.f32 %v3368, %v3480
        %3482 = vmatmul.f32.gmra.mxu0 %v1644
        %v3483 = vpop.f32.mrf.mxu0
        %v3484 = vadd.f32 %v3371, %v3483
        %3485 = vmatmul.f32.gmra.mxu0 %v1647
        %v3486 = vpop.f32.mrf.mxu0
        %v3487 = vadd.f32 %v3374, %v3486
        %3488 = vmatmul.f32.gmra.mxu0 %v1650
        %v3489 = vpop.f32.mrf.mxu0
        %v3490 = vadd.f32 %v3377, %v3489
        %3491 = vmatmul.f32.gmra.mxu0 %v1653
        %v3492 = vpop.f32.mrf.mxu0
        %v3493 = vadd.f32 %v3380, %v3492
        %3494 = vmatmul.f32.gmra.mxu0 %v1656
        %v3495 = vpop.f32.mrf.mxu0
        %v3496 = vadd.f32 %v3383, %v3495
        %3497 = vmatmul.f32.gmra.mxu0 %v1659
        %v3498 = vpop.f32.mrf.mxu0
        %v3499 = vadd.f32 %v3386, %v3498
        %3500 = vmatmul.f32.gmra.mxu0 %v1662
        %v3501 = vpop.f32.mrf.mxu0
        %v3502 = vadd.f32 %v3389, %v3501
        %3503 = vmatmul.f32.gmra.mxu0 %v1665
        %v3504 = vpop.f32.mrf.mxu0
        %v3505 = vadd.f32 %v3392, %v3504
        %3506 = vmatmul.f32.gmra.mxu0 %v1668
        %v3507 = vpop.f32.mrf.mxu0
        %v3508 = vadd.f32 %v3395, %v3507
        %3509 = vmatmul.f32.gmra.mxu0 %v1671
        %v3510 = vpop.f32.mrf.mxu0
        %v3511 = vadd.f32 %v3398, %v3510
        %3512 = vmatmul.f32.gmra.mxu0 %v1674
        %v3513 = vpop.f32.mrf.mxu0
        %v3514 = vadd.f32 %v3401, %v3513
        %3515 = vmatmul.f32.gmra.mxu0 %v1677
        %v3516 = vpop.f32.mrf.mxu0
        %v3517 = vadd.f32 %v3404, %v3516
        %3518 = vmatmul.f32.gmra.mxu0 %v1680
        %v3519 = vpop.f32.mrf.mxu0
        %v3520 = vadd.f32 %v3407, %v3519
        %3521 = vmatmul.f32.gmra.mxu0 %v1683
        %v3522 = vpop.f32.mrf.mxu0
        %v3523 = vadd.f32 %v3410, %v3522
        %3524 = vmatmul.f32.gmra.mxu0 %v1686
        %v3525 = vpop.f32.mrf.mxu0
        %v3526 = vadd.f32 %v3413, %v3525
        %3527 = vmatmul.f32.gmra.mxu0 %v1689
        %v3528 = vpop.f32.mrf.mxu0
        %v3529 = vadd.f32 %v3416, %v3528
        %3530 = vdwg.mxu0
        %3531 = vmatpush.msra.mxu0 %v457
        %3532 = vmatpush.msra.mxu0 %v453
        %3533 = vmatpush.msra.mxu0 %v449
        %3534 = vmatpush.msra.mxu0 %v445
        %3535 = vmatpush.msra.mxu0 %v441
        %3536 = vmatpush.msra.mxu0 %v437
        %3537 = vmatpush.msra.mxu0 %v433
        %3538 = vmatpush.msra.mxu0 %v429
        %3539 = vmatpush.msra.mxu0 %v425
        %3540 = vmatpush.msra.mxu0 %v421
        %3541 = vmatpush.msra.mxu0 %v417
        %3542 = vmatpush.msra.mxu0 %v413
        %3543 = vmatpush.msra.mxu0 %v409
        %3544 = vmatpush.msra.mxu0 %v405
        %3545 = vmatpush.msra.mxu0 %v401
        %3546 = vmatpush.msra.mxu0 %v397
        %3547 = vmatmul.f32.gmra.mxu0 %v2048
        %v3548 = vpop.f32.mrf.mxu0
        %v3549 = vadd.f32 %v3436, %v3548
        %3550 = vmatmul.f32.gmra.mxu0 %v2051
        %v3551 = vpop.f32.mrf.mxu0
        %v3552 = vadd.f32 %v3439, %v3551
        %3553 = vmatmul.f32.gmra.mxu0 %v2054
        %v3554 = vpop.f32.mrf.mxu0
        %v3555 = vadd.f32 %v3442, %v3554
        %3556 = vmatmul.f32.gmra.mxu0 %v2057
        %v3557 = vpop.f32.mrf.mxu0
        %v3558 = vadd.f32 %v3445, %v3557
        %3559 = vmatmul.f32.gmra.mxu0 %v2060
        %v3560 = vpop.f32.mrf.mxu0
        %v3561 = vadd.f32 %v3448, %v3560
        %3562 = vmatmul.f32.gmra.mxu0 %v2063
        %v3563 = vpop.f32.mrf.mxu0
        %v3564 = vadd.f32 %v3451, %v3563
        %3565 = vmatmul.f32.gmra.mxu0 %v2066
        %v3566 = vpop.f32.mrf.mxu0
        %v3567 = vadd.f32 %v3454, %v3566
        %3568 = vmatmul.f32.gmra.mxu0 %v2069
        %v3569 = vpop.f32.mrf.mxu0
        %v3570 = vadd.f32 %v3457, %v3569
        %3571 = vmatmul.f32.gmra.mxu0 %v2072
        %v3572 = vpop.f32.mrf.mxu0
        %v3573 = vadd.f32 %v3460, %v3572
        %3574 = vmatmul.f32.gmra.mxu0 %v2075
        %v3575 = vpop.f32.mrf.mxu0
        %v3576 = vadd.f32 %v3463, %v3575
        %3577 = vmatmul.f32.gmra.mxu0 %v2078
        %v3578 = vpop.f32.mrf.mxu0
        %v3579 = vadd.f32 %v3466, %v3578
        %3580 = vmatmul.f32.gmra.mxu0 %v2081
        %v3581 = vpop.f32.mrf.mxu0
        %v3582 = vadd.f32 %v3469, %v3581
        %3583 = vmatmul.f32.gmra.mxu0 %v2084
        %v3584 = vpop.f32.mrf.mxu0
        %v3585 = vadd.f32 %v3472, %v3584
        %3586 = vmatmul.f32.gmra.mxu0 %v2087
        %v3587 = vpop.f32.mrf.mxu0
        %v3588 = vadd.f32 %v3475, %v3587
        %3589 = vmatmul.f32.gmra.mxu0 %v2090
        %v3590 = vpop.f32.mrf.mxu0
        %v3591 = vadd.f32 %v3478, %v3590
        %3592 = vmatmul.f32.gmra.mxu0 %v2093
        %v3593 = vpop.f32.mrf.mxu0
        %v3594 = vadd.f32 %v3481, %v3593
        %3595 = vmatmul.f32.gmra.mxu0 %v2096
        %v3596 = vpop.f32.mrf.mxu0
        %v3597 = vadd.f32 %v3484, %v3596
        %3598 = vmatmul.f32.gmra.mxu0 %v2099
        %v3599 = vpop.f32.mrf.mxu0
        %v3600 = vadd.f32 %v3487, %v3599
        %3601 = vmatmul.f32.gmra.mxu0 %v2102
        %v3602 = vpop.f32.mrf.mxu0
        %v3603 = vadd.f32 %v3490, %v3602
        %3604 = vmatmul.f32.gmra.mxu0 %v2105
        %v3605 = vpop.f32.mrf.mxu0
        %v3606 = vadd.f32 %v3493, %v3605
        %3607 = vmatmul.f32.gmra.mxu0 %v2108
        %v3608 = vpop.f32.mrf.mxu0
        %v3609 = vadd.f32 %v3496, %v3608
        %3610 = vmatmul.f32.gmra.mxu0 %v2111
        %v3611 = vpop.f32.mrf.mxu0
        %v3612 = vadd.f32 %v3499, %v3611
        %3613 = vmatmul.f32.gmra.mxu0 %v2114
        %v3614 = vpop.f32.mrf.mxu0
        %v3615 = vadd.f32 %v3502, %v3614
        %3616 = vmatmul.f32.gmra.mxu0 %v2117
        %v3617 = vpop.f32.mrf.mxu0
        %v3618 = vadd.f32 %v3505, %v3617
        %3619 = vmatmul.f32.gmra.mxu0 %v2120
        %v3620 = vpop.f32.mrf.mxu0
        %v3621 = vadd.f32 %v3508, %v3620
        %3622 = vmatmul.f32.gmra.mxu0 %v2123
        %v3623 = vpop.f32.mrf.mxu0
        %v3624 = vadd.f32 %v3511, %v3623
        %3625 = vmatmul.f32.gmra.mxu0 %v2126
        %v3626 = vpop.f32.mrf.mxu0
        %v3627 = vadd.f32 %v3514, %v3626
        %3628 = vmatmul.f32.gmra.mxu0 %v2129
        %v3629 = vpop.f32.mrf.mxu0
        %v3630 = vadd.f32 %v3517, %v3629
        %3631 = vmatmul.f32.gmra.mxu0 %v2132
        %v3632 = vpop.f32.mrf.mxu0
        %v3633 = vadd.f32 %v3520, %v3632
        %3634 = vmatmul.f32.gmra.mxu0 %v2135
        %v3635 = vpop.f32.mrf.mxu0
        %v3636 = vadd.f32 %v3523, %v3635
        %3637 = vmatmul.f32.gmra.mxu0 %v2138
        %v3638 = vpop.f32.mrf.mxu0
        %v3639 = vadd.f32 %v3526, %v3638
        %3640 = vmatmul.f32.gmra.mxu0 %v2141
        %v3641 = vpop.f32.mrf.mxu0
        %v3642 = vadd.f32 %v3529, %v3641
        %3643 = vdwg.mxu0
        %3644 = vmatpush.msra.mxu0 %v521
        %3645 = vmatpush.msra.mxu0 %v517
        %3646 = vmatpush.msra.mxu0 %v513
        %3647 = vmatpush.msra.mxu0 %v509
        %3648 = vmatpush.msra.mxu0 %v505
        %3649 = vmatpush.msra.mxu0 %v501
        %3650 = vmatpush.msra.mxu0 %v497
        %3651 = vmatpush.msra.mxu0 %v493
        %3652 = vmatpush.msra.mxu0 %v489
        %3653 = vmatpush.msra.mxu0 %v485
        %3654 = vmatpush.msra.mxu0 %v481
        %3655 = vmatpush.msra.mxu0 %v477
        %3656 = vmatpush.msra.mxu0 %v473
        %3657 = vmatpush.msra.mxu0 %v469
        %3658 = vmatpush.msra.mxu0 %v465
        %3659 = vmatpush.msra.mxu0 %v461
        %3660 = vmatmul.f32.gmra.mxu0 %v2500
        %v3661 = vpop.f32.mrf.mxu0
        %v3662 = vadd.f32 %v3549, %v3661
        %3663 = vmatmul.f32.gmra.mxu0 %v2503
        %v3664 = vpop.f32.mrf.mxu0
        %v3665 = vadd.f32 %v3552, %v3664
        %3666 = vmatmul.f32.gmra.mxu0 %v2506
        %v3667 = vpop.f32.mrf.mxu0
        %v3668 = vadd.f32 %v3555, %v3667
        %3669 = vmatmul.f32.gmra.mxu0 %v2509
        %v3670 = vpop.f32.mrf.mxu0
        %v3671 = vadd.f32 %v3558, %v3670
        %3672 = vmatmul.f32.gmra.mxu0 %v2512
        %v3673 = vpop.f32.mrf.mxu0
        %v3674 = vadd.f32 %v3561, %v3673
        %3675 = vmatmul.f32.gmra.mxu0 %v2515
        %v3676 = vpop.f32.mrf.mxu0
        %v3677 = vadd.f32 %v3564, %v3676
        %3678 = vmatmul.f32.gmra.mxu0 %v2518
        %v3679 = vpop.f32.mrf.mxu0
        %v3680 = vadd.f32 %v3567, %v3679
        %3681 = vmatmul.f32.gmra.mxu0 %v2521
        %v3682 = vpop.f32.mrf.mxu0
        %v3683 = vadd.f32 %v3570, %v3682
        %3684 = vmatmul.f32.gmra.mxu0 %v2524
        %v3685 = vpop.f32.mrf.mxu0
        %v3686 = vadd.f32 %v3573, %v3685
        %3687 = vmatmul.f32.gmra.mxu0 %v2527
        %v3688 = vpop.f32.mrf.mxu0
        %v3689 = vadd.f32 %v3576, %v3688
        %3690 = vmatmul.f32.gmra.mxu0 %v2530
        %v3691 = vpop.f32.mrf.mxu0
        %v3692 = vadd.f32 %v3579, %v3691
        %3693 = vmatmul.f32.gmra.mxu0 %v2533
        %v3694 = vpop.f32.mrf.mxu0
        %v3695 = vadd.f32 %v3582, %v3694
        %3696 = vmatmul.f32.gmra.mxu0 %v2536
        %v3697 = vpop.f32.mrf.mxu0
        %v3698 = vadd.f32 %v3585, %v3697
        %3699 = vmatmul.f32.gmra.mxu0 %v2539
        %v3700 = vpop.f32.mrf.mxu0
        %v3701 = vadd.f32 %v3588, %v3700
        %3702 = vmatmul.f32.gmra.mxu0 %v2542
        %v3703 = vpop.f32.mrf.mxu0
        %v3704 = vadd.f32 %v3591, %v3703
        %3705 = vmatmul.f32.gmra.mxu0 %v2545
        %v3706 = vpop.f32.mrf.mxu0
        %v3707 = vadd.f32 %v3594, %v3706
        %3708 = vmatmul.f32.gmra.mxu0 %v2548
        %v3709 = vpop.f32.mrf.mxu0
        %v3710 = vadd.f32 %v3597, %v3709
        %3711 = vmatmul.f32.gmra.mxu0 %v2551
        %v3712 = vpop.f32.mrf.mxu0
        %v3713 = vadd.f32 %v3600, %v3712
        %3714 = vmatmul.f32.gmra.mxu0 %v2554
        %v3715 = vpop.f32.mrf.mxu0
        %v3716 = vadd.f32 %v3603, %v3715
        %3717 = vmatmul.f32.gmra.mxu0 %v2557
        %v3718 = vpop.f32.mrf.mxu0
        %v3719 = vadd.f32 %v3606, %v3718
        %3720 = vmatmul.f32.gmra.mxu0 %v2560
        %v3721 = vpop.f32.mrf.mxu0
        %v3722 = vadd.f32 %v3609, %v3721
        %3723 = vmatmul.f32.gmra.mxu0 %v2563
        %v3724 = vpop.f32.mrf.mxu0
        %v3725 = vadd.f32 %v3612, %v3724
        %3726 = vmatmul.f32.gmra.mxu0 %v2566
        %v3727 = vpop.f32.mrf.mxu0
        %v3728 = vadd.f32 %v3615, %v3727
        %3729 = vmatmul.f32.gmra.mxu0 %v2569
        %v3730 = vpop.f32.mrf.mxu0
        %v3731 = vadd.f32 %v3618, %v3730
        %3732 = vmatmul.f32.gmra.mxu0 %v2572
        %v3733 = vpop.f32.mrf.mxu0
        %v3734 = vadd.f32 %v3621, %v3733
        %3735 = vmatmul.f32.gmra.mxu0 %v2575
        %v3736 = vpop.f32.mrf.mxu0
        %v3737 = vadd.f32 %v3624, %v3736
        %3738 = vmatmul.f32.gmra.mxu0 %v2578
        %v3739 = vpop.f32.mrf.mxu0
        %v3740 = vadd.f32 %v3627, %v3739
        %3741 = vmatmul.f32.gmra.mxu0 %v2581
        %v3742 = vpop.f32.mrf.mxu0
        %v3743 = vadd.f32 %v3630, %v3742
        %3744 = vmatmul.f32.gmra.mxu0 %v2584
        %v3745 = vpop.f32.mrf.mxu0
        %v3746 = vadd.f32 %v3633, %v3745
        %3747 = vmatmul.f32.gmra.mxu0 %v2587
        %v3748 = vpop.f32.mrf.mxu0
        %v3749 = vadd.f32 %v3636, %v3748
        %3750 = vmatmul.f32.gmra.mxu0 %v2590
        %v3751 = vpop.f32.mrf.mxu0
        %v3752 = vadd.f32 %v3639, %v3751
        %3753 = vmatmul.f32.gmra.mxu0 %v2593
        %v3754 = vpop.f32.mrf.mxu0
        %v3755 = vadd.f32 %v3642, %v3754
        %3756 = vdwg.mxu0
        %3757 = vmatpush.msra.mxu0 %v330
        %3758 = vmatpush.msra.mxu0 %v326
        %3759 = vmatpush.msra.mxu0 %v322
        %3760 = vmatpush.msra.mxu0 %v318
        %3761 = vmatpush.msra.mxu0 %v314
        %3762 = vmatpush.msra.mxu0 %v310
        %3763 = vmatpush.msra.mxu0 %v306
        %3764 = vmatpush.msra.mxu0 %v302
        %3765 = vmatpush.msra.mxu0 %v298
        %3766 = vmatpush.msra.mxu0 %v294
        %3767 = vmatpush.msra.mxu0 %v290
        %3768 = vmatpush.msra.mxu0 %v286
        %3769 = vmatpush.msra.mxu0 %v282
        %3770 = vmatpush.msra.mxu0 %v278
        %3771 = vmatpush.msra.mxu0 %v274
        %3772 = vmatpush.msra.mxu0 %v270
        %3773 = vmatmul.f32.gmra.mxu0 %v1144
        %v3774 = vpop.f32.mrf.mxu0
        %v3775 = vadd.f32 0.0, %v3774
        %3776 = vmatmul.f32.gmra.mxu0 %v1147
        %v3777 = vpop.f32.mrf.mxu0
        %v3778 = vadd.f32 0.0, %v3777
        %3779 = vmatmul.f32.gmra.mxu0 %v1150
        %v3780 = vpop.f32.mrf.mxu0
        %v3781 = vadd.f32 0.0, %v3780
        %3782 = vmatmul.f32.gmra.mxu0 %v1153
        %v3783 = vpop.f32.mrf.mxu0
        %v3784 = vadd.f32 0.0, %v3783
        %3785 = vmatmul.f32.gmra.mxu0 %v1156
        %v3786 = vpop.f32.mrf.mxu0
        %v3787 = vadd.f32 0.0, %v3786
        %3788 = vmatmul.f32.gmra.mxu0 %v1159
        %v3789 = vpop.f32.mrf.mxu0
        %v3790 = vadd.f32 0.0, %v3789
        %3791 = vmatmul.f32.gmra.mxu0 %v1162
        %v3792 = vpop.f32.mrf.mxu0
        %v3793 = vadd.f32 0.0, %v3792
        %3794 = vmatmul.f32.gmra.mxu0 %v1165
        %v3795 = vpop.f32.mrf.mxu0
        %v3796 = vadd.f32 0.0, %v3795
        %3797 = vmatmul.f32.gmra.mxu0 %v1168
        %v3798 = vpop.f32.mrf.mxu0
        %v3799 = vadd.f32 0.0, %v3798
        %3800 = vmatmul.f32.gmra.mxu0 %v1171
        %v3801 = vpop.f32.mrf.mxu0
        %v3802 = vadd.f32 0.0, %v3801
        %3803 = vmatmul.f32.gmra.mxu0 %v1174
        %v3804 = vpop.f32.mrf.mxu0
        %v3805 = vadd.f32 0.0, %v3804
        %3806 = vmatmul.f32.gmra.mxu0 %v1177
        %v3807 = vpop.f32.mrf.mxu0
        %v3808 = vadd.f32 0.0, %v3807
        %3809 = vmatmul.f32.gmra.mxu0 %v1180
        %v3810 = vpop.f32.mrf.mxu0
        %v3811 = vadd.f32 0.0, %v3810
        %3812 = vmatmul.f32.gmra.mxu0 %v1183
        %v3813 = vpop.f32.mrf.mxu0
        %v3814 = vadd.f32 0.0, %v3813
        %3815 = vmatmul.f32.gmra.mxu0 %v1186
        %v3816 = vpop.f32.mrf.mxu0
        %v3817 = vadd.f32 0.0, %v3816
        %3818 = vmatmul.f32.gmra.mxu0 %v1189
        %v3819 = vpop.f32.mrf.mxu0
        %v3820 = vadd.f32 0.0, %v3819
        %3821 = vmatmul.f32.gmra.mxu0 %v1192
        %v3822 = vpop.f32.mrf.mxu0
        %v3823 = vadd.f32 0.0, %v3822
        %3824 = vmatmul.f32.gmra.mxu0 %v1195
        %v3825 = vpop.f32.mrf.mxu0
        %v3826 = vadd.f32 0.0, %v3825
        %3827 = vmatmul.f32.gmra.mxu0 %v1198
        %v3828 = vpop.f32.mrf.mxu0
        %v3829 = vadd.f32 0.0, %v3828
        %3830 = vmatmul.f32.gmra.mxu0 %v1201
        %v3831 = vpop.f32.mrf.mxu0
        %v3832 = vadd.f32 0.0, %v3831
        %3833 = vmatmul.f32.gmra.mxu0 %v1204
        %v3834 = vpop.f32.mrf.mxu0
        %v3835 = vadd.f32 0.0, %v3834
        %3836 = vmatmul.f32.gmra.mxu0 %v1207
        %v3837 = vpop.f32.mrf.mxu0
        %v3838 = vadd.f32 0.0, %v3837
        %3839 = vmatmul.f32.gmra.mxu0 %v1210
        %v3840 = vpop.f32.mrf.mxu0
        %v3841 = vadd.f32 0.0, %v3840
        %3842 = vmatmul.f32.gmra.mxu0 %v1213
        %v3843 = vpop.f32.mrf.mxu0
        %v3844 = vadd.f32 0.0, %v3843
        %3845 = vmatmul.f32.gmra.mxu0 %v1216
        %v3846 = vpop.f32.mrf.mxu0
        %v3847 = vadd.f32 0.0, %v3846
        %3848 = vmatmul.f32.gmra.mxu0 %v1219
        %v3849 = vpop.f32.mrf.mxu0
        %v3850 = vadd.f32 0.0, %v3849
        %3851 = vmatmul.f32.gmra.mxu0 %v1222
        %v3852 = vpop.f32.mrf.mxu0
        %v3853 = vadd.f32 0.0, %v3852
        %3854 = vmatmul.f32.gmra.mxu0 %v1225
        %v3855 = vpop.f32.mrf.mxu0
        %v3856 = vadd.f32 0.0, %v3855
        %3857 = vmatmul.f32.gmra.mxu0 %v1228
        %v3858 = vpop.f32.mrf.mxu0
        %v3859 = vadd.f32 0.0, %v3858
        %3860 = vmatmul.f32.gmra.mxu0 %v1231
        %v3861 = vpop.f32.mrf.mxu0
        %v3862 = vadd.f32 0.0, %v3861
        %3863 = vmatmul.f32.gmra.mxu0 %v1234
        %v3864 = vpop.f32.mrf.mxu0
        %v3865 = vadd.f32 0.0, %v3864
        %3866 = vmatmul.f32.gmra.mxu0 %v1237
        %v3867 = vpop.f32.mrf.mxu0
        %v3868 = vadd.f32 0.0, %v3867
        %3869 = vdwg.mxu0
        %3870 = vmatpush.msra.mxu0 %v394
        %3871 = vmatpush.msra.mxu0 %v390
        %3872 = vmatpush.msra.mxu0 %v386
        %3873 = vmatpush.msra.mxu0 %v382
        %3874 = vmatpush.msra.mxu0 %v378
        %3875 = vmatpush.msra.mxu0 %v374
        %3876 = vmatpush.msra.mxu0 %v370
        %3877 = vmatpush.msra.mxu0 %v366
        %3878 = vmatpush.msra.mxu0 %v362
        %3879 = vmatpush.msra.mxu0 %v358
        %3880 = vmatpush.msra.mxu0 %v354
        %3881 = vmatpush.msra.mxu0 %v350
        %3882 = vmatpush.msra.mxu0 %v346
        %3883 = vmatpush.msra.mxu0 %v342
        %3884 = vmatpush.msra.mxu0 %v338
        %3885 = vmatpush.msra.mxu0 %v334
        %3886 = vmatmul.f32.gmra.mxu0 %v1596
        %v3887 = vpop.f32.mrf.mxu0
        %v3888 = vadd.f32 %v3775, %v3887
        %3889 = vmatmul.f32.gmra.mxu0 %v1599
        %v3890 = vpop.f32.mrf.mxu0
        %v3891 = vadd.f32 %v3778, %v3890
        %3892 = vmatmul.f32.gmra.mxu0 %v1602
        %v3893 = vpop.f32.mrf.mxu0
        %v3894 = vadd.f32 %v3781, %v3893
        %3895 = vmatmul.f32.gmra.mxu0 %v1605
        %v3896 = vpop.f32.mrf.mxu0
        %v3897 = vadd.f32 %v3784, %v3896
        %3898 = vmatmul.f32.gmra.mxu0 %v1608
        %v3899 = vpop.f32.mrf.mxu0
        %v3900 = vadd.f32 %v3787, %v3899
        %3901 = vmatmul.f32.gmra.mxu0 %v1611
        %v3902 = vpop.f32.mrf.mxu0
        %v3903 = vadd.f32 %v3790, %v3902
        %3904 = vmatmul.f32.gmra.mxu0 %v1614
        %v3905 = vpop.f32.mrf.mxu0
        %v3906 = vadd.f32 %v3793, %v3905
        %3907 = vmatmul.f32.gmra.mxu0 %v1617
        %v3908 = vpop.f32.mrf.mxu0
        %v3909 = vadd.f32 %v3796, %v3908
        %3910 = vmatmul.f32.gmra.mxu0 %v1620
        %v3911 = vpop.f32.mrf.mxu0
        %v3912 = vadd.f32 %v3799, %v3911
        %3913 = vmatmul.f32.gmra.mxu0 %v1623
        %v3914 = vpop.f32.mrf.mxu0
        %v3915 = vadd.f32 %v3802, %v3914
        %3916 = vmatmul.f32.gmra.mxu0 %v1626
        %v3917 = vpop.f32.mrf.mxu0
        %v3918 = vadd.f32 %v3805, %v3917
        %3919 = vmatmul.f32.gmra.mxu0 %v1629
        %v3920 = vpop.f32.mrf.mxu0
        %v3921 = vadd.f32 %v3808, %v3920
        %3922 = vmatmul.f32.gmra.mxu0 %v1632
        %v3923 = vpop.f32.mrf.mxu0
        %v3924 = vadd.f32 %v3811, %v3923
        %3925 = vmatmul.f32.gmra.mxu0 %v1635
        %v3926 = vpop.f32.mrf.mxu0
        %v3927 = vadd.f32 %v3814, %v3926
        %3928 = vmatmul.f32.gmra.mxu0 %v1638
        %v3929 = vpop.f32.mrf.mxu0
        %v3930 = vadd.f32 %v3817, %v3929
        %3931 = vmatmul.f32.gmra.mxu0 %v1641
        %v3932 = vpop.f32.mrf.mxu0
        %v3933 = vadd.f32 %v3820, %v3932
        %3934 = vmatmul.f32.gmra.mxu0 %v1644
        %v3935 = vpop.f32.mrf.mxu0
        %v3936 = vadd.f32 %v3823, %v3935
        %3937 = vmatmul.f32.gmra.mxu0 %v1647
        %v3938 = vpop.f32.mrf.mxu0
        %v3939 = vadd.f32 %v3826, %v3938
        %3940 = vmatmul.f32.gmra.mxu0 %v1650
        %v3941 = vpop.f32.mrf.mxu0
        %v3942 = vadd.f32 %v3829, %v3941
        %3943 = vmatmul.f32.gmra.mxu0 %v1653
        %v3944 = vpop.f32.mrf.mxu0
        %v3945 = vadd.f32 %v3832, %v3944
        %3946 = vmatmul.f32.gmra.mxu0 %v1656
        %v3947 = vpop.f32.mrf.mxu0
        %v3948 = vadd.f32 %v3835, %v3947
        %3949 = vmatmul.f32.gmra.mxu0 %v1659
        %v3950 = vpop.f32.mrf.mxu0
        %v3951 = vadd.f32 %v3838, %v3950
        %3952 = vmatmul.f32.gmra.mxu0 %v1662
        %v3953 = vpop.f32.mrf.mxu0
        %v3954 = vadd.f32 %v3841, %v3953
        %3955 = vmatmul.f32.gmra.mxu0 %v1665
        %v3956 = vpop.f32.mrf.mxu0
        %v3957 = vadd.f32 %v3844, %v3956
        %3958 = vmatmul.f32.gmra.mxu0 %v1668
        %v3959 = vpop.f32.mrf.mxu0
        %v3960 = vadd.f32 %v3847, %v3959
        %3961 = vmatmul.f32.gmra.mxu0 %v1671
        %v3962 = vpop.f32.mrf.mxu0
        %v3963 = vadd.f32 %v3850, %v3962
        %3964 = vmatmul.f32.gmra.mxu0 %v1674
        %v3965 = vpop.f32.mrf.mxu0
        %v3966 = vadd.f32 %v3853, %v3965
        %3967 = vmatmul.f32.gmra.mxu0 %v1677
        %v3968 = vpop.f32.mrf.mxu0
        %v3969 = vadd.f32 %v3856, %v3968
        %3970 = vmatmul.f32.gmra.mxu0 %v1680
        %v3971 = vpop.f32.mrf.mxu0
        %v3972 = vadd.f32 %v3859, %v3971
        %3973 = vmatmul.f32.gmra.mxu0 %v1683
        %v3974 = vpop.f32.mrf.mxu0
        %v3975 = vadd.f32 %v3862, %v3974
        %3976 = vmatmul.f32.gmra.mxu0 %v1686
        %v3977 = vpop.f32.mrf.mxu0
        %v3978 = vadd.f32 %v3865, %v3977
        %3979 = vmatmul.f32.gmra.mxu0 %v1689
        %v3980 = vpop.f32.mrf.mxu0
        %v3981 = vadd.f32 %v3868, %v3980
        %3982 = vdwg.mxu0
        %3983 = vmatpush.msra.mxu0 %v458
        %3984 = vmatpush.msra.mxu0 %v454
        %3985 = vmatpush.msra.mxu0 %v450
        %3986 = vmatpush.msra.mxu0 %v446
        %3987 = vmatpush.msra.mxu0 %v442
        %3988 = vmatpush.msra.mxu0 %v438
        %3989 = vmatpush.msra.mxu0 %v434
        %3990 = vmatpush.msra.mxu0 %v430
        %3991 = vmatpush.msra.mxu0 %v426
        %3992 = vmatpush.msra.mxu0 %v422
        %3993 = vmatpush.msra.mxu0 %v418
        %3994 = vmatpush.msra.mxu0 %v414
        %3995 = vmatpush.msra.mxu0 %v410
        %3996 = vmatpush.msra.mxu0 %v406
        %3997 = vmatpush.msra.mxu0 %v402
        %3998 = vmatpush.msra.mxu0 %v398
        %3999 = vmatmul.f32.gmra.mxu0 %v2048
        %v4000 = vpop.f32.mrf.mxu0
        %v4001 = vadd.f32 %v3888, %v4000
        %4002 = vmatmul.f32.gmra.mxu0 %v2051
        %v4003 = vpop.f32.mrf.mxu0
        %v4004 = vadd.f32 %v3891, %v4003
        %4005 = vmatmul.f32.gmra.mxu0 %v2054
        %v4006 = vpop.f32.mrf.mxu0
        %v4007 = vadd.f32 %v3894, %v4006
        %4008 = vmatmul.f32.gmra.mxu0 %v2057
        %v4009 = vpop.f32.mrf.mxu0
        %v4010 = vadd.f32 %v3897, %v4009
        %4011 = vmatmul.f32.gmra.mxu0 %v2060
        %v4012 = vpop.f32.mrf.mxu0
        %v4013 = vadd.f32 %v3900, %v4012
        %4014 = vmatmul.f32.gmra.mxu0 %v2063
        %v4015 = vpop.f32.mrf.mxu0
        %v4016 = vadd.f32 %v3903, %v4015
        %4017 = vmatmul.f32.gmra.mxu0 %v2066
        %v4018 = vpop.f32.mrf.mxu0
        %v4019 = vadd.f32 %v3906, %v4018
        %4020 = vmatmul.f32.gmra.mxu0 %v2069
        %v4021 = vpop.f32.mrf.mxu0
        %v4022 = vadd.f32 %v3909, %v4021
        %4023 = vmatmul.f32.gmra.mxu0 %v2072
        %v4024 = vpop.f32.mrf.mxu0
        %v4025 = vadd.f32 %v3912, %v4024
        %4026 = vmatmul.f32.gmra.mxu0 %v2075
        %v4027 = vpop.f32.mrf.mxu0
        %v4028 = vadd.f32 %v3915, %v4027
        %4029 = vmatmul.f32.gmra.mxu0 %v2078
        %v4030 = vpop.f32.mrf.mxu0
        %v4031 = vadd.f32 %v3918, %v4030
        %4032 = vmatmul.f32.gmra.mxu0 %v2081
        %v4033 = vpop.f32.mrf.mxu0
        %v4034 = vadd.f32 %v3921, %v4033
        %4035 = vmatmul.f32.gmra.mxu0 %v2084
        %v4036 = vpop.f32.mrf.mxu0
        %v4037 = vadd.f32 %v3924, %v4036
        %4038 = vmatmul.f32.gmra.mxu0 %v2087
        %v4039 = vpop.f32.mrf.mxu0
        %v4040 = vadd.f32 %v3927, %v4039
        %4041 = vmatmul.f32.gmra.mxu0 %v2090
        %v4042 = vpop.f32.mrf.mxu0
        %v4043 = vadd.f32 %v3930, %v4042
        %4044 = vmatmul.f32.gmra.mxu0 %v2093
        %v4045 = vpop.f32.mrf.mxu0
        %v4046 = vadd.f32 %v3933, %v4045
        %4047 = vmatmul.f32.gmra.mxu0 %v2096
        %v4048 = vpop.f32.mrf.mxu0
        %v4049 = vadd.f32 %v3936, %v4048
        %4050 = vmatmul.f32.gmra.mxu0 %v2099
        %v4051 = vpop.f32.mrf.mxu0
        %v4052 = vadd.f32 %v3939, %v4051
        %4053 = vmatmul.f32.gmra.mxu0 %v2102
        %v4054 = vpop.f32.mrf.mxu0
        %v4055 = vadd.f32 %v3942, %v4054
        %4056 = vmatmul.f32.gmra.mxu0 %v2105
        %v4057 = vpop.f32.mrf.mxu0
        %v4058 = vadd.f32 %v3945, %v4057
        %4059 = vmatmul.f32.gmra.mxu0 %v2108
        %v4060 = vpop.f32.mrf.mxu0
        %v4061 = vadd.f32 %v3948, %v4060
        %4062 = vmatmul.f32.gmra.mxu0 %v2111
        %v4063 = vpop.f32.mrf.mxu0
        %v4064 = vadd.f32 %v3951, %v4063
        %4065 = vmatmul.f32.gmra.mxu0 %v2114
        %v4066 = vpop.f32.mrf.mxu0
        %v4067 = vadd.f32 %v3954, %v4066
        %4068 = vmatmul.f32.gmra.mxu0 %v2117
        %v4069 = vpop.f32.mrf.mxu0
        %v4070 = vadd.f32 %v3957, %v4069
        %4071 = vmatmul.f32.gmra.mxu0 %v2120
        %v4072 = vpop.f32.mrf.mxu0
        %v4073 = vadd.f32 %v3960, %v4072
        %4074 = vmatmul.f32.gmra.mxu0 %v2123
        %v4075 = vpop.f32.mrf.mxu0
        %v4076 = vadd.f32 %v3963, %v4075
        %4077 = vmatmul.f32.gmra.mxu0 %v2126
        %v4078 = vpop.f32.mrf.mxu0
        %v4079 = vadd.f32 %v3966, %v4078
        %4080 = vmatmul.f32.gmra.mxu0 %v2129
        %v4081 = vpop.f32.mrf.mxu0
        %v4082 = vadd.f32 %v3969, %v4081
        %4083 = vmatmul.f32.gmra.mxu0 %v2132
        %v4084 = vpop.f32.mrf.mxu0
        %v4085 = vadd.f32 %v3972, %v4084
        %4086 = vmatmul.f32.gmra.mxu0 %v2135
        %v4087 = vpop.f32.mrf.mxu0
        %v4088 = vadd.f32 %v3975, %v4087
        %4089 = vmatmul.f32.gmra.mxu0 %v2138
        %v4090 = vpop.f32.mrf.mxu0
        %v4091 = vadd.f32 %v3978, %v4090
        %4092 = vmatmul.f32.gmra.mxu0 %v2141
        %v4093 = vpop.f32.mrf.mxu0
        %v4094 = vadd.f32 %v3981, %v4093
        %4095 = vdwg.mxu0
        %4096 = vmatpush.msra.mxu0 %v522
        %4097 = vmatpush.msra.mxu0 %v518
        %4098 = vmatpush.msra.mxu0 %v514
        %4099 = vmatpush.msra.mxu0 %v510
        %4100 = vmatpush.msra.mxu0 %v506
        %4101 = vmatpush.msra.mxu0 %v502
        %4102 = vmatpush.msra.mxu0 %v498
        %4103 = vmatpush.msra.mxu0 %v494
        %4104 = vmatpush.msra.mxu0 %v490
        %4105 = vmatpush.msra.mxu0 %v486
        %4106 = vmatpush.msra.mxu0 %v482
        %4107 = vmatpush.msra.mxu0 %v478
        %4108 = vmatpush.msra.mxu0 %v474
        %4109 = vmatpush.msra.mxu0 %v470
        %4110 = vmatpush.msra.mxu0 %v466
        %4111 = vmatpush.msra.mxu0 %v462
        %4112 = vmatmul.f32.gmra.mxu0 %v2500
        %v4113 = vpop.f32.mrf.mxu0
        %v4114 = vadd.f32 %v4001, %v4113
        %4115 = vmatmul.f32.gmra.mxu0 %v2503
        %v4116 = vpop.f32.mrf.mxu0
        %v4117 = vadd.f32 %v4004, %v4116
        %4118 = vmatmul.f32.gmra.mxu0 %v2506
        %v4119 = vpop.f32.mrf.mxu0
        %v4120 = vadd.f32 %v4007, %v4119
        %4121 = vmatmul.f32.gmra.mxu0 %v2509
        %v4122 = vpop.f32.mrf.mxu0
        %v4123 = vadd.f32 %v4010, %v4122
        %4124 = vmatmul.f32.gmra.mxu0 %v2512
        %v4125 = vpop.f32.mrf.mxu0
        %v4126 = vadd.f32 %v4013, %v4125
        %4127 = vmatmul.f32.gmra.mxu0 %v2515
        %v4128 = vpop.f32.mrf.mxu0
        %v4129 = vadd.f32 %v4016, %v4128
        %4130 = vmatmul.f32.gmra.mxu0 %v2518
        %v4131 = vpop.f32.mrf.mxu0
        %v4132 = vadd.f32 %v4019, %v4131
        %4133 = vmatmul.f32.gmra.mxu0 %v2521
        %v4134 = vpop.f32.mrf.mxu0
        %v4135 = vadd.f32 %v4022, %v4134
        %4136 = vmatmul.f32.gmra.mxu0 %v2524
        %v4137 = vpop.f32.mrf.mxu0
        %v4138 = vadd.f32 %v4025, %v4137
        %4139 = vmatmul.f32.gmra.mxu0 %v2527
        %v4140 = vpop.f32.mrf.mxu0
        %v4141 = vadd.f32 %v4028, %v4140
        %4142 = vmatmul.f32.gmra.mxu0 %v2530
        %v4143 = vpop.f32.mrf.mxu0
        %v4144 = vadd.f32 %v4031, %v4143
        %4145 = vmatmul.f32.gmra.mxu0 %v2533
        %v4146 = vpop.f32.mrf.mxu0
        %v4147 = vadd.f32 %v4034, %v4146
        %4148 = vmatmul.f32.gmra.mxu0 %v2536
        %v4149 = vpop.f32.mrf.mxu0
        %v4150 = vadd.f32 %v4037, %v4149
        %4151 = vmatmul.f32.gmra.mxu0 %v2539
        %v4152 = vpop.f32.mrf.mxu0
        %v4153 = vadd.f32 %v4040, %v4152
        %4154 = vmatmul.f32.gmra.mxu0 %v2542
        %v4155 = vpop.f32.mrf.mxu0
        %v4156 = vadd.f32 %v4043, %v4155
        %4157 = vmatmul.f32.gmra.mxu0 %v2545
        %v4158 = vpop.f32.mrf.mxu0
        %v4159 = vadd.f32 %v4046, %v4158
        %4160 = vmatmul.f32.gmra.mxu0 %v2548
        %v4161 = vpop.f32.mrf.mxu0
        %v4162 = vadd.f32 %v4049, %v4161
        %4163 = vmatmul.f32.gmra.mxu0 %v2551
        %v4164 = vpop.f32.mrf.mxu0
        %v4165 = vadd.f32 %v4052, %v4164
        %4166 = vmatmul.f32.gmra.mxu0 %v2554
        %v4167 = vpop.f32.mrf.mxu0
        %v4168 = vadd.f32 %v4055, %v4167
        %4169 = vmatmul.f32.gmra.mxu0 %v2557
        %v4170 = vpop.f32.mrf.mxu0
        %v4171 = vadd.f32 %v4058, %v4170
        %4172 = vmatmul.f32.gmra.mxu0 %v2560
        %v4173 = vpop.f32.mrf.mxu0
        %v4174 = vadd.f32 %v4061, %v4173
        %4175 = vmatmul.f32.gmra.mxu0 %v2563
        %v4176 = vpop.f32.mrf.mxu0
        %v4177 = vadd.f32 %v4064, %v4176
        %4178 = vmatmul.f32.gmra.mxu0 %v2566
        %v4179 = vpop.f32.mrf.mxu0
        %v4180 = vadd.f32 %v4067, %v4179
        %4181 = vmatmul.f32.gmra.mxu0 %v2569
        %v4182 = vpop.f32.mrf.mxu0
        %v4183 = vadd.f32 %v4070, %v4182
        %4184 = vmatmul.f32.gmra.mxu0 %v2572
        %v4185 = vpop.f32.mrf.mxu0
        %v4186 = vadd.f32 %v4073, %v4185
        %4187 = vmatmul.f32.gmra.mxu0 %v2575
        %v4188 = vpop.f32.mrf.mxu0
        %v4189 = vadd.f32 %v4076, %v4188
        %4190 = vmatmul.f32.gmra.mxu0 %v2578
        %v4191 = vpop.f32.mrf.mxu0
        %v4192 = vadd.f32 %v4079, %v4191
        %4193 = vmatmul.f32.gmra.mxu0 %v2581
        %v4194 = vpop.f32.mrf.mxu0
        %v4195 = vadd.f32 %v4082, %v4194
        %4196 = vmatmul.f32.gmra.mxu0 %v2584
        %v4197 = vpop.f32.mrf.mxu0
        %v4198 = vadd.f32 %v4085, %v4197
        %4199 = vmatmul.f32.gmra.mxu0 %v2587
        %v4200 = vpop.f32.mrf.mxu0
        %v4201 = vadd.f32 %v4088, %v4200
        %4202 = vmatmul.f32.gmra.mxu0 %v2590
        %v4203 = vpop.f32.mrf.mxu0
        %v4204 = vadd.f32 %v4091, %v4203
        %4205 = vmatmul.f32.gmra.mxu0 %v2593
        %v4206 = vpop.f32.mrf.mxu0
        %v4207 = vadd.f32 %v4094, %v4206
        %4208 = vdwg.mxu0
        %4209 = vmatpush.msra.mxu0 %v331
        %4210 = vmatpush.msra.mxu0 %v327
        %4211 = vmatpush.msra.mxu0 %v323
        %4212 = vmatpush.msra.mxu0 %v319
        %4213 = vmatpush.msra.mxu0 %v315
        %4214 = vmatpush.msra.mxu0 %v311
        %4215 = vmatpush.msra.mxu0 %v307
        %4216 = vmatpush.msra.mxu0 %v303
        %4217 = vmatpush.msra.mxu0 %v299
        %4218 = vmatpush.msra.mxu0 %v295
        %4219 = vmatpush.msra.mxu0 %v291
        %4220 = vmatpush.msra.mxu0 %v287
        %4221 = vmatpush.msra.mxu0 %v283
        %4222 = vmatpush.msra.mxu0 %v279
        %4223 = vmatpush.msra.mxu0 %v275
        %4224 = vmatpush.msra.mxu0 %v271
        %4225 = vmatmul.f32.gmra.mxu0 %v1144
        %v4226 = vpop.f32.mrf.mxu0
        %v4227 = vadd.f32 0.0, %v4226
        %4228 = vmatmul.f32.gmra.mxu0 %v1147
        %v4229 = vpop.f32.mrf.mxu0
        %v4230 = vadd.f32 0.0, %v4229
        %4231 = vmatmul.f32.gmra.mxu0 %v1150
        %v4232 = vpop.f32.mrf.mxu0
        %v4233 = vadd.f32 0.0, %v4232
        %4234 = vmatmul.f32.gmra.mxu0 %v1153
        %v4235 = vpop.f32.mrf.mxu0
        %v4236 = vadd.f32 0.0, %v4235
        %4237 = vmatmul.f32.gmra.mxu0 %v1156
        %v4238 = vpop.f32.mrf.mxu0
        %v4239 = vadd.f32 0.0, %v4238
        %4240 = vmatmul.f32.gmra.mxu0 %v1159
        %v4241 = vpop.f32.mrf.mxu0
        %v4242 = vadd.f32 0.0, %v4241
        %4243 = vmatmul.f32.gmra.mxu0 %v1162
        %v4244 = vpop.f32.mrf.mxu0
        %v4245 = vadd.f32 0.0, %v4244
        %4246 = vmatmul.f32.gmra.mxu0 %v1165
        %v4247 = vpop.f32.mrf.mxu0
        %v4248 = vadd.f32 0.0, %v4247
        %4249 = vmatmul.f32.gmra.mxu0 %v1168
        %v4250 = vpop.f32.mrf.mxu0
        %v4251 = vadd.f32 0.0, %v4250
        %4252 = vmatmul.f32.gmra.mxu0 %v1171
        %v4253 = vpop.f32.mrf.mxu0
        %v4254 = vadd.f32 0.0, %v4253
        %4255 = vmatmul.f32.gmra.mxu0 %v1174
        %v4256 = vpop.f32.mrf.mxu0
        %v4257 = vadd.f32 0.0, %v4256
        %4258 = vmatmul.f32.gmra.mxu0 %v1177
        %v4259 = vpop.f32.mrf.mxu0
        %v4260 = vadd.f32 0.0, %v4259
        %4261 = vmatmul.f32.gmra.mxu0 %v1180
        %v4262 = vpop.f32.mrf.mxu0
        %v4263 = vadd.f32 0.0, %v4262
        %4264 = vmatmul.f32.gmra.mxu0 %v1183
        %v4265 = vpop.f32.mrf.mxu0
        %v4266 = vadd.f32 0.0, %v4265
        %4267 = vmatmul.f32.gmra.mxu0 %v1186
        %v4268 = vpop.f32.mrf.mxu0
        %v4269 = vadd.f32 0.0, %v4268
        %4270 = vmatmul.f32.gmra.mxu0 %v1189
        %v4271 = vpop.f32.mrf.mxu0
        %v4272 = vadd.f32 0.0, %v4271
        %4273 = vmatmul.f32.gmra.mxu0 %v1192
        %v4274 = vpop.f32.mrf.mxu0
        %v4275 = vadd.f32 0.0, %v4274
        %4276 = vmatmul.f32.gmra.mxu0 %v1195
        %v4277 = vpop.f32.mrf.mxu0
        %v4278 = vadd.f32 0.0, %v4277
        %4279 = vmatmul.f32.gmra.mxu0 %v1198
        %v4280 = vpop.f32.mrf.mxu0
        %v4281 = vadd.f32 0.0, %v4280
        %4282 = vmatmul.f32.gmra.mxu0 %v1201
        %v4283 = vpop.f32.mrf.mxu0
        %v4284 = vadd.f32 0.0, %v4283
        %4285 = vmatmul.f32.gmra.mxu0 %v1204
        %v4286 = vpop.f32.mrf.mxu0
        %v4287 = vadd.f32 0.0, %v4286
        %4288 = vmatmul.f32.gmra.mxu0 %v1207
        %v4289 = vpop.f32.mrf.mxu0
        %v4290 = vadd.f32 0.0, %v4289
        %4291 = vmatmul.f32.gmra.mxu0 %v1210
        %v4292 = vpop.f32.mrf.mxu0
        %v4293 = vadd.f32 0.0, %v4292
        %4294 = vmatmul.f32.gmra.mxu0 %v1213
        %v4295 = vpop.f32.mrf.mxu0
        %v4296 = vadd.f32 0.0, %v4295
        %4297 = vmatmul.f32.gmra.mxu0 %v1216
        %v4298 = vpop.f32.mrf.mxu0
        %v4299 = vadd.f32 0.0, %v4298
        %4300 = vmatmul.f32.gmra.mxu0 %v1219
        %v4301 = vpop.f32.mrf.mxu0
        %v4302 = vadd.f32 0.0, %v4301
        %4303 = vmatmul.f32.gmra.mxu0 %v1222
        %v4304 = vpop.f32.mrf.mxu0
        %v4305 = vadd.f32 0.0, %v4304
        %4306 = vmatmul.f32.gmra.mxu0 %v1225
        %v4307 = vpop.f32.mrf.mxu0
        %v4308 = vadd.f32 0.0, %v4307
        %4309 = vmatmul.f32.gmra.mxu0 %v1228
        %v4310 = vpop.f32.mrf.mxu0
        %v4311 = vadd.f32 0.0, %v4310
        %4312 = vmatmul.f32.gmra.mxu0 %v1231
        %v4313 = vpop.f32.mrf.mxu0
        %v4314 = vadd.f32 0.0, %v4313
        %4315 = vmatmul.f32.gmra.mxu0 %v1234
        %v4316 = vpop.f32.mrf.mxu0
        %v4317 = vadd.f32 0.0, %v4316
        %4318 = vmatmul.f32.gmra.mxu0 %v1237
        %v4319 = vpop.f32.mrf.mxu0
        %v4320 = vadd.f32 0.0, %v4319
        %4321 = vdwg.mxu0
        %4322 = vmatpush.msra.mxu0 %v395
        %4323 = vmatpush.msra.mxu0 %v391
        %4324 = vmatpush.msra.mxu0 %v387
        %4325 = vmatpush.msra.mxu0 %v383
        %4326 = vmatpush.msra.mxu0 %v379
        %4327 = vmatpush.msra.mxu0 %v375
        %4328 = vmatpush.msra.mxu0 %v371
        %4329 = vmatpush.msra.mxu0 %v367
        %4330 = vmatpush.msra.mxu0 %v363
        %4331 = vmatpush.msra.mxu0 %v359
        %4332 = vmatpush.msra.mxu0 %v355
        %4333 = vmatpush.msra.mxu0 %v351
        %4334 = vmatpush.msra.mxu0 %v347
        %4335 = vmatpush.msra.mxu0 %v343
        %4336 = vmatpush.msra.mxu0 %v339
        %4337 = vmatpush.msra.mxu0 %v335
        %4338 = vmatmul.f32.gmra.mxu0 %v1596
        %v4339 = vpop.f32.mrf.mxu0
        %v4340 = vadd.f32 %v4227, %v4339
        %4341 = vmatmul.f32.gmra.mxu0 %v1599
        %v4342 = vpop.f32.mrf.mxu0
        %v4343 = vadd.f32 %v4230, %v4342
        %4344 = vmatmul.f32.gmra.mxu0 %v1602
        %v4345 = vpop.f32.mrf.mxu0
        %v4346 = vadd.f32 %v4233, %v4345
        %4347 = vmatmul.f32.gmra.mxu0 %v1605
        %v4348 = vpop.f32.mrf.mxu0
        %v4349 = vadd.f32 %v4236, %v4348
        %4350 = vmatmul.f32.gmra.mxu0 %v1608
        %v4351 = vpop.f32.mrf.mxu0
        %v4352 = vadd.f32 %v4239, %v4351
        %4353 = vmatmul.f32.gmra.mxu0 %v1611
        %v4354 = vpop.f32.mrf.mxu0
        %v4355 = vadd.f32 %v4242, %v4354
        %4356 = vmatmul.f32.gmra.mxu0 %v1614
        %v4357 = vpop.f32.mrf.mxu0
        %v4358 = vadd.f32 %v4245, %v4357
        %4359 = vmatmul.f32.gmra.mxu0 %v1617
        %v4360 = vpop.f32.mrf.mxu0
        %v4361 = vadd.f32 %v4248, %v4360
        %4362 = vmatmul.f32.gmra.mxu0 %v1620
        %v4363 = vpop.f32.mrf.mxu0
        %v4364 = vadd.f32 %v4251, %v4363
        %4365 = vmatmul.f32.gmra.mxu0 %v1623
        %v4366 = vpop.f32.mrf.mxu0
        %v4367 = vadd.f32 %v4254, %v4366
        %4368 = vmatmul.f32.gmra.mxu0 %v1626
        %v4369 = vpop.f32.mrf.mxu0
        %v4370 = vadd.f32 %v4257, %v4369
        %4371 = vmatmul.f32.gmra.mxu0 %v1629
        %v4372 = vpop.f32.mrf.mxu0
        %v4373 = vadd.f32 %v4260, %v4372
        %4374 = vmatmul.f32.gmra.mxu0 %v1632
        %v4375 = vpop.f32.mrf.mxu0
        %v4376 = vadd.f32 %v4263, %v4375
        %4377 = vmatmul.f32.gmra.mxu0 %v1635
        %v4378 = vpop.f32.mrf.mxu0
        %v4379 = vadd.f32 %v4266, %v4378
        %4380 = vmatmul.f32.gmra.mxu0 %v1638
        %v4381 = vpop.f32.mrf.mxu0
        %v4382 = vadd.f32 %v4269, %v4381
        %4383 = vmatmul.f32.gmra.mxu0 %v1641
        %v4384 = vpop.f32.mrf.mxu0
        %v4385 = vadd.f32 %v4272, %v4384
        %4386 = vmatmul.f32.gmra.mxu0 %v1644
        %v4387 = vpop.f32.mrf.mxu0
        %v4388 = vadd.f32 %v4275, %v4387
        %4389 = vmatmul.f32.gmra.mxu0 %v1647
        %v4390 = vpop.f32.mrf.mxu0
        %v4391 = vadd.f32 %v4278, %v4390
        %4392 = vmatmul.f32.gmra.mxu0 %v1650
        %v4393 = vpop.f32.mrf.mxu0
        %v4394 = vadd.f32 %v4281, %v4393
        %4395 = vmatmul.f32.gmra.mxu0 %v1653
        %v4396 = vpop.f32.mrf.mxu0
        %v4397 = vadd.f32 %v4284, %v4396
        %4398 = vmatmul.f32.gmra.mxu0 %v1656
        %v4399 = vpop.f32.mrf.mxu0
        %v4400 = vadd.f32 %v4287, %v4399
        %4401 = vmatmul.f32.gmra.mxu0 %v1659
        %v4402 = vpop.f32.mrf.mxu0
        %v4403 = vadd.f32 %v4290, %v4402
        %4404 = vmatmul.f32.gmra.mxu0 %v1662
        %v4405 = vpop.f32.mrf.mxu0
        %v4406 = vadd.f32 %v4293, %v4405
        %4407 = vmatmul.f32.gmra.mxu0 %v1665
        %v4408 = vpop.f32.mrf.mxu0
        %v4409 = vadd.f32 %v4296, %v4408
        %4410 = vmatmul.f32.gmra.mxu0 %v1668
        %v4411 = vpop.f32.mrf.mxu0
        %v4412 = vadd.f32 %v4299, %v4411
        %4413 = vmatmul.f32.gmra.mxu0 %v1671
        %v4414 = vpop.f32.mrf.mxu0
        %v4415 = vadd.f32 %v4302, %v4414
        %4416 = vmatmul.f32.gmra.mxu0 %v1674
        %v4417 = vpop.f32.mrf.mxu0
        %v4418 = vadd.f32 %v4305, %v4417
        %4419 = vmatmul.f32.gmra.mxu0 %v1677
        %v4420 = vpop.f32.mrf.mxu0
        %v4421 = vadd.f32 %v4308, %v4420
        %4422 = vmatmul.f32.gmra.mxu0 %v1680
        %v4423 = vpop.f32.mrf.mxu0
        %v4424 = vadd.f32 %v4311, %v4423
        %4425 = vmatmul.f32.gmra.mxu0 %v1683
        %v4426 = vpop.f32.mrf.mxu0
        %v4427 = vadd.f32 %v4314, %v4426
        %4428 = vmatmul.f32.gmra.mxu0 %v1686
        %v4429 = vpop.f32.mrf.mxu0
        %v4430 = vadd.f32 %v4317, %v4429
        %4431 = vmatmul.f32.gmra.mxu0 %v1689
        %v4432 = vpop.f32.mrf.mxu0
        %v4433 = vadd.f32 %v4320, %v4432
        %4434 = vdwg.mxu0
        %4435 = vmatpush.msra.mxu0 %v459
        %4436 = vmatpush.msra.mxu0 %v455
        %4437 = vmatpush.msra.mxu0 %v451
        %4438 = vmatpush.msra.mxu0 %v447
        %4439 = vmatpush.msra.mxu0 %v443
        %4440 = vmatpush.msra.mxu0 %v439
        %4441 = vmatpush.msra.mxu0 %v435
        %4442 = vmatpush.msra.mxu0 %v431
        %4443 = vmatpush.msra.mxu0 %v427
        %4444 = vmatpush.msra.mxu0 %v423
        %4445 = vmatpush.msra.mxu0 %v419
        %4446 = vmatpush.msra.mxu0 %v415
        %4447 = vmatpush.msra.mxu0 %v411
        %4448 = vmatpush.msra.mxu0 %v407
        %4449 = vmatpush.msra.mxu0 %v403
        %4450 = vmatpush.msra.mxu0 %v399
        %4451 = vmatmul.f32.gmra.mxu0 %v2048
        %v4452 = vpop.f32.mrf.mxu0
        %v4453 = vadd.f32 %v4340, %v4452
        %4454 = vmatmul.f32.gmra.mxu0 %v2051
        %v4455 = vpop.f32.mrf.mxu0
        %v4456 = vadd.f32 %v4343, %v4455
        %4457 = vmatmul.f32.gmra.mxu0 %v2054
        %v4458 = vpop.f32.mrf.mxu0
        %v4459 = vadd.f32 %v4346, %v4458
        %4460 = vmatmul.f32.gmra.mxu0 %v2057
        %v4461 = vpop.f32.mrf.mxu0
        %v4462 = vadd.f32 %v4349, %v4461
        %4463 = vmatmul.f32.gmra.mxu0 %v2060
        %v4464 = vpop.f32.mrf.mxu0
        %v4465 = vadd.f32 %v4352, %v4464
        %4466 = vmatmul.f32.gmra.mxu0 %v2063
        %v4467 = vpop.f32.mrf.mxu0
        %v4468 = vadd.f32 %v4355, %v4467
        %4469 = vmatmul.f32.gmra.mxu0 %v2066
        %v4470 = vpop.f32.mrf.mxu0
        %v4471 = vadd.f32 %v4358, %v4470
        %4472 = vmatmul.f32.gmra.mxu0 %v2069
        %v4473 = vpop.f32.mrf.mxu0
        %v4474 = vadd.f32 %v4361, %v4473
        %4475 = vmatmul.f32.gmra.mxu0 %v2072
        %v4476 = vpop.f32.mrf.mxu0
        %v4477 = vadd.f32 %v4364, %v4476
        %4478 = vmatmul.f32.gmra.mxu0 %v2075
        %v4479 = vpop.f32.mrf.mxu0
        %v4480 = vadd.f32 %v4367, %v4479
        %4481 = vmatmul.f32.gmra.mxu0 %v2078
        %v4482 = vpop.f32.mrf.mxu0
        %v4483 = vadd.f32 %v4370, %v4482
        %4484 = vmatmul.f32.gmra.mxu0 %v2081
        %v4485 = vpop.f32.mrf.mxu0
        %v4486 = vadd.f32 %v4373, %v4485
        %4487 = vmatmul.f32.gmra.mxu0 %v2084
        %v4488 = vpop.f32.mrf.mxu0
        %v4489 = vadd.f32 %v4376, %v4488
        %4490 = vmatmul.f32.gmra.mxu0 %v2087
        %v4491 = vpop.f32.mrf.mxu0
        %v4492 = vadd.f32 %v4379, %v4491
        %4493 = vmatmul.f32.gmra.mxu0 %v2090
        %v4494 = vpop.f32.mrf.mxu0
        %v4495 = vadd.f32 %v4382, %v4494
        %4496 = vmatmul.f32.gmra.mxu0 %v2093
        %v4497 = vpop.f32.mrf.mxu0
        %v4498 = vadd.f32 %v4385, %v4497
        %4499 = vmatmul.f32.gmra.mxu0 %v2096
        %v4500 = vpop.f32.mrf.mxu0
        %v4501 = vadd.f32 %v4388, %v4500
        %4502 = vmatmul.f32.gmra.mxu0 %v2099
        %v4503 = vpop.f32.mrf.mxu0
        %v4504 = vadd.f32 %v4391, %v4503
        %4505 = vmatmul.f32.gmra.mxu0 %v2102
        %v4506 = vpop.f32.mrf.mxu0
        %v4507 = vadd.f32 %v4394, %v4506
        %4508 = vmatmul.f32.gmra.mxu0 %v2105
        %v4509 = vpop.f32.mrf.mxu0
        %v4510 = vadd.f32 %v4397, %v4509
        %4511 = vmatmul.f32.gmra.mxu0 %v2108
        %v4512 = vpop.f32.mrf.mxu0
        %v4513 = vadd.f32 %v4400, %v4512
        %4514 = vmatmul.f32.gmra.mxu0 %v2111
        %v4515 = vpop.f32.mrf.mxu0
        %v4516 = vadd.f32 %v4403, %v4515
        %4517 = vmatmul.f32.gmra.mxu0 %v2114
        %v4518 = vpop.f32.mrf.mxu0
        %v4519 = vadd.f32 %v4406, %v4518
        %4520 = vmatmul.f32.gmra.mxu0 %v2117
        %v4521 = vpop.f32.mrf.mxu0
        %v4522 = vadd.f32 %v4409, %v4521
        %4523 = vmatmul.f32.gmra.mxu0 %v2120
        %v4524 = vpop.f32.mrf.mxu0
        %v4525 = vadd.f32 %v4412, %v4524
        %4526 = vmatmul.f32.gmra.mxu0 %v2123
        %v4527 = vpop.f32.mrf.mxu0
        %v4528 = vadd.f32 %v4415, %v4527
        %4529 = vmatmul.f32.gmra.mxu0 %v2126
        %v4530 = vpop.f32.mrf.mxu0
        %v4531 = vadd.f32 %v4418, %v4530
        %4532 = vmatmul.f32.gmra.mxu0 %v2129
        %v4533 = vpop.f32.mrf.mxu0
        %v4534 = vadd.f32 %v4421, %v4533
        %4535 = vmatmul.f32.gmra.mxu0 %v2132
        %v4536 = vpop.f32.mrf.mxu0
        %v4537 = vadd.f32 %v4424, %v4536
        %4538 = vmatmul.f32.gmra.mxu0 %v2135
        %v4539 = vpop.f32.mrf.mxu0
        %v4540 = vadd.f32 %v4427, %v4539
        %4541 = vmatmul.f32.gmra.mxu0 %v2138
        %v4542 = vpop.f32.mrf.mxu0
        %v4543 = vadd.f32 %v4430, %v4542
        %4544 = vmatmul.f32.gmra.mxu0 %v2141
        %v4545 = vpop.f32.mrf.mxu0
        %v4546 = vadd.f32 %v4433, %v4545
        %4547 = vdwg.mxu0
        %4548 = vmatpush.msra.mxu0 %v523
        %4549 = vmatpush.msra.mxu0 %v519
        %4550 = vmatpush.msra.mxu0 %v515
        %4551 = vmatpush.msra.mxu0 %v511
        %4552 = vmatpush.msra.mxu0 %v507
        %4553 = vmatpush.msra.mxu0 %v503
        %4554 = vmatpush.msra.mxu0 %v499
        %4555 = vmatpush.msra.mxu0 %v495
        %4556 = vmatpush.msra.mxu0 %v491
        %4557 = vmatpush.msra.mxu0 %v487
        %4558 = vmatpush.msra.mxu0 %v483
        %4559 = vmatpush.msra.mxu0 %v479
        %4560 = vmatpush.msra.mxu0 %v475
        %4561 = vmatpush.msra.mxu0 %v471
        %4562 = vmatpush.msra.mxu0 %v467
        %4563 = vmatpush.msra.mxu0 %v463
        %4564 = vmatmul.f32.gmra.mxu0 %v2500
        %v4565 = vpop.f32.mrf.mxu0
        %v4566 = vadd.f32 %v4453, %v4565
        %4567 = vmatmul.f32.gmra.mxu0 %v2503
        %v4568 = vpop.f32.mrf.mxu0
        %v4569 = vadd.f32 %v4456, %v4568
        %4570 = vmatmul.f32.gmra.mxu0 %v2506
        %v4571 = vpop.f32.mrf.mxu0
        %v4572 = vadd.f32 %v4459, %v4571
        %4573 = vmatmul.f32.gmra.mxu0 %v2509
        %v4574 = vpop.f32.mrf.mxu0
        %v4575 = vadd.f32 %v4462, %v4574
        %4576 = vmatmul.f32.gmra.mxu0 %v2512
        %v4577 = vpop.f32.mrf.mxu0
        %v4578 = vadd.f32 %v4465, %v4577
        %4579 = vmatmul.f32.gmra.mxu0 %v2515
        %v4580 = vpop.f32.mrf.mxu0
        %v4581 = vadd.f32 %v4468, %v4580
        %4582 = vmatmul.f32.gmra.mxu0 %v2518
        %v4583 = vpop.f32.mrf.mxu0
        %v4584 = vadd.f32 %v4471, %v4583
        %4585 = vmatmul.f32.gmra.mxu0 %v2521
        %v4586 = vpop.f32.mrf.mxu0
        %v4587 = vadd.f32 %v4474, %v4586
        %4588 = vmatmul.f32.gmra.mxu0 %v2524
        %v4589 = vpop.f32.mrf.mxu0
        %v4590 = vadd.f32 %v4477, %v4589
        %4591 = vmatmul.f32.gmra.mxu0 %v2527
        %v4592 = vpop.f32.mrf.mxu0
        %v4593 = vadd.f32 %v4480, %v4592
        %4594 = vmatmul.f32.gmra.mxu0 %v2530
        %v4595 = vpop.f32.mrf.mxu0
        %v4596 = vadd.f32 %v4483, %v4595
        %4597 = vmatmul.f32.gmra.mxu0 %v2533
        %v4598 = vpop.f32.mrf.mxu0
        %v4599 = vadd.f32 %v4486, %v4598
        %4600 = vmatmul.f32.gmra.mxu0 %v2536
        %v4601 = vpop.f32.mrf.mxu0
        %v4602 = vadd.f32 %v4489, %v4601
        %4603 = vmatmul.f32.gmra.mxu0 %v2539
        %v4604 = vpop.f32.mrf.mxu0
        %v4605 = vadd.f32 %v4492, %v4604
        %4606 = vmatmul.f32.gmra.mxu0 %v2542
        %v4607 = vpop.f32.mrf.mxu0
        %v4608 = vadd.f32 %v4495, %v4607
        %4609 = vmatmul.f32.gmra.mxu0 %v2545
        %v4610 = vpop.f32.mrf.mxu0
        %v4611 = vadd.f32 %v4498, %v4610
        %4612 = vmatmul.f32.gmra.mxu0 %v2548
        %v4613 = vpop.f32.mrf.mxu0
        %v4614 = vadd.f32 %v4501, %v4613
        %4615 = vmatmul.f32.gmra.mxu0 %v2551
        %v4616 = vpop.f32.mrf.mxu0
        %v4617 = vadd.f32 %v4504, %v4616
        %4618 = vmatmul.f32.gmra.mxu0 %v2554
        %v4619 = vpop.f32.mrf.mxu0
        %v4620 = vadd.f32 %v4507, %v4619
        %4621 = vmatmul.f32.gmra.mxu0 %v2557
        %v4622 = vpop.f32.mrf.mxu0
        %v4623 = vadd.f32 %v4510, %v4622
        %4624 = vmatmul.f32.gmra.mxu0 %v2560
        %v4625 = vpop.f32.mrf.mxu0
        %v4626 = vadd.f32 %v4513, %v4625
        %4627 = vmatmul.f32.gmra.mxu0 %v2563
        %v4628 = vpop.f32.mrf.mxu0
        %v4629 = vadd.f32 %v4516, %v4628
        %4630 = vmatmul.f32.gmra.mxu0 %v2566
        %v4631 = vpop.f32.mrf.mxu0
        %v4632 = vadd.f32 %v4519, %v4631
        %4633 = vmatmul.f32.gmra.mxu0 %v2569
        %v4634 = vpop.f32.mrf.mxu0
        %v4635 = vadd.f32 %v4522, %v4634
        %4636 = vmatmul.f32.gmra.mxu0 %v2572
        %v4637 = vpop.f32.mrf.mxu0
        %v4638 = vadd.f32 %v4525, %v4637
        %4639 = vmatmul.f32.gmra.mxu0 %v2575
        %v4640 = vpop.f32.mrf.mxu0
        %v4641 = vadd.f32 %v4528, %v4640
        %4642 = vmatmul.f32.gmra.mxu0 %v2578
        %v4643 = vpop.f32.mrf.mxu0
        %v4644 = vadd.f32 %v4531, %v4643
        %4645 = vmatmul.f32.gmra.mxu0 %v2581
        %v4646 = vpop.f32.mrf.mxu0
        %v4647 = vadd.f32 %v4534, %v4646
        %4648 = vmatmul.f32.gmra.mxu0 %v2584
        %v4649 = vpop.f32.mrf.mxu0
        %v4650 = vadd.f32 %v4537, %v4649
        %4651 = vmatmul.f32.gmra.mxu0 %v2587
        %v4652 = vpop.f32.mrf.mxu0
        %v4653 = vadd.f32 %v4540, %v4652
        %4654 = vmatmul.f32.gmra.mxu0 %v2590
        %v4655 = vpop.f32.mrf.mxu0
        %v4656 = vadd.f32 %v4543, %v4655
        %4657 = vmatmul.f32.gmra.mxu0 %v2593
        %v4658 = vpop.f32.mrf.mxu0
        %v4659 = vadd.f32 %v4546, %v4658
        %4660 = vdwg.mxu0
        %s4661 = sld [smem:[#allocation2 + $0x2]]
        %v4662 = vstv %s4661
        %v4663 = vmul.f32 %v4662, %v3210
        %v4664 = vmul.f32 %v4662, %v3662
        %v4665 = vmul.f32 %v4662, %v4114
        %v4666 = vmul.f32 %v4662, %v4566
        %v4667 = vmul.f32 %v4662, %v3213
        %v4668 = vmul.f32 %v4662, %v3665
        %v4669 = vmul.f32 %v4662, %v4117
        %v4670 = vmul.f32 %v4662, %v4569
        %v4671 = vmul.f32 %v4662, %v3216
        %v4672 = vmul.f32 %v4662, %v3668
        %v4673 = vmul.f32 %v4662, %v4120
        %v4674 = vmul.f32 %v4662, %v4572
        %v4675 = vmul.f32 %v4662, %v3219
        %v4676 = vmul.f32 %v4662, %v3671
        %v4677 = vmul.f32 %v4662, %v4123
        %v4678 = vmul.f32 %v4662, %v4575
        %v4679 = vmul.f32 %v4662, %v3222
        %v4680 = vmul.f32 %v4662, %v3674
        %v4681 = vmul.f32 %v4662, %v4126
        %v4682 = vmul.f32 %v4662, %v4578
        %v4683 = vmul.f32 %v4662, %v3225
        %v4684 = vmul.f32 %v4662, %v3677
        %v4685 = vmul.f32 %v4662, %v4129
        %v4686 = vmul.f32 %v4662, %v4581
        %v4687 = vmul.f32 %v4662, %v3228
        %v4688 = vmul.f32 %v4662, %v3680
        %v4689 = vmul.f32 %v4662, %v4132
        %v4690 = vmul.f32 %v4662, %v4584
        %v4691 = vmul.f32 %v4662, %v3231
        %v4692 = vmul.f32 %v4662, %v3683
        %v4693 = vmul.f32 %v4662, %v4135
        %v4694 = vmul.f32 %v4662, %v4587
        %v4695 = vmul.f32 %v4662, %v3234
        %v4696 = vmul.f32 %v4662, %v3686
        %v4697 = vmul.f32 %v4662, %v4138
        %v4698 = vmul.f32 %v4662, %v4590
        %v4699 = vmul.f32 %v4662, %v3237
        %v4700 = vmul.f32 %v4662, %v3689
        %v4701 = vmul.f32 %v4662, %v4141
        %v4702 = vmul.f32 %v4662, %v4593
        %v4703 = vmul.f32 %v4662, %v3240
        %v4704 = vmul.f32 %v4662, %v3692
        %v4705 = vmul.f32 %v4662, %v4144
        %v4706 = vmul.f32 %v4662, %v4596
        %v4707 = vmul.f32 %v4662, %v3243
        %v4708 = vmul.f32 %v4662, %v3695
        %v4709 = vmul.f32 %v4662, %v4147
        %v4710 = vmul.f32 %v4662, %v4599
        %v4711 = vmul.f32 %v4662, %v3246
        %v4712 = vmul.f32 %v4662, %v3698
        %v4713 = vmul.f32 %v4662, %v4150
        %v4714 = vmul.f32 %v4662, %v4602
        %v4715 = vmul.f32 %v4662, %v3249
        %v4716 = vmul.f32 %v4662, %v3701
        %v4717 = vmul.f32 %v4662, %v4153
        %v4718 = vmul.f32 %v4662, %v4605
        %v4719 = vmul.f32 %v4662, %v3252
        %v4720 = vmul.f32 %v4662, %v3704
        %v4721 = vmul.f32 %v4662, %v4156
        %v4722 = vmul.f32 %v4662, %v4608
        %v4723 = vmul.f32 %v4662, %v3255
        %v4724 = vmul.f32 %v4662, %v3707
        %v4725 = vmul.f32 %v4662, %v4159
        %v4726 = vmul.f32 %v4662, %v4611
        %v4727 = vmul.f32 %v4662, %v3258
        %v4728 = vmul.f32 %v4662, %v3710
        %v4729 = vmul.f32 %v4662, %v4162
        %v4730 = vmul.f32 %v4662, %v4614
        %v4731 = vmul.f32 %v4662, %v3261
        %v4732 = vmul.f32 %v4662, %v3713
        %v4733 = vmul.f32 %v4662, %v4165
        %v4734 = vmul.f32 %v4662, %v4617
        %v4735 = vmul.f32 %v4662, %v3264
        %v4736 = vmul.f32 %v4662, %v3716
        %v4737 = vmul.f32 %v4662, %v4168
        %v4738 = vmul.f32 %v4662, %v4620
        %v4739 = vmul.f32 %v4662, %v3267
        %v4740 = vmul.f32 %v4662, %v3719
        %v4741 = vmul.f32 %v4662, %v4171
        %v4742 = vmul.f32 %v4662, %v4623
        %v4743 = vmul.f32 %v4662, %v3270
        %v4744 = vmul.f32 %v4662, %v3722
        %v4745 = vmul.f32 %v4662, %v4174
        %v4746 = vmul.f32 %v4662, %v4626
        %v4747 = vmul.f32 %v4662, %v3273
        %v4748 = vmul.f32 %v4662, %v3725
        %v4749 = vmul.f32 %v4662, %v4177
        %v4750 = vmul.f32 %v4662, %v4629
        %v4751 = vmul.f32 %v4662, %v3276
        %v4752 = vmul.f32 %v4662, %v3728
        %v4753 = vmul.f32 %v4662, %v4180
        %v4754 = vmul.f32 %v4662, %v4632
        %v4755 = vmul.f32 %v4662, %v3279
        %v4756 = vmul.f32 %v4662, %v3731
        %v4757 = vmul.f32 %v4662, %v4183
        %v4758 = vmul.f32 %v4662, %v4635
        %v4759 = vmul.f32 %v4662, %v3282
        %v4760 = vmul.f32 %v4662, %v3734
        %v4761 = vmul.f32 %v4662, %v4186
        %v4762 = vmul.f32 %v4662, %v4638
        %v4763 = vmul.f32 %v4662, %v3285
        %v4764 = vmul.f32 %v4662, %v3737
        %v4765 = vmul.f32 %v4662, %v4189
        %v4766 = vmul.f32 %v4662, %v4641
        %v4767 = vmul.f32 %v4662, %v3288
        %v4768 = vmul.f32 %v4662, %v3740
        %v4769 = vmul.f32 %v4662, %v4192
        %v4770 = vmul.f32 %v4662, %v4644
        %v4771 = vmul.f32 %v4662, %v3291
        %v4772 = vmul.f32 %v4662, %v3743
        %v4773 = vmul.f32 %v4662, %v4195
        %v4774 = vmul.f32 %v4662, %v4647
        %v4775 = vmul.f32 %v4662, %v3294
        %v4776 = vmul.f32 %v4662, %v3746
        %v4777 = vmul.f32 %v4662, %v4198
        %v4778 = vmul.f32 %v4662, %v4650
        %v4779 = vmul.f32 %v4662, %v3297
        %v4780 = vmul.f32 %v4662, %v3749
        %v4781 = vmul.f32 %v4662, %v4201
        %v4782 = vmul.f32 %v4662, %v4653
        %v4783 = vmul.f32 %v4662, %v3300
        %v4784 = vmul.f32 %v4662, %v3752
        %v4785 = vmul.f32 %v4662, %v4204
        %v4786 = vmul.f32 %v4662, %v4656
        %v4787 = vmul.f32 %v4662, %v3303
        %v4788 = vmul.f32 %v4662, %v3755
        %v4789 = vmul.f32 %v4662, %v4207
        %v4790 = vmul.f32 %v4662, %v4659
        %v4791 = vadd.f32 %v2725, %v4663
        %v4792 = vadd.f32 %v2726, %v4664
        %v4793 = vadd.f32 %v2727, %v4665
        %v4794 = vadd.f32 %v2728, %v4666
        %v4795 = vadd.f32 %v2729, %v4667
        %v4796 = vadd.f32 %v2730, %v4668
        %v4797 = vadd.f32 %v2731, %v4669
        %v4798 = vadd.f32 %v2732, %v4670
        %v4799 = vadd.f32 %v2733, %v4671
        %v4800 = vadd.f32 %v2734, %v4672
        %v4801 = vadd.f32 %v2735, %v4673
        %v4802 = vadd.f32 %v2736, %v4674
        %v4803 = vadd.f32 %v2737, %v4675
        %v4804 = vadd.f32 %v2738, %v4676
        %v4805 = vadd.f32 %v2739, %v4677
        %v4806 = vadd.f32 %v2740, %v4678
        %v4807 = vadd.f32 %v2741, %v4679
        %v4808 = vadd.f32 %v2742, %v4680
        %v4809 = vadd.f32 %v2743, %v4681
        %v4810 = vadd.f32 %v2744, %v4682
        %v4811 = vadd.f32 %v2745, %v4683
        %v4812 = vadd.f32 %v2746, %v4684
        %v4813 = vadd.f32 %v2747, %v4685
        %v4814 = vadd.f32 %v2748, %v4686
        %v4815 = vadd.f32 %v2749, %v4687
        %v4816 = vadd.f32 %v2750, %v4688
        %v4817 = vadd.f32 %v2751, %v4689
        %v4818 = vadd.f32 %v2752, %v4690
        %v4819 = vadd.f32 %v2753, %v4691
        %v4820 = vadd.f32 %v2754, %v4692
        %v4821 = vadd.f32 %v2755, %v4693
        %v4822 = vadd.f32 %v2756, %v4694
        %v4823 = vadd.f32 %v2757, %v4695
        %v4824 = vadd.f32 %v2758, %v4696
        %v4825 = vadd.f32 %v2759, %v4697
        %v4826 = vadd.f32 %v2760, %v4698
        %v4827 = vadd.f32 %v2761, %v4699
        %v4828 = vadd.f32 %v2762, %v4700
        %v4829 = vadd.f32 %v2763, %v4701
        %v4830 = vadd.f32 %v2764, %v4702
        %v4831 = vadd.f32 %v2765, %v4703
        %v4832 = vadd.f32 %v2766, %v4704
        %v4833 = vadd.f32 %v2767, %v4705
        %v4834 = vadd.f32 %v2768, %v4706
        %v4835 = vadd.f32 %v2769, %v4707
        %v4836 = vadd.f32 %v2770, %v4708
        %v4837 = vadd.f32 %v2771, %v4709
        %v4838 = vadd.f32 %v2772, %v4710
        %v4839 = vadd.f32 %v2773, %v4711
        %v4840 = vadd.f32 %v2774, %v4712
        %v4841 = vadd.f32 %v2775, %v4713
        %v4842 = vadd.f32 %v2776, %v4714
        %v4843 = vadd.f32 %v2777, %v4715
        %v4844 = vadd.f32 %v2778, %v4716
        %v4845 = vadd.f32 %v2779, %v4717
        %v4846 = vadd.f32 %v2780, %v4718
        %v4847 = vadd.f32 %v2781, %v4719
        %v4848 = vadd.f32 %v2782, %v4720
        %v4849 = vadd.f32 %v2783, %v4721
        %v4850 = vadd.f32 %v2784, %v4722
        %v4851 = vadd.f32 %v2785, %v4723
        %v4852 = vadd.f32 %v2786, %v4724
        %v4853 = vadd.f32 %v2787, %v4725
        %v4854 = vadd.f32 %v2788, %v4726
        %v4855 = vadd.f32 %v2789, %v4727
        %v4856 = vadd.f32 %v2790, %v4728
        %v4857 = vadd.f32 %v2791, %v4729
        %v4858 = vadd.f32 %v2792, %v4730
        %v4859 = vadd.f32 %v2793, %v4731
        %v4860 = vadd.f32 %v2794, %v4732
        %v4861 = vadd.f32 %v2795, %v4733
        %v4862 = vadd.f32 %v2796, %v4734
        %v4863 = vadd.f32 %v2797, %v4735
        %v4864 = vadd.f32 %v2798, %v4736
        %v4865 = vadd.f32 %v2799, %v4737
        %v4866 = vadd.f32 %v2800, %v4738
        %v4867 = vadd.f32 %v2801, %v4739
        %v4868 = vadd.f32 %v2802, %v4740
        %v4869 = vadd.f32 %v2803, %v4741
        %v4870 = vadd.f32 %v2804, %v4742
        %v4871 = vadd.f32 %v2805, %v4743
        %v4872 = vadd.f32 %v2806, %v4744
        %v4873 = vadd.f32 %v2807, %v4745
        %v4874 = vadd.f32 %v2808, %v4746
        %v4875 = vadd.f32 %v2809, %v4747
        %v4876 = vadd.f32 %v2810, %v4748
        %v4877 = vadd.f32 %v2811, %v4749
        %v4878 = vadd.f32 %v2812, %v4750
        %v4879 = vadd.f32 %v2813, %v4751
        %v4880 = vadd.f32 %v2814, %v4752
        %v4881 = vadd.f32 %v2815, %v4753
        %v4882 = vadd.f32 %v2816, %v4754
        %v4883 = vadd.f32 %v2817, %v4755
        %v4884 = vadd.f32 %v2818, %v4756
        %v4885 = vadd.f32 %v2819, %v4757
        %v4886 = vadd.f32 %v2820, %v4758
        %v4887 = vadd.f32 %v2821, %v4759
        %v4888 = vadd.f32 %v2822, %v4760
        %v4889 = vadd.f32 %v2823, %v4761
        %v4890 = vadd.f32 %v2824, %v4762
        %v4891 = vadd.f32 %v2825, %v4763
        %v4892 = vadd.f32 %v2826, %v4764
        %v4893 = vadd.f32 %v2827, %v4765
        %v4894 = vadd.f32 %v2828, %v4766
        %v4895 = vadd.f32 %v2829, %v4767
        %v4896 = vadd.f32 %v2830, %v4768
        %v4897 = vadd.f32 %v2831, %v4769
        %v4898 = vadd.f32 %v2832, %v4770
        %v4899 = vadd.f32 %v2833, %v4771
        %v4900 = vadd.f32 %v2834, %v4772
        %v4901 = vadd.f32 %v2835, %v4773
        %v4902 = vadd.f32 %v2836, %v4774
        %v4903 = vadd.f32 %v2837, %v4775
        %v4904 = vadd.f32 %v2838, %v4776
        %v4905 = vadd.f32 %v2839, %v4777
        %v4906 = vadd.f32 %v2840, %v4778
        %v4907 = vadd.f32 %v2841, %v4779
        %v4908 = vadd.f32 %v2842, %v4780
        %v4909 = vadd.f32 %v2843, %v4781
        %v4910 = vadd.f32 %v2844, %v4782
        %v4911 = vadd.f32 %v2845, %v4783
        %v4912 = vadd.f32 %v2846, %v4784
        %v4913 = vadd.f32 %v2847, %v4785
        %v4914 = vadd.f32 %v2848, %v4786
        %v4915 = vadd.f32 %v2849, %v4787
        %v4916 = vadd.f32 %v2850, %v4788
        %v4917 = vadd.f32 %v2851, %v4789
        %v4918 = vadd.f32 %v2852, %v4790
        %4919 = vmatpush.msra.mxu0 %v328
        %4920 = vmatpush.msra.mxu0 %v324
        %4921 = vmatpush.msra.mxu0 %v320
        %4922 = vmatpush.msra.mxu0 %v316
        %4923 = vmatpush.msra.mxu0 %v312
        %4924 = vmatpush.msra.mxu0 %v308
        %4925 = vmatpush.msra.mxu0 %v304
        %4926 = vmatpush.msra.mxu0 %v300
        %4927 = vmatpush.msra.mxu0 %v296
        %4928 = vmatpush.msra.mxu0 %v292
        %4929 = vmatpush.msra.mxu0 %v288
        %4930 = vmatpush.msra.mxu0 %v284
        %4931 = vmatpush.msra.mxu0 %v280
        %4932 = vmatpush.msra.mxu0 %v276
        %4933 = vmatpush.msra.mxu0 %v272
        %4934 = vmatpush.msra.mxu0 %v268
        %4935 = vmatmul.f32.gmra.mxu0 %v3210
        %v4936 = vpop.f32.mrf.mxu0
        %v4937 = vadd.f32 0.0, %v4936
        %4938 = vmatmul.f32.gmra.mxu0 %v3213
        %v4939 = vpop.f32.mrf.mxu0
        %v4940 = vadd.f32 0.0, %v4939
        %4941 = vmatmul.f32.gmra.mxu0 %v3216
        %v4942 = vpop.f32.mrf.mxu0
        %v4943 = vadd.f32 0.0, %v4942
        %4944 = vmatmul.f32.gmra.mxu0 %v3219
        %v4945 = vpop.f32.mrf.mxu0
        %v4946 = vadd.f32 0.0, %v4945
        %4947 = vmatmul.f32.gmra.mxu0 %v3222
        %v4948 = vpop.f32.mrf.mxu0
        %v4949 = vadd.f32 0.0, %v4948
        %4950 = vmatmul.f32.gmra.mxu0 %v3225
        %v4951 = vpop.f32.mrf.mxu0
        %v4952 = vadd.f32 0.0, %v4951
        %4953 = vmatmul.f32.gmra.mxu0 %v3228
        %v4954 = vpop.f32.mrf.mxu0
        %v4955 = vadd.f32 0.0, %v4954
        %4956 = vmatmul.f32.gmra.mxu0 %v3231
        %v4957 = vpop.f32.mrf.mxu0
        %v4958 = vadd.f32 0.0, %v4957
        %4959 = vmatmul.f32.gmra.mxu0 %v3234
        %v4960 = vpop.f32.mrf.mxu0
        %v4961 = vadd.f32 0.0, %v4960
        %4962 = vmatmul.f32.gmra.mxu0 %v3237
        %v4963 = vpop.f32.mrf.mxu0
        %v4964 = vadd.f32 0.0, %v4963
        %4965 = vmatmul.f32.gmra.mxu0 %v3240
        %v4966 = vpop.f32.mrf.mxu0
        %v4967 = vadd.f32 0.0, %v4966
        %4968 = vmatmul.f32.gmra.mxu0 %v3243
        %v4969 = vpop.f32.mrf.mxu0
        %v4970 = vadd.f32 0.0, %v4969
        %4971 = vmatmul.f32.gmra.mxu0 %v3246
        %v4972 = vpop.f32.mrf.mxu0
        %v4973 = vadd.f32 0.0, %v4972
        %4974 = vmatmul.f32.gmra.mxu0 %v3249
        %v4975 = vpop.f32.mrf.mxu0
        %v4976 = vadd.f32 0.0, %v4975
        %4977 = vmatmul.f32.gmra.mxu0 %v3252
        %v4978 = vpop.f32.mrf.mxu0
        %v4979 = vadd.f32 0.0, %v4978
        %4980 = vmatmul.f32.gmra.mxu0 %v3255
        %v4981 = vpop.f32.mrf.mxu0
        %v4982 = vadd.f32 0.0, %v4981
        %4983 = vmatmul.f32.gmra.mxu0 %v3258
        %v4984 = vpop.f32.mrf.mxu0
        %v4985 = vadd.f32 0.0, %v4984
        %4986 = vmatmul.f32.gmra.mxu0 %v3261
        %v4987 = vpop.f32.mrf.mxu0
        %v4988 = vadd.f32 0.0, %v4987
        %4989 = vmatmul.f32.gmra.mxu0 %v3264
        %v4990 = vpop.f32.mrf.mxu0
        %v4991 = vadd.f32 0.0, %v4990
        %4992 = vmatmul.f32.gmra.mxu0 %v3267
        %v4993 = vpop.f32.mrf.mxu0
        %v4994 = vadd.f32 0.0, %v4993
        %4995 = vmatmul.f32.gmra.mxu0 %v3270
        %v4996 = vpop.f32.mrf.mxu0
        %v4997 = vadd.f32 0.0, %v4996
        %4998 = vmatmul.f32.gmra.mxu0 %v3273
        %v4999 = vpop.f32.mrf.mxu0
        %v5000 = vadd.f32 0.0, %v4999
        %5001 = vmatmul.f32.gmra.mxu0 %v3276
        %v5002 = vpop.f32.mrf.mxu0
        %v5003 = vadd.f32 0.0, %v5002
        %5004 = vmatmul.f32.gmra.mxu0 %v3279
        %v5005 = vpop.f32.mrf.mxu0
        %v5006 = vadd.f32 0.0, %v5005
        %5007 = vmatmul.f32.gmra.mxu0 %v3282
        %v5008 = vpop.f32.mrf.mxu0
        %v5009 = vadd.f32 0.0, %v5008
        %5010 = vmatmul.f32.gmra.mxu0 %v3285
        %v5011 = vpop.f32.mrf.mxu0
        %v5012 = vadd.f32 0.0, %v5011
        %5013 = vmatmul.f32.gmra.mxu0 %v3288
        %v5014 = vpop.f32.mrf.mxu0
        %v5015 = vadd.f32 0.0, %v5014
        %5016 = vmatmul.f32.gmra.mxu0 %v3291
        %v5017 = vpop.f32.mrf.mxu0
        %v5018 = vadd.f32 0.0, %v5017
        %5019 = vmatmul.f32.gmra.mxu0 %v3294
        %v5020 = vpop.f32.mrf.mxu0
        %v5021 = vadd.f32 0.0, %v5020
        %5022 = vmatmul.f32.gmra.mxu0 %v3297
        %v5023 = vpop.f32.mrf.mxu0
        %v5024 = vadd.f32 0.0, %v5023
        %5025 = vmatmul.f32.gmra.mxu0 %v3300
        %v5026 = vpop.f32.mrf.mxu0
        %v5027 = vadd.f32 0.0, %v5026
        %5028 = vmatmul.f32.gmra.mxu0 %v3303
        %v5029 = vpop.f32.mrf.mxu0
        %v5030 = vadd.f32 0.0, %v5029
        %5031 = vdwg.mxu0
        %5032 = vmatpush.msra.mxu0 %v392
        %5033 = vmatpush.msra.mxu0 %v388
        %5034 = vmatpush.msra.mxu0 %v384
        %5035 = vmatpush.msra.mxu0 %v380
        %5036 = vmatpush.msra.mxu0 %v376
        %5037 = vmatpush.msra.mxu0 %v372
        %5038 = vmatpush.msra.mxu0 %v368
        %5039 = vmatpush.msra.mxu0 %v364
        %5040 = vmatpush.msra.mxu0 %v360
        %5041 = vmatpush.msra.mxu0 %v356
        %5042 = vmatpush.msra.mxu0 %v352
        %5043 = vmatpush.msra.mxu0 %v348
        %5044 = vmatpush.msra.mxu0 %v344
        %5045 = vmatpush.msra.mxu0 %v340
        %5046 = vmatpush.msra.mxu0 %v336
        %5047 = vmatpush.msra.mxu0 %v332
        %5048 = vmatmul.f32.gmra.mxu0 %v3662
        %v5049 = vpop.f32.mrf.mxu0
        %v5050 = vadd.f32 %v4937, %v5049
        %5051 = vmatmul.f32.gmra.mxu0 %v3665
        %v5052 = vpop.f32.mrf.mxu0
        %v5053 = vadd.f32 %v4940, %v5052
        %5054 = vmatmul.f32.gmra.mxu0 %v3668
        %v5055 = vpop.f32.mrf.mxu0
        %v5056 = vadd.f32 %v4943, %v5055
        %5057 = vmatmul.f32.gmra.mxu0 %v3671
        %v5058 = vpop.f32.mrf.mxu0
        %v5059 = vadd.f32 %v4946, %v5058
        %5060 = vmatmul.f32.gmra.mxu0 %v3674
        %v5061 = vpop.f32.mrf.mxu0
        %v5062 = vadd.f32 %v4949, %v5061
        %5063 = vmatmul.f32.gmra.mxu0 %v3677
        %v5064 = vpop.f32.mrf.mxu0
        %v5065 = vadd.f32 %v4952, %v5064
        %5066 = vmatmul.f32.gmra.mxu0 %v3680
        %v5067 = vpop.f32.mrf.mxu0
        %v5068 = vadd.f32 %v4955, %v5067
        %5069 = vmatmul.f32.gmra.mxu0 %v3683
        %v5070 = vpop.f32.mrf.mxu0
        %v5071 = vadd.f32 %v4958, %v5070
        %5072 = vmatmul.f32.gmra.mxu0 %v3686
        %v5073 = vpop.f32.mrf.mxu0
        %v5074 = vadd.f32 %v4961, %v5073
        %5075 = vmatmul.f32.gmra.mxu0 %v3689
        %v5076 = vpop.f32.mrf.mxu0
        %v5077 = vadd.f32 %v4964, %v5076
        %5078 = vmatmul.f32.gmra.mxu0 %v3692
        %v5079 = vpop.f32.mrf.mxu0
        %v5080 = vadd.f32 %v4967, %v5079
        %5081 = vmatmul.f32.gmra.mxu0 %v3695
        %v5082 = vpop.f32.mrf.mxu0
        %v5083 = vadd.f32 %v4970, %v5082
        %5084 = vmatmul.f32.gmra.mxu0 %v3698
        %v5085 = vpop.f32.mrf.mxu0
        %v5086 = vadd.f32 %v4973, %v5085
        %5087 = vmatmul.f32.gmra.mxu0 %v3701
        %v5088 = vpop.f32.mrf.mxu0
        %v5089 = vadd.f32 %v4976, %v5088
        %5090 = vmatmul.f32.gmra.mxu0 %v3704
        %v5091 = vpop.f32.mrf.mxu0
        %v5092 = vadd.f32 %v4979, %v5091
        %5093 = vmatmul.f32.gmra.mxu0 %v3707
        %v5094 = vpop.f32.mrf.mxu0
        %v5095 = vadd.f32 %v4982, %v5094
        %5096 = vmatmul.f32.gmra.mxu0 %v3710
        %v5097 = vpop.f32.mrf.mxu0
        %v5098 = vadd.f32 %v4985, %v5097
        %5099 = vmatmul.f32.gmra.mxu0 %v3713
        %v5100 = vpop.f32.mrf.mxu0
        %v5101 = vadd.f32 %v4988, %v5100
        %5102 = vmatmul.f32.gmra.mxu0 %v3716
        %v5103 = vpop.f32.mrf.mxu0
        %v5104 = vadd.f32 %v4991, %v5103
        %5105 = vmatmul.f32.gmra.mxu0 %v3719
        %v5106 = vpop.f32.mrf.mxu0
        %v5107 = vadd.f32 %v4994, %v5106
        %5108 = vmatmul.f32.gmra.mxu0 %v3722
        %v5109 = vpop.f32.mrf.mxu0
        %v5110 = vadd.f32 %v4997, %v5109
        %5111 = vmatmul.f32.gmra.mxu0 %v3725
        %v5112 = vpop.f32.mrf.mxu0
        %v5113 = vadd.f32 %v5000, %v5112
        %5114 = vmatmul.f32.gmra.mxu0 %v3728
        %v5115 = vpop.f32.mrf.mxu0
        %v5116 = vadd.f32 %v5003, %v5115
        %5117 = vmatmul.f32.gmra.mxu0 %v3731
        %v5118 = vpop.f32.mrf.mxu0
        %v5119 = vadd.f32 %v5006, %v5118
        %5120 = vmatmul.f32.gmra.mxu0 %v3734
        %v5121 = vpop.f32.mrf.mxu0
        %v5122 = vadd.f32 %v5009, %v5121
        %5123 = vmatmul.f32.gmra.mxu0 %v3737
        %v5124 = vpop.f32.mrf.mxu0
        %v5125 = vadd.f32 %v5012, %v5124
        %5126 = vmatmul.f32.gmra.mxu0 %v3740
        %v5127 = vpop.f32.mrf.mxu0
        %v5128 = vadd.f32 %v5015, %v5127
        %5129 = vmatmul.f32.gmra.mxu0 %v3743
        %v5130 = vpop.f32.mrf.mxu0
        %v5131 = vadd.f32 %v5018, %v5130
        %5132 = vmatmul.f32.gmra.mxu0 %v3746
        %v5133 = vpop.f32.mrf.mxu0
        %v5134 = vadd.f32 %v5021, %v5133
        %5135 = vmatmul.f32.gmra.mxu0 %v3749
        %v5136 = vpop.f32.mrf.mxu0
        %v5137 = vadd.f32 %v5024, %v5136
        %5138 = vmatmul.f32.gmra.mxu0 %v3752
        %v5139 = vpop.f32.mrf.mxu0
        %v5140 = vadd.f32 %v5027, %v5139
        %5141 = vmatmul.f32.gmra.mxu0 %v3755
        %v5142 = vpop.f32.mrf.mxu0
        %v5143 = vadd.f32 %v5030, %v5142
        %5144 = vdwg.mxu0
        %5145 = vmatpush.msra.mxu0 %v456
        %5146 = vmatpush.msra.mxu0 %v452
        %5147 = vmatpush.msra.mxu0 %v448
        %5148 = vmatpush.msra.mxu0 %v444
        %5149 = vmatpush.msra.mxu0 %v440
        %5150 = vmatpush.msra.mxu0 %v436
        %5151 = vmatpush.msra.mxu0 %v432
        %5152 = vmatpush.msra.mxu0 %v428
        %5153 = vmatpush.msra.mxu0 %v424
        %5154 = vmatpush.msra.mxu0 %v420
        %5155 = vmatpush.msra.mxu0 %v416
        %5156 = vmatpush.msra.mxu0 %v412
        %5157 = vmatpush.msra.mxu0 %v408
        %5158 = vmatpush.msra.mxu0 %v404
        %5159 = vmatpush.msra.mxu0 %v400
        %5160 = vmatpush.msra.mxu0 %v396
        %5161 = vmatmul.f32.gmra.mxu0 %v4114
        %v5162 = vpop.f32.mrf.mxu0
        %v5163 = vadd.f32 %v5050, %v5162
        %5164 = vmatmul.f32.gmra.mxu0 %v4117
        %v5165 = vpop.f32.mrf.mxu0
        %v5166 = vadd.f32 %v5053, %v5165
        %5167 = vmatmul.f32.gmra.mxu0 %v4120
        %v5168 = vpop.f32.mrf.mxu0
        %v5169 = vadd.f32 %v5056, %v5168
        %5170 = vmatmul.f32.gmra.mxu0 %v4123
        %v5171 = vpop.f32.mrf.mxu0
        %v5172 = vadd.f32 %v5059, %v5171
        %5173 = vmatmul.f32.gmra.mxu0 %v4126
        %v5174 = vpop.f32.mrf.mxu0
        %v5175 = vadd.f32 %v5062, %v5174
        %5176 = vmatmul.f32.gmra.mxu0 %v4129
        %v5177 = vpop.f32.mrf.mxu0
        %v5178 = vadd.f32 %v5065, %v5177
        %5179 = vmatmul.f32.gmra.mxu0 %v4132
        %v5180 = vpop.f32.mrf.mxu0
        %v5181 = vadd.f32 %v5068, %v5180
        %5182 = vmatmul.f32.gmra.mxu0 %v4135
        %v5183 = vpop.f32.mrf.mxu0
        %v5184 = vadd.f32 %v5071, %v5183
        %5185 = vmatmul.f32.gmra.mxu0 %v4138
        %v5186 = vpop.f32.mrf.mxu0
        %v5187 = vadd.f32 %v5074, %v5186
        %5188 = vmatmul.f32.gmra.mxu0 %v4141
        %v5189 = vpop.f32.mrf.mxu0
        %v5190 = vadd.f32 %v5077, %v5189
        %5191 = vmatmul.f32.gmra.mxu0 %v4144
        %v5192 = vpop.f32.mrf.mxu0
        %v5193 = vadd.f32 %v5080, %v5192
        %5194 = vmatmul.f32.gmra.mxu0 %v4147
        %v5195 = vpop.f32.mrf.mxu0
        %v5196 = vadd.f32 %v5083, %v5195
        %5197 = vmatmul.f32.gmra.mxu0 %v4150
        %v5198 = vpop.f32.mrf.mxu0
        %v5199 = vadd.f32 %v5086, %v5198
        %5200 = vmatmul.f32.gmra.mxu0 %v4153
        %v5201 = vpop.f32.mrf.mxu0
        %v5202 = vadd.f32 %v5089, %v5201
        %5203 = vmatmul.f32.gmra.mxu0 %v4156
        %v5204 = vpop.f32.mrf.mxu0
        %v5205 = vadd.f32 %v5092, %v5204
        %5206 = vmatmul.f32.gmra.mxu0 %v4159
        %v5207 = vpop.f32.mrf.mxu0
        %v5208 = vadd.f32 %v5095, %v5207
        %5209 = vmatmul.f32.gmra.mxu0 %v4162
        %v5210 = vpop.f32.mrf.mxu0
        %v5211 = vadd.f32 %v5098, %v5210
        %5212 = vmatmul.f32.gmra.mxu0 %v4165
        %v5213 = vpop.f32.mrf.mxu0
        %v5214 = vadd.f32 %v5101, %v5213
        %5215 = vmatmul.f32.gmra.mxu0 %v4168
        %v5216 = vpop.f32.mrf.mxu0
        %v5217 = vadd.f32 %v5104, %v5216
        %5218 = vmatmul.f32.gmra.mxu0 %v4171
        %v5219 = vpop.f32.mrf.mxu0
        %v5220 = vadd.f32 %v5107, %v5219
        %5221 = vmatmul.f32.gmra.mxu0 %v4174
        %v5222 = vpop.f32.mrf.mxu0
        %v5223 = vadd.f32 %v5110, %v5222
        %5224 = vmatmul.f32.gmra.mxu0 %v4177
        %v5225 = vpop.f32.mrf.mxu0
        %v5226 = vadd.f32 %v5113, %v5225
        %5227 = vmatmul.f32.gmra.mxu0 %v4180
        %v5228 = vpop.f32.mrf.mxu0
        %v5229 = vadd.f32 %v5116, %v5228
        %5230 = vmatmul.f32.gmra.mxu0 %v4183
        %v5231 = vpop.f32.mrf.mxu0
        %v5232 = vadd.f32 %v5119, %v5231
        %5233 = vmatmul.f32.gmra.mxu0 %v4186
        %v5234 = vpop.f32.mrf.mxu0
        %v5235 = vadd.f32 %v5122, %v5234
        %5236 = vmatmul.f32.gmra.mxu0 %v4189
        %v5237 = vpop.f32.mrf.mxu0
        %v5238 = vadd.f32 %v5125, %v5237
        %5239 = vmatmul.f32.gmra.mxu0 %v4192
        %v5240 = vpop.f32.mrf.mxu0
        %v5241 = vadd.f32 %v5128, %v5240
        %5242 = vmatmul.f32.gmra.mxu0 %v4195
        %v5243 = vpop.f32.mrf.mxu0
        %v5244 = vadd.f32 %v5131, %v5243
        %5245 = vmatmul.f32.gmra.mxu0 %v4198
        %v5246 = vpop.f32.mrf.mxu0
        %v5247 = vadd.f32 %v5134, %v5246
        %5248 = vmatmul.f32.gmra.mxu0 %v4201
        %v5249 = vpop.f32.mrf.mxu0
        %v5250 = vadd.f32 %v5137, %v5249
        %5251 = vmatmul.f32.gmra.mxu0 %v4204
        %v5252 = vpop.f32.mrf.mxu0
        %v5253 = vadd.f32 %v5140, %v5252
        %5254 = vmatmul.f32.gmra.mxu0 %v4207
        %v5255 = vpop.f32.mrf.mxu0
        %v5256 = vadd.f32 %v5143, %v5255
        %5257 = vdwg.mxu0
        %5258 = vmatpush.msra.mxu0 %v520
        %5259 = vmatpush.msra.mxu0 %v516
        %5260 = vmatpush.msra.mxu0 %v512
        %5261 = vmatpush.msra.mxu0 %v508
        %5262 = vmatpush.msra.mxu0 %v504
        %5263 = vmatpush.msra.mxu0 %v500
        %5264 = vmatpush.msra.mxu0 %v496
        %5265 = vmatpush.msra.mxu0 %v492
        %5266 = vmatpush.msra.mxu0 %v488
        %5267 = vmatpush.msra.mxu0 %v484
        %5268 = vmatpush.msra.mxu0 %v480
        %5269 = vmatpush.msra.mxu0 %v476
        %5270 = vmatpush.msra.mxu0 %v472
        %5271 = vmatpush.msra.mxu0 %v468
        %5272 = vmatpush.msra.mxu0 %v464
        %5273 = vmatpush.msra.mxu0 %v460
        %5274 = vmatmul.f32.gmra.mxu0 %v4566
        %v5275 = vpop.f32.mrf.mxu0
        %v5276 = vadd.f32 %v5163, %v5275
        %5277 = vmatmul.f32.gmra.mxu0 %v4569
        %v5278 = vpop.f32.mrf.mxu0
        %v5279 = vadd.f32 %v5166, %v5278
        %5280 = vmatmul.f32.gmra.mxu0 %v4572
        %v5281 = vpop.f32.mrf.mxu0
        %v5282 = vadd.f32 %v5169, %v5281
        %5283 = vmatmul.f32.gmra.mxu0 %v4575
        %v5284 = vpop.f32.mrf.mxu0
        %v5285 = vadd.f32 %v5172, %v5284
        %5286 = vmatmul.f32.gmra.mxu0 %v4578
        %v5287 = vpop.f32.mrf.mxu0
        %v5288 = vadd.f32 %v5175, %v5287
        %5289 = vmatmul.f32.gmra.mxu0 %v4581
        %v5290 = vpop.f32.mrf.mxu0
        %v5291 = vadd.f32 %v5178, %v5290
        %5292 = vmatmul.f32.gmra.mxu0 %v4584
        %v5293 = vpop.f32.mrf.mxu0
        %v5294 = vadd.f32 %v5181, %v5293
        %5295 = vmatmul.f32.gmra.mxu0 %v4587
        %v5296 = vpop.f32.mrf.mxu0
        %v5297 = vadd.f32 %v5184, %v5296
        %5298 = vmatmul.f32.gmra.mxu0 %v4590
        %v5299 = vpop.f32.mrf.mxu0
        %v5300 = vadd.f32 %v5187, %v5299
        %5301 = vmatmul.f32.gmra.mxu0 %v4593
        %v5302 = vpop.f32.mrf.mxu0
        %v5303 = vadd.f32 %v5190, %v5302
        %5304 = vmatmul.f32.gmra.mxu0 %v4596
        %v5305 = vpop.f32.mrf.mxu0
        %v5306 = vadd.f32 %v5193, %v5305
        %5307 = vmatmul.f32.gmra.mxu0 %v4599
        %v5308 = vpop.f32.mrf.mxu0
        %v5309 = vadd.f32 %v5196, %v5308
        %5310 = vmatmul.f32.gmra.mxu0 %v4602
        %v5311 = vpop.f32.mrf.mxu0
        %v5312 = vadd.f32 %v5199, %v5311
        %5313 = vmatmul.f32.gmra.mxu0 %v4605
        %v5314 = vpop.f32.mrf.mxu0
        %v5315 = vadd.f32 %v5202, %v5314
        %5316 = vmatmul.f32.gmra.mxu0 %v4608
        %v5317 = vpop.f32.mrf.mxu0
        %v5318 = vadd.f32 %v5205, %v5317
        %5319 = vmatmul.f32.gmra.mxu0 %v4611
        %v5320 = vpop.f32.mrf.mxu0
        %v5321 = vadd.f32 %v5208, %v5320
        %5322 = vmatmul.f32.gmra.mxu0 %v4614
        %v5323 = vpop.f32.mrf.mxu0
        %v5324 = vadd.f32 %v5211, %v5323
        %5325 = vmatmul.f32.gmra.mxu0 %v4617
        %v5326 = vpop.f32.mrf.mxu0
        %v5327 = vadd.f32 %v5214, %v5326
        %5328 = vmatmul.f32.gmra.mxu0 %v4620
        %v5329 = vpop.f32.mrf.mxu0
        %v5330 = vadd.f32 %v5217, %v5329
        %5331 = vmatmul.f32.gmra.mxu0 %v4623
        %v5332 = vpop.f32.mrf.mxu0
        %v5333 = vadd.f32 %v5220, %v5332
        %5334 = vmatmul.f32.gmra.mxu0 %v4626
        %v5335 = vpop.f32.mrf.mxu0
        %v5336 = vadd.f32 %v5223, %v5335
        %5337 = vmatmul.f32.gmra.mxu0 %v4629
        %v5338 = vpop.f32.mrf.mxu0
        %v5339 = vadd.f32 %v5226, %v5338
        %5340 = vmatmul.f32.gmra.mxu0 %v4632
        %v5341 = vpop.f32.mrf.mxu0
        %v5342 = vadd.f32 %v5229, %v5341
        %5343 = vmatmul.f32.gmra.mxu0 %v4635
        %v5344 = vpop.f32.mrf.mxu0
        %v5345 = vadd.f32 %v5232, %v5344
        %5346 = vmatmul.f32.gmra.mxu0 %v4638
        %v5347 = vpop.f32.mrf.mxu0
        %v5348 = vadd.f32 %v5235, %v5347
        %5349 = vmatmul.f32.gmra.mxu0 %v4641
        %v5350 = vpop.f32.mrf.mxu0
        %v5351 = vadd.f32 %v5238, %v5350
        %5352 = vmatmul.f32.gmra.mxu0 %v4644
        %v5353 = vpop.f32.mrf.mxu0
        %v5354 = vadd.f32 %v5241, %v5353
        %5355 = vmatmul.f32.gmra.mxu0 %v4647
        %v5356 = vpop.f32.mrf.mxu0
        %v5357 = vadd.f32 %v5244, %v5356
        %5358 = vmatmul.f32.gmra.mxu0 %v4650
        %v5359 = vpop.f32.mrf.mxu0
        %v5360 = vadd.f32 %v5247, %v5359
        %5361 = vmatmul.f32.gmra.mxu0 %v4653
        %v5362 = vpop.f32.mrf.mxu0
        %v5363 = vadd.f32 %v5250, %v5362
        %5364 = vmatmul.f32.gmra.mxu0 %v4656
        %v5365 = vpop.f32.mrf.mxu0
        %v5366 = vadd.f32 %v5253, %v5365
        %5367 = vmatmul.f32.gmra.mxu0 %v4659
        %v5368 = vpop.f32.mrf.mxu0
        %v5369 = vadd.f32 %v5256, %v5368
        %5370 = vdwg.mxu0
        %5371 = vmatpush.msra.mxu0 %v329
        %5372 = vmatpush.msra.mxu0 %v325
        %5373 = vmatpush.msra.mxu0 %v321
        %5374 = vmatpush.msra.mxu0 %v317
        %5375 = vmatpush.msra.mxu0 %v313
        %5376 = vmatpush.msra.mxu0 %v309
        %5377 = vmatpush.msra.mxu0 %v305
        %5378 = vmatpush.msra.mxu0 %v301
        %5379 = vmatpush.msra.mxu0 %v297
        %5380 = vmatpush.msra.mxu0 %v293
        %5381 = vmatpush.msra.mxu0 %v289
        %5382 = vmatpush.msra.mxu0 %v285
        %5383 = vmatpush.msra.mxu0 %v281
        %5384 = vmatpush.msra.mxu0 %v277
        %5385 = vmatpush.msra.mxu0 %v273
        %5386 = vmatpush.msra.mxu0 %v269
        %5387 = vmatmul.f32.gmra.mxu0 %v3210
        %v5388 = vpop.f32.mrf.mxu0
        %v5389 = vadd.f32 0.0, %v5388
        %5390 = vmatmul.f32.gmra.mxu0 %v3213
        %v5391 = vpop.f32.mrf.mxu0
        %v5392 = vadd.f32 0.0, %v5391
        %5393 = vmatmul.f32.gmra.mxu0 %v3216
        %v5394 = vpop.f32.mrf.mxu0
        %v5395 = vadd.f32 0.0, %v5394
        %5396 = vmatmul.f32.gmra.mxu0 %v3219
        %v5397 = vpop.f32.mrf.mxu0
        %v5398 = vadd.f32 0.0, %v5397
        %5399 = vmatmul.f32.gmra.mxu0 %v3222
        %v5400 = vpop.f32.mrf.mxu0
        %v5401 = vadd.f32 0.0, %v5400
        %5402 = vmatmul.f32.gmra.mxu0 %v3225
        %v5403 = vpop.f32.mrf.mxu0
        %v5404 = vadd.f32 0.0, %v5403
        %5405 = vmatmul.f32.gmra.mxu0 %v3228
        %v5406 = vpop.f32.mrf.mxu0
        %v5407 = vadd.f32 0.0, %v5406
        %5408 = vmatmul.f32.gmra.mxu0 %v3231
        %v5409 = vpop.f32.mrf.mxu0
        %v5410 = vadd.f32 0.0, %v5409
        %5411 = vmatmul.f32.gmra.mxu0 %v3234
        %v5412 = vpop.f32.mrf.mxu0
        %v5413 = vadd.f32 0.0, %v5412
        %5414 = vmatmul.f32.gmra.mxu0 %v3237
        %v5415 = vpop.f32.mrf.mxu0
        %v5416 = vadd.f32 0.0, %v5415
        %5417 = vmatmul.f32.gmra.mxu0 %v3240
        %v5418 = vpop.f32.mrf.mxu0
        %v5419 = vadd.f32 0.0, %v5418
        %5420 = vmatmul.f32.gmra.mxu0 %v3243
        %v5421 = vpop.f32.mrf.mxu0
        %v5422 = vadd.f32 0.0, %v5421
        %5423 = vmatmul.f32.gmra.mxu0 %v3246
        %v5424 = vpop.f32.mrf.mxu0
        %v5425 = vadd.f32 0.0, %v5424
        %5426 = vmatmul.f32.gmra.mxu0 %v3249
        %v5427 = vpop.f32.mrf.mxu0
        %v5428 = vadd.f32 0.0, %v5427
        %5429 = vmatmul.f32.gmra.mxu0 %v3252
        %v5430 = vpop.f32.mrf.mxu0
        %v5431 = vadd.f32 0.0, %v5430
        %5432 = vmatmul.f32.gmra.mxu0 %v3255
        %v5433 = vpop.f32.mrf.mxu0
        %v5434 = vadd.f32 0.0, %v5433
        %5435 = vmatmul.f32.gmra.mxu0 %v3258
        %v5436 = vpop.f32.mrf.mxu0
        %v5437 = vadd.f32 0.0, %v5436
        %5438 = vmatmul.f32.gmra.mxu0 %v3261
        %v5439 = vpop.f32.mrf.mxu0
        %v5440 = vadd.f32 0.0, %v5439
        %5441 = vmatmul.f32.gmra.mxu0 %v3264
        %v5442 = vpop.f32.mrf.mxu0
        %v5443 = vadd.f32 0.0, %v5442
        %5444 = vmatmul.f32.gmra.mxu0 %v3267
        %v5445 = vpop.f32.mrf.mxu0
        %v5446 = vadd.f32 0.0, %v5445
        %5447 = vmatmul.f32.gmra.mxu0 %v3270
        %v5448 = vpop.f32.mrf.mxu0
        %v5449 = vadd.f32 0.0, %v5448
        %5450 = vmatmul.f32.gmra.mxu0 %v3273
        %v5451 = vpop.f32.mrf.mxu0
        %v5452 = vadd.f32 0.0, %v5451
        %5453 = vmatmul.f32.gmra.mxu0 %v3276
        %v5454 = vpop.f32.mrf.mxu0
        %v5455 = vadd.f32 0.0, %v5454
        %5456 = vmatmul.f32.gmra.mxu0 %v3279
        %v5457 = vpop.f32.mrf.mxu0
        %v5458 = vadd.f32 0.0, %v5457
        %5459 = vmatmul.f32.gmra.mxu0 %v3282
        %v5460 = vpop.f32.mrf.mxu0
        %v5461 = vadd.f32 0.0, %v5460
        %5462 = vmatmul.f32.gmra.mxu0 %v3285
        %v5463 = vpop.f32.mrf.mxu0
        %v5464 = vadd.f32 0.0, %v5463
        %5465 = vmatmul.f32.gmra.mxu0 %v3288
        %v5466 = vpop.f32.mrf.mxu0
        %v5467 = vadd.f32 0.0, %v5466
        %5468 = vmatmul.f32.gmra.mxu0 %v3291
        %v5469 = vpop.f32.mrf.mxu0
        %v5470 = vadd.f32 0.0, %v5469
        %5471 = vmatmul.f32.gmra.mxu0 %v3294
        %v5472 = vpop.f32.mrf.mxu0
        %v5473 = vadd.f32 0.0, %v5472
        %5474 = vmatmul.f32.gmra.mxu0 %v3297
        %v5475 = vpop.f32.mrf.mxu0
        %v5476 = vadd.f32 0.0, %v5475
        %5477 = vmatmul.f32.gmra.mxu0 %v3300
        %v5478 = vpop.f32.mrf.mxu0
        %v5479 = vadd.f32 0.0, %v5478
        %5480 = vmatmul.f32.gmra.mxu0 %v3303
        %v5481 = vpop.f32.mrf.mxu0
        %v5482 = vadd.f32 0.0, %v5481
        %5483 = vdwg.mxu0
        %5484 = vmatpush.msra.mxu0 %v393
        %5485 = vmatpush.msra.mxu0 %v389
        %5486 = vmatpush.msra.mxu0 %v385
        %5487 = vmatpush.msra.mxu0 %v381
        %5488 = vmatpush.msra.mxu0 %v377
        %5489 = vmatpush.msra.mxu0 %v373
        %5490 = vmatpush.msra.mxu0 %v369
        %5491 = vmatpush.msra.mxu0 %v365
        %5492 = vmatpush.msra.mxu0 %v361
        %5493 = vmatpush.msra.mxu0 %v357
        %5494 = vmatpush.msra.mxu0 %v353
        %5495 = vmatpush.msra.mxu0 %v349
        %5496 = vmatpush.msra.mxu0 %v345
        %5497 = vmatpush.msra.mxu0 %v341
        %5498 = vmatpush.msra.mxu0 %v337
        %5499 = vmatpush.msra.mxu0 %v333
        %5500 = vmatmul.f32.gmra.mxu0 %v3662
        %v5501 = vpop.f32.mrf.mxu0
        %v5502 = vadd.f32 %v5389, %v5501
        %5503 = vmatmul.f32.gmra.mxu0 %v3665
        %v5504 = vpop.f32.mrf.mxu0
        %v5505 = vadd.f32 %v5392, %v5504
        %5506 = vmatmul.f32.gmra.mxu0 %v3668
        %v5507 = vpop.f32.mrf.mxu0
        %v5508 = vadd.f32 %v5395, %v5507
        %5509 = vmatmul.f32.gmra.mxu0 %v3671
        %v5510 = vpop.f32.mrf.mxu0
        %v5511 = vadd.f32 %v5398, %v5510
        %5512 = vmatmul.f32.gmra.mxu0 %v3674
        %v5513 = vpop.f32.mrf.mxu0
        %v5514 = vadd.f32 %v5401, %v5513
        %5515 = vmatmul.f32.gmra.mxu0 %v3677
        %v5516 = vpop.f32.mrf.mxu0
        %v5517 = vadd.f32 %v5404, %v5516
        %5518 = vmatmul.f32.gmra.mxu0 %v3680
        %v5519 = vpop.f32.mrf.mxu0
        %v5520 = vadd.f32 %v5407, %v5519
        %5521 = vmatmul.f32.gmra.mxu0 %v3683
        %v5522 = vpop.f32.mrf.mxu0
        %v5523 = vadd.f32 %v5410, %v5522
        %5524 = vmatmul.f32.gmra.mxu0 %v3686
        %v5525 = vpop.f32.mrf.mxu0
        %v5526 = vadd.f32 %v5413, %v5525
        %5527 = vmatmul.f32.gmra.mxu0 %v3689
        %v5528 = vpop.f32.mrf.mxu0
        %v5529 = vadd.f32 %v5416, %v5528
        %5530 = vmatmul.f32.gmra.mxu0 %v3692
        %v5531 = vpop.f32.mrf.mxu0
        %v5532 = vadd.f32 %v5419, %v5531
        %5533 = vmatmul.f32.gmra.mxu0 %v3695
        %v5534 = vpop.f32.mrf.mxu0
        %v5535 = vadd.f32 %v5422, %v5534
        %5536 = vmatmul.f32.gmra.mxu0 %v3698
        %v5537 = vpop.f32.mrf.mxu0
        %v5538 = vadd.f32 %v5425, %v5537
        %5539 = vmatmul.f32.gmra.mxu0 %v3701
        %v5540 = vpop.f32.mrf.mxu0
        %v5541 = vadd.f32 %v5428, %v5540
        %5542 = vmatmul.f32.gmra.mxu0 %v3704
        %v5543 = vpop.f32.mrf.mxu0
        %v5544 = vadd.f32 %v5431, %v5543
        %5545 = vmatmul.f32.gmra.mxu0 %v3707
        %v5546 = vpop.f32.mrf.mxu0
        %v5547 = vadd.f32 %v5434, %v5546
        %5548 = vmatmul.f32.gmra.mxu0 %v3710
        %v5549 = vpop.f32.mrf.mxu0
        %v5550 = vadd.f32 %v5437, %v5549
        %5551 = vmatmul.f32.gmra.mxu0 %v3713
        %v5552 = vpop.f32.mrf.mxu0
        %v5553 = vadd.f32 %v5440, %v5552
        %5554 = vmatmul.f32.gmra.mxu0 %v3716
        %v5555 = vpop.f32.mrf.mxu0
        %v5556 = vadd.f32 %v5443, %v5555
        %5557 = vmatmul.f32.gmra.mxu0 %v3719
        %v5558 = vpop.f32.mrf.mxu0
        %v5559 = vadd.f32 %v5446, %v5558
        %5560 = vmatmul.f32.gmra.mxu0 %v3722
        %v5561 = vpop.f32.mrf.mxu0
        %v5562 = vadd.f32 %v5449, %v5561
        %5563 = vmatmul.f32.gmra.mxu0 %v3725
        %v5564 = vpop.f32.mrf.mxu0
        %v5565 = vadd.f32 %v5452, %v5564
        %5566 = vmatmul.f32.gmra.mxu0 %v3728
        %v5567 = vpop.f32.mrf.mxu0
        %v5568 = vadd.f32 %v5455, %v5567
        %5569 = vmatmul.f32.gmra.mxu0 %v3731
        %v5570 = vpop.f32.mrf.mxu0
        %v5571 = vadd.f32 %v5458, %v5570
        %5572 = vmatmul.f32.gmra.mxu0 %v3734
        %v5573 = vpop.f32.mrf.mxu0
        %v5574 = vadd.f32 %v5461, %v5573
        %5575 = vmatmul.f32.gmra.mxu0 %v3737
        %v5576 = vpop.f32.mrf.mxu0
        %v5577 = vadd.f32 %v5464, %v5576
        %5578 = vmatmul.f32.gmra.mxu0 %v3740
        %v5579 = vpop.f32.mrf.mxu0
        %v5580 = vadd.f32 %v5467, %v5579
        %5581 = vmatmul.f32.gmra.mxu0 %v3743
        %v5582 = vpop.f32.mrf.mxu0
        %v5583 = vadd.f32 %v5470, %v5582
        %5584 = vmatmul.f32.gmra.mxu0 %v3746
        %v5585 = vpop.f32.mrf.mxu0
        %v5586 = vadd.f32 %v5473, %v5585
        %5587 = vmatmul.f32.gmra.mxu0 %v3749
        %v5588 = vpop.f32.mrf.mxu0
        %v5589 = vadd.f32 %v5476, %v5588
        %5590 = vmatmul.f32.gmra.mxu0 %v3752
        %v5591 = vpop.f32.mrf.mxu0
        %v5592 = vadd.f32 %v5479, %v5591
        %5593 = vmatmul.f32.gmra.mxu0 %v3755
        %v5594 = vpop.f32.mrf.mxu0
        %v5595 = vadd.f32 %v5482, %v5594
        %5596 = vdwg.mxu0
        %5597 = vmatpush.msra.mxu0 %v457
        %5598 = vmatpush.msra.mxu0 %v453
        %5599 = vmatpush.msra.mxu0 %v449
        %5600 = vmatpush.msra.mxu0 %v445
        %5601 = vmatpush.msra.mxu0 %v441
        %5602 = vmatpush.msra.mxu0 %v437
        %5603 = vmatpush.msra.mxu0 %v433
        %5604 = vmatpush.msra.mxu0 %v429
        %5605 = vmatpush.msra.mxu0 %v425
        %5606 = vmatpush.msra.mxu0 %v421
        %5607 = vmatpush.msra.mxu0 %v417
        %5608 = vmatpush.msra.mxu0 %v413
        %5609 = vmatpush.msra.mxu0 %v409
        %5610 = vmatpush.msra.mxu0 %v405
        %5611 = vmatpush.msra.mxu0 %v401
        %5612 = vmatpush.msra.mxu0 %v397
        %5613 = vmatmul.f32.gmra.mxu0 %v4114
        %v5614 = vpop.f32.mrf.mxu0
        %v5615 = vadd.f32 %v5502, %v5614
        %5616 = vmatmul.f32.gmra.mxu0 %v4117
        %v5617 = vpop.f32.mrf.mxu0
        %v5618 = vadd.f32 %v5505, %v5617
        %5619 = vmatmul.f32.gmra.mxu0 %v4120
        %v5620 = vpop.f32.mrf.mxu0
        %v5621 = vadd.f32 %v5508, %v5620
        %5622 = vmatmul.f32.gmra.mxu0 %v4123
        %v5623 = vpop.f32.mrf.mxu0
        %v5624 = vadd.f32 %v5511, %v5623
        %5625 = vmatmul.f32.gmra.mxu0 %v4126
        %v5626 = vpop.f32.mrf.mxu0
        %v5627 = vadd.f32 %v5514, %v5626
        %5628 = vmatmul.f32.gmra.mxu0 %v4129
        %v5629 = vpop.f32.mrf.mxu0
        %v5630 = vadd.f32 %v5517, %v5629
        %5631 = vmatmul.f32.gmra.mxu0 %v4132
        %v5632 = vpop.f32.mrf.mxu0
        %v5633 = vadd.f32 %v5520, %v5632
        %5634 = vmatmul.f32.gmra.mxu0 %v4135
        %v5635 = vpop.f32.mrf.mxu0
        %v5636 = vadd.f32 %v5523, %v5635
        %5637 = vmatmul.f32.gmra.mxu0 %v4138
        %v5638 = vpop.f32.mrf.mxu0
        %v5639 = vadd.f32 %v5526, %v5638
        %5640 = vmatmul.f32.gmra.mxu0 %v4141
        %v5641 = vpop.f32.mrf.mxu0
        %v5642 = vadd.f32 %v5529, %v5641
        %5643 = vmatmul.f32.gmra.mxu0 %v4144
        %v5644 = vpop.f32.mrf.mxu0
        %v5645 = vadd.f32 %v5532, %v5644
        %5646 = vmatmul.f32.gmra.mxu0 %v4147
        %v5647 = vpop.f32.mrf.mxu0
        %v5648 = vadd.f32 %v5535, %v5647
        %5649 = vmatmul.f32.gmra.mxu0 %v4150
        %v5650 = vpop.f32.mrf.mxu0
        %v5651 = vadd.f32 %v5538, %v5650
        %5652 = vmatmul.f32.gmra.mxu0 %v4153
        %v5653 = vpop.f32.mrf.mxu0
        %v5654 = vadd.f32 %v5541, %v5653
        %5655 = vmatmul.f32.gmra.mxu0 %v4156
        %v5656 = vpop.f32.mrf.mxu0
        %v5657 = vadd.f32 %v5544, %v5656
        %5658 = vmatmul.f32.gmra.mxu0 %v4159
        %v5659 = vpop.f32.mrf.mxu0
        %v5660 = vadd.f32 %v5547, %v5659
        %5661 = vmatmul.f32.gmra.mxu0 %v4162
        %v5662 = vpop.f32.mrf.mxu0
        %v5663 = vadd.f32 %v5550, %v5662
        %5664 = vmatmul.f32.gmra.mxu0 %v4165
        %v5665 = vpop.f32.mrf.mxu0
        %v5666 = vadd.f32 %v5553, %v5665
        %5667 = vmatmul.f32.gmra.mxu0 %v4168
        %v5668 = vpop.f32.mrf.mxu0
        %v5669 = vadd.f32 %v5556, %v5668
        %5670 = vmatmul.f32.gmra.mxu0 %v4171
        %v5671 = vpop.f32.mrf.mxu0
        %v5672 = vadd.f32 %v5559, %v5671
        %5673 = vmatmul.f32.gmra.mxu0 %v4174
        %v5674 = vpop.f32.mrf.mxu0
        %v5675 = vadd.f32 %v5562, %v5674
        %5676 = vmatmul.f32.gmra.mxu0 %v4177
        %v5677 = vpop.f32.mrf.mxu0
        %v5678 = vadd.f32 %v5565, %v5677
        %5679 = vmatmul.f32.gmra.mxu0 %v4180
        %v5680 = vpop.f32.mrf.mxu0
        %v5681 = vadd.f32 %v5568, %v5680
        %5682 = vmatmul.f32.gmra.mxu0 %v4183
        %v5683 = vpop.f32.mrf.mxu0
        %v5684 = vadd.f32 %v5571, %v5683
        %5685 = vmatmul.f32.gmra.mxu0 %v4186
        %v5686 = vpop.f32.mrf.mxu0
        %v5687 = vadd.f32 %v5574, %v5686
        %5688 = vmatmul.f32.gmra.mxu0 %v4189
        %v5689 = vpop.f32.mrf.mxu0
        %v5690 = vadd.f32 %v5577, %v5689
        %5691 = vmatmul.f32.gmra.mxu0 %v4192
        %v5692 = vpop.f32.mrf.mxu0
        %v5693 = vadd.f32 %v5580, %v5692
        %5694 = vmatmul.f32.gmra.mxu0 %v4195
        %v5695 = vpop.f32.mrf.mxu0
        %v5696 = vadd.f32 %v5583, %v5695
        %5697 = vmatmul.f32.gmra.mxu0 %v4198
        %v5698 = vpop.f32.mrf.mxu0
        %v5699 = vadd.f32 %v5586, %v5698
        %5700 = vmatmul.f32.gmra.mxu0 %v4201
        %v5701 = vpop.f32.mrf.mxu0
        %v5702 = vadd.f32 %v5589, %v5701
        %5703 = vmatmul.f32.gmra.mxu0 %v4204
        %v5704 = vpop.f32.mrf.mxu0
        %v5705 = vadd.f32 %v5592, %v5704
        %5706 = vmatmul.f32.gmra.mxu0 %v4207
        %v5707 = vpop.f32.mrf.mxu0
        %v5708 = vadd.f32 %v5595, %v5707
        %5709 = vdwg.mxu0
        %5710 = vmatpush.msra.mxu0 %v521
        %5711 = vmatpush.msra.mxu0 %v517
        %5712 = vmatpush.msra.mxu0 %v513
        %5713 = vmatpush.msra.mxu0 %v509
        %5714 = vmatpush.msra.mxu0 %v505
        %5715 = vmatpush.msra.mxu0 %v501
        %5716 = vmatpush.msra.mxu0 %v497
        %5717 = vmatpush.msra.mxu0 %v493
        %5718 = vmatpush.msra.mxu0 %v489
        %5719 = vmatpush.msra.mxu0 %v485
        %5720 = vmatpush.msra.mxu0 %v481
        %5721 = vmatpush.msra.mxu0 %v477
        %5722 = vmatpush.msra.mxu0 %v473
        %5723 = vmatpush.msra.mxu0 %v469
        %5724 = vmatpush.msra.mxu0 %v465
        %5725 = vmatpush.msra.mxu0 %v461
        %5726 = vmatmul.f32.gmra.mxu0 %v4566
        %v5727 = vpop.f32.mrf.mxu0
        %v5728 = vadd.f32 %v5615, %v5727
        %5729 = vmatmul.f32.gmra.mxu0 %v4569
        %v5730 = vpop.f32.mrf.mxu0
        %v5731 = vadd.f32 %v5618, %v5730
        %5732 = vmatmul.f32.gmra.mxu0 %v4572
        %v5733 = vpop.f32.mrf.mxu0
        %v5734 = vadd.f32 %v5621, %v5733
        %5735 = vmatmul.f32.gmra.mxu0 %v4575
        %v5736 = vpop.f32.mrf.mxu0
        %v5737 = vadd.f32 %v5624, %v5736
        %5738 = vmatmul.f32.gmra.mxu0 %v4578
        %v5739 = vpop.f32.mrf.mxu0
        %v5740 = vadd.f32 %v5627, %v5739
        %5741 = vmatmul.f32.gmra.mxu0 %v4581
        %v5742 = vpop.f32.mrf.mxu0
        %v5743 = vadd.f32 %v5630, %v5742
        %5744 = vmatmul.f32.gmra.mxu0 %v4584
        %v5745 = vpop.f32.mrf.mxu0
        %v5746 = vadd.f32 %v5633, %v5745
        %5747 = vmatmul.f32.gmra.mxu0 %v4587
        %v5748 = vpop.f32.mrf.mxu0
        %v5749 = vadd.f32 %v5636, %v5748
        %5750 = vmatmul.f32.gmra.mxu0 %v4590
        %v5751 = vpop.f32.mrf.mxu0
        %v5752 = vadd.f32 %v5639, %v5751
        %5753 = vmatmul.f32.gmra.mxu0 %v4593
        %v5754 = vpop.f32.mrf.mxu0
        %v5755 = vadd.f32 %v5642, %v5754
        %5756 = vmatmul.f32.gmra.mxu0 %v4596
        %v5757 = vpop.f32.mrf.mxu0
        %v5758 = vadd.f32 %v5645, %v5757
        %5759 = vmatmul.f32.gmra.mxu0 %v4599
        %v5760 = vpop.f32.mrf.mxu0
        %v5761 = vadd.f32 %v5648, %v5760
        %5762 = vmatmul.f32.gmra.mxu0 %v4602
        %v5763 = vpop.f32.mrf.mxu0
        %v5764 = vadd.f32 %v5651, %v5763
        %5765 = vmatmul.f32.gmra.mxu0 %v4605
        %v5766 = vpop.f32.mrf.mxu0
        %v5767 = vadd.f32 %v5654, %v5766
        %5768 = vmatmul.f32.gmra.mxu0 %v4608
        %v5769 = vpop.f32.mrf.mxu0
        %v5770 = vadd.f32 %v5657, %v5769
        %5771 = vmatmul.f32.gmra.mxu0 %v4611
        %v5772 = vpop.f32.mrf.mxu0
        %v5773 = vadd.f32 %v5660, %v5772
        %5774 = vmatmul.f32.gmra.mxu0 %v4614
        %v5775 = vpop.f32.mrf.mxu0
        %v5776 = vadd.f32 %v5663, %v5775
        %5777 = vmatmul.f32.gmra.mxu0 %v4617
        %v5778 = vpop.f32.mrf.mxu0
        %v5779 = vadd.f32 %v5666, %v5778
        %5780 = vmatmul.f32.gmra.mxu0 %v4620
        %v5781 = vpop.f32.mrf.mxu0
        %v5782 = vadd.f32 %v5669, %v5781
        %5783 = vmatmul.f32.gmra.mxu0 %v4623
        %v5784 = vpop.f32.mrf.mxu0
        %v5785 = vadd.f32 %v5672, %v5784
        %5786 = vmatmul.f32.gmra.mxu0 %v4626
        %v5787 = vpop.f32.mrf.mxu0
        %v5788 = vadd.f32 %v5675, %v5787
        %5789 = vmatmul.f32.gmra.mxu0 %v4629
        %v5790 = vpop.f32.mrf.mxu0
        %v5791 = vadd.f32 %v5678, %v5790
        %5792 = vmatmul.f32.gmra.mxu0 %v4632
        %v5793 = vpop.f32.mrf.mxu0
        %v5794 = vadd.f32 %v5681, %v5793
        %5795 = vmatmul.f32.gmra.mxu0 %v4635
        %v5796 = vpop.f32.mrf.mxu0
        %v5797 = vadd.f32 %v5684, %v5796
        %5798 = vmatmul.f32.gmra.mxu0 %v4638
        %v5799 = vpop.f32.mrf.mxu0
        %v5800 = vadd.f32 %v5687, %v5799
        %5801 = vmatmul.f32.gmra.mxu0 %v4641
        %v5802 = vpop.f32.mrf.mxu0
        %v5803 = vadd.f32 %v5690, %v5802
        %5804 = vmatmul.f32.gmra.mxu0 %v4644
        %v5805 = vpop.f32.mrf.mxu0
        %v5806 = vadd.f32 %v5693, %v5805
        %5807 = vmatmul.f32.gmra.mxu0 %v4647
        %v5808 = vpop.f32.mrf.mxu0
        %v5809 = vadd.f32 %v5696, %v5808
        %5810 = vmatmul.f32.gmra.mxu0 %v4650
        %v5811 = vpop.f32.mrf.mxu0
        %v5812 = vadd.f32 %v5699, %v5811
        %5813 = vmatmul.f32.gmra.mxu0 %v4653
        %v5814 = vpop.f32.mrf.mxu0
        %v5815 = vadd.f32 %v5702, %v5814
        %5816 = vmatmul.f32.gmra.mxu0 %v4656
        %v5817 = vpop.f32.mrf.mxu0
        %v5818 = vadd.f32 %v5705, %v5817
        %5819 = vmatmul.f32.gmra.mxu0 %v4659
        %v5820 = vpop.f32.mrf.mxu0
        %v5821 = vadd.f32 %v5708, %v5820
        %5822 = vdwg.mxu0
        %5823 = vmatpush.msra.mxu0 %v330
        %5824 = vmatpush.msra.mxu0 %v326
        %5825 = vmatpush.msra.mxu0 %v322
        %5826 = vmatpush.msra.mxu0 %v318
        %5827 = vmatpush.msra.mxu0 %v314
        %5828 = vmatpush.msra.mxu0 %v310
        %5829 = vmatpush.msra.mxu0 %v306
        %5830 = vmatpush.msra.mxu0 %v302
        %5831 = vmatpush.msra.mxu0 %v298
        %5832 = vmatpush.msra.mxu0 %v294
        %5833 = vmatpush.msra.mxu0 %v290
        %5834 = vmatpush.msra.mxu0 %v286
        %5835 = vmatpush.msra.mxu0 %v282
        %5836 = vmatpush.msra.mxu0 %v278
        %5837 = vmatpush.msra.mxu0 %v274
        %5838 = vmatpush.msra.mxu0 %v270
        %5839 = vmatmul.f32.gmra.mxu0 %v3210
        %v5840 = vpop.f32.mrf.mxu0
        %v5841 = vadd.f32 0.0, %v5840
        %5842 = vmatmul.f32.gmra.mxu0 %v3213
        %v5843 = vpop.f32.mrf.mxu0
        %v5844 = vadd.f32 0.0, %v5843
        %5845 = vmatmul.f32.gmra.mxu0 %v3216
        %v5846 = vpop.f32.mrf.mxu0
        %v5847 = vadd.f32 0.0, %v5846
        %5848 = vmatmul.f32.gmra.mxu0 %v3219
        %v5849 = vpop.f32.mrf.mxu0
        %v5850 = vadd.f32 0.0, %v5849
        %5851 = vmatmul.f32.gmra.mxu0 %v3222
        %v5852 = vpop.f32.mrf.mxu0
        %v5853 = vadd.f32 0.0, %v5852
        %5854 = vmatmul.f32.gmra.mxu0 %v3225
        %v5855 = vpop.f32.mrf.mxu0
        %v5856 = vadd.f32 0.0, %v5855
        %5857 = vmatmul.f32.gmra.mxu0 %v3228
        %v5858 = vpop.f32.mrf.mxu0
        %v5859 = vadd.f32 0.0, %v5858
        %5860 = vmatmul.f32.gmra.mxu0 %v3231
        %v5861 = vpop.f32.mrf.mxu0
        %v5862 = vadd.f32 0.0, %v5861
        %5863 = vmatmul.f32.gmra.mxu0 %v3234
        %v5864 = vpop.f32.mrf.mxu0
        %v5865 = vadd.f32 0.0, %v5864
        %5866 = vmatmul.f32.gmra.mxu0 %v3237
        %v5867 = vpop.f32.mrf.mxu0
        %v5868 = vadd.f32 0.0, %v5867
        %5869 = vmatmul.f32.gmra.mxu0 %v3240
        %v5870 = vpop.f32.mrf.mxu0
        %v5871 = vadd.f32 0.0, %v5870
        %5872 = vmatmul.f32.gmra.mxu0 %v3243
        %v5873 = vpop.f32.mrf.mxu0
        %v5874 = vadd.f32 0.0, %v5873
        %5875 = vmatmul.f32.gmra.mxu0 %v3246
        %v5876 = vpop.f32.mrf.mxu0
        %v5877 = vadd.f32 0.0, %v5876
        %5878 = vmatmul.f32.gmra.mxu0 %v3249
        %v5879 = vpop.f32.mrf.mxu0
        %v5880 = vadd.f32 0.0, %v5879
        %5881 = vmatmul.f32.gmra.mxu0 %v3252
        %v5882 = vpop.f32.mrf.mxu0
        %v5883 = vadd.f32 0.0, %v5882
        %5884 = vmatmul.f32.gmra.mxu0 %v3255
        %v5885 = vpop.f32.mrf.mxu0
        %v5886 = vadd.f32 0.0, %v5885
        %5887 = vmatmul.f32.gmra.mxu0 %v3258
        %v5888 = vpop.f32.mrf.mxu0
        %v5889 = vadd.f32 0.0, %v5888
        %5890 = vmatmul.f32.gmra.mxu0 %v3261
        %v5891 = vpop.f32.mrf.mxu0
        %v5892 = vadd.f32 0.0, %v5891
        %5893 = vmatmul.f32.gmra.mxu0 %v3264
        %v5894 = vpop.f32.mrf.mxu0
        %v5895 = vadd.f32 0.0, %v5894
        %5896 = vmatmul.f32.gmra.mxu0 %v3267
        %v5897 = vpop.f32.mrf.mxu0
        %v5898 = vadd.f32 0.0, %v5897
        %5899 = vmatmul.f32.gmra.mxu0 %v3270
        %v5900 = vpop.f32.mrf.mxu0
        %v5901 = vadd.f32 0.0, %v5900
        %5902 = vmatmul.f32.gmra.mxu0 %v3273
        %v5903 = vpop.f32.mrf.mxu0
        %v5904 = vadd.f32 0.0, %v5903
        %5905 = vmatmul.f32.gmra.mxu0 %v3276
        %v5906 = vpop.f32.mrf.mxu0
        %v5907 = vadd.f32 0.0, %v5906
        %5908 = vmatmul.f32.gmra.mxu0 %v3279
        %v5909 = vpop.f32.mrf.mxu0
        %v5910 = vadd.f32 0.0, %v5909
        %5911 = vmatmul.f32.gmra.mxu0 %v3282
        %v5912 = vpop.f32.mrf.mxu0
        %v5913 = vadd.f32 0.0, %v5912
        %5914 = vmatmul.f32.gmra.mxu0 %v3285
        %v5915 = vpop.f32.mrf.mxu0
        %v5916 = vadd.f32 0.0, %v5915
        %5917 = vmatmul.f32.gmra.mxu0 %v3288
        %v5918 = vpop.f32.mrf.mxu0
        %v5919 = vadd.f32 0.0, %v5918
        %5920 = vmatmul.f32.gmra.mxu0 %v3291
        %v5921 = vpop.f32.mrf.mxu0
        %v5922 = vadd.f32 0.0, %v5921
        %5923 = vmatmul.f32.gmra.mxu0 %v3294
        %v5924 = vpop.f32.mrf.mxu0
        %v5925 = vadd.f32 0.0, %v5924
        %5926 = vmatmul.f32.gmra.mxu0 %v3297
        %v5927 = vpop.f32.mrf.mxu0
        %v5928 = vadd.f32 0.0, %v5927
        %5929 = vmatmul.f32.gmra.mxu0 %v3300
        %v5930 = vpop.f32.mrf.mxu0
        %v5931 = vadd.f32 0.0, %v5930
        %5932 = vmatmul.f32.gmra.mxu0 %v3303
        %v5933 = vpop.f32.mrf.mxu0
        %v5934 = vadd.f32 0.0, %v5933
        %5935 = vdwg.mxu0
        %5936 = vmatpush.msra.mxu0 %v394
        %5937 = vmatpush.msra.mxu0 %v390
        %5938 = vmatpush.msra.mxu0 %v386
        %5939 = vmatpush.msra.mxu0 %v382
        %5940 = vmatpush.msra.mxu0 %v378
        %5941 = vmatpush.msra.mxu0 %v374
        %5942 = vmatpush.msra.mxu0 %v370
        %5943 = vmatpush.msra.mxu0 %v366
        %5944 = vmatpush.msra.mxu0 %v362
        %5945 = vmatpush.msra.mxu0 %v358
        %5946 = vmatpush.msra.mxu0 %v354
        %5947 = vmatpush.msra.mxu0 %v350
        %5948 = vmatpush.msra.mxu0 %v346
        %5949 = vmatpush.msra.mxu0 %v342
        %5950 = vmatpush.msra.mxu0 %v338
        %5951 = vmatpush.msra.mxu0 %v334
        %5952 = vmatmul.f32.gmra.mxu0 %v3662
        %v5953 = vpop.f32.mrf.mxu0
        %v5954 = vadd.f32 %v5841, %v5953
        %5955 = vmatmul.f32.gmra.mxu0 %v3665
        %v5956 = vpop.f32.mrf.mxu0
        %v5957 = vadd.f32 %v5844, %v5956
        %5958 = vmatmul.f32.gmra.mxu0 %v3668
        %v5959 = vpop.f32.mrf.mxu0
        %v5960 = vadd.f32 %v5847, %v5959
        %5961 = vmatmul.f32.gmra.mxu0 %v3671
        %v5962 = vpop.f32.mrf.mxu0
        %v5963 = vadd.f32 %v5850, %v5962
        %5964 = vmatmul.f32.gmra.mxu0 %v3674
        %v5965 = vpop.f32.mrf.mxu0
        %v5966 = vadd.f32 %v5853, %v5965
        %5967 = vmatmul.f32.gmra.mxu0 %v3677
        %v5968 = vpop.f32.mrf.mxu0
        %v5969 = vadd.f32 %v5856, %v5968
        %5970 = vmatmul.f32.gmra.mxu0 %v3680
        %v5971 = vpop.f32.mrf.mxu0
        %v5972 = vadd.f32 %v5859, %v5971
        %5973 = vmatmul.f32.gmra.mxu0 %v3683
        %v5974 = vpop.f32.mrf.mxu0
        %v5975 = vadd.f32 %v5862, %v5974
        %5976 = vmatmul.f32.gmra.mxu0 %v3686
        %v5977 = vpop.f32.mrf.mxu0
        %v5978 = vadd.f32 %v5865, %v5977
        %5979 = vmatmul.f32.gmra.mxu0 %v3689
        %v5980 = vpop.f32.mrf.mxu0
        %v5981 = vadd.f32 %v5868, %v5980
        %5982 = vmatmul.f32.gmra.mxu0 %v3692
        %v5983 = vpop.f32.mrf.mxu0
        %v5984 = vadd.f32 %v5871, %v5983
        %5985 = vmatmul.f32.gmra.mxu0 %v3695
        %v5986 = vpop.f32.mrf.mxu0
        %v5987 = vadd.f32 %v5874, %v5986
        %5988 = vmatmul.f32.gmra.mxu0 %v3698
        %v5989 = vpop.f32.mrf.mxu0
        %v5990 = vadd.f32 %v5877, %v5989
        %5991 = vmatmul.f32.gmra.mxu0 %v3701
        %v5992 = vpop.f32.mrf.mxu0
        %v5993 = vadd.f32 %v5880, %v5992
        %5994 = vmatmul.f32.gmra.mxu0 %v3704
        %v5995 = vpop.f32.mrf.mxu0
        %v5996 = vadd.f32 %v5883, %v5995
        %5997 = vmatmul.f32.gmra.mxu0 %v3707
        %v5998 = vpop.f32.mrf.mxu0
        %v5999 = vadd.f32 %v5886, %v5998
        %6000 = vmatmul.f32.gmra.mxu0 %v3710
        %v6001 = vpop.f32.mrf.mxu0
        %v6002 = vadd.f32 %v5889, %v6001
        %6003 = vmatmul.f32.gmra.mxu0 %v3713
        %v6004 = vpop.f32.mrf.mxu0
        %v6005 = vadd.f32 %v5892, %v6004
        %6006 = vmatmul.f32.gmra.mxu0 %v3716
        %v6007 = vpop.f32.mrf.mxu0
        %v6008 = vadd.f32 %v5895, %v6007
        %6009 = vmatmul.f32.gmra.mxu0 %v3719
        %v6010 = vpop.f32.mrf.mxu0
        %v6011 = vadd.f32 %v5898, %v6010
        %6012 = vmatmul.f32.gmra.mxu0 %v3722
        %v6013 = vpop.f32.mrf.mxu0
        %v6014 = vadd.f32 %v5901, %v6013
        %6015 = vmatmul.f32.gmra.mxu0 %v3725
        %v6016 = vpop.f32.mrf.mxu0
        %v6017 = vadd.f32 %v5904, %v6016
        %6018 = vmatmul.f32.gmra.mxu0 %v3728
        %v6019 = vpop.f32.mrf.mxu0
        %v6020 = vadd.f32 %v5907, %v6019
        %6021 = vmatmul.f32.gmra.mxu0 %v3731
        %v6022 = vpop.f32.mrf.mxu0
        %v6023 = vadd.f32 %v5910, %v6022
        %6024 = vmatmul.f32.gmra.mxu0 %v3734
        %v6025 = vpop.f32.mrf.mxu0
        %v6026 = vadd.f32 %v5913, %v6025
        %6027 = vmatmul.f32.gmra.mxu0 %v3737
        %v6028 = vpop.f32.mrf.mxu0
        %v6029 = vadd.f32 %v5916, %v6028
        %6030 = vmatmul.f32.gmra.mxu0 %v3740
        %v6031 = vpop.f32.mrf.mxu0
        %v6032 = vadd.f32 %v5919, %v6031
        %6033 = vmatmul.f32.gmra.mxu0 %v3743
        %v6034 = vpop.f32.mrf.mxu0
        %v6035 = vadd.f32 %v5922, %v6034
        %6036 = vmatmul.f32.gmra.mxu0 %v3746
        %v6037 = vpop.f32.mrf.mxu0
        %v6038 = vadd.f32 %v5925, %v6037
        %6039 = vmatmul.f32.gmra.mxu0 %v3749
        %v6040 = vpop.f32.mrf.mxu0
        %v6041 = vadd.f32 %v5928, %v6040
        %6042 = vmatmul.f32.gmra.mxu0 %v3752
        %v6043 = vpop.f32.mrf.mxu0
        %v6044 = vadd.f32 %v5931, %v6043
        %6045 = vmatmul.f32.gmra.mxu0 %v3755
        %v6046 = vpop.f32.mrf.mxu0
        %v6047 = vadd.f32 %v5934, %v6046
        %6048 = vdwg.mxu0
        %6049 = vmatpush.msra.mxu0 %v458
        %6050 = vmatpush.msra.mxu0 %v454
        %6051 = vmatpush.msra.mxu0 %v450
        %6052 = vmatpush.msra.mxu0 %v446
        %6053 = vmatpush.msra.mxu0 %v442
        %6054 = vmatpush.msra.mxu0 %v438
        %6055 = vmatpush.msra.mxu0 %v434
        %6056 = vmatpush.msra.mxu0 %v430
        %6057 = vmatpush.msra.mxu0 %v426
        %6058 = vmatpush.msra.mxu0 %v422
        %6059 = vmatpush.msra.mxu0 %v418
        %6060 = vmatpush.msra.mxu0 %v414
        %6061 = vmatpush.msra.mxu0 %v410
        %6062 = vmatpush.msra.mxu0 %v406
        %6063 = vmatpush.msra.mxu0 %v402
        %6064 = vmatpush.msra.mxu0 %v398
        %6065 = vmatmul.f32.gmra.mxu0 %v4114
        %v6066 = vpop.f32.mrf.mxu0
        %v6067 = vadd.f32 %v5954, %v6066
        %6068 = vmatmul.f32.gmra.mxu0 %v4117
        %v6069 = vpop.f32.mrf.mxu0
        %v6070 = vadd.f32 %v5957, %v6069
        %6071 = vmatmul.f32.gmra.mxu0 %v4120
        %v6072 = vpop.f32.mrf.mxu0
        %v6073 = vadd.f32 %v5960, %v6072
        %6074 = vmatmul.f32.gmra.mxu0 %v4123
        %v6075 = vpop.f32.mrf.mxu0
        %v6076 = vadd.f32 %v5963, %v6075
        %6077 = vmatmul.f32.gmra.mxu0 %v4126
        %v6078 = vpop.f32.mrf.mxu0
        %v6079 = vadd.f32 %v5966, %v6078
        %6080 = vmatmul.f32.gmra.mxu0 %v4129
        %v6081 = vpop.f32.mrf.mxu0
        %v6082 = vadd.f32 %v5969, %v6081
        %6083 = vmatmul.f32.gmra.mxu0 %v4132
        %v6084 = vpop.f32.mrf.mxu0
        %v6085 = vadd.f32 %v5972, %v6084
        %6086 = vmatmul.f32.gmra.mxu0 %v4135
        %v6087 = vpop.f32.mrf.mxu0
        %v6088 = vadd.f32 %v5975, %v6087
        %6089 = vmatmul.f32.gmra.mxu0 %v4138
        %v6090 = vpop.f32.mrf.mxu0
        %v6091 = vadd.f32 %v5978, %v6090
        %6092 = vmatmul.f32.gmra.mxu0 %v4141
        %v6093 = vpop.f32.mrf.mxu0
        %v6094 = vadd.f32 %v5981, %v6093
        %6095 = vmatmul.f32.gmra.mxu0 %v4144
        %v6096 = vpop.f32.mrf.mxu0
        %v6097 = vadd.f32 %v5984, %v6096
        %6098 = vmatmul.f32.gmra.mxu0 %v4147
        %v6099 = vpop.f32.mrf.mxu0
        %v6100 = vadd.f32 %v5987, %v6099
        %6101 = vmatmul.f32.gmra.mxu0 %v4150
        %v6102 = vpop.f32.mrf.mxu0
        %v6103 = vadd.f32 %v5990, %v6102
        %6104 = vmatmul.f32.gmra.mxu0 %v4153
        %v6105 = vpop.f32.mrf.mxu0
        %v6106 = vadd.f32 %v5993, %v6105
        %6107 = vmatmul.f32.gmra.mxu0 %v4156
        %v6108 = vpop.f32.mrf.mxu0
        %v6109 = vadd.f32 %v5996, %v6108
        %6110 = vmatmul.f32.gmra.mxu0 %v4159
        %v6111 = vpop.f32.mrf.mxu0
        %v6112 = vadd.f32 %v5999, %v6111
        %6113 = vmatmul.f32.gmra.mxu0 %v4162
        %v6114 = vpop.f32.mrf.mxu0
        %v6115 = vadd.f32 %v6002, %v6114
        %6116 = vmatmul.f32.gmra.mxu0 %v4165
        %v6117 = vpop.f32.mrf.mxu0
        %v6118 = vadd.f32 %v6005, %v6117
        %6119 = vmatmul.f32.gmra.mxu0 %v4168
        %v6120 = vpop.f32.mrf.mxu0
        %v6121 = vadd.f32 %v6008, %v6120
        %6122 = vmatmul.f32.gmra.mxu0 %v4171
        %v6123 = vpop.f32.mrf.mxu0
        %v6124 = vadd.f32 %v6011, %v6123
        %6125 = vmatmul.f32.gmra.mxu0 %v4174
        %v6126 = vpop.f32.mrf.mxu0
        %v6127 = vadd.f32 %v6014, %v6126
        %6128 = vmatmul.f32.gmra.mxu0 %v4177
        %v6129 = vpop.f32.mrf.mxu0
        %v6130 = vadd.f32 %v6017, %v6129
        %6131 = vmatmul.f32.gmra.mxu0 %v4180
        %v6132 = vpop.f32.mrf.mxu0
        %v6133 = vadd.f32 %v6020, %v6132
        %6134 = vmatmul.f32.gmra.mxu0 %v4183
        %v6135 = vpop.f32.mrf.mxu0
        %v6136 = vadd.f32 %v6023, %v6135
        %6137 = vmatmul.f32.gmra.mxu0 %v4186
        %v6138 = vpop.f32.mrf.mxu0
        %v6139 = vadd.f32 %v6026, %v6138
        %6140 = vmatmul.f32.gmra.mxu0 %v4189
        %v6141 = vpop.f32.mrf.mxu0
        %v6142 = vadd.f32 %v6029, %v6141
        %6143 = vmatmul.f32.gmra.mxu0 %v4192
        %v6144 = vpop.f32.mrf.mxu0
        %v6145 = vadd.f32 %v6032, %v6144
        %6146 = vmatmul.f32.gmra.mxu0 %v4195
        %v6147 = vpop.f32.mrf.mxu0
        %v6148 = vadd.f32 %v6035, %v6147
        %6149 = vmatmul.f32.gmra.mxu0 %v4198
        %v6150 = vpop.f32.mrf.mxu0
        %v6151 = vadd.f32 %v6038, %v6150
        %6152 = vmatmul.f32.gmra.mxu0 %v4201
        %v6153 = vpop.f32.mrf.mxu0
        %v6154 = vadd.f32 %v6041, %v6153
        %6155 = vmatmul.f32.gmra.mxu0 %v4204
        %v6156 = vpop.f32.mrf.mxu0
        %v6157 = vadd.f32 %v6044, %v6156
        %6158 = vmatmul.f32.gmra.mxu0 %v4207
        %v6159 = vpop.f32.mrf.mxu0
        %v6160 = vadd.f32 %v6047, %v6159
        %6161 = vdwg.mxu0
        %6162 = vmatpush.msra.mxu0 %v522
        %6163 = vmatpush.msra.mxu0 %v518
        %6164 = vmatpush.msra.mxu0 %v514
        %6165 = vmatpush.msra.mxu0 %v510
        %6166 = vmatpush.msra.mxu0 %v506
        %6167 = vmatpush.msra.mxu0 %v502
        %6168 = vmatpush.msra.mxu0 %v498
        %6169 = vmatpush.msra.mxu0 %v494
        %6170 = vmatpush.msra.mxu0 %v490
        %6171 = vmatpush.msra.mxu0 %v486
        %6172 = vmatpush.msra.mxu0 %v482
        %6173 = vmatpush.msra.mxu0 %v478
        %6174 = vmatpush.msra.mxu0 %v474
        %6175 = vmatpush.msra.mxu0 %v470
        %6176 = vmatpush.msra.mxu0 %v466
        %6177 = vmatpush.msra.mxu0 %v462
        %6178 = vmatmul.f32.gmra.mxu0 %v4566
        %v6179 = vpop.f32.mrf.mxu0
        %v6180 = vadd.f32 %v6067, %v6179
        %6181 = vmatmul.f32.gmra.mxu0 %v4569
        %v6182 = vpop.f32.mrf.mxu0
        %v6183 = vadd.f32 %v6070, %v6182
        %6184 = vmatmul.f32.gmra.mxu0 %v4572
        %v6185 = vpop.f32.mrf.mxu0
        %v6186 = vadd.f32 %v6073, %v6185
        %6187 = vmatmul.f32.gmra.mxu0 %v4575
        %v6188 = vpop.f32.mrf.mxu0
        %v6189 = vadd.f32 %v6076, %v6188
        %6190 = vmatmul.f32.gmra.mxu0 %v4578
        %v6191 = vpop.f32.mrf.mxu0
        %v6192 = vadd.f32 %v6079, %v6191
        %6193 = vmatmul.f32.gmra.mxu0 %v4581
        %v6194 = vpop.f32.mrf.mxu0
        %v6195 = vadd.f32 %v6082, %v6194
        %6196 = vmatmul.f32.gmra.mxu0 %v4584
        %v6197 = vpop.f32.mrf.mxu0
        %v6198 = vadd.f32 %v6085, %v6197
        %6199 = vmatmul.f32.gmra.mxu0 %v4587
        %v6200 = vpop.f32.mrf.mxu0
        %v6201 = vadd.f32 %v6088, %v6200
        %6202 = vmatmul.f32.gmra.mxu0 %v4590
        %v6203 = vpop.f32.mrf.mxu0
        %v6204 = vadd.f32 %v6091, %v6203
        %6205 = vmatmul.f32.gmra.mxu0 %v4593
        %v6206 = vpop.f32.mrf.mxu0
        %v6207 = vadd.f32 %v6094, %v6206
        %6208 = vmatmul.f32.gmra.mxu0 %v4596
        %v6209 = vpop.f32.mrf.mxu0
        %v6210 = vadd.f32 %v6097, %v6209
        %6211 = vmatmul.f32.gmra.mxu0 %v4599
        %v6212 = vpop.f32.mrf.mxu0
        %v6213 = vadd.f32 %v6100, %v6212
        %6214 = vmatmul.f32.gmra.mxu0 %v4602
        %v6215 = vpop.f32.mrf.mxu0
        %v6216 = vadd.f32 %v6103, %v6215
        %6217 = vmatmul.f32.gmra.mxu0 %v4605
        %v6218 = vpop.f32.mrf.mxu0
        %v6219 = vadd.f32 %v6106, %v6218
        %6220 = vmatmul.f32.gmra.mxu0 %v4608
        %v6221 = vpop.f32.mrf.mxu0
        %v6222 = vadd.f32 %v6109, %v6221
        %6223 = vmatmul.f32.gmra.mxu0 %v4611
        %v6224 = vpop.f32.mrf.mxu0
        %v6225 = vadd.f32 %v6112, %v6224
        %6226 = vmatmul.f32.gmra.mxu0 %v4614
        %v6227 = vpop.f32.mrf.mxu0
        %v6228 = vadd.f32 %v6115, %v6227
        %6229 = vmatmul.f32.gmra.mxu0 %v4617
        %v6230 = vpop.f32.mrf.mxu0
        %v6231 = vadd.f32 %v6118, %v6230
        %6232 = vmatmul.f32.gmra.mxu0 %v4620
        %v6233 = vpop.f32.mrf.mxu0
        %v6234 = vadd.f32 %v6121, %v6233
        %6235 = vmatmul.f32.gmra.mxu0 %v4623
        %v6236 = vpop.f32.mrf.mxu0
        %v6237 = vadd.f32 %v6124, %v6236
        %6238 = vmatmul.f32.gmra.mxu0 %v4626
        %v6239 = vpop.f32.mrf.mxu0
        %v6240 = vadd.f32 %v6127, %v6239
        %6241 = vmatmul.f32.gmra.mxu0 %v4629
        %v6242 = vpop.f32.mrf.mxu0
        %v6243 = vadd.f32 %v6130, %v6242
        %6244 = vmatmul.f32.gmra.mxu0 %v4632
        %v6245 = vpop.f32.mrf.mxu0
        %v6246 = vadd.f32 %v6133, %v6245
        %6247 = vmatmul.f32.gmra.mxu0 %v4635
        %v6248 = vpop.f32.mrf.mxu0
        %v6249 = vadd.f32 %v6136, %v6248
        %6250 = vmatmul.f32.gmra.mxu0 %v4638
        %v6251 = vpop.f32.mrf.mxu0
        %v6252 = vadd.f32 %v6139, %v6251
        %6253 = vmatmul.f32.gmra.mxu0 %v4641
        %v6254 = vpop.f32.mrf.mxu0
        %v6255 = vadd.f32 %v6142, %v6254
        %6256 = vmatmul.f32.gmra.mxu0 %v4644
        %v6257 = vpop.f32.mrf.mxu0
        %v6258 = vadd.f32 %v6145, %v6257
        %6259 = vmatmul.f32.gmra.mxu0 %v4647
        %v6260 = vpop.f32.mrf.mxu0
        %v6261 = vadd.f32 %v6148, %v6260
        %6262 = vmatmul.f32.gmra.mxu0 %v4650
        %v6263 = vpop.f32.mrf.mxu0
        %v6264 = vadd.f32 %v6151, %v6263
        %6265 = vmatmul.f32.gmra.mxu0 %v4653
        %v6266 = vpop.f32.mrf.mxu0
        %v6267 = vadd.f32 %v6154, %v6266
        %6268 = vmatmul.f32.gmra.mxu0 %v4656
        %v6269 = vpop.f32.mrf.mxu0
        %v6270 = vadd.f32 %v6157, %v6269
        %6271 = vmatmul.f32.gmra.mxu0 %v4659
        %v6272 = vpop.f32.mrf.mxu0
        %v6273 = vadd.f32 %v6160, %v6272
        %6274 = vdwg.mxu0
        %6275 = vmatpush.msra.mxu0 %v331
        %6276 = vmatpush.msra.mxu0 %v327
        %6277 = vmatpush.msra.mxu0 %v323
        %6278 = vmatpush.msra.mxu0 %v319
        %6279 = vmatpush.msra.mxu0 %v315
        %6280 = vmatpush.msra.mxu0 %v311
        %6281 = vmatpush.msra.mxu0 %v307
        %6282 = vmatpush.msra.mxu0 %v303
        %6283 = vmatpush.msra.mxu0 %v299
        %6284 = vmatpush.msra.mxu0 %v295
        %6285 = vmatpush.msra.mxu0 %v291
        %6286 = vmatpush.msra.mxu0 %v287
        %6287 = vmatpush.msra.mxu0 %v283
        %6288 = vmatpush.msra.mxu0 %v279
        %6289 = vmatpush.msra.mxu0 %v275
        %6290 = vmatpush.msra.mxu0 %v271
        %6291 = vmatmul.f32.gmra.mxu0 %v3210
        %v6292 = vpop.f32.mrf.mxu0
        %v6293 = vadd.f32 0.0, %v6292
        %6294 = vmatmul.f32.gmra.mxu0 %v3213
        %v6295 = vpop.f32.mrf.mxu0
        %v6296 = vadd.f32 0.0, %v6295
        %6297 = vmatmul.f32.gmra.mxu0 %v3216
        %v6298 = vpop.f32.mrf.mxu0
        %v6299 = vadd.f32 0.0, %v6298
        %6300 = vmatmul.f32.gmra.mxu0 %v3219
        %v6301 = vpop.f32.mrf.mxu0
        %v6302 = vadd.f32 0.0, %v6301
        %6303 = vmatmul.f32.gmra.mxu0 %v3222
        %v6304 = vpop.f32.mrf.mxu0
        %v6305 = vadd.f32 0.0, %v6304
        %6306 = vmatmul.f32.gmra.mxu0 %v3225
        %v6307 = vpop.f32.mrf.mxu0
        %v6308 = vadd.f32 0.0, %v6307
        %6309 = vmatmul.f32.gmra.mxu0 %v3228
        %v6310 = vpop.f32.mrf.mxu0
        %v6311 = vadd.f32 0.0, %v6310
        %6312 = vmatmul.f32.gmra.mxu0 %v3231
        %v6313 = vpop.f32.mrf.mxu0
        %v6314 = vadd.f32 0.0, %v6313
        %6315 = vmatmul.f32.gmra.mxu0 %v3234
        %v6316 = vpop.f32.mrf.mxu0
        %v6317 = vadd.f32 0.0, %v6316
        %6318 = vmatmul.f32.gmra.mxu0 %v3237
        %v6319 = vpop.f32.mrf.mxu0
        %v6320 = vadd.f32 0.0, %v6319
        %6321 = vmatmul.f32.gmra.mxu0 %v3240
        %v6322 = vpop.f32.mrf.mxu0
        %v6323 = vadd.f32 0.0, %v6322
        %6324 = vmatmul.f32.gmra.mxu0 %v3243
        %v6325 = vpop.f32.mrf.mxu0
        %v6326 = vadd.f32 0.0, %v6325
        %6327 = vmatmul.f32.gmra.mxu0 %v3246
        %v6328 = vpop.f32.mrf.mxu0
        %v6329 = vadd.f32 0.0, %v6328
        %6330 = vmatmul.f32.gmra.mxu0 %v3249
        %v6331 = vpop.f32.mrf.mxu0
        %v6332 = vadd.f32 0.0, %v6331
        %6333 = vmatmul.f32.gmra.mxu0 %v3252
        %v6334 = vpop.f32.mrf.mxu0
        %v6335 = vadd.f32 0.0, %v6334
        %6336 = vmatmul.f32.gmra.mxu0 %v3255
        %v6337 = vpop.f32.mrf.mxu0
        %v6338 = vadd.f32 0.0, %v6337
        %6339 = vmatmul.f32.gmra.mxu0 %v3258
        %v6340 = vpop.f32.mrf.mxu0
        %v6341 = vadd.f32 0.0, %v6340
        %6342 = vmatmul.f32.gmra.mxu0 %v3261
        %v6343 = vpop.f32.mrf.mxu0
        %v6344 = vadd.f32 0.0, %v6343
        %6345 = vmatmul.f32.gmra.mxu0 %v3264
        %v6346 = vpop.f32.mrf.mxu0
        %v6347 = vadd.f32 0.0, %v6346
        %6348 = vmatmul.f32.gmra.mxu0 %v3267
        %v6349 = vpop.f32.mrf.mxu0
        %v6350 = vadd.f32 0.0, %v6349
        %6351 = vmatmul.f32.gmra.mxu0 %v3270
        %v6352 = vpop.f32.mrf.mxu0
        %v6353 = vadd.f32 0.0, %v6352
        %6354 = vmatmul.f32.gmra.mxu0 %v3273
        %v6355 = vpop.f32.mrf.mxu0
        %v6356 = vadd.f32 0.0, %v6355
        %6357 = vmatmul.f32.gmra.mxu0 %v3276
        %v6358 = vpop.f32.mrf.mxu0
        %v6359 = vadd.f32 0.0, %v6358
        %6360 = vmatmul.f32.gmra.mxu0 %v3279
        %v6361 = vpop.f32.mrf.mxu0
        %v6362 = vadd.f32 0.0, %v6361
        %6363 = vmatmul.f32.gmra.mxu0 %v3282
        %v6364 = vpop.f32.mrf.mxu0
        %v6365 = vadd.f32 0.0, %v6364
        %6366 = vmatmul.f32.gmra.mxu0 %v3285
        %v6367 = vpop.f32.mrf.mxu0
        %v6368 = vadd.f32 0.0, %v6367
        %6369 = vmatmul.f32.gmra.mxu0 %v3288
        %v6370 = vpop.f32.mrf.mxu0
        %v6371 = vadd.f32 0.0, %v6370
        %6372 = vmatmul.f32.gmra.mxu0 %v3291
        %v6373 = vpop.f32.mrf.mxu0
        %v6374 = vadd.f32 0.0, %v6373
        %6375 = vmatmul.f32.gmra.mxu0 %v3294
        %v6376 = vpop.f32.mrf.mxu0
        %v6377 = vadd.f32 0.0, %v6376
        %6378 = vmatmul.f32.gmra.mxu0 %v3297
        %v6379 = vpop.f32.mrf.mxu0
        %v6380 = vadd.f32 0.0, %v6379
        %6381 = vmatmul.f32.gmra.mxu0 %v3300
        %v6382 = vpop.f32.mrf.mxu0
        %v6383 = vadd.f32 0.0, %v6382
        %6384 = vmatmul.f32.gmra.mxu0 %v3303
        %v6385 = vpop.f32.mrf.mxu0
        %v6386 = vadd.f32 0.0, %v6385
        %6387 = vdwg.mxu0
        %6388 = vmatpush.msra.mxu0 %v395
        %6389 = vmatpush.msra.mxu0 %v391
        %6390 = vmatpush.msra.mxu0 %v387
        %6391 = vmatpush.msra.mxu0 %v383
        %6392 = vmatpush.msra.mxu0 %v379
        %6393 = vmatpush.msra.mxu0 %v375
        %6394 = vmatpush.msra.mxu0 %v371
        %6395 = vmatpush.msra.mxu0 %v367
        %6396 = vmatpush.msra.mxu0 %v363
        %6397 = vmatpush.msra.mxu0 %v359
        %6398 = vmatpush.msra.mxu0 %v355
        %6399 = vmatpush.msra.mxu0 %v351
        %6400 = vmatpush.msra.mxu0 %v347
        %6401 = vmatpush.msra.mxu0 %v343
        %6402 = vmatpush.msra.mxu0 %v339
        %6403 = vmatpush.msra.mxu0 %v335
        %6404 = vmatmul.f32.gmra.mxu0 %v3662
        %v6405 = vpop.f32.mrf.mxu0
        %v6406 = vadd.f32 %v6293, %v6405
        %6407 = vmatmul.f32.gmra.mxu0 %v3665
        %v6408 = vpop.f32.mrf.mxu0
        %v6409 = vadd.f32 %v6296, %v6408
        %6410 = vmatmul.f32.gmra.mxu0 %v3668
        %v6411 = vpop.f32.mrf.mxu0
        %v6412 = vadd.f32 %v6299, %v6411
        %6413 = vmatmul.f32.gmra.mxu0 %v3671
        %v6414 = vpop.f32.mrf.mxu0
        %v6415 = vadd.f32 %v6302, %v6414
        %6416 = vmatmul.f32.gmra.mxu0 %v3674
        %v6417 = vpop.f32.mrf.mxu0
        %v6418 = vadd.f32 %v6305, %v6417
        %6419 = vmatmul.f32.gmra.mxu0 %v3677
        %v6420 = vpop.f32.mrf.mxu0
        %v6421 = vadd.f32 %v6308, %v6420
        %6422 = vmatmul.f32.gmra.mxu0 %v3680
        %v6423 = vpop.f32.mrf.mxu0
        %v6424 = vadd.f32 %v6311, %v6423
        %6425 = vmatmul.f32.gmra.mxu0 %v3683
        %v6426 = vpop.f32.mrf.mxu0
        %v6427 = vadd.f32 %v6314, %v6426
        %6428 = vmatmul.f32.gmra.mxu0 %v3686
        %v6429 = vpop.f32.mrf.mxu0
        %v6430 = vadd.f32 %v6317, %v6429
        %6431 = vmatmul.f32.gmra.mxu0 %v3689
        %v6432 = vpop.f32.mrf.mxu0
        %v6433 = vadd.f32 %v6320, %v6432
        %6434 = vmatmul.f32.gmra.mxu0 %v3692
        %v6435 = vpop.f32.mrf.mxu0
        %v6436 = vadd.f32 %v6323, %v6435
        %6437 = vmatmul.f32.gmra.mxu0 %v3695
        %v6438 = vpop.f32.mrf.mxu0
        %v6439 = vadd.f32 %v6326, %v6438
        %6440 = vmatmul.f32.gmra.mxu0 %v3698
        %v6441 = vpop.f32.mrf.mxu0
        %v6442 = vadd.f32 %v6329, %v6441
        %6443 = vmatmul.f32.gmra.mxu0 %v3701
        %v6444 = vpop.f32.mrf.mxu0
        %v6445 = vadd.f32 %v6332, %v6444
        %6446 = vmatmul.f32.gmra.mxu0 %v3704
        %v6447 = vpop.f32.mrf.mxu0
        %v6448 = vadd.f32 %v6335, %v6447
        %6449 = vmatmul.f32.gmra.mxu0 %v3707
        %v6450 = vpop.f32.mrf.mxu0
        %v6451 = vadd.f32 %v6338, %v6450
        %6452 = vmatmul.f32.gmra.mxu0 %v3710
        %v6453 = vpop.f32.mrf.mxu0
        %v6454 = vadd.f32 %v6341, %v6453
        %6455 = vmatmul.f32.gmra.mxu0 %v3713
        %v6456 = vpop.f32.mrf.mxu0
        %v6457 = vadd.f32 %v6344, %v6456
        %6458 = vmatmul.f32.gmra.mxu0 %v3716
        %v6459 = vpop.f32.mrf.mxu0
        %v6460 = vadd.f32 %v6347, %v6459
        %6461 = vmatmul.f32.gmra.mxu0 %v3719
        %v6462 = vpop.f32.mrf.mxu0
        %v6463 = vadd.f32 %v6350, %v6462
        %6464 = vmatmul.f32.gmra.mxu0 %v3722
        %v6465 = vpop.f32.mrf.mxu0
        %v6466 = vadd.f32 %v6353, %v6465
        %6467 = vmatmul.f32.gmra.mxu0 %v3725
        %v6468 = vpop.f32.mrf.mxu0
        %v6469 = vadd.f32 %v6356, %v6468
        %6470 = vmatmul.f32.gmra.mxu0 %v3728
        %v6471 = vpop.f32.mrf.mxu0
        %v6472 = vadd.f32 %v6359, %v6471
        %6473 = vmatmul.f32.gmra.mxu0 %v3731
        %v6474 = vpop.f32.mrf.mxu0
        %v6475 = vadd.f32 %v6362, %v6474
        %6476 = vmatmul.f32.gmra.mxu0 %v3734
        %v6477 = vpop.f32.mrf.mxu0
        %v6478 = vadd.f32 %v6365, %v6477
        %6479 = vmatmul.f32.gmra.mxu0 %v3737
        %v6480 = vpop.f32.mrf.mxu0
        %v6481 = vadd.f32 %v6368, %v6480
        %6482 = vmatmul.f32.gmra.mxu0 %v3740
        %v6483 = vpop.f32.mrf.mxu0
        %v6484 = vadd.f32 %v6371, %v6483
        %6485 = vmatmul.f32.gmra.mxu0 %v3743
        %v6486 = vpop.f32.mrf.mxu0
        %v6487 = vadd.f32 %v6374, %v6486
        %6488 = vmatmul.f32.gmra.mxu0 %v3746
        %v6489 = vpop.f32.mrf.mxu0
        %v6490 = vadd.f32 %v6377, %v6489
        %6491 = vmatmul.f32.gmra.mxu0 %v3749
        %v6492 = vpop.f32.mrf.mxu0
        %v6493 = vadd.f32 %v6380, %v6492
        %6494 = vmatmul.f32.gmra.mxu0 %v3752
        %v6495 = vpop.f32.mrf.mxu0
        %v6496 = vadd.f32 %v6383, %v6495
        %6497 = vmatmul.f32.gmra.mxu0 %v3755
        %v6498 = vpop.f32.mrf.mxu0
        %v6499 = vadd.f32 %v6386, %v6498
        %6500 = vdwg.mxu0
        %6501 = vmatpush.msra.mxu0 %v459
        %6502 = vmatpush.msra.mxu0 %v455
        %6503 = vmatpush.msra.mxu0 %v451
        %6504 = vmatpush.msra.mxu0 %v447
        %6505 = vmatpush.msra.mxu0 %v443
        %6506 = vmatpush.msra.mxu0 %v439
        %6507 = vmatpush.msra.mxu0 %v435
        %6508 = vmatpush.msra.mxu0 %v431
        %6509 = vmatpush.msra.mxu0 %v427
        %6510 = vmatpush.msra.mxu0 %v423
        %6511 = vmatpush.msra.mxu0 %v419
        %6512 = vmatpush.msra.mxu0 %v415
        %6513 = vmatpush.msra.mxu0 %v411
        %6514 = vmatpush.msra.mxu0 %v407
        %6515 = vmatpush.msra.mxu0 %v403
        %6516 = vmatpush.msra.mxu0 %v399
        %6517 = vmatmul.f32.gmra.mxu0 %v4114
        %v6518 = vpop.f32.mrf.mxu0
        %v6519 = vadd.f32 %v6406, %v6518
        %6520 = vmatmul.f32.gmra.mxu0 %v4117
        %v6521 = vpop.f32.mrf.mxu0
        %v6522 = vadd.f32 %v6409, %v6521
        %6523 = vmatmul.f32.gmra.mxu0 %v4120
        %v6524 = vpop.f32.mrf.mxu0
        %v6525 = vadd.f32 %v6412, %v6524
        %6526 = vmatmul.f32.gmra.mxu0 %v4123
        %v6527 = vpop.f32.mrf.mxu0
        %v6528 = vadd.f32 %v6415, %v6527
        %6529 = vmatmul.f32.gmra.mxu0 %v4126
        %v6530 = vpop.f32.mrf.mxu0
        %v6531 = vadd.f32 %v6418, %v6530
        %6532 = vmatmul.f32.gmra.mxu0 %v4129
        %v6533 = vpop.f32.mrf.mxu0
        %v6534 = vadd.f32 %v6421, %v6533
        %6535 = vmatmul.f32.gmra.mxu0 %v4132
        %v6536 = vpop.f32.mrf.mxu0
        %v6537 = vadd.f32 %v6424, %v6536
        %6538 = vmatmul.f32.gmra.mxu0 %v4135
        %v6539 = vpop.f32.mrf.mxu0
        %v6540 = vadd.f32 %v6427, %v6539
        %6541 = vmatmul.f32.gmra.mxu0 %v4138
        %v6542 = vpop.f32.mrf.mxu0
        %v6543 = vadd.f32 %v6430, %v6542
        %6544 = vmatmul.f32.gmra.mxu0 %v4141
        %v6545 = vpop.f32.mrf.mxu0
        %v6546 = vadd.f32 %v6433, %v6545
        %6547 = vmatmul.f32.gmra.mxu0 %v4144
        %v6548 = vpop.f32.mrf.mxu0
        %v6549 = vadd.f32 %v6436, %v6548
        %6550 = vmatmul.f32.gmra.mxu0 %v4147
        %v6551 = vpop.f32.mrf.mxu0
        %v6552 = vadd.f32 %v6439, %v6551
        %6553 = vmatmul.f32.gmra.mxu0 %v4150
        %v6554 = vpop.f32.mrf.mxu0
        %v6555 = vadd.f32 %v6442, %v6554
        %6556 = vmatmul.f32.gmra.mxu0 %v4153
        %v6557 = vpop.f32.mrf.mxu0
        %v6558 = vadd.f32 %v6445, %v6557
        %6559 = vmatmul.f32.gmra.mxu0 %v4156
        %v6560 = vpop.f32.mrf.mxu0
        %v6561 = vadd.f32 %v6448, %v6560
        %6562 = vmatmul.f32.gmra.mxu0 %v4159
        %v6563 = vpop.f32.mrf.mxu0
        %v6564 = vadd.f32 %v6451, %v6563
        %6565 = vmatmul.f32.gmra.mxu0 %v4162
        %v6566 = vpop.f32.mrf.mxu0
        %v6567 = vadd.f32 %v6454, %v6566
        %6568 = vmatmul.f32.gmra.mxu0 %v4165
        %v6569 = vpop.f32.mrf.mxu0
        %v6570 = vadd.f32 %v6457, %v6569
        %6571 = vmatmul.f32.gmra.mxu0 %v4168
        %v6572 = vpop.f32.mrf.mxu0
        %v6573 = vadd.f32 %v6460, %v6572
        %6574 = vmatmul.f32.gmra.mxu0 %v4171
        %v6575 = vpop.f32.mrf.mxu0
        %v6576 = vadd.f32 %v6463, %v6575
        %6577 = vmatmul.f32.gmra.mxu0 %v4174
        %v6578 = vpop.f32.mrf.mxu0
        %v6579 = vadd.f32 %v6466, %v6578
        %6580 = vmatmul.f32.gmra.mxu0 %v4177
        %v6581 = vpop.f32.mrf.mxu0
        %v6582 = vadd.f32 %v6469, %v6581
        %6583 = vmatmul.f32.gmra.mxu0 %v4180
        %v6584 = vpop.f32.mrf.mxu0
        %v6585 = vadd.f32 %v6472, %v6584
        %6586 = vmatmul.f32.gmra.mxu0 %v4183
        %v6587 = vpop.f32.mrf.mxu0
        %v6588 = vadd.f32 %v6475, %v6587
        %6589 = vmatmul.f32.gmra.mxu0 %v4186
        %v6590 = vpop.f32.mrf.mxu0
        %v6591 = vadd.f32 %v6478, %v6590
        %6592 = vmatmul.f32.gmra.mxu0 %v4189
        %v6593 = vpop.f32.mrf.mxu0
        %v6594 = vadd.f32 %v6481, %v6593
        %6595 = vmatmul.f32.gmra.mxu0 %v4192
        %v6596 = vpop.f32.mrf.mxu0
        %v6597 = vadd.f32 %v6484, %v6596
        %6598 = vmatmul.f32.gmra.mxu0 %v4195
        %v6599 = vpop.f32.mrf.mxu0
        %v6600 = vadd.f32 %v6487, %v6599
        %6601 = vmatmul.f32.gmra.mxu0 %v4198
        %v6602 = vpop.f32.mrf.mxu0
        %v6603 = vadd.f32 %v6490, %v6602
        %6604 = vmatmul.f32.gmra.mxu0 %v4201
        %v6605 = vpop.f32.mrf.mxu0
        %v6606 = vadd.f32 %v6493, %v6605
        %6607 = vmatmul.f32.gmra.mxu0 %v4204
        %v6608 = vpop.f32.mrf.mxu0
        %v6609 = vadd.f32 %v6496, %v6608
        %6610 = vmatmul.f32.gmra.mxu0 %v4207
        %v6611 = vpop.f32.mrf.mxu0
        %v6612 = vadd.f32 %v6499, %v6611
        %6613 = vdwg.mxu0
        %6614 = vmatpush.msra.mxu0 %v523
        %6615 = vmatpush.msra.mxu0 %v519
        %6616 = vmatpush.msra.mxu0 %v515
        %6617 = vmatpush.msra.mxu0 %v511
        %6618 = vmatpush.msra.mxu0 %v507
        %6619 = vmatpush.msra.mxu0 %v503
        %6620 = vmatpush.msra.mxu0 %v499
        %6621 = vmatpush.msra.mxu0 %v495
        %6622 = vmatpush.msra.mxu0 %v491
        %6623 = vmatpush.msra.mxu0 %v487
        %6624 = vmatpush.msra.mxu0 %v483
        %6625 = vmatpush.msra.mxu0 %v479
        %6626 = vmatpush.msra.mxu0 %v475
        %6627 = vmatpush.msra.mxu0 %v471
        %6628 = vmatpush.msra.mxu0 %v467
        %6629 = vmatpush.msra.mxu0 %v463
        %6630 = vmatmul.f32.gmra.mxu0 %v4566
        %v6631 = vpop.f32.mrf.mxu0
        %v6632 = vadd.f32 %v6519, %v6631
        %6633 = vmatmul.f32.gmra.mxu0 %v4569
        %v6634 = vpop.f32.mrf.mxu0
        %v6635 = vadd.f32 %v6522, %v6634
        %6636 = vmatmul.f32.gmra.mxu0 %v4572
        %v6637 = vpop.f32.mrf.mxu0
        %v6638 = vadd.f32 %v6525, %v6637
        %6639 = vmatmul.f32.gmra.mxu0 %v4575
        %v6640 = vpop.f32.mrf.mxu0
        %v6641 = vadd.f32 %v6528, %v6640
        %6642 = vmatmul.f32.gmra.mxu0 %v4578
        %v6643 = vpop.f32.mrf.mxu0
        %v6644 = vadd.f32 %v6531, %v6643
        %6645 = vmatmul.f32.gmra.mxu0 %v4581
        %v6646 = vpop.f32.mrf.mxu0
        %v6647 = vadd.f32 %v6534, %v6646
        %6648 = vmatmul.f32.gmra.mxu0 %v4584
        %v6649 = vpop.f32.mrf.mxu0
        %v6650 = vadd.f32 %v6537, %v6649
        %6651 = vmatmul.f32.gmra.mxu0 %v4587
        %v6652 = vpop.f32.mrf.mxu0
        %v6653 = vadd.f32 %v6540, %v6652
        %6654 = vmatmul.f32.gmra.mxu0 %v4590
        %v6655 = vpop.f32.mrf.mxu0
        %v6656 = vadd.f32 %v6543, %v6655
        %6657 = vmatmul.f32.gmra.mxu0 %v4593
        %v6658 = vpop.f32.mrf.mxu0
        %v6659 = vadd.f32 %v6546, %v6658
        %6660 = vmatmul.f32.gmra.mxu0 %v4596
        %v6661 = vpop.f32.mrf.mxu0
        %v6662 = vadd.f32 %v6549, %v6661
        %6663 = vmatmul.f32.gmra.mxu0 %v4599
        %v6664 = vpop.f32.mrf.mxu0
        %v6665 = vadd.f32 %v6552, %v6664
        %6666 = vmatmul.f32.gmra.mxu0 %v4602
        %v6667 = vpop.f32.mrf.mxu0
        %v6668 = vadd.f32 %v6555, %v6667
        %6669 = vmatmul.f32.gmra.mxu0 %v4605
        %v6670 = vpop.f32.mrf.mxu0
        %v6671 = vadd.f32 %v6558, %v6670
        %6672 = vmatmul.f32.gmra.mxu0 %v4608
        %v6673 = vpop.f32.mrf.mxu0
        %v6674 = vadd.f32 %v6561, %v6673
        %6675 = vmatmul.f32.gmra.mxu0 %v4611
        %v6676 = vpop.f32.mrf.mxu0
        %v6677 = vadd.f32 %v6564, %v6676
        %6678 = vmatmul.f32.gmra.mxu0 %v4614
        %v6679 = vpop.f32.mrf.mxu0
        %v6680 = vadd.f32 %v6567, %v6679
        %6681 = vmatmul.f32.gmra.mxu0 %v4617
        %v6682 = vpop.f32.mrf.mxu0
        %v6683 = vadd.f32 %v6570, %v6682
        %6684 = vmatmul.f32.gmra.mxu0 %v4620
        %v6685 = vpop.f32.mrf.mxu0
        %v6686 = vadd.f32 %v6573, %v6685
        %6687 = vmatmul.f32.gmra.mxu0 %v4623
        %v6688 = vpop.f32.mrf.mxu0
        %v6689 = vadd.f32 %v6576, %v6688
        %6690 = vmatmul.f32.gmra.mxu0 %v4626
        %v6691 = vpop.f32.mrf.mxu0
        %v6692 = vadd.f32 %v6579, %v6691
        %6693 = vmatmul.f32.gmra.mxu0 %v4629
        %v6694 = vpop.f32.mrf.mxu0
        %v6695 = vadd.f32 %v6582, %v6694
        %6696 = vmatmul.f32.gmra.mxu0 %v4632
        %v6697 = vpop.f32.mrf.mxu0
        %v6698 = vadd.f32 %v6585, %v6697
        %6699 = vmatmul.f32.gmra.mxu0 %v4635
        %v6700 = vpop.f32.mrf.mxu0
        %v6701 = vadd.f32 %v6588, %v6700
        %6702 = vmatmul.f32.gmra.mxu0 %v4638
        %v6703 = vpop.f32.mrf.mxu0
        %v6704 = vadd.f32 %v6591, %v6703
        %6705 = vmatmul.f32.gmra.mxu0 %v4641
        %v6706 = vpop.f32.mrf.mxu0
        %v6707 = vadd.f32 %v6594, %v6706
        %6708 = vmatmul.f32.gmra.mxu0 %v4644
        %v6709 = vpop.f32.mrf.mxu0
        %v6710 = vadd.f32 %v6597, %v6709
        %6711 = vmatmul.f32.gmra.mxu0 %v4647
        %v6712 = vpop.f32.mrf.mxu0
        %v6713 = vadd.f32 %v6600, %v6712
        %6714 = vmatmul.f32.gmra.mxu0 %v4650
        %v6715 = vpop.f32.mrf.mxu0
        %v6716 = vadd.f32 %v6603, %v6715
        %6717 = vmatmul.f32.gmra.mxu0 %v4653
        %v6718 = vpop.f32.mrf.mxu0
        %v6719 = vadd.f32 %v6606, %v6718
        %6720 = vmatmul.f32.gmra.mxu0 %v4656
        %v6721 = vpop.f32.mrf.mxu0
        %v6722 = vadd.f32 %v6609, %v6721
        %6723 = vmatmul.f32.gmra.mxu0 %v4659
        %v6724 = vpop.f32.mrf.mxu0
        %v6725 = vadd.f32 %v6612, %v6724
        %6726 = vdwg.mxu0
        %s6727 = sld [smem:[#allocation2 + $0x3]]
        %v6728 = vstv %s6727
        %v6729 = vmul.f32 %v6728, %v5276
        %v6730 = vmul.f32 %v6728, %v5728
        %v6731 = vmul.f32 %v6728, %v6180
        %v6732 = vmul.f32 %v6728, %v6632
        %v6733 = vmul.f32 %v6728, %v5279
        %v6734 = vmul.f32 %v6728, %v5731
        %v6735 = vmul.f32 %v6728, %v6183
        %v6736 = vmul.f32 %v6728, %v6635
        %v6737 = vmul.f32 %v6728, %v5282
        %v6738 = vmul.f32 %v6728, %v5734
        %v6739 = vmul.f32 %v6728, %v6186
        %v6740 = vmul.f32 %v6728, %v6638
        %v6741 = vmul.f32 %v6728, %v5285
        %v6742 = vmul.f32 %v6728, %v5737
        %v6743 = vmul.f32 %v6728, %v6189
        %v6744 = vmul.f32 %v6728, %v6641
        %v6745 = vmul.f32 %v6728, %v5288
        %v6746 = vmul.f32 %v6728, %v5740
        %v6747 = vmul.f32 %v6728, %v6192
        %v6748 = vmul.f32 %v6728, %v6644
        %v6749 = vmul.f32 %v6728, %v5291
        %v6750 = vmul.f32 %v6728, %v5743
        %v6751 = vmul.f32 %v6728, %v6195
        %v6752 = vmul.f32 %v6728, %v6647
        %v6753 = vmul.f32 %v6728, %v5294
        %v6754 = vmul.f32 %v6728, %v5746
        %v6755 = vmul.f32 %v6728, %v6198
        %v6756 = vmul.f32 %v6728, %v6650
        %v6757 = vmul.f32 %v6728, %v5297
        %v6758 = vmul.f32 %v6728, %v5749
        %v6759 = vmul.f32 %v6728, %v6201
        %v6760 = vmul.f32 %v6728, %v6653
        %v6761 = vmul.f32 %v6728, %v5300
        %v6762 = vmul.f32 %v6728, %v5752
        %v6763 = vmul.f32 %v6728, %v6204
        %v6764 = vmul.f32 %v6728, %v6656
        %v6765 = vmul.f32 %v6728, %v5303
        %v6766 = vmul.f32 %v6728, %v5755
        %v6767 = vmul.f32 %v6728, %v6207
        %v6768 = vmul.f32 %v6728, %v6659
        %v6769 = vmul.f32 %v6728, %v5306
        %v6770 = vmul.f32 %v6728, %v5758
        %v6771 = vmul.f32 %v6728, %v6210
        %v6772 = vmul.f32 %v6728, %v6662
        %v6773 = vmul.f32 %v6728, %v5309
        %v6774 = vmul.f32 %v6728, %v5761
        %v6775 = vmul.f32 %v6728, %v6213
        %v6776 = vmul.f32 %v6728, %v6665
        %v6777 = vmul.f32 %v6728, %v5312
        %v6778 = vmul.f32 %v6728, %v5764
        %v6779 = vmul.f32 %v6728, %v6216
        %v6780 = vmul.f32 %v6728, %v6668
        %v6781 = vmul.f32 %v6728, %v5315
        %v6782 = vmul.f32 %v6728, %v5767
        %v6783 = vmul.f32 %v6728, %v6219
        %v6784 = vmul.f32 %v6728, %v6671
        %v6785 = vmul.f32 %v6728, %v5318
        %v6786 = vmul.f32 %v6728, %v5770
        %v6787 = vmul.f32 %v6728, %v6222
        %v6788 = vmul.f32 %v6728, %v6674
        %v6789 = vmul.f32 %v6728, %v5321
        %v6790 = vmul.f32 %v6728, %v5773
        %v6791 = vmul.f32 %v6728, %v6225
        %v6792 = vmul.f32 %v6728, %v6677
        %v6793 = vmul.f32 %v6728, %v5324
        %v6794 = vmul.f32 %v6728, %v5776
        %v6795 = vmul.f32 %v6728, %v6228
        %v6796 = vmul.f32 %v6728, %v6680
        %v6797 = vmul.f32 %v6728, %v5327
        %v6798 = vmul.f32 %v6728, %v5779
        %v6799 = vmul.f32 %v6728, %v6231
        %v6800 = vmul.f32 %v6728, %v6683
        %v6801 = vmul.f32 %v6728, %v5330
        %v6802 = vmul.f32 %v6728, %v5782
        %v6803 = vmul.f32 %v6728, %v6234
        %v6804 = vmul.f32 %v6728, %v6686
        %v6805 = vmul.f32 %v6728, %v5333
        %v6806 = vmul.f32 %v6728, %v5785
        %v6807 = vmul.f32 %v6728, %v6237
        %v6808 = vmul.f32 %v6728, %v6689
        %v6809 = vmul.f32 %v6728, %v5336
        %v6810 = vmul.f32 %v6728, %v5788
        %v6811 = vmul.f32 %v6728, %v6240
        %v6812 = vmul.f32 %v6728, %v6692
        %v6813 = vmul.f32 %v6728, %v5339
        %v6814 = vmul.f32 %v6728, %v5791
        %v6815 = vmul.f32 %v6728, %v6243
        %v6816 = vmul.f32 %v6728, %v6695
        %v6817 = vmul.f32 %v6728, %v5342
        %v6818 = vmul.f32 %v6728, %v5794
        %v6819 = vmul.f32 %v6728, %v6246
        %v6820 = vmul.f32 %v6728, %v6698
        %v6821 = vmul.f32 %v6728, %v5345
        %v6822 = vmul.f32 %v6728, %v5797
        %v6823 = vmul.f32 %v6728, %v6249
        %v6824 = vmul.f32 %v6728, %v6701
        %v6825 = vmul.f32 %v6728, %v5348
        %v6826 = vmul.f32 %v6728, %v5800
        %v6827 = vmul.f32 %v6728, %v6252
        %v6828 = vmul.f32 %v6728, %v6704
        %v6829 = vmul.f32 %v6728, %v5351
        %v6830 = vmul.f32 %v6728, %v5803
        %v6831 = vmul.f32 %v6728, %v6255
        %v6832 = vmul.f32 %v6728, %v6707
        %v6833 = vmul.f32 %v6728, %v5354
        %v6834 = vmul.f32 %v6728, %v5806
        %v6835 = vmul.f32 %v6728, %v6258
        %v6836 = vmul.f32 %v6728, %v6710
        %v6837 = vmul.f32 %v6728, %v5357
        %v6838 = vmul.f32 %v6728, %v5809
        %v6839 = vmul.f32 %v6728, %v6261
        %v6840 = vmul.f32 %v6728, %v6713
        %v6841 = vmul.f32 %v6728, %v5360
        %v6842 = vmul.f32 %v6728, %v5812
        %v6843 = vmul.f32 %v6728, %v6264
        %v6844 = vmul.f32 %v6728, %v6716
        %v6845 = vmul.f32 %v6728, %v5363
        %v6846 = vmul.f32 %v6728, %v5815
        %v6847 = vmul.f32 %v6728, %v6267
        %v6848 = vmul.f32 %v6728, %v6719
        %v6849 = vmul.f32 %v6728, %v5366
        %v6850 = vmul.f32 %v6728, %v5818
        %v6851 = vmul.f32 %v6728, %v6270
        %v6852 = vmul.f32 %v6728, %v6722
        %v6853 = vmul.f32 %v6728, %v5369
        %v6854 = vmul.f32 %v6728, %v5821
        %v6855 = vmul.f32 %v6728, %v6273
        %v6856 = vmul.f32 %v6728, %v6725
        %v6857 = vadd.f32 %v4791, %v6729
        %v6858 = vadd.f32 %v4792, %v6730
        %v6859 = vadd.f32 %v4793, %v6731
        %v6860 = vadd.f32 %v4794, %v6732
        %v6861 = vadd.f32 %v4795, %v6733
        %v6862 = vadd.f32 %v4796, %v6734
        %v6863 = vadd.f32 %v4797, %v6735
        %v6864 = vadd.f32 %v4798, %v6736
        %v6865 = vadd.f32 %v4799, %v6737
        %v6866 = vadd.f32 %v4800, %v6738
        %v6867 = vadd.f32 %v4801, %v6739
        %v6868 = vadd.f32 %v4802, %v6740
        %v6869 = vadd.f32 %v4803, %v6741
        %v6870 = vadd.f32 %v4804, %v6742
        %v6871 = vadd.f32 %v4805, %v6743
        %v6872 = vadd.f32 %v4806, %v6744
        %v6873 = vadd.f32 %v4807, %v6745
        %v6874 = vadd.f32 %v4808, %v6746
        %v6875 = vadd.f32 %v4809, %v6747
        %v6876 = vadd.f32 %v4810, %v6748
        %v6877 = vadd.f32 %v4811, %v6749
        %v6878 = vadd.f32 %v4812, %v6750
        %v6879 = vadd.f32 %v4813, %v6751
        %v6880 = vadd.f32 %v4814, %v6752
        %v6881 = vadd.f32 %v4815, %v6753
        %v6882 = vadd.f32 %v4816, %v6754
        %v6883 = vadd.f32 %v4817, %v6755
        %v6884 = vadd.f32 %v4818, %v6756
        %v6885 = vadd.f32 %v4819, %v6757
        %v6886 = vadd.f32 %v4820, %v6758
        %v6887 = vadd.f32 %v4821, %v6759
        %v6888 = vadd.f32 %v4822, %v6760
        %v6889 = vadd.f32 %v4823, %v6761
        %v6890 = vadd.f32 %v4824, %v6762
        %v6891 = vadd.f32 %v4825, %v6763
        %v6892 = vadd.f32 %v4826, %v6764
        %v6893 = vadd.f32 %v4827, %v6765
        %v6894 = vadd.f32 %v4828, %v6766
        %v6895 = vadd.f32 %v4829, %v6767
        %v6896 = vadd.f32 %v4830, %v6768
        %v6897 = vadd.f32 %v4831, %v6769
        %v6898 = vadd.f32 %v4832, %v6770
        %v6899 = vadd.f32 %v4833, %v6771
        %v6900 = vadd.f32 %v4834, %v6772
        %v6901 = vadd.f32 %v4835, %v6773
        %v6902 = vadd.f32 %v4836, %v6774
        %v6903 = vadd.f32 %v4837, %v6775
        %v6904 = vadd.f32 %v4838, %v6776
        %v6905 = vadd.f32 %v4839, %v6777
        %v6906 = vadd.f32 %v4840, %v6778
        %v6907 = vadd.f32 %v4841, %v6779
        %v6908 = vadd.f32 %v4842, %v6780
        %v6909 = vadd.f32 %v4843, %v6781
        %v6910 = vadd.f32 %v4844, %v6782
        %v6911 = vadd.f32 %v4845, %v6783
        %v6912 = vadd.f32 %v4846, %v6784
        %v6913 = vadd.f32 %v4847, %v6785
        %v6914 = vadd.f32 %v4848, %v6786
        %v6915 = vadd.f32 %v4849, %v6787
        %v6916 = vadd.f32 %v4850, %v6788
        %v6917 = vadd.f32 %v4851, %v6789
        %v6918 = vadd.f32 %v4852, %v6790
        %v6919 = vadd.f32 %v4853, %v6791
        %v6920 = vadd.f32 %v4854, %v6792
        %v6921 = vadd.f32 %v4855, %v6793
        %v6922 = vadd.f32 %v4856, %v6794
        %v6923 = vadd.f32 %v4857, %v6795
        %v6924 = vadd.f32 %v4858, %v6796
        %v6925 = vadd.f32 %v4859, %v6797
        %v6926 = vadd.f32 %v4860, %v6798
        %v6927 = vadd.f32 %v4861, %v6799
        %v6928 = vadd.f32 %v4862, %v6800
        %v6929 = vadd.f32 %v4863, %v6801
        %v6930 = vadd.f32 %v4864, %v6802
        %v6931 = vadd.f32 %v4865, %v6803
        %v6932 = vadd.f32 %v4866, %v6804
        %v6933 = vadd.f32 %v4867, %v6805
        %v6934 = vadd.f32 %v4868, %v6806
        %v6935 = vadd.f32 %v4869, %v6807
        %v6936 = vadd.f32 %v4870, %v6808
        %v6937 = vadd.f32 %v4871, %v6809
        %v6938 = vadd.f32 %v4872, %v6810
        %v6939 = vadd.f32 %v4873, %v6811
        %v6940 = vadd.f32 %v4874, %v6812
        %v6941 = vadd.f32 %v4875, %v6813
        %v6942 = vadd.f32 %v4876, %v6814
        %v6943 = vadd.f32 %v4877, %v6815
        %v6944 = vadd.f32 %v4878, %v6816
        %v6945 = vadd.f32 %v4879, %v6817
        %v6946 = vadd.f32 %v4880, %v6818
        %v6947 = vadd.f32 %v4881, %v6819
        %v6948 = vadd.f32 %v4882, %v6820
        %v6949 = vadd.f32 %v4883, %v6821
        %v6950 = vadd.f32 %v4884, %v6822
        %v6951 = vadd.f32 %v4885, %v6823
        %v6952 = vadd.f32 %v4886, %v6824
        %v6953 = vadd.f32 %v4887, %v6825
        %v6954 = vadd.f32 %v4888, %v6826
        %v6955 = vadd.f32 %v4889, %v6827
        %v6956 = vadd.f32 %v4890, %v6828
        %v6957 = vadd.f32 %v4891, %v6829
        %v6958 = vadd.f32 %v4892, %v6830
        %v6959 = vadd.f32 %v4893, %v6831
        %v6960 = vadd.f32 %v4894, %v6832
        %v6961 = vadd.f32 %v4895, %v6833
        %v6962 = vadd.f32 %v4896, %v6834
        %v6963 = vadd.f32 %v4897, %v6835
        %v6964 = vadd.f32 %v4898, %v6836
        %v6965 = vadd.f32 %v4899, %v6837
        %v6966 = vadd.f32 %v4900, %v6838
        %v6967 = vadd.f32 %v4901, %v6839
        %v6968 = vadd.f32 %v4902, %v6840
        %v6969 = vadd.f32 %v4903, %v6841
        %v6970 = vadd.f32 %v4904, %v6842
        %v6971 = vadd.f32 %v4905, %v6843
        %v6972 = vadd.f32 %v4906, %v6844
        %v6973 = vadd.f32 %v4907, %v6845
        %v6974 = vadd.f32 %v4908, %v6846
        %v6975 = vadd.f32 %v4909, %v6847
        %v6976 = vadd.f32 %v4910, %v6848
        %v6977 = vadd.f32 %v4911, %v6849
        %v6978 = vadd.f32 %v4912, %v6850
        %v6979 = vadd.f32 %v4913, %v6851
        %v6980 = vadd.f32 %v4914, %v6852
        %v6981 = vadd.f32 %v4915, %v6853
        %v6982 = vadd.f32 %v4916, %v6854
        %v6983 = vadd.f32 %v4917, %v6855
        %v6984 = vadd.f32 %v4918, %v6856
        %v6985 = vld [vmem:[%s259] sm:$0xff]
        %v6986 = vld [vmem:[%s259 + $0x8] sm:$0xff]
        %v6987 = vld [vmem:[%s259 + $0x10] sm:$0xff]
        %v6988 = vld [vmem:[%s259 + $0x18] sm:$0xff]
        %v6989 = vld [vmem:[%s259 + $0x20] sm:$0xff]
        %v6990 = vld [vmem:[%s259 + $0x28] sm:$0xff]
        %v6991 = vld [vmem:[%s259 + $0x30] sm:$0xff]
        %v6992 = vld [vmem:[%s259 + $0x38] sm:$0xff]
        %v6993 = vld [vmem:[%s259 + $0x40] sm:$0xff]
        %v6994 = vld [vmem:[%s259 + $0x48] sm:$0xff]
        %v6995 = vld [vmem:[%s259 + $0x50] sm:$0xff]
        %v6996 = vld [vmem:[%s259 + $0x58] sm:$0xff]
        %v6997 = vld [vmem:[%s259 + $0x60] sm:$0xff]
        %v6998 = vld [vmem:[%s259 + $0x68] sm:$0xff]
        %v6999 = vld [vmem:[%s259 + $0x70] sm:$0xff]
        %v7000 = vld [vmem:[%s259 + $0x78] sm:$0xff]
        %v7001 = vld [vmem:[%s259 + $0x80] sm:$0xff]
        %v7002 = vld [vmem:[%s259 + $0x88] sm:$0xff]
        %v7003 = vld [vmem:[%s259 + $0x90] sm:$0xff]
        %v7004 = vld [vmem:[%s259 + $0x98] sm:$0xff]
        %v7005 = vld [vmem:[%s259 + $0xa0] sm:$0xff]
        %v7006 = vld [vmem:[%s259 + $0xa8] sm:$0xff]
        %v7007 = vld [vmem:[%s259 + $0xb0] sm:$0xff]
        %v7008 = vld [vmem:[%s259 + $0xb8] sm:$0xff]
        %v7009 = vld [vmem:[%s259 + $0xc0] sm:$0xff]
        %v7010 = vld [vmem:[%s259 + $0xc8] sm:$0xff]
        %v7011 = vld [vmem:[%s259 + $0xd0] sm:$0xff]
        %v7012 = vld [vmem:[%s259 + $0xd8] sm:$0xff]
        %v7013 = vld [vmem:[%s259 + $0xe0] sm:$0xff]
        %v7014 = vld [vmem:[%s259 + $0xe8] sm:$0xff]
        %v7015 = vld [vmem:[%s259 + $0xf0] sm:$0xff]
        %v7016 = vld [vmem:[%s259 + $0xf8] sm:$0xff]
        %v7017 = vld [vmem:[%s4] sm:$0xff]
        %v7018 = vld [vmem:[%s4 + $0x8] sm:$0xff]
        %v7019 = vld [vmem:[%s4 + $0x10] sm:$0xff]
        %v7020 = vld [vmem:[%s4 + $0x18] sm:$0xff]
        %v7021 = vld [vmem:[%s4 + $0x20] sm:$0xff]
        %v7022 = vld [vmem:[%s4 + $0x28] sm:$0xff]
        %v7023 = vld [vmem:[%s4 + $0x30] sm:$0xff]
        %v7024 = vld [vmem:[%s4 + $0x38] sm:$0xff]
        %v7025 = vld [vmem:[%s4 + $0x40] sm:$0xff]
        %v7026 = vld [vmem:[%s4 + $0x48] sm:$0xff]
        %v7027 = vld [vmem:[%s4 + $0x50] sm:$0xff]
        %v7028 = vld [vmem:[%s4 + $0x58] sm:$0xff]
        %v7029 = vld [vmem:[%s4 + $0x60] sm:$0xff]
        %v7030 = vld [vmem:[%s4 + $0x68] sm:$0xff]
        %v7031 = vld [vmem:[%s4 + $0x70] sm:$0xff]
        %v7032 = vld [vmem:[%s4 + $0x78] sm:$0xff]
        %v7033 = vld [vmem:[%s4 + $0x80] sm:$0xff]
        %v7034 = vld [vmem:[%s4 + $0x88] sm:$0xff]
        %v7035 = vld [vmem:[%s4 + $0x90] sm:$0xff]
        %v7036 = vld [vmem:[%s4 + $0x98] sm:$0xff]
        %v7037 = vld [vmem:[%s4 + $0xa0] sm:$0xff]
        %v7038 = vld [vmem:[%s4 + $0xa8] sm:$0xff]
        %v7039 = vld [vmem:[%s4 + $0xb0] sm:$0xff]
        %v7040 = vld [vmem:[%s4 + $0xb8] sm:$0xff]
        %v7041 = vld [vmem:[%s4 + $0xc0] sm:$0xff]
        %v7042 = vld [vmem:[%s4 + $0xc8] sm:$0xff]
        %v7043 = vld [vmem:[%s4 + $0xd0] sm:$0xff]
        %v7044 = vld [vmem:[%s4 + $0xd8] sm:$0xff]
        %v7045 = vld [vmem:[%s4 + $0xe0] sm:$0xff]
        %v7046 = vld [vmem:[%s4 + $0xe8] sm:$0xff]
        %v7047 = vld [vmem:[%s4 + $0xf0] sm:$0xff]
        %v7048 = vld [vmem:[%s4 + $0xf8] sm:$0xff]
        %v7049 = vld [vmem:[%s4 + $0x100] sm:$0xff]
        %v7050 = vld [vmem:[%s4 + $0x108] sm:$0xff]
        %v7051 = vld [vmem:[%s4 + $0x110] sm:$0xff]
        %v7052 = vld [vmem:[%s4 + $0x118] sm:$0xff]
        %v7053 = vld [vmem:[%s4 + $0x120] sm:$0xff]
        %v7054 = vld [vmem:[%s4 + $0x128] sm:$0xff]
        %v7055 = vld [vmem:[%s4 + $0x130] sm:$0xff]
        %v7056 = vld [vmem:[%s4 + $0x138] sm:$0xff]
        %v7057 = vld [vmem:[%s4 + $0x140] sm:$0xff]
        %v7058 = vld [vmem:[%s4 + $0x148] sm:$0xff]
        %v7059 = vld [vmem:[%s4 + $0x150] sm:$0xff]
        %v7060 = vld [vmem:[%s4 + $0x158] sm:$0xff]
        %v7061 = vld [vmem:[%s4 + $0x160] sm:$0xff]
        %v7062 = vld [vmem:[%s4 + $0x168] sm:$0xff]
        %v7063 = vld [vmem:[%s4 + $0x170] sm:$0xff]
        %v7064 = vld [vmem:[%s4 + $0x178] sm:$0xff]
        %v7065 = vld [vmem:[%s4 + $0x180] sm:$0xff]
        %v7066 = vld [vmem:[%s4 + $0x188] sm:$0xff]
        %v7067 = vld [vmem:[%s4 + $0x190] sm:$0xff]
        %v7068 = vld [vmem:[%s4 + $0x198] sm:$0xff]
        %v7069 = vld [vmem:[%s4 + $0x1a0] sm:$0xff]
        %v7070 = vld [vmem:[%s4 + $0x1a8] sm:$0xff]
        %v7071 = vld [vmem:[%s4 + $0x1b0] sm:$0xff]
        %v7072 = vld [vmem:[%s4 + $0x1b8] sm:$0xff]
        %v7073 = vld [vmem:[%s4 + $0x1c0] sm:$0xff]
        %v7074 = vld [vmem:[%s4 + $0x1c8] sm:$0xff]
        %v7075 = vld [vmem:[%s4 + $0x1d0] sm:$0xff]
        %v7076 = vld [vmem:[%s4 + $0x1d8] sm:$0xff]
        %v7077 = vld [vmem:[%s4 + $0x1e0] sm:$0xff]
        %v7078 = vld [vmem:[%s4 + $0x1e8] sm:$0xff]
        %v7079 = vld [vmem:[%s4 + $0x1f0] sm:$0xff]
        %v7080 = vld [vmem:[%s4 + $0x1f8] sm:$0xff]
        %vm7081 = vcmask 130048
        %v7083 = vsel %vm7081, %v6985, 0
        %v7086 = vsel %vm7081, %v6986, 0
        %v7089 = vsel %vm7081, %v6987, 0
        %v7092 = vsel %vm7081, %v6988, 0
        %v7095 = vsel %vm7081, %v6989, 0
        %v7098 = vsel %vm7081, %v6990, 0
        %v7101 = vsel %vm7081, %v6991, 0
        %v7104 = vsel %vm7081, %v6992, 0
        %v7107 = vsel %vm7081, %v6993, 0
        %v7110 = vsel %vm7081, %v6994, 0
        %v7113 = vsel %vm7081, %v6995, 0
        %v7116 = vsel %vm7081, %v6996, 0
        %v7119 = vsel %vm7081, %v6997, 0
        %v7122 = vsel %vm7081, %v6998, 0
        %v7125 = vsel %vm7081, %v6999, 0
        %v7128 = vsel %vm7081, %v7000, 0
        %v7131 = vsel %vm7081, %v7001, 0
        %v7134 = vsel %vm7081, %v7002, 0
        %v7137 = vsel %vm7081, %v7003, 0
        %v7140 = vsel %vm7081, %v7004, 0
        %v7143 = vsel %vm7081, %v7005, 0
        %v7146 = vsel %vm7081, %v7006, 0
        %v7149 = vsel %vm7081, %v7007, 0
        %v7152 = vsel %vm7081, %v7008, 0
        %v7155 = vsel %vm7081, %v7009, 0
        %v7158 = vsel %vm7081, %v7010, 0
        %v7161 = vsel %vm7081, %v7011, 0
        %v7164 = vsel %vm7081, %v7012, 0
        %v7167 = vsel %vm7081, %v7013, 0
        %v7170 = vsel %vm7081, %v7014, 0
        %v7173 = vsel %vm7081, %v7015, 0
        %v7176 = vsel %vm7081, %v7016, 0
        %v7179 = vsel %vm7081, %v7017, 0
        %v7182 = vsel %vm7081, %v7018, 0
        %v7185 = vsel %vm7081, %v7019, 0
        %v7188 = vsel %vm7081, %v7020, 0
        %v7191 = vsel %vm7081, %v7021, 0
        %v7194 = vsel %vm7081, %v7022, 0
        %v7197 = vsel %vm7081, %v7023, 0
        %v7200 = vsel %vm7081, %v7024, 0
        %v7203 = vsel %vm7081, %v7025, 0
        %v7206 = vsel %vm7081, %v7026, 0
        %v7209 = vsel %vm7081, %v7027, 0
        %v7212 = vsel %vm7081, %v7028, 0
        %v7215 = vsel %vm7081, %v7029, 0
        %v7218 = vsel %vm7081, %v7030, 0
        %v7221 = vsel %vm7081, %v7031, 0
        %v7224 = vsel %vm7081, %v7032, 0
        %v7227 = vsel %vm7081, %v7033, 0
        %v7230 = vsel %vm7081, %v7034, 0
        %v7233 = vsel %vm7081, %v7035, 0
        %v7236 = vsel %vm7081, %v7036, 0
        %v7239 = vsel %vm7081, %v7037, 0
        %v7242 = vsel %vm7081, %v7038, 0
        %v7245 = vsel %vm7081, %v7039, 0
        %v7248 = vsel %vm7081, %v7040, 0
        %v7251 = vsel %vm7081, %v7041, 0
        %v7254 = vsel %vm7081, %v7042, 0
        %v7257 = vsel %vm7081, %v7043, 0
        %v7260 = vsel %vm7081, %v7044, 0
        %v7263 = vsel %vm7081, %v7045, 0
        %v7266 = vsel %vm7081, %v7046, 0
        %v7269 = vsel %vm7081, %v7047, 0
        %v7272 = vsel %vm7081, %v7048, 0
        %v7275 = vsel %vm7081, %v7049, 0
        %v7278 = vsel %vm7081, %v7050, 0
        %v7281 = vsel %vm7081, %v7051, 0
        %v7284 = vsel %vm7081, %v7052, 0
        %v7287 = vsel %vm7081, %v7053, 0
        %v7290 = vsel %vm7081, %v7054, 0
        %v7293 = vsel %vm7081, %v7055, 0
        %v7296 = vsel %vm7081, %v7056, 0
        %v7299 = vsel %vm7081, %v7057, 0
        %v7302 = vsel %vm7081, %v7058, 0
        %v7305 = vsel %vm7081, %v7059, 0
        %v7308 = vsel %vm7081, %v7060, 0
        %v7311 = vsel %vm7081, %v7061, 0
        %v7314 = vsel %vm7081, %v7062, 0
        %v7317 = vsel %vm7081, %v7063, 0
        %v7320 = vsel %vm7081, %v7064, 0
        %v7323 = vsel %vm7081, %v7065, 0
        %v7326 = vsel %vm7081, %v7066, 0
        %v7329 = vsel %vm7081, %v7067, 0
        %v7332 = vsel %vm7081, %v7068, 0
        %v7335 = vsel %vm7081, %v7069, 0
        %v7338 = vsel %vm7081, %v7070, 0
        %v7341 = vsel %vm7081, %v7071, 0
        %v7344 = vsel %vm7081, %v7072, 0
        %v7347 = vsel %vm7081, %v7073, 0
        %v7350 = vsel %vm7081, %v7074, 0
        %v7353 = vsel %vm7081, %v7075, 0
        %v7356 = vsel %vm7081, %v7076, 0
        %v7359 = vsel %vm7081, %v7077, 0
        %v7362 = vsel %vm7081, %v7078, 0
        %v7365 = vsel %vm7081, %v7079, 0
        %v7368 = vsel %vm7081, %v7080, 0
        %7370 = vmatpush.xpose.msra.mxu0 %v7224
        %7371 = vmatpush.xpose.msra.mxu0 %v7221
        %7372 = vmatpush.xpose.msra.mxu0 %v7218
        %7373 = vmatpush.xpose.msra.mxu0 %v7215
        %7374 = vmatpush.xpose.msra.mxu0 %v7212
        %7375 = vmatpush.xpose.msra.mxu0 %v7209
        %7376 = vmatpush.xpose.msra.mxu0 %v7206
        %7377 = vmatpush.xpose.msra.mxu0 %v7203
        %7378 = vmatpush.xpose.msra.mxu0 %v7200
        %7379 = vmatpush.xpose.msra.mxu0 %v7197
        %7380 = vmatpush.xpose.msra.mxu0 %v7194
        %7381 = vmatpush.xpose.msra.mxu0 %v7191
        %7382 = vmatpush.xpose.msra.mxu0 %v7188
        %7383 = vmatpush.xpose.msra.mxu0 %v7185
        %7384 = vmatpush.xpose.msra.mxu0 %v7182
        %7385 = vmatpush.xpose.msra.mxu0 %v7179
        %7386 = vmatmul.f32.gmra.mxu0 %v7083
        %v7387 = vpop.f32.mrf.mxu0
        %v7388 = vadd.f32 0.0, %v7387
        %7389 = vmatmul.f32.gmra.mxu0 %v7086
        %v7390 = vpop.f32.mrf.mxu0
        %v7391 = vadd.f32 0.0, %v7390
        %7392 = vmatmul.f32.gmra.mxu0 %v7089
        %v7393 = vpop.f32.mrf.mxu0
        %v7394 = vadd.f32 0.0, %v7393
        %7395 = vmatmul.f32.gmra.mxu0 %v7092
        %v7396 = vpop.f32.mrf.mxu0
        %v7397 = vadd.f32 0.0, %v7396
        %7398 = vmatmul.f32.gmra.mxu0 %v7095
        %v7399 = vpop.f32.mrf.mxu0
        %v7400 = vadd.f32 0.0, %v7399
        %7401 = vmatmul.f32.gmra.mxu0 %v7098
        %v7402 = vpop.f32.mrf.mxu0
        %v7403 = vadd.f32 0.0, %v7402
        %7404 = vmatmul.f32.gmra.mxu0 %v7101
        %v7405 = vpop.f32.mrf.mxu0
        %v7406 = vadd.f32 0.0, %v7405
        %7407 = vmatmul.f32.gmra.mxu0 %v7104
        %v7408 = vpop.f32.mrf.mxu0
        %v7409 = vadd.f32 0.0, %v7408
        %7410 = vmatmul.f32.gmra.mxu0 %v7107
        %v7411 = vpop.f32.mrf.mxu0
        %v7412 = vadd.f32 0.0, %v7411
        %7413 = vmatmul.f32.gmra.mxu0 %v7110
        %v7414 = vpop.f32.mrf.mxu0
        %v7415 = vadd.f32 0.0, %v7414
        %7416 = vmatmul.f32.gmra.mxu0 %v7113
        %v7417 = vpop.f32.mrf.mxu0
        %v7418 = vadd.f32 0.0, %v7417
        %7419 = vmatmul.f32.gmra.mxu0 %v7116
        %v7420 = vpop.f32.mrf.mxu0
        %v7421 = vadd.f32 0.0, %v7420
        %7422 = vmatmul.f32.gmra.mxu0 %v7119
        %v7423 = vpop.f32.mrf.mxu0
        %v7424 = vadd.f32 0.0, %v7423
        %7425 = vmatmul.f32.gmra.mxu0 %v7122
        %v7426 = vpop.f32.mrf.mxu0
        %v7427 = vadd.f32 0.0, %v7426
        %7428 = vmatmul.f32.gmra.mxu0 %v7125
        %v7429 = vpop.f32.mrf.mxu0
        %v7430 = vadd.f32 0.0, %v7429
        %7431 = vmatmul.f32.gmra.mxu0 %v7128
        %v7432 = vpop.f32.mrf.mxu0
        %v7433 = vadd.f32 0.0, %v7432
        %7434 = vmatmul.f32.gmra.mxu0 %v7131
        %v7435 = vpop.f32.mrf.mxu0
        %v7436 = vadd.f32 0.0, %v7435
        %7437 = vmatmul.f32.gmra.mxu0 %v7134
        %v7438 = vpop.f32.mrf.mxu0
        %v7439 = vadd.f32 0.0, %v7438
        %7440 = vmatmul.f32.gmra.mxu0 %v7137
        %v7441 = vpop.f32.mrf.mxu0
        %v7442 = vadd.f32 0.0, %v7441
        %7443 = vmatmul.f32.gmra.mxu0 %v7140
        %v7444 = vpop.f32.mrf.mxu0
        %v7445 = vadd.f32 0.0, %v7444
        %7446 = vmatmul.f32.gmra.mxu0 %v7143
        %v7447 = vpop.f32.mrf.mxu0
        %v7448 = vadd.f32 0.0, %v7447
        %7449 = vmatmul.f32.gmra.mxu0 %v7146
        %v7450 = vpop.f32.mrf.mxu0
        %v7451 = vadd.f32 0.0, %v7450
        %7452 = vmatmul.f32.gmra.mxu0 %v7149
        %v7453 = vpop.f32.mrf.mxu0
        %v7454 = vadd.f32 0.0, %v7453
        %7455 = vmatmul.f32.gmra.mxu0 %v7152
        %v7456 = vpop.f32.mrf.mxu0
        %v7457 = vadd.f32 0.0, %v7456
        %7458 = vmatmul.f32.gmra.mxu0 %v7155
        %v7459 = vpop.f32.mrf.mxu0
        %v7460 = vadd.f32 0.0, %v7459
        %7461 = vmatmul.f32.gmra.mxu0 %v7158
        %v7462 = vpop.f32.mrf.mxu0
        %v7463 = vadd.f32 0.0, %v7462
        %7464 = vmatmul.f32.gmra.mxu0 %v7161
        %v7465 = vpop.f32.mrf.mxu0
        %v7466 = vadd.f32 0.0, %v7465
        %7467 = vmatmul.f32.gmra.mxu0 %v7164
        %v7468 = vpop.f32.mrf.mxu0
        %v7469 = vadd.f32 0.0, %v7468
        %7470 = vmatmul.f32.gmra.mxu0 %v7167
        %v7471 = vpop.f32.mrf.mxu0
        %v7472 = vadd.f32 0.0, %v7471
        %7473 = vmatmul.f32.gmra.mxu0 %v7170
        %v7474 = vpop.f32.mrf.mxu0
        %v7475 = vadd.f32 0.0, %v7474
        %7476 = vmatmul.f32.gmra.mxu0 %v7173
        %v7477 = vpop.f32.mrf.mxu0
        %v7478 = vadd.f32 0.0, %v7477
        %7479 = vmatmul.f32.gmra.mxu0 %v7176
        %v7480 = vpop.f32.mrf.mxu0
        %v7481 = vadd.f32 0.0, %v7480
        %7482 = vdwg.mxu0
        %7483 = vmatpush.xpose.msra.mxu0 %v7272
        %7484 = vmatpush.xpose.msra.mxu0 %v7269
        %7485 = vmatpush.xpose.msra.mxu0 %v7266
        %7486 = vmatpush.xpose.msra.mxu0 %v7263
        %7487 = vmatpush.xpose.msra.mxu0 %v7260
        %7488 = vmatpush.xpose.msra.mxu0 %v7257
        %7489 = vmatpush.xpose.msra.mxu0 %v7254
        %7490 = vmatpush.xpose.msra.mxu0 %v7251
        %7491 = vmatpush.xpose.msra.mxu0 %v7248
        %7492 = vmatpush.xpose.msra.mxu0 %v7245
        %7493 = vmatpush.xpose.msra.mxu0 %v7242
        %7494 = vmatpush.xpose.msra.mxu0 %v7239
        %7495 = vmatpush.xpose.msra.mxu0 %v7236
        %7496 = vmatpush.xpose.msra.mxu0 %v7233
        %7497 = vmatpush.xpose.msra.mxu0 %v7230
        %7498 = vmatpush.xpose.msra.mxu0 %v7227
        %7499 = vmatmul.f32.gmra.mxu0 %v7083
        %v7500 = vpop.f32.mrf.mxu0
        %v7501 = vadd.f32 0.0, %v7500
        %7502 = vmatmul.f32.gmra.mxu0 %v7086
        %v7503 = vpop.f32.mrf.mxu0
        %v7504 = vadd.f32 0.0, %v7503
        %7505 = vmatmul.f32.gmra.mxu0 %v7089
        %v7506 = vpop.f32.mrf.mxu0
        %v7507 = vadd.f32 0.0, %v7506
        %7508 = vmatmul.f32.gmra.mxu0 %v7092
        %v7509 = vpop.f32.mrf.mxu0
        %v7510 = vadd.f32 0.0, %v7509
        %7511 = vmatmul.f32.gmra.mxu0 %v7095
        %v7512 = vpop.f32.mrf.mxu0
        %v7513 = vadd.f32 0.0, %v7512
        %7514 = vmatmul.f32.gmra.mxu0 %v7098
        %v7515 = vpop.f32.mrf.mxu0
        %v7516 = vadd.f32 0.0, %v7515
        %7517 = vmatmul.f32.gmra.mxu0 %v7101
        %v7518 = vpop.f32.mrf.mxu0
        %v7519 = vadd.f32 0.0, %v7518
        %7520 = vmatmul.f32.gmra.mxu0 %v7104
        %v7521 = vpop.f32.mrf.mxu0
        %v7522 = vadd.f32 0.0, %v7521
        %7523 = vmatmul.f32.gmra.mxu0 %v7107
        %v7524 = vpop.f32.mrf.mxu0
        %v7525 = vadd.f32 0.0, %v7524
        %7526 = vmatmul.f32.gmra.mxu0 %v7110
        %v7527 = vpop.f32.mrf.mxu0
        %v7528 = vadd.f32 0.0, %v7527
        %7529 = vmatmul.f32.gmra.mxu0 %v7113
        %v7530 = vpop.f32.mrf.mxu0
        %v7531 = vadd.f32 0.0, %v7530
        %7532 = vmatmul.f32.gmra.mxu0 %v7116
        %v7533 = vpop.f32.mrf.mxu0
        %v7534 = vadd.f32 0.0, %v7533
        %7535 = vmatmul.f32.gmra.mxu0 %v7119
        %v7536 = vpop.f32.mrf.mxu0
        %v7537 = vadd.f32 0.0, %v7536
        %7538 = vmatmul.f32.gmra.mxu0 %v7122
        %v7539 = vpop.f32.mrf.mxu0
        %v7540 = vadd.f32 0.0, %v7539
        %7541 = vmatmul.f32.gmra.mxu0 %v7125
        %v7542 = vpop.f32.mrf.mxu0
        %v7543 = vadd.f32 0.0, %v7542
        %7544 = vmatmul.f32.gmra.mxu0 %v7128
        %v7545 = vpop.f32.mrf.mxu0
        %v7546 = vadd.f32 0.0, %v7545
        %7547 = vmatmul.f32.gmra.mxu0 %v7131
        %v7548 = vpop.f32.mrf.mxu0
        %v7549 = vadd.f32 0.0, %v7548
        %7550 = vmatmul.f32.gmra.mxu0 %v7134
        %v7551 = vpop.f32.mrf.mxu0
        %v7552 = vadd.f32 0.0, %v7551
        %7553 = vmatmul.f32.gmra.mxu0 %v7137
        %v7554 = vpop.f32.mrf.mxu0
        %v7555 = vadd.f32 0.0, %v7554
        %7556 = vmatmul.f32.gmra.mxu0 %v7140
        %v7557 = vpop.f32.mrf.mxu0
        %v7558 = vadd.f32 0.0, %v7557
        %7559 = vmatmul.f32.gmra.mxu0 %v7143
        %v7560 = vpop.f32.mrf.mxu0
        %v7561 = vadd.f32 0.0, %v7560
        %7562 = vmatmul.f32.gmra.mxu0 %v7146
        %v7563 = vpop.f32.mrf.mxu0
        %v7564 = vadd.f32 0.0, %v7563
        %7565 = vmatmul.f32.gmra.mxu0 %v7149
        %v7566 = vpop.f32.mrf.mxu0
        %v7567 = vadd.f32 0.0, %v7566
        %7568 = vmatmul.f32.gmra.mxu0 %v7152
        %v7569 = vpop.f32.mrf.mxu0
        %v7570 = vadd.f32 0.0, %v7569
        %7571 = vmatmul.f32.gmra.mxu0 %v7155
        %v7572 = vpop.f32.mrf.mxu0
        %v7573 = vadd.f32 0.0, %v7572
        %7574 = vmatmul.f32.gmra.mxu0 %v7158
        %v7575 = vpop.f32.mrf.mxu0
        %v7576 = vadd.f32 0.0, %v7575
        %7577 = vmatmul.f32.gmra.mxu0 %v7161
        %v7578 = vpop.f32.mrf.mxu0
        %v7579 = vadd.f32 0.0, %v7578
        %7580 = vmatmul.f32.gmra.mxu0 %v7164
        %v7581 = vpop.f32.mrf.mxu0
        %v7582 = vadd.f32 0.0, %v7581
        %7583 = vmatmul.f32.gmra.mxu0 %v7167
        %v7584 = vpop.f32.mrf.mxu0
        %v7585 = vadd.f32 0.0, %v7584
        %7586 = vmatmul.f32.gmra.mxu0 %v7170
        %v7587 = vpop.f32.mrf.mxu0
        %v7588 = vadd.f32 0.0, %v7587
        %7589 = vmatmul.f32.gmra.mxu0 %v7173
        %v7590 = vpop.f32.mrf.mxu0
        %v7591 = vadd.f32 0.0, %v7590
        %7592 = vmatmul.f32.gmra.mxu0 %v7176
        %v7593 = vpop.f32.mrf.mxu0
        %v7594 = vadd.f32 0.0, %v7593
        %7595 = vdwg.mxu0
        %7596 = vmatpush.xpose.msra.mxu0 %v7320
        %7597 = vmatpush.xpose.msra.mxu0 %v7317
        %7598 = vmatpush.xpose.msra.mxu0 %v7314
        %7599 = vmatpush.xpose.msra.mxu0 %v7311
        %7600 = vmatpush.xpose.msra.mxu0 %v7308
        %7601 = vmatpush.xpose.msra.mxu0 %v7305
        %7602 = vmatpush.xpose.msra.mxu0 %v7302
        %7603 = vmatpush.xpose.msra.mxu0 %v7299
        %7604 = vmatpush.xpose.msra.mxu0 %v7296
        %7605 = vmatpush.xpose.msra.mxu0 %v7293
        %7606 = vmatpush.xpose.msra.mxu0 %v7290
        %7607 = vmatpush.xpose.msra.mxu0 %v7287
        %7608 = vmatpush.xpose.msra.mxu0 %v7284
        %7609 = vmatpush.xpose.msra.mxu0 %v7281
        %7610 = vmatpush.xpose.msra.mxu0 %v7278
        %7611 = vmatpush.xpose.msra.mxu0 %v7275
        %7612 = vmatmul.f32.gmra.mxu0 %v7083
        %v7613 = vpop.f32.mrf.mxu0
        %v7614 = vadd.f32 0.0, %v7613
        %7615 = vmatmul.f32.gmra.mxu0 %v7086
        %v7616 = vpop.f32.mrf.mxu0
        %v7617 = vadd.f32 0.0, %v7616
        %7618 = vmatmul.f32.gmra.mxu0 %v7089
        %v7619 = vpop.f32.mrf.mxu0
        %v7620 = vadd.f32 0.0, %v7619
        %7621 = vmatmul.f32.gmra.mxu0 %v7092
        %v7622 = vpop.f32.mrf.mxu0
        %v7623 = vadd.f32 0.0, %v7622
        %7624 = vmatmul.f32.gmra.mxu0 %v7095
        %v7625 = vpop.f32.mrf.mxu0
        %v7626 = vadd.f32 0.0, %v7625
        %7627 = vmatmul.f32.gmra.mxu0 %v7098
        %v7628 = vpop.f32.mrf.mxu0
        %v7629 = vadd.f32 0.0, %v7628
        %7630 = vmatmul.f32.gmra.mxu0 %v7101
        %v7631 = vpop.f32.mrf.mxu0
        %v7632 = vadd.f32 0.0, %v7631
        %7633 = vmatmul.f32.gmra.mxu0 %v7104
        %v7634 = vpop.f32.mrf.mxu0
        %v7635 = vadd.f32 0.0, %v7634
        %7636 = vmatmul.f32.gmra.mxu0 %v7107
        %v7637 = vpop.f32.mrf.mxu0
        %v7638 = vadd.f32 0.0, %v7637
        %7639 = vmatmul.f32.gmra.mxu0 %v7110
        %v7640 = vpop.f32.mrf.mxu0
        %v7641 = vadd.f32 0.0, %v7640
        %7642 = vmatmul.f32.gmra.mxu0 %v7113
        %v7643 = vpop.f32.mrf.mxu0
        %v7644 = vadd.f32 0.0, %v7643
        %7645 = vmatmul.f32.gmra.mxu0 %v7116
        %v7646 = vpop.f32.mrf.mxu0
        %v7647 = vadd.f32 0.0, %v7646
        %7648 = vmatmul.f32.gmra.mxu0 %v7119
        %v7649 = vpop.f32.mrf.mxu0
        %v7650 = vadd.f32 0.0, %v7649
        %7651 = vmatmul.f32.gmra.mxu0 %v7122
        %v7652 = vpop.f32.mrf.mxu0
        %v7653 = vadd.f32 0.0, %v7652
        %7654 = vmatmul.f32.gmra.mxu0 %v7125
        %v7655 = vpop.f32.mrf.mxu0
        %v7656 = vadd.f32 0.0, %v7655
        %7657 = vmatmul.f32.gmra.mxu0 %v7128
        %v7658 = vpop.f32.mrf.mxu0
        %v7659 = vadd.f32 0.0, %v7658
        %7660 = vmatmul.f32.gmra.mxu0 %v7131
        %v7661 = vpop.f32.mrf.mxu0
        %v7662 = vadd.f32 0.0, %v7661
        %7663 = vmatmul.f32.gmra.mxu0 %v7134
        %v7664 = vpop.f32.mrf.mxu0
        %v7665 = vadd.f32 0.0, %v7664
        %7666 = vmatmul.f32.gmra.mxu0 %v7137
        %v7667 = vpop.f32.mrf.mxu0
        %v7668 = vadd.f32 0.0, %v7667
        %7669 = vmatmul.f32.gmra.mxu0 %v7140
        %v7670 = vpop.f32.mrf.mxu0
        %v7671 = vadd.f32 0.0, %v7670
        %7672 = vmatmul.f32.gmra.mxu0 %v7143
        %v7673 = vpop.f32.mrf.mxu0
        %v7674 = vadd.f32 0.0, %v7673
        %7675 = vmatmul.f32.gmra.mxu0 %v7146
        %v7676 = vpop.f32.mrf.mxu0
        %v7677 = vadd.f32 0.0, %v7676
        %7678 = vmatmul.f32.gmra.mxu0 %v7149
        %v7679 = vpop.f32.mrf.mxu0
        %v7680 = vadd.f32 0.0, %v7679
        %7681 = vmatmul.f32.gmra.mxu0 %v7152
        %v7682 = vpop.f32.mrf.mxu0
        %v7683 = vadd.f32 0.0, %v7682
        %7684 = vmatmul.f32.gmra.mxu0 %v7155
        %v7685 = vpop.f32.mrf.mxu0
        %v7686 = vadd.f32 0.0, %v7685
        %7687 = vmatmul.f32.gmra.mxu0 %v7158
        %v7688 = vpop.f32.mrf.mxu0
        %v7689 = vadd.f32 0.0, %v7688
        %7690 = vmatmul.f32.gmra.mxu0 %v7161
        %v7691 = vpop.f32.mrf.mxu0
        %v7692 = vadd.f32 0.0, %v7691
        %7693 = vmatmul.f32.gmra.mxu0 %v7164
        %v7694 = vpop.f32.mrf.mxu0
        %v7695 = vadd.f32 0.0, %v7694
        %7696 = vmatmul.f32.gmra.mxu0 %v7167
        %v7697 = vpop.f32.mrf.mxu0
        %v7698 = vadd.f32 0.0, %v7697
        %7699 = vmatmul.f32.gmra.mxu0 %v7170
        %v7700 = vpop.f32.mrf.mxu0
        %v7701 = vadd.f32 0.0, %v7700
        %7702 = vmatmul.f32.gmra.mxu0 %v7173
        %v7703 = vpop.f32.mrf.mxu0
        %v7704 = vadd.f32 0.0, %v7703
        %7705 = vmatmul.f32.gmra.mxu0 %v7176
        %v7706 = vpop.f32.mrf.mxu0
        %v7707 = vadd.f32 0.0, %v7706
        %7708 = vdwg.mxu0
        %7709 = vmatpush.xpose.msra.mxu0 %v7368
        %7710 = vmatpush.xpose.msra.mxu0 %v7365
        %7711 = vmatpush.xpose.msra.mxu0 %v7362
        %7712 = vmatpush.xpose.msra.mxu0 %v7359
        %7713 = vmatpush.xpose.msra.mxu0 %v7356
        %7714 = vmatpush.xpose.msra.mxu0 %v7353
        %7715 = vmatpush.xpose.msra.mxu0 %v7350
        %7716 = vmatpush.xpose.msra.mxu0 %v7347
        %7717 = vmatpush.xpose.msra.mxu0 %v7344
        %7718 = vmatpush.xpose.msra.mxu0 %v7341
        %7719 = vmatpush.xpose.msra.mxu0 %v7338
        %7720 = vmatpush.xpose.msra.mxu0 %v7335
        %7721 = vmatpush.xpose.msra.mxu0 %v7332
        %7722 = vmatpush.xpose.msra.mxu0 %v7329
        %7723 = vmatpush.xpose.msra.mxu0 %v7326
        %7724 = vmatpush.xpose.msra.mxu0 %v7323
        %7725 = vmatmul.f32.gmra.mxu0 %v7083
        %v7726 = vpop.f32.mrf.mxu0
        %v7727 = vadd.f32 0.0, %v7726
        %7728 = vmatmul.f32.gmra.mxu0 %v7086
        %v7729 = vpop.f32.mrf.mxu0
        %v7730 = vadd.f32 0.0, %v7729
        %7731 = vmatmul.f32.gmra.mxu0 %v7089
        %v7732 = vpop.f32.mrf.mxu0
        %v7733 = vadd.f32 0.0, %v7732
        %7734 = vmatmul.f32.gmra.mxu0 %v7092
        %v7735 = vpop.f32.mrf.mxu0
        %v7736 = vadd.f32 0.0, %v7735
        %7737 = vmatmul.f32.gmra.mxu0 %v7095
        %v7738 = vpop.f32.mrf.mxu0
        %v7739 = vadd.f32 0.0, %v7738
        %7740 = vmatmul.f32.gmra.mxu0 %v7098
        %v7741 = vpop.f32.mrf.mxu0
        %v7742 = vadd.f32 0.0, %v7741
        %7743 = vmatmul.f32.gmra.mxu0 %v7101
        %v7744 = vpop.f32.mrf.mxu0
        %v7745 = vadd.f32 0.0, %v7744
        %7746 = vmatmul.f32.gmra.mxu0 %v7104
        %v7747 = vpop.f32.mrf.mxu0
        %v7748 = vadd.f32 0.0, %v7747
        %7749 = vmatmul.f32.gmra.mxu0 %v7107
        %v7750 = vpop.f32.mrf.mxu0
        %v7751 = vadd.f32 0.0, %v7750
        %7752 = vmatmul.f32.gmra.mxu0 %v7110
        %v7753 = vpop.f32.mrf.mxu0
        %v7754 = vadd.f32 0.0, %v7753
        %7755 = vmatmul.f32.gmra.mxu0 %v7113
        %v7756 = vpop.f32.mrf.mxu0
        %v7757 = vadd.f32 0.0, %v7756
        %7758 = vmatmul.f32.gmra.mxu0 %v7116
        %v7759 = vpop.f32.mrf.mxu0
        %v7760 = vadd.f32 0.0, %v7759
        %7761 = vmatmul.f32.gmra.mxu0 %v7119
        %v7762 = vpop.f32.mrf.mxu0
        %v7763 = vadd.f32 0.0, %v7762
        %7764 = vmatmul.f32.gmra.mxu0 %v7122
        %v7765 = vpop.f32.mrf.mxu0
        %v7766 = vadd.f32 0.0, %v7765
        %7767 = vmatmul.f32.gmra.mxu0 %v7125
        %v7768 = vpop.f32.mrf.mxu0
        %v7769 = vadd.f32 0.0, %v7768
        %7770 = vmatmul.f32.gmra.mxu0 %v7128
        %v7771 = vpop.f32.mrf.mxu0
        %v7772 = vadd.f32 0.0, %v7771
        %7773 = vmatmul.f32.gmra.mxu0 %v7131
        %v7774 = vpop.f32.mrf.mxu0
        %v7775 = vadd.f32 0.0, %v7774
        %7776 = vmatmul.f32.gmra.mxu0 %v7134
        %v7777 = vpop.f32.mrf.mxu0
        %v7778 = vadd.f32 0.0, %v7777
        %7779 = vmatmul.f32.gmra.mxu0 %v7137
        %v7780 = vpop.f32.mrf.mxu0
        %v7781 = vadd.f32 0.0, %v7780
        %7782 = vmatmul.f32.gmra.mxu0 %v7140
        %v7783 = vpop.f32.mrf.mxu0
        %v7784 = vadd.f32 0.0, %v7783
        %7785 = vmatmul.f32.gmra.mxu0 %v7143
        %v7786 = vpop.f32.mrf.mxu0
        %v7787 = vadd.f32 0.0, %v7786
        %7788 = vmatmul.f32.gmra.mxu0 %v7146
        %v7789 = vpop.f32.mrf.mxu0
        %v7790 = vadd.f32 0.0, %v7789
        %7791 = vmatmul.f32.gmra.mxu0 %v7149
        %v7792 = vpop.f32.mrf.mxu0
        %v7793 = vadd.f32 0.0, %v7792
        %7794 = vmatmul.f32.gmra.mxu0 %v7152
        %v7795 = vpop.f32.mrf.mxu0
        %v7796 = vadd.f32 0.0, %v7795
        %7797 = vmatmul.f32.gmra.mxu0 %v7155
        %v7798 = vpop.f32.mrf.mxu0
        %v7799 = vadd.f32 0.0, %v7798
        %7800 = vmatmul.f32.gmra.mxu0 %v7158
        %v7801 = vpop.f32.mrf.mxu0
        %v7802 = vadd.f32 0.0, %v7801
        %7803 = vmatmul.f32.gmra.mxu0 %v7161
        %v7804 = vpop.f32.mrf.mxu0
        %v7805 = vadd.f32 0.0, %v7804
        %7806 = vmatmul.f32.gmra.mxu0 %v7164
        %v7807 = vpop.f32.mrf.mxu0
        %v7808 = vadd.f32 0.0, %v7807
        %7809 = vmatmul.f32.gmra.mxu0 %v7167
        %v7810 = vpop.f32.mrf.mxu0
        %v7811 = vadd.f32 0.0, %v7810
        %7812 = vmatmul.f32.gmra.mxu0 %v7170
        %v7813 = vpop.f32.mrf.mxu0
        %v7814 = vadd.f32 0.0, %v7813
        %7815 = vmatmul.f32.gmra.mxu0 %v7173
        %v7816 = vpop.f32.mrf.mxu0
        %v7817 = vadd.f32 0.0, %v7816
        %7818 = vmatmul.f32.gmra.mxu0 %v7176
        %v7819 = vpop.f32.mrf.mxu0
        %v7820 = vadd.f32 0.0, %v7819
        %7821 = vdwg.mxu0
        %v7822 = vmin.f32 %v7388, 0.0
        %v7823 = vmin.f32 %v7501, 0.0
        %v7824 = vmin.f32 %v7614, 0.0
        %v7825 = vmin.f32 %v7727, 0.0
        %v7826 = vmin.f32 %v7391, 0.0
        %v7827 = vmin.f32 %v7504, 0.0
        %v7828 = vmin.f32 %v7617, 0.0
        %v7829 = vmin.f32 %v7730, 0.0
        %v7830 = vmin.f32 %v7394, 0.0
        %v7831 = vmin.f32 %v7507, 0.0
        %v7832 = vmin.f32 %v7620, 0.0
        %v7833 = vmin.f32 %v7733, 0.0
        %v7834 = vmin.f32 %v7397, 0.0
        %v7835 = vmin.f32 %v7510, 0.0
        %v7836 = vmin.f32 %v7623, 0.0
        %v7837 = vmin.f32 %v7736, 0.0
        %v7838 = vmin.f32 %v7400, 0.0
        %v7839 = vmin.f32 %v7513, 0.0
        %v7840 = vmin.f32 %v7626, 0.0
        %v7841 = vmin.f32 %v7739, 0.0
        %v7842 = vmin.f32 %v7403, 0.0
        %v7843 = vmin.f32 %v7516, 0.0
        %v7844 = vmin.f32 %v7629, 0.0
        %v7845 = vmin.f32 %v7742, 0.0
        %v7846 = vmin.f32 %v7406, 0.0
        %v7847 = vmin.f32 %v7519, 0.0
        %v7848 = vmin.f32 %v7632, 0.0
        %v7849 = vmin.f32 %v7745, 0.0
        %v7850 = vmin.f32 %v7409, 0.0
        %v7851 = vmin.f32 %v7522, 0.0
        %v7852 = vmin.f32 %v7635, 0.0
        %v7853 = vmin.f32 %v7748, 0.0
        %v7854 = vmin.f32 %v7412, 0.0
        %v7855 = vmin.f32 %v7525, 0.0
        %v7856 = vmin.f32 %v7638, 0.0
        %v7857 = vmin.f32 %v7751, 0.0
        %v7858 = vmin.f32 %v7415, 0.0
        %v7859 = vmin.f32 %v7528, 0.0
        %v7860 = vmin.f32 %v7641, 0.0
        %v7861 = vmin.f32 %v7754, 0.0
        %v7862 = vmin.f32 %v7418, 0.0
        %v7863 = vmin.f32 %v7531, 0.0
        %v7864 = vmin.f32 %v7644, 0.0
        %v7865 = vmin.f32 %v7757, 0.0
        %v7866 = vmin.f32 %v7421, 0.0
        %v7867 = vmin.f32 %v7534, 0.0
        %v7868 = vmin.f32 %v7647, 0.0
        %v7869 = vmin.f32 %v7760, 0.0
        %v7870 = vmin.f32 %v7424, 0.0
        %v7871 = vmin.f32 %v7537, 0.0
        %v7872 = vmin.f32 %v7650, 0.0
        %v7873 = vmin.f32 %v7763, 0.0
        %v7874 = vmin.f32 %v7427, 0.0
        %v7875 = vmin.f32 %v7540, 0.0
        %v7876 = vmin.f32 %v7653, 0.0
        %v7877 = vmin.f32 %v7766, 0.0
        %v7878 = vmin.f32 %v7430, 0.0
        %v7879 = vmin.f32 %v7543, 0.0
        %v7880 = vmin.f32 %v7656, 0.0
        %v7881 = vmin.f32 %v7769, 0.0
        %v7882 = vmin.f32 %v7433, 0.0
        %v7883 = vmin.f32 %v7546, 0.0
        %v7884 = vmin.f32 %v7659, 0.0
        %v7885 = vmin.f32 %v7772, 0.0
        %v7886 = vmin.f32 %v7436, 0.0
        %v7887 = vmin.f32 %v7549, 0.0
        %v7888 = vmin.f32 %v7662, 0.0
        %v7889 = vmin.f32 %v7775, 0.0
        %v7890 = vmin.f32 %v7439, 0.0
        %v7891 = vmin.f32 %v7552, 0.0
        %v7892 = vmin.f32 %v7665, 0.0
        %v7893 = vmin.f32 %v7778, 0.0
        %v7894 = vmin.f32 %v7442, 0.0
        %v7895 = vmin.f32 %v7555, 0.0
        %v7896 = vmin.f32 %v7668, 0.0
        %v7897 = vmin.f32 %v7781, 0.0
        %v7898 = vmin.f32 %v7445, 0.0
        %v7899 = vmin.f32 %v7558, 0.0
        %v7900 = vmin.f32 %v7671, 0.0
        %v7901 = vmin.f32 %v7784, 0.0
        %v7902 = vmin.f32 %v7448, 0.0
        %v7903 = vmin.f32 %v7561, 0.0
        %v7904 = vmin.f32 %v7674, 0.0
        %v7905 = vmin.f32 %v7787, 0.0
        %v7906 = vmin.f32 %v7451, 0.0
        %v7907 = vmin.f32 %v7564, 0.0
        %v7908 = vmin.f32 %v7677, 0.0
        %v7909 = vmin.f32 %v7790, 0.0
        %v7910 = vmin.f32 %v7454, 0.0
        %v7911 = vmin.f32 %v7567, 0.0
        %v7912 = vmin.f32 %v7680, 0.0
        %v7913 = vmin.f32 %v7793, 0.0
        %v7914 = vmin.f32 %v7457, 0.0
        %v7915 = vmin.f32 %v7570, 0.0
        %v7916 = vmin.f32 %v7683, 0.0
        %v7917 = vmin.f32 %v7796, 0.0
        %v7918 = vmin.f32 %v7460, 0.0
        %v7919 = vmin.f32 %v7573, 0.0
        %v7920 = vmin.f32 %v7686, 0.0
        %v7921 = vmin.f32 %v7799, 0.0
        %v7922 = vmin.f32 %v7463, 0.0
        %v7923 = vmin.f32 %v7576, 0.0
        %v7924 = vmin.f32 %v7689, 0.0
        %v7925 = vmin.f32 %v7802, 0.0
        %v7926 = vmin.f32 %v7466, 0.0
        %v7927 = vmin.f32 %v7579, 0.0
        %v7928 = vmin.f32 %v7692, 0.0
        %v7929 = vmin.f32 %v7805, 0.0
        %v7930 = vmin.f32 %v7469, 0.0
        %v7931 = vmin.f32 %v7582, 0.0
        %v7932 = vmin.f32 %v7695, 0.0
        %v7933 = vmin.f32 %v7808, 0.0
        %v7934 = vmin.f32 %v7472, 0.0
        %v7935 = vmin.f32 %v7585, 0.0
        %v7936 = vmin.f32 %v7698, 0.0
        %v7937 = vmin.f32 %v7811, 0.0
        %v7938 = vmin.f32 %v7475, 0.0
        %v7939 = vmin.f32 %v7588, 0.0
        %v7940 = vmin.f32 %v7701, 0.0
        %v7941 = vmin.f32 %v7814, 0.0
        %v7942 = vmin.f32 %v7478, 0.0
        %v7943 = vmin.f32 %v7591, 0.0
        %v7944 = vmin.f32 %v7704, 0.0
        %v7945 = vmin.f32 %v7817, 0.0
        %v7946 = vmin.f32 %v7481, 0.0
        %v7947 = vmin.f32 %v7594, 0.0
        %v7948 = vmin.f32 %v7707, 0.0
        %v7949 = vmin.f32 %v7820, 0.0
        %v7950 = vand.u32 2147483647, %v7388
        %v7951 = vand.u32 2147483647, %v7501
        %v7952 = vand.u32 2147483647, %v7614
        %v7953 = vand.u32 2147483647, %v7727
        %v7954 = vand.u32 2147483647, %v7391
        %v7955 = vand.u32 2147483647, %v7504
        %v7956 = vand.u32 2147483647, %v7617
        %v7957 = vand.u32 2147483647, %v7730
        %v7958 = vand.u32 2147483647, %v7394
        %v7959 = vand.u32 2147483647, %v7507
        %v7960 = vand.u32 2147483647, %v7620
        %v7961 = vand.u32 2147483647, %v7733
        %v7962 = vand.u32 2147483647, %v7397
        %v7963 = vand.u32 2147483647, %v7510
        %v7964 = vand.u32 2147483647, %v7623
        %v7965 = vand.u32 2147483647, %v7736
        %v7966 = vand.u32 2147483647, %v7400
        %v7967 = vand.u32 2147483647, %v7513
        %v7968 = vand.u32 2147483647, %v7626
        %v7969 = vand.u32 2147483647, %v7739
        %v7970 = vand.u32 2147483647, %v7403
        %v7971 = vand.u32 2147483647, %v7516
        %v7972 = vand.u32 2147483647, %v7629
        %v7973 = vand.u32 2147483647, %v7742
        %v7974 = vand.u32 2147483647, %v7406
        %v7975 = vand.u32 2147483647, %v7519
        %v7976 = vand.u32 2147483647, %v7632
        %v7977 = vand.u32 2147483647, %v7745
        %v7978 = vand.u32 2147483647, %v7409
        %v7979 = vand.u32 2147483647, %v7522
        %v7980 = vand.u32 2147483647, %v7635
        %v7981 = vand.u32 2147483647, %v7748
        %v7982 = vand.u32 2147483647, %v7412
        %v7983 = vand.u32 2147483647, %v7525
        %v7984 = vand.u32 2147483647, %v7638
        %v7985 = vand.u32 2147483647, %v7751
        %v7986 = vand.u32 2147483647, %v7415
        %v7987 = vand.u32 2147483647, %v7528
        %v7988 = vand.u32 2147483647, %v7641
        %v7989 = vand.u32 2147483647, %v7754
        %v7990 = vand.u32 2147483647, %v7418
        %v7991 = vand.u32 2147483647, %v7531
        %v7992 = vand.u32 2147483647, %v7644
        %v7993 = vand.u32 2147483647, %v7757
        %v7994 = vand.u32 2147483647, %v7421
        %v7995 = vand.u32 2147483647, %v7534
        %v7996 = vand.u32 2147483647, %v7647
        %v7997 = vand.u32 2147483647, %v7760
        %v7998 = vand.u32 2147483647, %v7424
        %v7999 = vand.u32 2147483647, %v7537
        %v8000 = vand.u32 2147483647, %v7650
        %v8001 = vand.u32 2147483647, %v7763
        %v8002 = vand.u32 2147483647, %v7427
        %v8003 = vand.u32 2147483647, %v7540
        %v8004 = vand.u32 2147483647, %v7653
        %v8005 = vand.u32 2147483647, %v7766
        %v8006 = vand.u32 2147483647, %v7430
        %v8007 = vand.u32 2147483647, %v7543
        %v8008 = vand.u32 2147483647, %v7656
        %v8009 = vand.u32 2147483647, %v7769
        %v8010 = vand.u32 2147483647, %v7433
        %v8011 = vand.u32 2147483647, %v7546
        %v8012 = vand.u32 2147483647, %v7659
        %v8013 = vand.u32 2147483647, %v7772
        %v8014 = vand.u32 2147483647, %v7436
        %v8015 = vand.u32 2147483647, %v7549
        %v8016 = vand.u32 2147483647, %v7662
        %v8017 = vand.u32 2147483647, %v7775
        %v8018 = vand.u32 2147483647, %v7439
        %v8019 = vand.u32 2147483647, %v7552
        %v8020 = vand.u32 2147483647, %v7665
        %v8021 = vand.u32 2147483647, %v7778
        %v8022 = vand.u32 2147483647, %v7442
        %v8023 = vand.u32 2147483647, %v7555
        %v8024 = vand.u32 2147483647, %v7668
        %v8025 = vand.u32 2147483647, %v7781
        %v8026 = vand.u32 2147483647, %v7445
        %v8027 = vand.u32 2147483647, %v7558
        %v8028 = vand.u32 2147483647, %v7671
        %v8029 = vand.u32 2147483647, %v7784
        %v8030 = vand.u32 2147483647, %v7448
        %v8031 = vand.u32 2147483647, %v7561
        %v8032 = vand.u32 2147483647, %v7674
        %v8033 = vand.u32 2147483647, %v7787
        %v8034 = vand.u32 2147483647, %v7451
        %v8035 = vand.u32 2147483647, %v7564
        %v8036 = vand.u32 2147483647, %v7677
        %v8037 = vand.u32 2147483647, %v7790
        %v8038 = vand.u32 2147483647, %v7454
        %v8039 = vand.u32 2147483647, %v7567
        %v8040 = vand.u32 2147483647, %v7680
        %v8041 = vand.u32 2147483647, %v7793
        %v8042 = vand.u32 2147483647, %v7457
        %v8043 = vand.u32 2147483647, %v7570
        %v8044 = vand.u32 2147483647, %v7683
        %v8045 = vand.u32 2147483647, %v7796
        %v8046 = vand.u32 2147483647, %v7460
        %v8047 = vand.u32 2147483647, %v7573
        %v8048 = vand.u32 2147483647, %v7686
        %v8049 = vand.u32 2147483647, %v7799
        %v8050 = vand.u32 2147483647, %v7463
        %v8051 = vand.u32 2147483647, %v7576
        %v8052 = vand.u32 2147483647, %v7689
        %v8053 = vand.u32 2147483647, %v7802
        %v8054 = vand.u32 2147483647, %v7466
        %v8055 = vand.u32 2147483647, %v7579
        %v8056 = vand.u32 2147483647, %v7692
        %v8057 = vand.u32 2147483647, %v7805
        %v8058 = vand.u32 2147483647, %v7469
        %v8059 = vand.u32 2147483647, %v7582
        %v8060 = vand.u32 2147483647, %v7695
        %v8061 = vand.u32 2147483647, %v7808
        %v8062 = vand.u32 2147483647, %v7472
        %v8063 = vand.u32 2147483647, %v7585
        %v8064 = vand.u32 2147483647, %v7698
        %v8065 = vand.u32 2147483647, %v7811
        %v8066 = vand.u32 2147483647, %v7475
        %v8067 = vand.u32 2147483647, %v7588
        %v8068 = vand.u32 2147483647, %v7701
        %v8069 = vand.u32 2147483647, %v7814
        %v8070 = vand.u32 2147483647, %v7478
        %v8071 = vand.u32 2147483647, %v7591
        %v8072 = vand.u32 2147483647, %v7704
        %v8073 = vand.u32 2147483647, %v7817
        %v8074 = vand.u32 2147483647, %v7481
        %v8075 = vand.u32 2147483647, %v7594
        %v8076 = vand.u32 2147483647, %v7707
        %v8077 = vand.u32 2147483647, %v7820
        %v8078 = vsub.f32 0.0, %v7950
        %v8079 = vsub.f32 0.0, %v7951
        %v8080 = vsub.f32 0.0, %v7952
        %v8081 = vsub.f32 0.0, %v7953
        %v8082 = vsub.f32 0.0, %v7954
        %v8083 = vsub.f32 0.0, %v7955
        %v8084 = vsub.f32 0.0, %v7956
        %v8085 = vsub.f32 0.0, %v7957
        %v8086 = vsub.f32 0.0, %v7958
        %v8087 = vsub.f32 0.0, %v7959
        %v8088 = vsub.f32 0.0, %v7960
        %v8089 = vsub.f32 0.0, %v7961
        %v8090 = vsub.f32 0.0, %v7962
        %v8091 = vsub.f32 0.0, %v7963
        %v8092 = vsub.f32 0.0, %v7964
        %v8093 = vsub.f32 0.0, %v7965
        %v8094 = vsub.f32 0.0, %v7966
        %v8095 = vsub.f32 0.0, %v7967
        %v8096 = vsub.f32 0.0, %v7968
        %v8097 = vsub.f32 0.0, %v7969
        %v8098 = vsub.f32 0.0, %v7970
        %v8099 = vsub.f32 0.0, %v7971
        %v8100 = vsub.f32 0.0, %v7972
        %v8101 = vsub.f32 0.0, %v7973
        %v8102 = vsub.f32 0.0, %v7974
        %v8103 = vsub.f32 0.0, %v7975
        %v8104 = vsub.f32 0.0, %v7976
        %v8105 = vsub.f32 0.0, %v7977
        %v8106 = vsub.f32 0.0, %v7978
        %v8107 = vsub.f32 0.0, %v7979
        %v8108 = vsub.f32 0.0, %v7980
        %v8109 = vsub.f32 0.0, %v7981
        %v8110 = vsub.f32 0.0, %v7982
        %v8111 = vsub.f32 0.0, %v7983
        %v8112 = vsub.f32 0.0, %v7984
        %v8113 = vsub.f32 0.0, %v7985
        %v8114 = vsub.f32 0.0, %v7986
        %v8115 = vsub.f32 0.0, %v7987
        %v8116 = vsub.f32 0.0, %v7988
        %v8117 = vsub.f32 0.0, %v7989
        %v8118 = vsub.f32 0.0, %v7990
        %v8119 = vsub.f32 0.0, %v7991
        %v8120 = vsub.f32 0.0, %v7992
        %v8121 = vsub.f32 0.0, %v7993
        %v8122 = vsub.f32 0.0, %v7994
        %v8123 = vsub.f32 0.0, %v7995
        %v8124 = vsub.f32 0.0, %v7996
        %v8125 = vsub.f32 0.0, %v7997
        %v8126 = vsub.f32 0.0, %v7998
        %v8127 = vsub.f32 0.0, %v7999
        %v8128 = vsub.f32 0.0, %v8000
        %v8129 = vsub.f32 0.0, %v8001
        %v8130 = vsub.f32 0.0, %v8002
        %v8131 = vsub.f32 0.0, %v8003
        %v8132 = vsub.f32 0.0, %v8004
        %v8133 = vsub.f32 0.0, %v8005
        %v8134 = vsub.f32 0.0, %v8006
        %v8135 = vsub.f32 0.0, %v8007
        %v8136 = vsub.f32 0.0, %v8008
        %v8137 = vsub.f32 0.0, %v8009
        %v8138 = vsub.f32 0.0, %v8010
        %v8139 = vsub.f32 0.0, %v8011
        %v8140 = vsub.f32 0.0, %v8012
        %v8141 = vsub.f32 0.0, %v8013
        %v8142 = vsub.f32 0.0, %v8014
        %v8143 = vsub.f32 0.0, %v8015
        %v8144 = vsub.f32 0.0, %v8016
        %v8145 = vsub.f32 0.0, %v8017
        %v8146 = vsub.f32 0.0, %v8018
        %v8147 = vsub.f32 0.0, %v8019
        %v8148 = vsub.f32 0.0, %v8020
        %v8149 = vsub.f32 0.0, %v8021
        %v8150 = vsub.f32 0.0, %v8022
        %v8151 = vsub.f32 0.0, %v8023
        %v8152 = vsub.f32 0.0, %v8024
        %v8153 = vsub.f32 0.0, %v8025
        %v8154 = vsub.f32 0.0, %v8026
        %v8155 = vsub.f32 0.0, %v8027
        %v8156 = vsub.f32 0.0, %v8028
        %v8157 = vsub.f32 0.0, %v8029
        %v8158 = vsub.f32 0.0, %v8030
        %v8159 = vsub.f32 0.0, %v8031
        %v8160 = vsub.f32 0.0, %v8032
        %v8161 = vsub.f32 0.0, %v8033
        %v8162 = vsub.f32 0.0, %v8034
        %v8163 = vsub.f32 0.0, %v8035
        %v8164 = vsub.f32 0.0, %v8036
        %v8165 = vsub.f32 0.0, %v8037
        %v8166 = vsub.f32 0.0, %v8038
        %v8167 = vsub.f32 0.0, %v8039
        %v8168 = vsub.f32 0.0, %v8040
        %v8169 = vsub.f32 0.0, %v8041
        %v8170 = vsub.f32 0.0, %v8042
        %v8171 = vsub.f32 0.0, %v8043
        %v8172 = vsub.f32 0.0, %v8044
        %v8173 = vsub.f32 0.0, %v8045
        %v8174 = vsub.f32 0.0, %v8046
        %v8175 = vsub.f32 0.0, %v8047
        %v8176 = vsub.f32 0.0, %v8048
        %v8177 = vsub.f32 0.0, %v8049
        %v8178 = vsub.f32 0.0, %v8050
        %v8179 = vsub.f32 0.0, %v8051
        %v8180 = vsub.f32 0.0, %v8052
        %v8181 = vsub.f32 0.0, %v8053
        %v8182 = vsub.f32 0.0, %v8054
        %v8183 = vsub.f32 0.0, %v8055
        %v8184 = vsub.f32 0.0, %v8056
        %v8185 = vsub.f32 0.0, %v8057
        %v8186 = vsub.f32 0.0, %v8058
        %v8187 = vsub.f32 0.0, %v8059
        %v8188 = vsub.f32 0.0, %v8060
        %v8189 = vsub.f32 0.0, %v8061
        %v8190 = vsub.f32 0.0, %v8062
        %v8191 = vsub.f32 0.0, %v8063
        %v8192 = vsub.f32 0.0, %v8064
        %v8193 = vsub.f32 0.0, %v8065
        %v8194 = vsub.f32 0.0, %v8066
        %v8195 = vsub.f32 0.0, %v8067
        %v8196 = vsub.f32 0.0, %v8068
        %v8197 = vsub.f32 0.0, %v8069
        %v8198 = vsub.f32 0.0, %v8070
        %v8199 = vsub.f32 0.0, %v8071
        %v8200 = vsub.f32 0.0, %v8072
        %v8201 = vsub.f32 0.0, %v8073
        %v8202 = vsub.f32 0.0, %v8074
        %v8203 = vsub.f32 0.0, %v8075
        %v8204 = vsub.f32 0.0, %v8076
        %v8205 = vsub.f32 0.0, %v8077
        %v8206 = vmul.f32 %v8078, 1.442695
        %v8207 = vpow.pop %v8206
        %v8208 = vmul.f32 %v8079, 1.442695
        %v8209 = vpow.pop %v8208
        %v8210 = vmul.f32 %v8080, 1.442695
        %v8211 = vpow.pop %v8210
        %v8212 = vmul.f32 %v8081, 1.442695
        %v8213 = vpow.pop %v8212
        %v8214 = vmul.f32 %v8082, 1.442695
        %v8215 = vpow.pop %v8214
        %v8216 = vmul.f32 %v8083, 1.442695
        %v8217 = vpow.pop %v8216
        %v8218 = vmul.f32 %v8084, 1.442695
        %v8219 = vpow.pop %v8218
        %v8220 = vmul.f32 %v8085, 1.442695
        %v8221 = vpow.pop %v8220
        %v8222 = vmul.f32 %v8086, 1.442695
        %v8223 = vpow.pop %v8222
        %v8224 = vmul.f32 %v8087, 1.442695
        %v8225 = vpow.pop %v8224
        %v8226 = vmul.f32 %v8088, 1.442695
        %v8227 = vpow.pop %v8226
        %v8228 = vmul.f32 %v8089, 1.442695
        %v8229 = vpow.pop %v8228
        %v8230 = vmul.f32 %v8090, 1.442695
        %v8231 = vpow.pop %v8230
        %v8232 = vmul.f32 %v8091, 1.442695
        %v8233 = vpow.pop %v8232
        %v8234 = vmul.f32 %v8092, 1.442695
        %v8235 = vpow.pop %v8234
        %v8236 = vmul.f32 %v8093, 1.442695
        %v8237 = vpow.pop %v8236
        %v8238 = vmul.f32 %v8094, 1.442695
        %v8239 = vpow.pop %v8238
        %v8240 = vmul.f32 %v8095, 1.442695
        %v8241 = vpow.pop %v8240
        %v8242 = vmul.f32 %v8096, 1.442695
        %v8243 = vpow.pop %v8242
        %v8244 = vmul.f32 %v8097, 1.442695
        %v8245 = vpow.pop %v8244
        %v8246 = vmul.f32 %v8098, 1.442695
        %v8247 = vpow.pop %v8246
        %v8248 = vmul.f32 %v8099, 1.442695
        %v8249 = vpow.pop %v8248
        %v8250 = vmul.f32 %v8100, 1.442695
        %v8251 = vpow.pop %v8250
        %v8252 = vmul.f32 %v8101, 1.442695
        %v8253 = vpow.pop %v8252
        %v8254 = vmul.f32 %v8102, 1.442695
        %v8255 = vpow.pop %v8254
        %v8256 = vmul.f32 %v8103, 1.442695
        %v8257 = vpow.pop %v8256
        %v8258 = vmul.f32 %v8104, 1.442695
        %v8259 = vpow.pop %v8258
        %v8260 = vmul.f32 %v8105, 1.442695
        %v8261 = vpow.pop %v8260
        %v8262 = vmul.f32 %v8106, 1.442695
        %v8263 = vpow.pop %v8262
        %v8264 = vmul.f32 %v8107, 1.442695
        %v8265 = vpow.pop %v8264
        %v8266 = vmul.f32 %v8108, 1.442695
        %v8267 = vpow.pop %v8266
        %v8268 = vmul.f32 %v8109, 1.442695
        %v8269 = vpow.pop %v8268
        %v8270 = vmul.f32 %v8110, 1.442695
        %v8271 = vpow.pop %v8270
        %v8272 = vmul.f32 %v8111, 1.442695
        %v8273 = vpow.pop %v8272
        %v8274 = vmul.f32 %v8112, 1.442695
        %v8275 = vpow.pop %v8274
        %v8276 = vmul.f32 %v8113, 1.442695
        %v8277 = vpow.pop %v8276
        %v8278 = vmul.f32 %v8114, 1.442695
        %v8279 = vpow.pop %v8278
        %v8280 = vmul.f32 %v8115, 1.442695
        %v8281 = vpow.pop %v8280
        %v8282 = vmul.f32 %v8116, 1.442695
        %v8283 = vpow.pop %v8282
        %v8284 = vmul.f32 %v8117, 1.442695
        %v8285 = vpow.pop %v8284
        %v8286 = vmul.f32 %v8118, 1.442695
        %v8287 = vpow.pop %v8286
        %v8288 = vmul.f32 %v8119, 1.442695
        %v8289 = vpow.pop %v8288
        %v8290 = vmul.f32 %v8120, 1.442695
        %v8291 = vpow.pop %v8290
        %v8292 = vmul.f32 %v8121, 1.442695
        %v8293 = vpow.pop %v8292
        %v8294 = vmul.f32 %v8122, 1.442695
        %v8295 = vpow.pop %v8294
        %v8296 = vmul.f32 %v8123, 1.442695
        %v8297 = vpow.pop %v8296
        %v8298 = vmul.f32 %v8124, 1.442695
        %v8299 = vpow.pop %v8298
        %v8300 = vmul.f32 %v8125, 1.442695
        %v8301 = vpow.pop %v8300
        %v8302 = vmul.f32 %v8126, 1.442695
        %v8303 = vpow.pop %v8302
        %v8304 = vmul.f32 %v8127, 1.442695
        %v8305 = vpow.pop %v8304
        %v8306 = vmul.f32 %v8128, 1.442695
        %v8307 = vpow.pop %v8306
        %v8308 = vmul.f32 %v8129, 1.442695
        %v8309 = vpow.pop %v8308
        %v8310 = vmul.f32 %v8130, 1.442695
        %v8311 = vpow.pop %v8310
        %v8312 = vmul.f32 %v8131, 1.442695
        %v8313 = vpow.pop %v8312
        %v8314 = vmul.f32 %v8132, 1.442695
        %v8315 = vpow.pop %v8314
        %v8316 = vmul.f32 %v8133, 1.442695
        %v8317 = vpow.pop %v8316
        %v8318 = vmul.f32 %v8134, 1.442695
        %v8319 = vpow.pop %v8318
        %v8320 = vmul.f32 %v8135, 1.442695
        %v8321 = vpow.pop %v8320
        %v8322 = vmul.f32 %v8136, 1.442695
        %v8323 = vpow.pop %v8322
        %v8324 = vmul.f32 %v8137, 1.442695
        %v8325 = vpow.pop %v8324
        %v8326 = vmul.f32 %v8138, 1.442695
        %v8327 = vpow.pop %v8326
        %v8328 = vmul.f32 %v8139, 1.442695
        %v8329 = vpow.pop %v8328
        %v8330 = vmul.f32 %v8140, 1.442695
        %v8331 = vpow.pop %v8330
        %v8332 = vmul.f32 %v8141, 1.442695
        %v8333 = vpow.pop %v8332
        %v8334 = vmul.f32 %v8142, 1.442695
        %v8335 = vpow.pop %v8334
        %v8336 = vmul.f32 %v8143, 1.442695
        %v8337 = vpow.pop %v8336
        %v8338 = vmul.f32 %v8144, 1.442695
        %v8339 = vpow.pop %v8338
        %v8340 = vmul.f32 %v8145, 1.442695
        %v8341 = vpow.pop %v8340
        %v8342 = vmul.f32 %v8146, 1.442695
        %v8343 = vpow.pop %v8342
        %v8344 = vmul.f32 %v8147, 1.442695
        %v8345 = vpow.pop %v8344
        %v8346 = vmul.f32 %v8148, 1.442695
        %v8347 = vpow.pop %v8346
        %v8348 = vmul.f32 %v8149, 1.442695
        %v8349 = vpow.pop %v8348
        %v8350 = vmul.f32 %v8150, 1.442695
        %v8351 = vpow.pop %v8350
        %v8352 = vmul.f32 %v8151, 1.442695
        %v8353 = vpow.pop %v8352
        %v8354 = vmul.f32 %v8152, 1.442695
        %v8355 = vpow.pop %v8354
        %v8356 = vmul.f32 %v8153, 1.442695
        %v8357 = vpow.pop %v8356
        %v8358 = vmul.f32 %v8154, 1.442695
        %v8359 = vpow.pop %v8358
        %v8360 = vmul.f32 %v8155, 1.442695
        %v8361 = vpow.pop %v8360
        %v8362 = vmul.f32 %v8156, 1.442695
        %v8363 = vpow.pop %v8362
        %v8364 = vmul.f32 %v8157, 1.442695
        %v8365 = vpow.pop %v8364
        %v8366 = vmul.f32 %v8158, 1.442695
        %v8367 = vpow.pop %v8366
        %v8368 = vmul.f32 %v8159, 1.442695
        %v8369 = vpow.pop %v8368
        %v8370 = vmul.f32 %v8160, 1.442695
        %v8371 = vpow.pop %v8370
        %v8372 = vmul.f32 %v8161, 1.442695
        %v8373 = vpow.pop %v8372
        %v8374 = vmul.f32 %v8162, 1.442695
        %v8375 = vpow.pop %v8374
        %v8376 = vmul.f32 %v8163, 1.442695
        %v8377 = vpow.pop %v8376
        %v8378 = vmul.f32 %v8164, 1.442695
        %v8379 = vpow.pop %v8378
        %v8380 = vmul.f32 %v8165, 1.442695
        %v8381 = vpow.pop %v8380
        %v8382 = vmul.f32 %v8166, 1.442695
        %v8383 = vpow.pop %v8382
        %v8384 = vmul.f32 %v8167, 1.442695
        %v8385 = vpow.pop %v8384
        %v8386 = vmul.f32 %v8168, 1.442695
        %v8387 = vpow.pop %v8386
        %v8388 = vmul.f32 %v8169, 1.442695
        %v8389 = vpow.pop %v8388
        %v8390 = vmul.f32 %v8170, 1.442695
        %v8391 = vpow.pop %v8390
        %v8392 = vmul.f32 %v8171, 1.442695
        %v8393 = vpow.pop %v8392
        %v8394 = vmul.f32 %v8172, 1.442695
        %v8395 = vpow.pop %v8394
        %v8396 = vmul.f32 %v8173, 1.442695
        %v8397 = vpow.pop %v8396
        %v8398 = vmul.f32 %v8174, 1.442695
        %v8399 = vpow.pop %v8398
        %v8400 = vmul.f32 %v8175, 1.442695
        %v8401 = vpow.pop %v8400
        %v8402 = vmul.f32 %v8176, 1.442695
        %v8403 = vpow.pop %v8402
        %v8404 = vmul.f32 %v8177, 1.442695
        %v8405 = vpow.pop %v8404
        %v8406 = vmul.f32 %v8178, 1.442695
        %v8407 = vpow.pop %v8406
        %v8408 = vmul.f32 %v8179, 1.442695
        %v8409 = vpow.pop %v8408
        %v8410 = vmul.f32 %v8180, 1.442695
        %v8411 = vpow.pop %v8410
        %v8412 = vmul.f32 %v8181, 1.442695
        %v8413 = vpow.pop %v8412
        %v8414 = vmul.f32 %v8182, 1.442695
        %v8415 = vpow.pop %v8414
        %v8416 = vmul.f32 %v8183, 1.442695
        %v8417 = vpow.pop %v8416
        %v8418 = vmul.f32 %v8184, 1.442695
        %v8419 = vpow.pop %v8418
        %v8420 = vmul.f32 %v8185, 1.442695
        %v8421 = vpow.pop %v8420
        %v8422 = vmul.f32 %v8186, 1.442695
        %v8423 = vpow.pop %v8422
        %v8424 = vmul.f32 %v8187, 1.442695
        %v8425 = vpow.pop %v8424
        %v8426 = vmul.f32 %v8188, 1.442695
        %v8427 = vpow.pop %v8426
        %v8428 = vmul.f32 %v8189, 1.442695
        %v8429 = vpow.pop %v8428
        %v8430 = vmul.f32 %v8190, 1.442695
        %v8431 = vpow.pop %v8430
        %v8432 = vmul.f32 %v8191, 1.442695
        %v8433 = vpow.pop %v8432
        %v8434 = vmul.f32 %v8192, 1.442695
        %v8435 = vpow.pop %v8434
        %v8436 = vmul.f32 %v8193, 1.442695
        %v8437 = vpow.pop %v8436
        %v8438 = vmul.f32 %v8194, 1.442695
        %v8439 = vpow.pop %v8438
        %v8440 = vmul.f32 %v8195, 1.442695
        %v8441 = vpow.pop %v8440
        %v8442 = vmul.f32 %v8196, 1.442695
        %v8443 = vpow.pop %v8442
        %v8444 = vmul.f32 %v8197, 1.442695
        %v8445 = vpow.pop %v8444
        %v8446 = vmul.f32 %v8198, 1.442695
        %v8447 = vpow.pop %v8446
        %v8448 = vmul.f32 %v8199, 1.442695
        %v8449 = vpow.pop %v8448
        %v8450 = vmul.f32 %v8200, 1.442695
        %v8451 = vpow.pop %v8450
        %v8452 = vmul.f32 %v8201, 1.442695
        %v8453 = vpow.pop %v8452
        %v8454 = vmul.f32 %v8202, 1.442695
        %v8455 = vpow.pop %v8454
        %v8456 = vmul.f32 %v8203, 1.442695
        %v8457 = vpow.pop %v8456
        %v8458 = vmul.f32 %v8204, 1.442695
        %v8459 = vpow.pop %v8458
        %v8460 = vmul.f32 %v8205, 1.442695
        %v8461 = vpow.pop %v8460
        %v8462 = vadd.f32 %v8207, 1.0
        %v8463 = vlog2.pop %v8462
        %v8464 = vmul.f32 %v8463, 0.6931472
        %v8465 = vmul.f32 -0.5, %v8207
        %v8466 = vadd.f32 %v8465, 1.0
        %v8467 = vmul.f32 %v8466, %v8207
        %v8468 = vand.u32 2147483647, %v8207
        %vm8469 = vcmp.lt.f32.partialorder %v8468, 0.0004427343
        %v8470 = vsel %vm8469, %v8467, %v8464
        %v8471 = vadd.f32 %v8209, 1.0
        %v8472 = vlog2.pop %v8471
        %v8473 = vmul.f32 %v8472, 0.6931472
        %v8474 = vmul.f32 -0.5, %v8209
        %v8475 = vadd.f32 %v8474, 1.0
        %v8476 = vmul.f32 %v8475, %v8209
        %v8477 = vand.u32 2147483647, %v8209
        %vm8478 = vcmp.lt.f32.partialorder %v8477, 0.0004427343
        %v8479 = vsel %vm8478, %v8476, %v8473
        %v8480 = vadd.f32 %v8211, 1.0
        %v8481 = vlog2.pop %v8480
        %v8482 = vmul.f32 %v8481, 0.6931472
        %v8483 = vmul.f32 -0.5, %v8211
        %v8484 = vadd.f32 %v8483, 1.0
        %v8485 = vmul.f32 %v8484, %v8211
        %v8486 = vand.u32 2147483647, %v8211
        %vm8487 = vcmp.lt.f32.partialorder %v8486, 0.0004427343
        %v8488 = vsel %vm8487, %v8485, %v8482
        %v8489 = vadd.f32 %v8213, 1.0
        %v8490 = vlog2.pop %v8489
        %v8491 = vmul.f32 %v8490, 0.6931472
        %v8492 = vmul.f32 -0.5, %v8213
        %v8493 = vadd.f32 %v8492, 1.0
        %v8494 = vmul.f32 %v8493, %v8213
        %v8495 = vand.u32 2147483647, %v8213
        %vm8496 = vcmp.lt.f32.partialorder %v8495, 0.0004427343
        %v8497 = vsel %vm8496, %v8494, %v8491
        %v8498 = vadd.f32 %v8215, 1.0
        %v8499 = vlog2.pop %v8498
        %v8500 = vmul.f32 %v8499, 0.6931472
        %v8501 = vmul.f32 -0.5, %v8215
        %v8502 = vadd.f32 %v8501, 1.0
        %v8503 = vmul.f32 %v8502, %v8215
        %v8504 = vand.u32 2147483647, %v8215
        %vm8505 = vcmp.lt.f32.partialorder %v8504, 0.0004427343
        %v8506 = vsel %vm8505, %v8503, %v8500
        %v8507 = vadd.f32 %v8217, 1.0
        %v8508 = vlog2.pop %v8507
        %v8509 = vmul.f32 %v8508, 0.6931472
        %v8510 = vmul.f32 -0.5, %v8217
        %v8511 = vadd.f32 %v8510, 1.0
        %v8512 = vmul.f32 %v8511, %v8217
        %v8513 = vand.u32 2147483647, %v8217
        %vm8514 = vcmp.lt.f32.partialorder %v8513, 0.0004427343
        %v8515 = vsel %vm8514, %v8512, %v8509
        %v8516 = vadd.f32 %v8219, 1.0
        %v8517 = vlog2.pop %v8516
        %v8518 = vmul.f32 %v8517, 0.6931472
        %v8519 = vmul.f32 -0.5, %v8219
        %v8520 = vadd.f32 %v8519, 1.0
        %v8521 = vmul.f32 %v8520, %v8219
        %v8522 = vand.u32 2147483647, %v8219
        %vm8523 = vcmp.lt.f32.partialorder %v8522, 0.0004427343
        %v8524 = vsel %vm8523, %v8521, %v8518
        %v8525 = vadd.f32 %v8221, 1.0
        %v8526 = vlog2.pop %v8525
        %v8527 = vmul.f32 %v8526, 0.6931472
        %v8528 = vmul.f32 -0.5, %v8221
        %v8529 = vadd.f32 %v8528, 1.0
        %v8530 = vmul.f32 %v8529, %v8221
        %v8531 = vand.u32 2147483647, %v8221
        %vm8532 = vcmp.lt.f32.partialorder %v8531, 0.0004427343
        %v8533 = vsel %vm8532, %v8530, %v8527
        %v8534 = vadd.f32 %v8223, 1.0
        %v8535 = vlog2.pop %v8534
        %v8536 = vmul.f32 %v8535, 0.6931472
        %v8537 = vmul.f32 -0.5, %v8223
        %v8538 = vadd.f32 %v8537, 1.0
        %v8539 = vmul.f32 %v8538, %v8223
        %v8540 = vand.u32 2147483647, %v8223
        %vm8541 = vcmp.lt.f32.partialorder %v8540, 0.0004427343
        %v8542 = vsel %vm8541, %v8539, %v8536
        %v8543 = vadd.f32 %v8225, 1.0
        %v8544 = vlog2.pop %v8543
        %v8545 = vmul.f32 %v8544, 0.6931472
        %v8546 = vmul.f32 -0.5, %v8225
        %v8547 = vadd.f32 %v8546, 1.0
        %v8548 = vmul.f32 %v8547, %v8225
        %v8549 = vand.u32 2147483647, %v8225
        %vm8550 = vcmp.lt.f32.partialorder %v8549, 0.0004427343
        %v8551 = vsel %vm8550, %v8548, %v8545
        %v8552 = vadd.f32 %v8227, 1.0
        %v8553 = vlog2.pop %v8552
        %v8554 = vmul.f32 %v8553, 0.6931472
        %v8555 = vmul.f32 -0.5, %v8227
        %v8556 = vadd.f32 %v8555, 1.0
        %v8557 = vmul.f32 %v8556, %v8227
        %v8558 = vand.u32 2147483647, %v8227
        %vm8559 = vcmp.lt.f32.partialorder %v8558, 0.0004427343
        %v8560 = vsel %vm8559, %v8557, %v8554
        %v8561 = vadd.f32 %v8229, 1.0
        %v8562 = vlog2.pop %v8561
        %v8563 = vmul.f32 %v8562, 0.6931472
        %v8564 = vmul.f32 -0.5, %v8229
        %v8565 = vadd.f32 %v8564, 1.0
        %v8566 = vmul.f32 %v8565, %v8229
        %v8567 = vand.u32 2147483647, %v8229
        %vm8568 = vcmp.lt.f32.partialorder %v8567, 0.0004427343
        %v8569 = vsel %vm8568, %v8566, %v8563
        %v8570 = vadd.f32 %v8231, 1.0
        %v8571 = vlog2.pop %v8570
        %v8572 = vmul.f32 %v8571, 0.6931472
        %v8573 = vmul.f32 -0.5, %v8231
        %v8574 = vadd.f32 %v8573, 1.0
        %v8575 = vmul.f32 %v8574, %v8231
        %v8576 = vand.u32 2147483647, %v8231
        %vm8577 = vcmp.lt.f32.partialorder %v8576, 0.0004427343
        %v8578 = vsel %vm8577, %v8575, %v8572
        %v8579 = vadd.f32 %v8233, 1.0
        %v8580 = vlog2.pop %v8579
        %v8581 = vmul.f32 %v8580, 0.6931472
        %v8582 = vmul.f32 -0.5, %v8233
        %v8583 = vadd.f32 %v8582, 1.0
        %v8584 = vmul.f32 %v8583, %v8233
        %v8585 = vand.u32 2147483647, %v8233
        %vm8586 = vcmp.lt.f32.partialorder %v8585, 0.0004427343
        %v8587 = vsel %vm8586, %v8584, %v8581
        %v8588 = vadd.f32 %v8235, 1.0
        %v8589 = vlog2.pop %v8588
        %v8590 = vmul.f32 %v8589, 0.6931472
        %v8591 = vmul.f32 -0.5, %v8235
        %v8592 = vadd.f32 %v8591, 1.0
        %v8593 = vmul.f32 %v8592, %v8235
        %v8594 = vand.u32 2147483647, %v8235
        %vm8595 = vcmp.lt.f32.partialorder %v8594, 0.0004427343
        %v8596 = vsel %vm8595, %v8593, %v8590
        %v8597 = vadd.f32 %v8237, 1.0
        %v8598 = vlog2.pop %v8597
        %v8599 = vmul.f32 %v8598, 0.6931472
        %v8600 = vmul.f32 -0.5, %v8237
        %v8601 = vadd.f32 %v8600, 1.0
        %v8602 = vmul.f32 %v8601, %v8237
        %v8603 = vand.u32 2147483647, %v8237
        %vm8604 = vcmp.lt.f32.partialorder %v8603, 0.0004427343
        %v8605 = vsel %vm8604, %v8602, %v8599
        %v8606 = vadd.f32 %v8239, 1.0
        %v8607 = vlog2.pop %v8606
        %v8608 = vmul.f32 %v8607, 0.6931472
        %v8609 = vmul.f32 -0.5, %v8239
        %v8610 = vadd.f32 %v8609, 1.0
        %v8611 = vmul.f32 %v8610, %v8239
        %v8612 = vand.u32 2147483647, %v8239
        %vm8613 = vcmp.lt.f32.partialorder %v8612, 0.0004427343
        %v8614 = vsel %vm8613, %v8611, %v8608
        %v8615 = vadd.f32 %v8241, 1.0
        %v8616 = vlog2.pop %v8615
        %v8617 = vmul.f32 %v8616, 0.6931472
        %v8618 = vmul.f32 -0.5, %v8241
        %v8619 = vadd.f32 %v8618, 1.0
        %v8620 = vmul.f32 %v8619, %v8241
        %v8621 = vand.u32 2147483647, %v8241
        %vm8622 = vcmp.lt.f32.partialorder %v8621, 0.0004427343
        %v8623 = vsel %vm8622, %v8620, %v8617
        %v8624 = vadd.f32 %v8243, 1.0
        %v8625 = vlog2.pop %v8624
        %v8626 = vmul.f32 %v8625, 0.6931472
        %v8627 = vmul.f32 -0.5, %v8243
        %v8628 = vadd.f32 %v8627, 1.0
        %v8629 = vmul.f32 %v8628, %v8243
        %v8630 = vand.u32 2147483647, %v8243
        %vm8631 = vcmp.lt.f32.partialorder %v8630, 0.0004427343
        %v8632 = vsel %vm8631, %v8629, %v8626
        %v8633 = vadd.f32 %v8245, 1.0
        %v8634 = vlog2.pop %v8633
        %v8635 = vmul.f32 %v8634, 0.6931472
        %v8636 = vmul.f32 -0.5, %v8245
        %v8637 = vadd.f32 %v8636, 1.0
        %v8638 = vmul.f32 %v8637, %v8245
        %v8639 = vand.u32 2147483647, %v8245
        %vm8640 = vcmp.lt.f32.partialorder %v8639, 0.0004427343
        %v8641 = vsel %vm8640, %v8638, %v8635
        %v8642 = vadd.f32 %v8247, 1.0
        %v8643 = vlog2.pop %v8642
        %v8644 = vmul.f32 %v8643, 0.6931472
        %v8645 = vmul.f32 -0.5, %v8247
        %v8646 = vadd.f32 %v8645, 1.0
        %v8647 = vmul.f32 %v8646, %v8247
        %v8648 = vand.u32 2147483647, %v8247
        %vm8649 = vcmp.lt.f32.partialorder %v8648, 0.0004427343
        %v8650 = vsel %vm8649, %v8647, %v8644
        %v8651 = vadd.f32 %v8249, 1.0
        %v8652 = vlog2.pop %v8651
        %v8653 = vmul.f32 %v8652, 0.6931472
        %v8654 = vmul.f32 -0.5, %v8249
        %v8655 = vadd.f32 %v8654, 1.0
        %v8656 = vmul.f32 %v8655, %v8249
        %v8657 = vand.u32 2147483647, %v8249
        %vm8658 = vcmp.lt.f32.partialorder %v8657, 0.0004427343
        %v8659 = vsel %vm8658, %v8656, %v8653
        %v8660 = vadd.f32 %v8251, 1.0
        %v8661 = vlog2.pop %v8660
        %v8662 = vmul.f32 %v8661, 0.6931472
        %v8663 = vmul.f32 -0.5, %v8251
        %v8664 = vadd.f32 %v8663, 1.0
        %v8665 = vmul.f32 %v8664, %v8251
        %v8666 = vand.u32 2147483647, %v8251
        %vm8667 = vcmp.lt.f32.partialorder %v8666, 0.0004427343
        %v8668 = vsel %vm8667, %v8665, %v8662
        %v8669 = vadd.f32 %v8253, 1.0
        %v8670 = vlog2.pop %v8669
        %v8671 = vmul.f32 %v8670, 0.6931472
        %v8672 = vmul.f32 -0.5, %v8253
        %v8673 = vadd.f32 %v8672, 1.0
        %v8674 = vmul.f32 %v8673, %v8253
        %v8675 = vand.u32 2147483647, %v8253
        %vm8676 = vcmp.lt.f32.partialorder %v8675, 0.0004427343
        %v8677 = vsel %vm8676, %v8674, %v8671
        %v8678 = vadd.f32 %v8255, 1.0
        %v8679 = vlog2.pop %v8678
        %v8680 = vmul.f32 %v8679, 0.6931472
        %v8681 = vmul.f32 -0.5, %v8255
        %v8682 = vadd.f32 %v8681, 1.0
        %v8683 = vmul.f32 %v8682, %v8255
        %v8684 = vand.u32 2147483647, %v8255
        %vm8685 = vcmp.lt.f32.partialorder %v8684, 0.0004427343
        %v8686 = vsel %vm8685, %v8683, %v8680
        %v8687 = vadd.f32 %v8257, 1.0
        %v8688 = vlog2.pop %v8687
        %v8689 = vmul.f32 %v8688, 0.6931472
        %v8690 = vmul.f32 -0.5, %v8257
        %v8691 = vadd.f32 %v8690, 1.0
        %v8692 = vmul.f32 %v8691, %v8257
        %v8693 = vand.u32 2147483647, %v8257
        %vm8694 = vcmp.lt.f32.partialorder %v8693, 0.0004427343
        %v8695 = vsel %vm8694, %v8692, %v8689
        %v8696 = vadd.f32 %v8259, 1.0
        %v8697 = vlog2.pop %v8696
        %v8698 = vmul.f32 %v8697, 0.6931472
        %v8699 = vmul.f32 -0.5, %v8259
        %v8700 = vadd.f32 %v8699, 1.0
        %v8701 = vmul.f32 %v8700, %v8259
        %v8702 = vand.u32 2147483647, %v8259
        %vm8703 = vcmp.lt.f32.partialorder %v8702, 0.0004427343
        %v8704 = vsel %vm8703, %v8701, %v8698
        %v8705 = vadd.f32 %v8261, 1.0
        %v8706 = vlog2.pop %v8705
        %v8707 = vmul.f32 %v8706, 0.6931472
        %v8708 = vmul.f32 -0.5, %v8261
        %v8709 = vadd.f32 %v8708, 1.0
        %v8710 = vmul.f32 %v8709, %v8261
        %v8711 = vand.u32 2147483647, %v8261
        %vm8712 = vcmp.lt.f32.partialorder %v8711, 0.0004427343
        %v8713 = vsel %vm8712, %v8710, %v8707
        %v8714 = vadd.f32 %v8263, 1.0
        %v8715 = vlog2.pop %v8714
        %v8716 = vmul.f32 %v8715, 0.6931472
        %v8717 = vmul.f32 -0.5, %v8263
        %v8718 = vadd.f32 %v8717, 1.0
        %v8719 = vmul.f32 %v8718, %v8263
        %v8720 = vand.u32 2147483647, %v8263
        %vm8721 = vcmp.lt.f32.partialorder %v8720, 0.0004427343
        %v8722 = vsel %vm8721, %v8719, %v8716
        %v8723 = vadd.f32 %v8265, 1.0
        %v8724 = vlog2.pop %v8723
        %v8725 = vmul.f32 %v8724, 0.6931472
        %v8726 = vmul.f32 -0.5, %v8265
        %v8727 = vadd.f32 %v8726, 1.0
        %v8728 = vmul.f32 %v8727, %v8265
        %v8729 = vand.u32 2147483647, %v8265
        %vm8730 = vcmp.lt.f32.partialorder %v8729, 0.0004427343
        %v8731 = vsel %vm8730, %v8728, %v8725
        %v8732 = vadd.f32 %v8267, 1.0
        %v8733 = vlog2.pop %v8732
        %v8734 = vmul.f32 %v8733, 0.6931472
        %v8735 = vmul.f32 -0.5, %v8267
        %v8736 = vadd.f32 %v8735, 1.0
        %v8737 = vmul.f32 %v8736, %v8267
        %v8738 = vand.u32 2147483647, %v8267
        %vm8739 = vcmp.lt.f32.partialorder %v8738, 0.0004427343
        %v8740 = vsel %vm8739, %v8737, %v8734
        %v8741 = vadd.f32 %v8269, 1.0
        %v8742 = vlog2.pop %v8741
        %v8743 = vmul.f32 %v8742, 0.6931472
        %v8744 = vmul.f32 -0.5, %v8269
        %v8745 = vadd.f32 %v8744, 1.0
        %v8746 = vmul.f32 %v8745, %v8269
        %v8747 = vand.u32 2147483647, %v8269
        %vm8748 = vcmp.lt.f32.partialorder %v8747, 0.0004427343
        %v8749 = vsel %vm8748, %v8746, %v8743
        %v8750 = vadd.f32 %v8271, 1.0
        %v8751 = vlog2.pop %v8750
        %v8752 = vmul.f32 %v8751, 0.6931472
        %v8753 = vmul.f32 -0.5, %v8271
        %v8754 = vadd.f32 %v8753, 1.0
        %v8755 = vmul.f32 %v8754, %v8271
        %v8756 = vand.u32 2147483647, %v8271
        %vm8757 = vcmp.lt.f32.partialorder %v8756, 0.0004427343
        %v8758 = vsel %vm8757, %v8755, %v8752
        %v8759 = vadd.f32 %v8273, 1.0
        %v8760 = vlog2.pop %v8759
        %v8761 = vmul.f32 %v8760, 0.6931472
        %v8762 = vmul.f32 -0.5, %v8273
        %v8763 = vadd.f32 %v8762, 1.0
        %v8764 = vmul.f32 %v8763, %v8273
        %v8765 = vand.u32 2147483647, %v8273
        %vm8766 = vcmp.lt.f32.partialorder %v8765, 0.0004427343
        %v8767 = vsel %vm8766, %v8764, %v8761
        %v8768 = vadd.f32 %v8275, 1.0
        %v8769 = vlog2.pop %v8768
        %v8770 = vmul.f32 %v8769, 0.6931472
        %v8771 = vmul.f32 -0.5, %v8275
        %v8772 = vadd.f32 %v8771, 1.0
        %v8773 = vmul.f32 %v8772, %v8275
        %v8774 = vand.u32 2147483647, %v8275
        %vm8775 = vcmp.lt.f32.partialorder %v8774, 0.0004427343
        %v8776 = vsel %vm8775, %v8773, %v8770
        %v8777 = vadd.f32 %v8277, 1.0
        %v8778 = vlog2.pop %v8777
        %v8779 = vmul.f32 %v8778, 0.6931472
        %v8780 = vmul.f32 -0.5, %v8277
        %v8781 = vadd.f32 %v8780, 1.0
        %v8782 = vmul.f32 %v8781, %v8277
        %v8783 = vand.u32 2147483647, %v8277
        %vm8784 = vcmp.lt.f32.partialorder %v8783, 0.0004427343
        %v8785 = vsel %vm8784, %v8782, %v8779
        %v8786 = vadd.f32 %v8279, 1.0
        %v8787 = vlog2.pop %v8786
        %v8788 = vmul.f32 %v8787, 0.6931472
        %v8789 = vmul.f32 -0.5, %v8279
        %v8790 = vadd.f32 %v8789, 1.0
        %v8791 = vmul.f32 %v8790, %v8279
        %v8792 = vand.u32 2147483647, %v8279
        %vm8793 = vcmp.lt.f32.partialorder %v8792, 0.0004427343
        %v8794 = vsel %vm8793, %v8791, %v8788
        %v8795 = vadd.f32 %v8281, 1.0
        %v8796 = vlog2.pop %v8795
        %v8797 = vmul.f32 %v8796, 0.6931472
        %v8798 = vmul.f32 -0.5, %v8281
        %v8799 = vadd.f32 %v8798, 1.0
        %v8800 = vmul.f32 %v8799, %v8281
        %v8801 = vand.u32 2147483647, %v8281
        %vm8802 = vcmp.lt.f32.partialorder %v8801, 0.0004427343
        %v8803 = vsel %vm8802, %v8800, %v8797
        %v8804 = vadd.f32 %v8283, 1.0
        %v8805 = vlog2.pop %v8804
        %v8806 = vmul.f32 %v8805, 0.6931472
        %v8807 = vmul.f32 -0.5, %v8283
        %v8808 = vadd.f32 %v8807, 1.0
        %v8809 = vmul.f32 %v8808, %v8283
        %v8810 = vand.u32 2147483647, %v8283
        %vm8811 = vcmp.lt.f32.partialorder %v8810, 0.0004427343
        %v8812 = vsel %vm8811, %v8809, %v8806
        %v8813 = vadd.f32 %v8285, 1.0
        %v8814 = vlog2.pop %v8813
        %v8815 = vmul.f32 %v8814, 0.6931472
        %v8816 = vmul.f32 -0.5, %v8285
        %v8817 = vadd.f32 %v8816, 1.0
        %v8818 = vmul.f32 %v8817, %v8285
        %v8819 = vand.u32 2147483647, %v8285
        %vm8820 = vcmp.lt.f32.partialorder %v8819, 0.0004427343
        %v8821 = vsel %vm8820, %v8818, %v8815
        %v8822 = vadd.f32 %v8287, 1.0
        %v8823 = vlog2.pop %v8822
        %v8824 = vmul.f32 %v8823, 0.6931472
        %v8825 = vmul.f32 -0.5, %v8287
        %v8826 = vadd.f32 %v8825, 1.0
        %v8827 = vmul.f32 %v8826, %v8287
        %v8828 = vand.u32 2147483647, %v8287
        %vm8829 = vcmp.lt.f32.partialorder %v8828, 0.0004427343
        %v8830 = vsel %vm8829, %v8827, %v8824
        %v8831 = vadd.f32 %v8289, 1.0
        %v8832 = vlog2.pop %v8831
        %v8833 = vmul.f32 %v8832, 0.6931472
        %v8834 = vmul.f32 -0.5, %v8289
        %v8835 = vadd.f32 %v8834, 1.0
        %v8836 = vmul.f32 %v8835, %v8289
        %v8837 = vand.u32 2147483647, %v8289
        %vm8838 = vcmp.lt.f32.partialorder %v8837, 0.0004427343
        %v8839 = vsel %vm8838, %v8836, %v8833
        %v8840 = vadd.f32 %v8291, 1.0
        %v8841 = vlog2.pop %v8840
        %v8842 = vmul.f32 %v8841, 0.6931472
        %v8843 = vmul.f32 -0.5, %v8291
        %v8844 = vadd.f32 %v8843, 1.0
        %v8845 = vmul.f32 %v8844, %v8291
        %v8846 = vand.u32 2147483647, %v8291
        %vm8847 = vcmp.lt.f32.partialorder %v8846, 0.0004427343
        %v8848 = vsel %vm8847, %v8845, %v8842
        %v8849 = vadd.f32 %v8293, 1.0
        %v8850 = vlog2.pop %v8849
        %v8851 = vmul.f32 %v8850, 0.6931472
        %v8852 = vmul.f32 -0.5, %v8293
        %v8853 = vadd.f32 %v8852, 1.0
        %v8854 = vmul.f32 %v8853, %v8293
        %v8855 = vand.u32 2147483647, %v8293
        %vm8856 = vcmp.lt.f32.partialorder %v8855, 0.0004427343
        %v8857 = vsel %vm8856, %v8854, %v8851
        %v8858 = vadd.f32 %v8295, 1.0
        %v8859 = vlog2.pop %v8858
        %v8860 = vmul.f32 %v8859, 0.6931472
        %v8861 = vmul.f32 -0.5, %v8295
        %v8862 = vadd.f32 %v8861, 1.0
        %v8863 = vmul.f32 %v8862, %v8295
        %v8864 = vand.u32 2147483647, %v8295
        %vm8865 = vcmp.lt.f32.partialorder %v8864, 0.0004427343
        %v8866 = vsel %vm8865, %v8863, %v8860
        %v8867 = vadd.f32 %v8297, 1.0
        %v8868 = vlog2.pop %v8867
        %v8869 = vmul.f32 %v8868, 0.6931472
        %v8870 = vmul.f32 -0.5, %v8297
        %v8871 = vadd.f32 %v8870, 1.0
        %v8872 = vmul.f32 %v8871, %v8297
        %v8873 = vand.u32 2147483647, %v8297
        %vm8874 = vcmp.lt.f32.partialorder %v8873, 0.0004427343
        %v8875 = vsel %vm8874, %v8872, %v8869
        %v8876 = vadd.f32 %v8299, 1.0
        %v8877 = vlog2.pop %v8876
        %v8878 = vmul.f32 %v8877, 0.6931472
        %v8879 = vmul.f32 -0.5, %v8299
        %v8880 = vadd.f32 %v8879, 1.0
        %v8881 = vmul.f32 %v8880, %v8299
        %v8882 = vand.u32 2147483647, %v8299
        %vm8883 = vcmp.lt.f32.partialorder %v8882, 0.0004427343
        %v8884 = vsel %vm8883, %v8881, %v8878
        %v8885 = vadd.f32 %v8301, 1.0
        %v8886 = vlog2.pop %v8885
        %v8887 = vmul.f32 %v8886, 0.6931472
        %v8888 = vmul.f32 -0.5, %v8301
        %v8889 = vadd.f32 %v8888, 1.0
        %v8890 = vmul.f32 %v8889, %v8301
        %v8891 = vand.u32 2147483647, %v8301
        %vm8892 = vcmp.lt.f32.partialorder %v8891, 0.0004427343
        %v8893 = vsel %vm8892, %v8890, %v8887
        %v8894 = vadd.f32 %v8303, 1.0
        %v8895 = vlog2.pop %v8894
        %v8896 = vmul.f32 %v8895, 0.6931472
        %v8897 = vmul.f32 -0.5, %v8303
        %v8898 = vadd.f32 %v8897, 1.0
        %v8899 = vmul.f32 %v8898, %v8303
        %v8900 = vand.u32 2147483647, %v8303
        %vm8901 = vcmp.lt.f32.partialorder %v8900, 0.0004427343
        %v8902 = vsel %vm8901, %v8899, %v8896
        %v8903 = vadd.f32 %v8305, 1.0
        %v8904 = vlog2.pop %v8903
        %v8905 = vmul.f32 %v8904, 0.6931472
        %v8906 = vmul.f32 -0.5, %v8305
        %v8907 = vadd.f32 %v8906, 1.0
        %v8908 = vmul.f32 %v8907, %v8305
        %v8909 = vand.u32 2147483647, %v8305
        %vm8910 = vcmp.lt.f32.partialorder %v8909, 0.0004427343
        %v8911 = vsel %vm8910, %v8908, %v8905
        %v8912 = vadd.f32 %v8307, 1.0
        %v8913 = vlog2.pop %v8912
        %v8914 = vmul.f32 %v8913, 0.6931472
        %v8915 = vmul.f32 -0.5, %v8307
        %v8916 = vadd.f32 %v8915, 1.0
        %v8917 = vmul.f32 %v8916, %v8307
        %v8918 = vand.u32 2147483647, %v8307
        %vm8919 = vcmp.lt.f32.partialorder %v8918, 0.0004427343
        %v8920 = vsel %vm8919, %v8917, %v8914
        %v8921 = vadd.f32 %v8309, 1.0
        %v8922 = vlog2.pop %v8921
        %v8923 = vmul.f32 %v8922, 0.6931472
        %v8924 = vmul.f32 -0.5, %v8309
        %v8925 = vadd.f32 %v8924, 1.0
        %v8926 = vmul.f32 %v8925, %v8309
        %v8927 = vand.u32 2147483647, %v8309
        %vm8928 = vcmp.lt.f32.partialorder %v8927, 0.0004427343
        %v8929 = vsel %vm8928, %v8926, %v8923
        %v8930 = vadd.f32 %v8311, 1.0
        %v8931 = vlog2.pop %v8930
        %v8932 = vmul.f32 %v8931, 0.6931472
        %v8933 = vmul.f32 -0.5, %v8311
        %v8934 = vadd.f32 %v8933, 1.0
        %v8935 = vmul.f32 %v8934, %v8311
        %v8936 = vand.u32 2147483647, %v8311
        %vm8937 = vcmp.lt.f32.partialorder %v8936, 0.0004427343
        %v8938 = vsel %vm8937, %v8935, %v8932
        %v8939 = vadd.f32 %v8313, 1.0
        %v8940 = vlog2.pop %v8939
        %v8941 = vmul.f32 %v8940, 0.6931472
        %v8942 = vmul.f32 -0.5, %v8313
        %v8943 = vadd.f32 %v8942, 1.0
        %v8944 = vmul.f32 %v8943, %v8313
        %v8945 = vand.u32 2147483647, %v8313
        %vm8946 = vcmp.lt.f32.partialorder %v8945, 0.0004427343
        %v8947 = vsel %vm8946, %v8944, %v8941
        %v8948 = vadd.f32 %v8315, 1.0
        %v8949 = vlog2.pop %v8948
        %v8950 = vmul.f32 %v8949, 0.6931472
        %v8951 = vmul.f32 -0.5, %v8315
        %v8952 = vadd.f32 %v8951, 1.0
        %v8953 = vmul.f32 %v8952, %v8315
        %v8954 = vand.u32 2147483647, %v8315
        %vm8955 = vcmp.lt.f32.partialorder %v8954, 0.0004427343
        %v8956 = vsel %vm8955, %v8953, %v8950
        %v8957 = vadd.f32 %v8317, 1.0
        %v8958 = vlog2.pop %v8957
        %v8959 = vmul.f32 %v8958, 0.6931472
        %v8960 = vmul.f32 -0.5, %v8317
        %v8961 = vadd.f32 %v8960, 1.0
        %v8962 = vmul.f32 %v8961, %v8317
        %v8963 = vand.u32 2147483647, %v8317
        %vm8964 = vcmp.lt.f32.partialorder %v8963, 0.0004427343
        %v8965 = vsel %vm8964, %v8962, %v8959
        %v8966 = vadd.f32 %v8319, 1.0
        %v8967 = vlog2.pop %v8966
        %v8968 = vmul.f32 %v8967, 0.6931472
        %v8969 = vmul.f32 -0.5, %v8319
        %v8970 = vadd.f32 %v8969, 1.0
        %v8971 = vmul.f32 %v8970, %v8319
        %v8972 = vand.u32 2147483647, %v8319
        %vm8973 = vcmp.lt.f32.partialorder %v8972, 0.0004427343
        %v8974 = vsel %vm8973, %v8971, %v8968
        %v8975 = vadd.f32 %v8321, 1.0
        %v8976 = vlog2.pop %v8975
        %v8977 = vmul.f32 %v8976, 0.6931472
        %v8978 = vmul.f32 -0.5, %v8321
        %v8979 = vadd.f32 %v8978, 1.0
        %v8980 = vmul.f32 %v8979, %v8321
        %v8981 = vand.u32 2147483647, %v8321
        %vm8982 = vcmp.lt.f32.partialorder %v8981, 0.0004427343
        %v8983 = vsel %vm8982, %v8980, %v8977
        %v8984 = vadd.f32 %v8323, 1.0
        %v8985 = vlog2.pop %v8984
        %v8986 = vmul.f32 %v8985, 0.6931472
        %v8987 = vmul.f32 -0.5, %v8323
        %v8988 = vadd.f32 %v8987, 1.0
        %v8989 = vmul.f32 %v8988, %v8323
        %v8990 = vand.u32 2147483647, %v8323
        %vm8991 = vcmp.lt.f32.partialorder %v8990, 0.0004427343
        %v8992 = vsel %vm8991, %v8989, %v8986
        %v8993 = vadd.f32 %v8325, 1.0
        %v8994 = vlog2.pop %v8993
        %v8995 = vmul.f32 %v8994, 0.6931472
        %v8996 = vmul.f32 -0.5, %v8325
        %v8997 = vadd.f32 %v8996, 1.0
        %v8998 = vmul.f32 %v8997, %v8325
        %v8999 = vand.u32 2147483647, %v8325
        %vm9000 = vcmp.lt.f32.partialorder %v8999, 0.0004427343
        %v9001 = vsel %vm9000, %v8998, %v8995
        %v9002 = vadd.f32 %v8327, 1.0
        %v9003 = vlog2.pop %v9002
        %v9004 = vmul.f32 %v9003, 0.6931472
        %v9005 = vmul.f32 -0.5, %v8327
        %v9006 = vadd.f32 %v9005, 1.0
        %v9007 = vmul.f32 %v9006, %v8327
        %v9008 = vand.u32 2147483647, %v8327
        %vm9009 = vcmp.lt.f32.partialorder %v9008, 0.0004427343
        %v9010 = vsel %vm9009, %v9007, %v9004
        %v9011 = vadd.f32 %v8329, 1.0
        %v9012 = vlog2.pop %v9011
        %v9013 = vmul.f32 %v9012, 0.6931472
        %v9014 = vmul.f32 -0.5, %v8329
        %v9015 = vadd.f32 %v9014, 1.0
        %v9016 = vmul.f32 %v9015, %v8329
        %v9017 = vand.u32 2147483647, %v8329
        %vm9018 = vcmp.lt.f32.partialorder %v9017, 0.0004427343
        %v9019 = vsel %vm9018, %v9016, %v9013
        %v9020 = vadd.f32 %v8331, 1.0
        %v9021 = vlog2.pop %v9020
        %v9022 = vmul.f32 %v9021, 0.6931472
        %v9023 = vmul.f32 -0.5, %v8331
        %v9024 = vadd.f32 %v9023, 1.0
        %v9025 = vmul.f32 %v9024, %v8331
        %v9026 = vand.u32 2147483647, %v8331
        %vm9027 = vcmp.lt.f32.partialorder %v9026, 0.0004427343
        %v9028 = vsel %vm9027, %v9025, %v9022
        %v9029 = vadd.f32 %v8333, 1.0
        %v9030 = vlog2.pop %v9029
        %v9031 = vmul.f32 %v9030, 0.6931472
        %v9032 = vmul.f32 -0.5, %v8333
        %v9033 = vadd.f32 %v9032, 1.0
        %v9034 = vmul.f32 %v9033, %v8333
        %v9035 = vand.u32 2147483647, %v8333
        %vm9036 = vcmp.lt.f32.partialorder %v9035, 0.0004427343
        %v9037 = vsel %vm9036, %v9034, %v9031
        %v9038 = vadd.f32 %v8335, 1.0
        %v9039 = vlog2.pop %v9038
        %v9040 = vmul.f32 %v9039, 0.6931472
        %v9041 = vmul.f32 -0.5, %v8335
        %v9042 = vadd.f32 %v9041, 1.0
        %v9043 = vmul.f32 %v9042, %v8335
        %v9044 = vand.u32 2147483647, %v8335
        %vm9045 = vcmp.lt.f32.partialorder %v9044, 0.0004427343
        %v9046 = vsel %vm9045, %v9043, %v9040
        %v9047 = vadd.f32 %v8337, 1.0
        %v9048 = vlog2.pop %v9047
        %v9049 = vmul.f32 %v9048, 0.6931472
        %v9050 = vmul.f32 -0.5, %v8337
        %v9051 = vadd.f32 %v9050, 1.0
        %v9052 = vmul.f32 %v9051, %v8337
        %v9053 = vand.u32 2147483647, %v8337
        %vm9054 = vcmp.lt.f32.partialorder %v9053, 0.0004427343
        %v9055 = vsel %vm9054, %v9052, %v9049
        %v9056 = vadd.f32 %v8339, 1.0
        %v9057 = vlog2.pop %v9056
        %v9058 = vmul.f32 %v9057, 0.6931472
        %v9059 = vmul.f32 -0.5, %v8339
        %v9060 = vadd.f32 %v9059, 1.0
        %v9061 = vmul.f32 %v9060, %v8339
        %v9062 = vand.u32 2147483647, %v8339
        %vm9063 = vcmp.lt.f32.partialorder %v9062, 0.0004427343
        %v9064 = vsel %vm9063, %v9061, %v9058
        %v9065 = vadd.f32 %v8341, 1.0
        %v9066 = vlog2.pop %v9065
        %v9067 = vmul.f32 %v9066, 0.6931472
        %v9068 = vmul.f32 -0.5, %v8341
        %v9069 = vadd.f32 %v9068, 1.0
        %v9070 = vmul.f32 %v9069, %v8341
        %v9071 = vand.u32 2147483647, %v8341
        %vm9072 = vcmp.lt.f32.partialorder %v9071, 0.0004427343
        %v9073 = vsel %vm9072, %v9070, %v9067
        %v9074 = vadd.f32 %v8343, 1.0
        %v9075 = vlog2.pop %v9074
        %v9076 = vmul.f32 %v9075, 0.6931472
        %v9077 = vmul.f32 -0.5, %v8343
        %v9078 = vadd.f32 %v9077, 1.0
        %v9079 = vmul.f32 %v9078, %v8343
        %v9080 = vand.u32 2147483647, %v8343
        %vm9081 = vcmp.lt.f32.partialorder %v9080, 0.0004427343
        %v9082 = vsel %vm9081, %v9079, %v9076
        %v9083 = vadd.f32 %v8345, 1.0
        %v9084 = vlog2.pop %v9083
        %v9085 = vmul.f32 %v9084, 0.6931472
        %v9086 = vmul.f32 -0.5, %v8345
        %v9087 = vadd.f32 %v9086, 1.0
        %v9088 = vmul.f32 %v9087, %v8345
        %v9089 = vand.u32 2147483647, %v8345
        %vm9090 = vcmp.lt.f32.partialorder %v9089, 0.0004427343
        %v9091 = vsel %vm9090, %v9088, %v9085
        %v9092 = vadd.f32 %v8347, 1.0
        %v9093 = vlog2.pop %v9092
        %v9094 = vmul.f32 %v9093, 0.6931472
        %v9095 = vmul.f32 -0.5, %v8347
        %v9096 = vadd.f32 %v9095, 1.0
        %v9097 = vmul.f32 %v9096, %v8347
        %v9098 = vand.u32 2147483647, %v8347
        %vm9099 = vcmp.lt.f32.partialorder %v9098, 0.0004427343
        %v9100 = vsel %vm9099, %v9097, %v9094
        %v9101 = vadd.f32 %v8349, 1.0
        %v9102 = vlog2.pop %v9101
        %v9103 = vmul.f32 %v9102, 0.6931472
        %v9104 = vmul.f32 -0.5, %v8349
        %v9105 = vadd.f32 %v9104, 1.0
        %v9106 = vmul.f32 %v9105, %v8349
        %v9107 = vand.u32 2147483647, %v8349
        %vm9108 = vcmp.lt.f32.partialorder %v9107, 0.0004427343
        %v9109 = vsel %vm9108, %v9106, %v9103
        %v9110 = vadd.f32 %v8351, 1.0
        %v9111 = vlog2.pop %v9110
        %v9112 = vmul.f32 %v9111, 0.6931472
        %v9113 = vmul.f32 -0.5, %v8351
        %v9114 = vadd.f32 %v9113, 1.0
        %v9115 = vmul.f32 %v9114, %v8351
        %v9116 = vand.u32 2147483647, %v8351
        %vm9117 = vcmp.lt.f32.partialorder %v9116, 0.0004427343
        %v9118 = vsel %vm9117, %v9115, %v9112
        %v9119 = vadd.f32 %v8353, 1.0
        %v9120 = vlog2.pop %v9119
        %v9121 = vmul.f32 %v9120, 0.6931472
        %v9122 = vmul.f32 -0.5, %v8353
        %v9123 = vadd.f32 %v9122, 1.0
        %v9124 = vmul.f32 %v9123, %v8353
        %v9125 = vand.u32 2147483647, %v8353
        %vm9126 = vcmp.lt.f32.partialorder %v9125, 0.0004427343
        %v9127 = vsel %vm9126, %v9124, %v9121
        %v9128 = vadd.f32 %v8355, 1.0
        %v9129 = vlog2.pop %v9128
        %v9130 = vmul.f32 %v9129, 0.6931472
        %v9131 = vmul.f32 -0.5, %v8355
        %v9132 = vadd.f32 %v9131, 1.0
        %v9133 = vmul.f32 %v9132, %v8355
        %v9134 = vand.u32 2147483647, %v8355
        %vm9135 = vcmp.lt.f32.partialorder %v9134, 0.0004427343
        %v9136 = vsel %vm9135, %v9133, %v9130
        %v9137 = vadd.f32 %v8357, 1.0
        %v9138 = vlog2.pop %v9137
        %v9139 = vmul.f32 %v9138, 0.6931472
        %v9140 = vmul.f32 -0.5, %v8357
        %v9141 = vadd.f32 %v9140, 1.0
        %v9142 = vmul.f32 %v9141, %v8357
        %v9143 = vand.u32 2147483647, %v8357
        %vm9144 = vcmp.lt.f32.partialorder %v9143, 0.0004427343
        %v9145 = vsel %vm9144, %v9142, %v9139
        %v9146 = vadd.f32 %v8359, 1.0
        %v9147 = vlog2.pop %v9146
        %v9148 = vmul.f32 %v9147, 0.6931472
        %v9149 = vmul.f32 -0.5, %v8359
        %v9150 = vadd.f32 %v9149, 1.0
        %v9151 = vmul.f32 %v9150, %v8359
        %v9152 = vand.u32 2147483647, %v8359
        %vm9153 = vcmp.lt.f32.partialorder %v9152, 0.0004427343
        %v9154 = vsel %vm9153, %v9151, %v9148
        %v9155 = vadd.f32 %v8361, 1.0
        %v9156 = vlog2.pop %v9155
        %v9157 = vmul.f32 %v9156, 0.6931472
        %v9158 = vmul.f32 -0.5, %v8361
        %v9159 = vadd.f32 %v9158, 1.0
        %v9160 = vmul.f32 %v9159, %v8361
        %v9161 = vand.u32 2147483647, %v8361
        %vm9162 = vcmp.lt.f32.partialorder %v9161, 0.0004427343
        %v9163 = vsel %vm9162, %v9160, %v9157
        %v9164 = vadd.f32 %v8363, 1.0
        %v9165 = vlog2.pop %v9164
        %v9166 = vmul.f32 %v9165, 0.6931472
        %v9167 = vmul.f32 -0.5, %v8363
        %v9168 = vadd.f32 %v9167, 1.0
        %v9169 = vmul.f32 %v9168, %v8363
        %v9170 = vand.u32 2147483647, %v8363
        %vm9171 = vcmp.lt.f32.partialorder %v9170, 0.0004427343
        %v9172 = vsel %vm9171, %v9169, %v9166
        %v9173 = vadd.f32 %v8365, 1.0
        %v9174 = vlog2.pop %v9173
        %v9175 = vmul.f32 %v9174, 0.6931472
        %v9176 = vmul.f32 -0.5, %v8365
        %v9177 = vadd.f32 %v9176, 1.0
        %v9178 = vmul.f32 %v9177, %v8365
        %v9179 = vand.u32 2147483647, %v8365
        %vm9180 = vcmp.lt.f32.partialorder %v9179, 0.0004427343
        %v9181 = vsel %vm9180, %v9178, %v9175
        %v9182 = vadd.f32 %v8367, 1.0
        %v9183 = vlog2.pop %v9182
        %v9184 = vmul.f32 %v9183, 0.6931472
        %v9185 = vmul.f32 -0.5, %v8367
        %v9186 = vadd.f32 %v9185, 1.0
        %v9187 = vmul.f32 %v9186, %v8367
        %v9188 = vand.u32 2147483647, %v8367
        %vm9189 = vcmp.lt.f32.partialorder %v9188, 0.0004427343
        %v9190 = vsel %vm9189, %v9187, %v9184
        %v9191 = vadd.f32 %v8369, 1.0
        %v9192 = vlog2.pop %v9191
        %v9193 = vmul.f32 %v9192, 0.6931472
        %v9194 = vmul.f32 -0.5, %v8369
        %v9195 = vadd.f32 %v9194, 1.0
        %v9196 = vmul.f32 %v9195, %v8369
        %v9197 = vand.u32 2147483647, %v8369
        %vm9198 = vcmp.lt.f32.partialorder %v9197, 0.0004427343
        %v9199 = vsel %vm9198, %v9196, %v9193
        %v9200 = vadd.f32 %v8371, 1.0
        %v9201 = vlog2.pop %v9200
        %v9202 = vmul.f32 %v9201, 0.6931472
        %v9203 = vmul.f32 -0.5, %v8371
        %v9204 = vadd.f32 %v9203, 1.0
        %v9205 = vmul.f32 %v9204, %v8371
        %v9206 = vand.u32 2147483647, %v8371
        %vm9207 = vcmp.lt.f32.partialorder %v9206, 0.0004427343
        %v9208 = vsel %vm9207, %v9205, %v9202
        %v9209 = vadd.f32 %v8373, 1.0
        %v9210 = vlog2.pop %v9209
        %v9211 = vmul.f32 %v9210, 0.6931472
        %v9212 = vmul.f32 -0.5, %v8373
        %v9213 = vadd.f32 %v9212, 1.0
        %v9214 = vmul.f32 %v9213, %v8373
        %v9215 = vand.u32 2147483647, %v8373
        %vm9216 = vcmp.lt.f32.partialorder %v9215, 0.0004427343
        %v9217 = vsel %vm9216, %v9214, %v9211
        %v9218 = vadd.f32 %v8375, 1.0
        %v9219 = vlog2.pop %v9218
        %v9220 = vmul.f32 %v9219, 0.6931472
        %v9221 = vmul.f32 -0.5, %v8375
        %v9222 = vadd.f32 %v9221, 1.0
        %v9223 = vmul.f32 %v9222, %v8375
        %v9224 = vand.u32 2147483647, %v8375
        %vm9225 = vcmp.lt.f32.partialorder %v9224, 0.0004427343
        %v9226 = vsel %vm9225, %v9223, %v9220
        %v9227 = vadd.f32 %v8377, 1.0
        %v9228 = vlog2.pop %v9227
        %v9229 = vmul.f32 %v9228, 0.6931472
        %v9230 = vmul.f32 -0.5, %v8377
        %v9231 = vadd.f32 %v9230, 1.0
        %v9232 = vmul.f32 %v9231, %v8377
        %v9233 = vand.u32 2147483647, %v8377
        %vm9234 = vcmp.lt.f32.partialorder %v9233, 0.0004427343
        %v9235 = vsel %vm9234, %v9232, %v9229
        %v9236 = vadd.f32 %v8379, 1.0
        %v9237 = vlog2.pop %v9236
        %v9238 = vmul.f32 %v9237, 0.6931472
        %v9239 = vmul.f32 -0.5, %v8379
        %v9240 = vadd.f32 %v9239, 1.0
        %v9241 = vmul.f32 %v9240, %v8379
        %v9242 = vand.u32 2147483647, %v8379
        %vm9243 = vcmp.lt.f32.partialorder %v9242, 0.0004427343
        %v9244 = vsel %vm9243, %v9241, %v9238
        %v9245 = vadd.f32 %v8381, 1.0
        %v9246 = vlog2.pop %v9245
        %v9247 = vmul.f32 %v9246, 0.6931472
        %v9248 = vmul.f32 -0.5, %v8381
        %v9249 = vadd.f32 %v9248, 1.0
        %v9250 = vmul.f32 %v9249, %v8381
        %v9251 = vand.u32 2147483647, %v8381
        %vm9252 = vcmp.lt.f32.partialorder %v9251, 0.0004427343
        %v9253 = vsel %vm9252, %v9250, %v9247
        %v9254 = vadd.f32 %v8383, 1.0
        %v9255 = vlog2.pop %v9254
        %v9256 = vmul.f32 %v9255, 0.6931472
        %v9257 = vmul.f32 -0.5, %v8383
        %v9258 = vadd.f32 %v9257, 1.0
        %v9259 = vmul.f32 %v9258, %v8383
        %v9260 = vand.u32 2147483647, %v8383
        %vm9261 = vcmp.lt.f32.partialorder %v9260, 0.0004427343
        %v9262 = vsel %vm9261, %v9259, %v9256
        %v9263 = vadd.f32 %v8385, 1.0
        %v9264 = vlog2.pop %v9263
        %v9265 = vmul.f32 %v9264, 0.6931472
        %v9266 = vmul.f32 -0.5, %v8385
        %v9267 = vadd.f32 %v9266, 1.0
        %v9268 = vmul.f32 %v9267, %v8385
        %v9269 = vand.u32 2147483647, %v8385
        %vm9270 = vcmp.lt.f32.partialorder %v9269, 0.0004427343
        %v9271 = vsel %vm9270, %v9268, %v9265
        %v9272 = vadd.f32 %v8387, 1.0
        %v9273 = vlog2.pop %v9272
        %v9274 = vmul.f32 %v9273, 0.6931472
        %v9275 = vmul.f32 -0.5, %v8387
        %v9276 = vadd.f32 %v9275, 1.0
        %v9277 = vmul.f32 %v9276, %v8387
        %v9278 = vand.u32 2147483647, %v8387
        %vm9279 = vcmp.lt.f32.partialorder %v9278, 0.0004427343
        %v9280 = vsel %vm9279, %v9277, %v9274
        %v9281 = vadd.f32 %v8389, 1.0
        %v9282 = vlog2.pop %v9281
        %v9283 = vmul.f32 %v9282, 0.6931472
        %v9284 = vmul.f32 -0.5, %v8389
        %v9285 = vadd.f32 %v9284, 1.0
        %v9286 = vmul.f32 %v9285, %v8389
        %v9287 = vand.u32 2147483647, %v8389
        %vm9288 = vcmp.lt.f32.partialorder %v9287, 0.0004427343
        %v9289 = vsel %vm9288, %v9286, %v9283
        %v9290 = vadd.f32 %v8391, 1.0
        %v9291 = vlog2.pop %v9290
        %v9292 = vmul.f32 %v9291, 0.6931472
        %v9293 = vmul.f32 -0.5, %v8391
        %v9294 = vadd.f32 %v9293, 1.0
        %v9295 = vmul.f32 %v9294, %v8391
        %v9296 = vand.u32 2147483647, %v8391
        %vm9297 = vcmp.lt.f32.partialorder %v9296, 0.0004427343
        %v9298 = vsel %vm9297, %v9295, %v9292
        %v9299 = vadd.f32 %v8393, 1.0
        %v9300 = vlog2.pop %v9299
        %v9301 = vmul.f32 %v9300, 0.6931472
        %v9302 = vmul.f32 -0.5, %v8393
        %v9303 = vadd.f32 %v9302, 1.0
        %v9304 = vmul.f32 %v9303, %v8393
        %v9305 = vand.u32 2147483647, %v8393
        %vm9306 = vcmp.lt.f32.partialorder %v9305, 0.0004427343
        %v9307 = vsel %vm9306, %v9304, %v9301
        %v9308 = vadd.f32 %v8395, 1.0
        %v9309 = vlog2.pop %v9308
        %v9310 = vmul.f32 %v9309, 0.6931472
        %v9311 = vmul.f32 -0.5, %v8395
        %v9312 = vadd.f32 %v9311, 1.0
        %v9313 = vmul.f32 %v9312, %v8395
        %v9314 = vand.u32 2147483647, %v8395
        %vm9315 = vcmp.lt.f32.partialorder %v9314, 0.0004427343
        %v9316 = vsel %vm9315, %v9313, %v9310
        %v9317 = vadd.f32 %v8397, 1.0
        %v9318 = vlog2.pop %v9317
        %v9319 = vmul.f32 %v9318, 0.6931472
        %v9320 = vmul.f32 -0.5, %v8397
        %v9321 = vadd.f32 %v9320, 1.0
        %v9322 = vmul.f32 %v9321, %v8397
        %v9323 = vand.u32 2147483647, %v8397
        %vm9324 = vcmp.lt.f32.partialorder %v9323, 0.0004427343
        %v9325 = vsel %vm9324, %v9322, %v9319
        %v9326 = vadd.f32 %v8399, 1.0
        %v9327 = vlog2.pop %v9326
        %v9328 = vmul.f32 %v9327, 0.6931472
        %v9329 = vmul.f32 -0.5, %v8399
        %v9330 = vadd.f32 %v9329, 1.0
        %v9331 = vmul.f32 %v9330, %v8399
        %v9332 = vand.u32 2147483647, %v8399
        %vm9333 = vcmp.lt.f32.partialorder %v9332, 0.0004427343
        %v9334 = vsel %vm9333, %v9331, %v9328
        %v9335 = vadd.f32 %v8401, 1.0
        %v9336 = vlog2.pop %v9335
        %v9337 = vmul.f32 %v9336, 0.6931472
        %v9338 = vmul.f32 -0.5, %v8401
        %v9339 = vadd.f32 %v9338, 1.0
        %v9340 = vmul.f32 %v9339, %v8401
        %v9341 = vand.u32 2147483647, %v8401
        %vm9342 = vcmp.lt.f32.partialorder %v9341, 0.0004427343
        %v9343 = vsel %vm9342, %v9340, %v9337
        %v9344 = vadd.f32 %v8403, 1.0
        %v9345 = vlog2.pop %v9344
        %v9346 = vmul.f32 %v9345, 0.6931472
        %v9347 = vmul.f32 -0.5, %v8403
        %v9348 = vadd.f32 %v9347, 1.0
        %v9349 = vmul.f32 %v9348, %v8403
        %v9350 = vand.u32 2147483647, %v8403
        %vm9351 = vcmp.lt.f32.partialorder %v9350, 0.0004427343
        %v9352 = vsel %vm9351, %v9349, %v9346
        %v9353 = vadd.f32 %v8405, 1.0
        %v9354 = vlog2.pop %v9353
        %v9355 = vmul.f32 %v9354, 0.6931472
        %v9356 = vmul.f32 -0.5, %v8405
        %v9357 = vadd.f32 %v9356, 1.0
        %v9358 = vmul.f32 %v9357, %v8405
        %v9359 = vand.u32 2147483647, %v8405
        %vm9360 = vcmp.lt.f32.partialorder %v9359, 0.0004427343
        %v9361 = vsel %vm9360, %v9358, %v9355
        %v9362 = vadd.f32 %v8407, 1.0
        %v9363 = vlog2.pop %v9362
        %v9364 = vmul.f32 %v9363, 0.6931472
        %v9365 = vmul.f32 -0.5, %v8407
        %v9366 = vadd.f32 %v9365, 1.0
        %v9367 = vmul.f32 %v9366, %v8407
        %v9368 = vand.u32 2147483647, %v8407
        %vm9369 = vcmp.lt.f32.partialorder %v9368, 0.0004427343
        %v9370 = vsel %vm9369, %v9367, %v9364
        %v9371 = vadd.f32 %v8409, 1.0
        %v9372 = vlog2.pop %v9371
        %v9373 = vmul.f32 %v9372, 0.6931472
        %v9374 = vmul.f32 -0.5, %v8409
        %v9375 = vadd.f32 %v9374, 1.0
        %v9376 = vmul.f32 %v9375, %v8409
        %v9377 = vand.u32 2147483647, %v8409
        %vm9378 = vcmp.lt.f32.partialorder %v9377, 0.0004427343
        %v9379 = vsel %vm9378, %v9376, %v9373
        %v9380 = vadd.f32 %v8411, 1.0
        %v9381 = vlog2.pop %v9380
        %v9382 = vmul.f32 %v9381, 0.6931472
        %v9383 = vmul.f32 -0.5, %v8411
        %v9384 = vadd.f32 %v9383, 1.0
        %v9385 = vmul.f32 %v9384, %v8411
        %v9386 = vand.u32 2147483647, %v8411
        %vm9387 = vcmp.lt.f32.partialorder %v9386, 0.0004427343
        %v9388 = vsel %vm9387, %v9385, %v9382
        %v9389 = vadd.f32 %v8413, 1.0
        %v9390 = vlog2.pop %v9389
        %v9391 = vmul.f32 %v9390, 0.6931472
        %v9392 = vmul.f32 -0.5, %v8413
        %v9393 = vadd.f32 %v9392, 1.0
        %v9394 = vmul.f32 %v9393, %v8413
        %v9395 = vand.u32 2147483647, %v8413
        %vm9396 = vcmp.lt.f32.partialorder %v9395, 0.0004427343
        %v9397 = vsel %vm9396, %v9394, %v9391
        %v9398 = vadd.f32 %v8415, 1.0
        %v9399 = vlog2.pop %v9398
        %v9400 = vmul.f32 %v9399, 0.6931472
        %v9401 = vmul.f32 -0.5, %v8415
        %v9402 = vadd.f32 %v9401, 1.0
        %v9403 = vmul.f32 %v9402, %v8415
        %v9404 = vand.u32 2147483647, %v8415
        %vm9405 = vcmp.lt.f32.partialorder %v9404, 0.0004427343
        %v9406 = vsel %vm9405, %v9403, %v9400
        %v9407 = vadd.f32 %v8417, 1.0
        %v9408 = vlog2.pop %v9407
        %v9409 = vmul.f32 %v9408, 0.6931472
        %v9410 = vmul.f32 -0.5, %v8417
        %v9411 = vadd.f32 %v9410, 1.0
        %v9412 = vmul.f32 %v9411, %v8417
        %v9413 = vand.u32 2147483647, %v8417
        %vm9414 = vcmp.lt.f32.partialorder %v9413, 0.0004427343
        %v9415 = vsel %vm9414, %v9412, %v9409
        %v9416 = vadd.f32 %v8419, 1.0
        %v9417 = vlog2.pop %v9416
        %v9418 = vmul.f32 %v9417, 0.6931472
        %v9419 = vmul.f32 -0.5, %v8419
        %v9420 = vadd.f32 %v9419, 1.0
        %v9421 = vmul.f32 %v9420, %v8419
        %v9422 = vand.u32 2147483647, %v8419
        %vm9423 = vcmp.lt.f32.partialorder %v9422, 0.0004427343
        %v9424 = vsel %vm9423, %v9421, %v9418
        %v9425 = vadd.f32 %v8421, 1.0
        %v9426 = vlog2.pop %v9425
        %v9427 = vmul.f32 %v9426, 0.6931472
        %v9428 = vmul.f32 -0.5, %v8421
        %v9429 = vadd.f32 %v9428, 1.0
        %v9430 = vmul.f32 %v9429, %v8421
        %v9431 = vand.u32 2147483647, %v8421
        %vm9432 = vcmp.lt.f32.partialorder %v9431, 0.0004427343
        %v9433 = vsel %vm9432, %v9430, %v9427
        %v9434 = vadd.f32 %v8423, 1.0
        %v9435 = vlog2.pop %v9434
        %v9436 = vmul.f32 %v9435, 0.6931472
        %v9437 = vmul.f32 -0.5, %v8423
        %v9438 = vadd.f32 %v9437, 1.0
        %v9439 = vmul.f32 %v9438, %v8423
        %v9440 = vand.u32 2147483647, %v8423
        %vm9441 = vcmp.lt.f32.partialorder %v9440, 0.0004427343
        %v9442 = vsel %vm9441, %v9439, %v9436
        %v9443 = vadd.f32 %v8425, 1.0
        %v9444 = vlog2.pop %v9443
        %v9445 = vmul.f32 %v9444, 0.6931472
        %v9446 = vmul.f32 -0.5, %v8425
        %v9447 = vadd.f32 %v9446, 1.0
        %v9448 = vmul.f32 %v9447, %v8425
        %v9449 = vand.u32 2147483647, %v8425
        %vm9450 = vcmp.lt.f32.partialorder %v9449, 0.0004427343
        %v9451 = vsel %vm9450, %v9448, %v9445
        %v9452 = vadd.f32 %v8427, 1.0
        %v9453 = vlog2.pop %v9452
        %v9454 = vmul.f32 %v9453, 0.6931472
        %v9455 = vmul.f32 -0.5, %v8427
        %v9456 = vadd.f32 %v9455, 1.0
        %v9457 = vmul.f32 %v9456, %v8427
        %v9458 = vand.u32 2147483647, %v8427
        %vm9459 = vcmp.lt.f32.partialorder %v9458, 0.0004427343
        %v9460 = vsel %vm9459, %v9457, %v9454
        %v9461 = vadd.f32 %v8429, 1.0
        %v9462 = vlog2.pop %v9461
        %v9463 = vmul.f32 %v9462, 0.6931472
        %v9464 = vmul.f32 -0.5, %v8429
        %v9465 = vadd.f32 %v9464, 1.0
        %v9466 = vmul.f32 %v9465, %v8429
        %v9467 = vand.u32 2147483647, %v8429
        %vm9468 = vcmp.lt.f32.partialorder %v9467, 0.0004427343
        %v9469 = vsel %vm9468, %v9466, %v9463
        %v9470 = vadd.f32 %v8431, 1.0
        %v9471 = vlog2.pop %v9470
        %v9472 = vmul.f32 %v9471, 0.6931472
        %v9473 = vmul.f32 -0.5, %v8431
        %v9474 = vadd.f32 %v9473, 1.0
        %v9475 = vmul.f32 %v9474, %v8431
        %v9476 = vand.u32 2147483647, %v8431
        %vm9477 = vcmp.lt.f32.partialorder %v9476, 0.0004427343
        %v9478 = vsel %vm9477, %v9475, %v9472
        %v9479 = vadd.f32 %v8433, 1.0
        %v9480 = vlog2.pop %v9479
        %v9481 = vmul.f32 %v9480, 0.6931472
        %v9482 = vmul.f32 -0.5, %v8433
        %v9483 = vadd.f32 %v9482, 1.0
        %v9484 = vmul.f32 %v9483, %v8433
        %v9485 = vand.u32 2147483647, %v8433
        %vm9486 = vcmp.lt.f32.partialorder %v9485, 0.0004427343
        %v9487 = vsel %vm9486, %v9484, %v9481
        %v9488 = vadd.f32 %v8435, 1.0
        %v9489 = vlog2.pop %v9488
        %v9490 = vmul.f32 %v9489, 0.6931472
        %v9491 = vmul.f32 -0.5, %v8435
        %v9492 = vadd.f32 %v9491, 1.0
        %v9493 = vmul.f32 %v9492, %v8435
        %v9494 = vand.u32 2147483647, %v8435
        %vm9495 = vcmp.lt.f32.partialorder %v9494, 0.0004427343
        %v9496 = vsel %vm9495, %v9493, %v9490
        %v9497 = vadd.f32 %v8437, 1.0
        %v9498 = vlog2.pop %v9497
        %v9499 = vmul.f32 %v9498, 0.6931472
        %v9500 = vmul.f32 -0.5, %v8437
        %v9501 = vadd.f32 %v9500, 1.0
        %v9502 = vmul.f32 %v9501, %v8437
        %v9503 = vand.u32 2147483647, %v8437
        %vm9504 = vcmp.lt.f32.partialorder %v9503, 0.0004427343
        %v9505 = vsel %vm9504, %v9502, %v9499
        %v9506 = vadd.f32 %v8439, 1.0
        %v9507 = vlog2.pop %v9506
        %v9508 = vmul.f32 %v9507, 0.6931472
        %v9509 = vmul.f32 -0.5, %v8439
        %v9510 = vadd.f32 %v9509, 1.0
        %v9511 = vmul.f32 %v9510, %v8439
        %v9512 = vand.u32 2147483647, %v8439
        %vm9513 = vcmp.lt.f32.partialorder %v9512, 0.0004427343
        %v9514 = vsel %vm9513, %v9511, %v9508
        %v9515 = vadd.f32 %v8441, 1.0
        %v9516 = vlog2.pop %v9515
        %v9517 = vmul.f32 %v9516, 0.6931472
        %v9518 = vmul.f32 -0.5, %v8441
        %v9519 = vadd.f32 %v9518, 1.0
        %v9520 = vmul.f32 %v9519, %v8441
        %v9521 = vand.u32 2147483647, %v8441
        %vm9522 = vcmp.lt.f32.partialorder %v9521, 0.0004427343
        %v9523 = vsel %vm9522, %v9520, %v9517
        %v9524 = vadd.f32 %v8443, 1.0
        %v9525 = vlog2.pop %v9524
        %v9526 = vmul.f32 %v9525, 0.6931472
        %v9527 = vmul.f32 -0.5, %v8443
        %v9528 = vadd.f32 %v9527, 1.0
        %v9529 = vmul.f32 %v9528, %v8443
        %v9530 = vand.u32 2147483647, %v8443
        %vm9531 = vcmp.lt.f32.partialorder %v9530, 0.0004427343
        %v9532 = vsel %vm9531, %v9529, %v9526
        %v9533 = vadd.f32 %v8445, 1.0
        %v9534 = vlog2.pop %v9533
        %v9535 = vmul.f32 %v9534, 0.6931472
        %v9536 = vmul.f32 -0.5, %v8445
        %v9537 = vadd.f32 %v9536, 1.0
        %v9538 = vmul.f32 %v9537, %v8445
        %v9539 = vand.u32 2147483647, %v8445
        %vm9540 = vcmp.lt.f32.partialorder %v9539, 0.0004427343
        %v9541 = vsel %vm9540, %v9538, %v9535
        %v9542 = vadd.f32 %v8447, 1.0
        %v9543 = vlog2.pop %v9542
        %v9544 = vmul.f32 %v9543, 0.6931472
        %v9545 = vmul.f32 -0.5, %v8447
        %v9546 = vadd.f32 %v9545, 1.0
        %v9547 = vmul.f32 %v9546, %v8447
        %v9548 = vand.u32 2147483647, %v8447
        %vm9549 = vcmp.lt.f32.partialorder %v9548, 0.0004427343
        %v9550 = vsel %vm9549, %v9547, %v9544
        %v9551 = vadd.f32 %v8449, 1.0
        %v9552 = vlog2.pop %v9551
        %v9553 = vmul.f32 %v9552, 0.6931472
        %v9554 = vmul.f32 -0.5, %v8449
        %v9555 = vadd.f32 %v9554, 1.0
        %v9556 = vmul.f32 %v9555, %v8449
        %v9557 = vand.u32 2147483647, %v8449
        %vm9558 = vcmp.lt.f32.partialorder %v9557, 0.0004427343
        %v9559 = vsel %vm9558, %v9556, %v9553
        %v9560 = vadd.f32 %v8451, 1.0
        %v9561 = vlog2.pop %v9560
        %v9562 = vmul.f32 %v9561, 0.6931472
        %v9563 = vmul.f32 -0.5, %v8451
        %v9564 = vadd.f32 %v9563, 1.0
        %v9565 = vmul.f32 %v9564, %v8451
        %v9566 = vand.u32 2147483647, %v8451
        %vm9567 = vcmp.lt.f32.partialorder %v9566, 0.0004427343
        %v9568 = vsel %vm9567, %v9565, %v9562
        %v9569 = vadd.f32 %v8453, 1.0
        %v9570 = vlog2.pop %v9569
        %v9571 = vmul.f32 %v9570, 0.6931472
        %v9572 = vmul.f32 -0.5, %v8453
        %v9573 = vadd.f32 %v9572, 1.0
        %v9574 = vmul.f32 %v9573, %v8453
        %v9575 = vand.u32 2147483647, %v8453
        %vm9576 = vcmp.lt.f32.partialorder %v9575, 0.0004427343
        %v9577 = vsel %vm9576, %v9574, %v9571
        %v9578 = vadd.f32 %v8455, 1.0
        %v9579 = vlog2.pop %v9578
        %v9580 = vmul.f32 %v9579, 0.6931472
        %v9581 = vmul.f32 -0.5, %v8455
        %v9582 = vadd.f32 %v9581, 1.0
        %v9583 = vmul.f32 %v9582, %v8455
        %v9584 = vand.u32 2147483647, %v8455
        %vm9585 = vcmp.lt.f32.partialorder %v9584, 0.0004427343
        %v9586 = vsel %vm9585, %v9583, %v9580
        %v9587 = vadd.f32 %v8457, 1.0
        %v9588 = vlog2.pop %v9587
        %v9589 = vmul.f32 %v9588, 0.6931472
        %v9590 = vmul.f32 -0.5, %v8457
        %v9591 = vadd.f32 %v9590, 1.0
        %v9592 = vmul.f32 %v9591, %v8457
        %v9593 = vand.u32 2147483647, %v8457
        %vm9594 = vcmp.lt.f32.partialorder %v9593, 0.0004427343
        %v9595 = vsel %vm9594, %v9592, %v9589
        %v9596 = vadd.f32 %v8459, 1.0
        %v9597 = vlog2.pop %v9596
        %v9598 = vmul.f32 %v9597, 0.6931472
        %v9599 = vmul.f32 -0.5, %v8459
        %v9600 = vadd.f32 %v9599, 1.0
        %v9601 = vmul.f32 %v9600, %v8459
        %v9602 = vand.u32 2147483647, %v8459
        %vm9603 = vcmp.lt.f32.partialorder %v9602, 0.0004427343
        %v9604 = vsel %vm9603, %v9601, %v9598
        %v9605 = vadd.f32 %v8461, 1.0
        %v9606 = vlog2.pop %v9605
        %v9607 = vmul.f32 %v9606, 0.6931472
        %v9608 = vmul.f32 -0.5, %v8461
        %v9609 = vadd.f32 %v9608, 1.0
        %v9610 = vmul.f32 %v9609, %v8461
        %v9611 = vand.u32 2147483647, %v8461
        %vm9612 = vcmp.lt.f32.partialorder %v9611, 0.0004427343
        %v9613 = vsel %vm9612, %v9610, %v9607
        %v9614 = vsub.f32 %v7822, %v8470
        %v9615 = vsub.f32 %v7823, %v8479
        %v9616 = vsub.f32 %v7824, %v8488
        %v9617 = vsub.f32 %v7825, %v8497
        %v9618 = vsub.f32 %v7826, %v8506
        %v9619 = vsub.f32 %v7827, %v8515
        %v9620 = vsub.f32 %v7828, %v8524
        %v9621 = vsub.f32 %v7829, %v8533
        %v9622 = vsub.f32 %v7830, %v8542
        %v9623 = vsub.f32 %v7831, %v8551
        %v9624 = vsub.f32 %v7832, %v8560
        %v9625 = vsub.f32 %v7833, %v8569
        %v9626 = vsub.f32 %v7834, %v8578
        %v9627 = vsub.f32 %v7835, %v8587
        %v9628 = vsub.f32 %v7836, %v8596
        %v9629 = vsub.f32 %v7837, %v8605
        %v9630 = vsub.f32 %v7838, %v8614
        %v9631 = vsub.f32 %v7839, %v8623
        %v9632 = vsub.f32 %v7840, %v8632
        %v9633 = vsub.f32 %v7841, %v8641
        %v9634 = vsub.f32 %v7842, %v8650
        %v9635 = vsub.f32 %v7843, %v8659
        %v9636 = vsub.f32 %v7844, %v8668
        %v9637 = vsub.f32 %v7845, %v8677
        %v9638 = vsub.f32 %v7846, %v8686
        %v9639 = vsub.f32 %v7847, %v8695
        %v9640 = vsub.f32 %v7848, %v8704
        %v9641 = vsub.f32 %v7849, %v8713
        %v9642 = vsub.f32 %v7850, %v8722
        %v9643 = vsub.f32 %v7851, %v8731
        %v9644 = vsub.f32 %v7852, %v8740
        %v9645 = vsub.f32 %v7853, %v8749
        %v9646 = vsub.f32 %v7854, %v8758
        %v9647 = vsub.f32 %v7855, %v8767
        %v9648 = vsub.f32 %v7856, %v8776
        %v9649 = vsub.f32 %v7857, %v8785
        %v9650 = vsub.f32 %v7858, %v8794
        %v9651 = vsub.f32 %v7859, %v8803
        %v9652 = vsub.f32 %v7860, %v8812
        %v9653 = vsub.f32 %v7861, %v8821
        %v9654 = vsub.f32 %v7862, %v8830
        %v9655 = vsub.f32 %v7863, %v8839
        %v9656 = vsub.f32 %v7864, %v8848
        %v9657 = vsub.f32 %v7865, %v8857
        %v9658 = vsub.f32 %v7866, %v8866
        %v9659 = vsub.f32 %v7867, %v8875
        %v9660 = vsub.f32 %v7868, %v8884
        %v9661 = vsub.f32 %v7869, %v8893
        %v9662 = vsub.f32 %v7870, %v8902
        %v9663 = vsub.f32 %v7871, %v8911
        %v9664 = vsub.f32 %v7872, %v8920
        %v9665 = vsub.f32 %v7873, %v8929
        %v9666 = vsub.f32 %v7874, %v8938
        %v9667 = vsub.f32 %v7875, %v8947
        %v9668 = vsub.f32 %v7876, %v8956
        %v9669 = vsub.f32 %v7877, %v8965
        %v9670 = vsub.f32 %v7878, %v8974
        %v9671 = vsub.f32 %v7879, %v8983
        %v9672 = vsub.f32 %v7880, %v8992
        %v9673 = vsub.f32 %v7881, %v9001
        %v9674 = vsub.f32 %v7882, %v9010
        %v9675 = vsub.f32 %v7883, %v9019
        %v9676 = vsub.f32 %v7884, %v9028
        %v9677 = vsub.f32 %v7885, %v9037
        %v9678 = vsub.f32 %v7886, %v9046
        %v9679 = vsub.f32 %v7887, %v9055
        %v9680 = vsub.f32 %v7888, %v9064
        %v9681 = vsub.f32 %v7889, %v9073
        %v9682 = vsub.f32 %v7890, %v9082
        %v9683 = vsub.f32 %v7891, %v9091
        %v9684 = vsub.f32 %v7892, %v9100
        %v9685 = vsub.f32 %v7893, %v9109
        %v9686 = vsub.f32 %v7894, %v9118
        %v9687 = vsub.f32 %v7895, %v9127
        %v9688 = vsub.f32 %v7896, %v9136
        %v9689 = vsub.f32 %v7897, %v9145
        %v9690 = vsub.f32 %v7898, %v9154
        %v9691 = vsub.f32 %v7899, %v9163
        %v9692 = vsub.f32 %v7900, %v9172
        %v9693 = vsub.f32 %v7901, %v9181
        %v9694 = vsub.f32 %v7902, %v9190
        %v9695 = vsub.f32 %v7903, %v9199
        %v9696 = vsub.f32 %v7904, %v9208
        %v9697 = vsub.f32 %v7905, %v9217
        %v9698 = vsub.f32 %v7906, %v9226
        %v9699 = vsub.f32 %v7907, %v9235
        %v9700 = vsub.f32 %v7908, %v9244
        %v9701 = vsub.f32 %v7909, %v9253
        %v9702 = vsub.f32 %v7910, %v9262
        %v9703 = vsub.f32 %v7911, %v9271
        %v9704 = vsub.f32 %v7912, %v9280
        %v9705 = vsub.f32 %v7913, %v9289
        %v9706 = vsub.f32 %v7914, %v9298
        %v9707 = vsub.f32 %v7915, %v9307
        %v9708 = vsub.f32 %v7916, %v9316
        %v9709 = vsub.f32 %v7917, %v9325
        %v9710 = vsub.f32 %v7918, %v9334
        %v9711 = vsub.f32 %v7919, %v9343
        %v9712 = vsub.f32 %v7920, %v9352
        %v9713 = vsub.f32 %v7921, %v9361
        %v9714 = vsub.f32 %v7922, %v9370
        %v9715 = vsub.f32 %v7923, %v9379
        %v9716 = vsub.f32 %v7924, %v9388
        %v9717 = vsub.f32 %v7925, %v9397
        %v9718 = vsub.f32 %v7926, %v9406
        %v9719 = vsub.f32 %v7927, %v9415
        %v9720 = vsub.f32 %v7928, %v9424
        %v9721 = vsub.f32 %v7929, %v9433
        %v9722 = vsub.f32 %v7930, %v9442
        %v9723 = vsub.f32 %v7931, %v9451
        %v9724 = vsub.f32 %v7932, %v9460
        %v9725 = vsub.f32 %v7933, %v9469
        %v9726 = vsub.f32 %v7934, %v9478
        %v9727 = vsub.f32 %v7935, %v9487
        %v9728 = vsub.f32 %v7936, %v9496
        %v9729 = vsub.f32 %v7937, %v9505
        %v9730 = vsub.f32 %v7938, %v9514
        %v9731 = vsub.f32 %v7939, %v9523
        %v9732 = vsub.f32 %v7940, %v9532
        %v9733 = vsub.f32 %v7941, %v9541
        %v9734 = vsub.f32 %v7942, %v9550
        %v9735 = vsub.f32 %v7943, %v9559
        %v9736 = vsub.f32 %v7944, %v9568
        %v9737 = vsub.f32 %v7945, %v9577
        %v9738 = vsub.f32 %v7946, %v9586
        %v9739 = vsub.f32 %v7947, %v9595
        %v9740 = vsub.f32 %v7948, %v9604
        %v9741 = vsub.f32 %v7949, %v9613
        %v9742 = vmul.f32 %v6857, %v9614
        %v9743 = vmul.f32 %v6858, %v9615
        %v9744 = vmul.f32 %v6859, %v9616
        %v9745 = vmul.f32 %v6860, %v9617
        %v9746 = vmul.f32 %v6861, %v9618
        %v9747 = vmul.f32 %v6862, %v9619
        %v9748 = vmul.f32 %v6863, %v9620
        %v9749 = vmul.f32 %v6864, %v9621
        %v9750 = vmul.f32 %v6865, %v9622
        %v9751 = vmul.f32 %v6866, %v9623
        %v9752 = vmul.f32 %v6867, %v9624
        %v9753 = vmul.f32 %v6868, %v9625
        %v9754 = vmul.f32 %v6869, %v9626
        %v9755 = vmul.f32 %v6870, %v9627
        %v9756 = vmul.f32 %v6871, %v9628
        %v9757 = vmul.f32 %v6872, %v9629
        %v9758 = vmul.f32 %v6873, %v9630
        %v9759 = vmul.f32 %v6874, %v9631
        %v9760 = vmul.f32 %v6875, %v9632
        %v9761 = vmul.f32 %v6876, %v9633
        %v9762 = vmul.f32 %v6877, %v9634
        %v9763 = vmul.f32 %v6878, %v9635
        %v9764 = vmul.f32 %v6879, %v9636
        %v9765 = vmul.f32 %v6880, %v9637
        %v9766 = vmul.f32 %v6881, %v9638
        %v9767 = vmul.f32 %v6882, %v9639
        %v9768 = vmul.f32 %v6883, %v9640
        %v9769 = vmul.f32 %v6884, %v9641
        %v9770 = vmul.f32 %v6885, %v9642
        %v9771 = vmul.f32 %v6886, %v9643
        %v9772 = vmul.f32 %v6887, %v9644
        %v9773 = vmul.f32 %v6888, %v9645
        %v9774 = vmul.f32 %v6889, %v9646
        %v9775 = vmul.f32 %v6890, %v9647
        %v9776 = vmul.f32 %v6891, %v9648
        %v9777 = vmul.f32 %v6892, %v9649
        %v9778 = vmul.f32 %v6893, %v9650
        %v9779 = vmul.f32 %v6894, %v9651
        %v9780 = vmul.f32 %v6895, %v9652
        %v9781 = vmul.f32 %v6896, %v9653
        %v9782 = vmul.f32 %v6897, %v9654
        %v9783 = vmul.f32 %v6898, %v9655
        %v9784 = vmul.f32 %v6899, %v9656
        %v9785 = vmul.f32 %v6900, %v9657
        %v9786 = vmul.f32 %v6901, %v9658
        %v9787 = vmul.f32 %v6902, %v9659
        %v9788 = vmul.f32 %v6903, %v9660
        %v9789 = vmul.f32 %v6904, %v9661
        %v9790 = vmul.f32 %v6905, %v9662
        %v9791 = vmul.f32 %v6906, %v9663
        %v9792 = vmul.f32 %v6907, %v9664
        %v9793 = vmul.f32 %v6908, %v9665
        %v9794 = vmul.f32 %v6909, %v9666
        %v9795 = vmul.f32 %v6910, %v9667
        %v9796 = vmul.f32 %v6911, %v9668
        %v9797 = vmul.f32 %v6912, %v9669
        %v9798 = vmul.f32 %v6913, %v9670
        %v9799 = vmul.f32 %v6914, %v9671
        %v9800 = vmul.f32 %v6915, %v9672
        %v9801 = vmul.f32 %v6916, %v9673
        %v9802 = vmul.f32 %v6917, %v9674
        %v9803 = vmul.f32 %v6918, %v9675
        %v9804 = vmul.f32 %v6919, %v9676
        %v9805 = vmul.f32 %v6920, %v9677
        %v9806 = vmul.f32 %v6921, %v9678
        %v9807 = vmul.f32 %v6922, %v9679
        %v9808 = vmul.f32 %v6923, %v9680
        %v9809 = vmul.f32 %v6924, %v9681
        %v9810 = vmul.f32 %v6925, %v9682
        %v9811 = vmul.f32 %v6926, %v9683
        %v9812 = vmul.f32 %v6927, %v9684
        %v9813 = vmul.f32 %v6928, %v9685
        %v9814 = vmul.f32 %v6929, %v9686
        %v9815 = vmul.f32 %v6930, %v9687
        %v9816 = vmul.f32 %v6931, %v9688
        %v9817 = vmul.f32 %v6932, %v9689
        %v9818 = vmul.f32 %v6933, %v9690
        %v9819 = vmul.f32 %v6934, %v9691
        %v9820 = vmul.f32 %v6935, %v9692
        %v9821 = vmul.f32 %v6936, %v9693
        %v9822 = vmul.f32 %v6937, %v9694
        %v9823 = vmul.f32 %v6938, %v9695
        %v9824 = vmul.f32 %v6939, %v9696
        %v9825 = vmul.f32 %v6940, %v9697
        %v9826 = vmul.f32 %v6941, %v9698
        %v9827 = vmul.f32 %v6942, %v9699
        %v9828 = vmul.f32 %v6943, %v9700
        %v9829 = vmul.f32 %v6944, %v9701
        %v9830 = vmul.f32 %v6945, %v9702
        %v9831 = vmul.f32 %v6946, %v9703
        %v9832 = vmul.f32 %v6947, %v9704
        %v9833 = vmul.f32 %v6948, %v9705
        %v9834 = vmul.f32 %v6949, %v9706
        %v9835 = vmul.f32 %v6950, %v9707
        %v9836 = vmul.f32 %v6951, %v9708
        %v9837 = vmul.f32 %v6952, %v9709
        %v9838 = vmul.f32 %v6953, %v9710
        %v9839 = vmul.f32 %v6954, %v9711
        %v9840 = vmul.f32 %v6955, %v9712
        %v9841 = vmul.f32 %v6956, %v9713
        %v9842 = vmul.f32 %v6957, %v9714
        %v9843 = vmul.f32 %v6958, %v9715
        %v9844 = vmul.f32 %v6959, %v9716
        %v9845 = vmul.f32 %v6960, %v9717
        %v9846 = vmul.f32 %v6961, %v9718
        %v9847 = vmul.f32 %v6962, %v9719
        %v9848 = vmul.f32 %v6963, %v9720
        %v9849 = vmul.f32 %v6964, %v9721
        %v9850 = vmul.f32 %v6965, %v9722
        %v9851 = vmul.f32 %v6966, %v9723
        %v9852 = vmul.f32 %v6967, %v9724
        %v9853 = vmul.f32 %v6968, %v9725
        %v9854 = vmul.f32 %v6969, %v9726
        %v9855 = vmul.f32 %v6970, %v9727
        %v9856 = vmul.f32 %v6971, %v9728
        %v9857 = vmul.f32 %v6972, %v9729
        %v9858 = vmul.f32 %v6973, %v9730
        %v9859 = vmul.f32 %v6974, %v9731
        %v9860 = vmul.f32 %v6975, %v9732
        %v9861 = vmul.f32 %v6976, %v9733
        %v9862 = vmul.f32 %v6977, %v9734
        %v9863 = vmul.f32 %v6978, %v9735
        %v9864 = vmul.f32 %v6979, %v9736
        %v9865 = vmul.f32 %v6980, %v9737
        %v9866 = vmul.f32 %v6981, %v9738
        %v9867 = vmul.f32 %v6982, %v9739
        %v9868 = vmul.f32 %v6983, %v9740
        %v9869 = vmul.f32 %v6984, %v9741
        %v9870 = vld [vmem:[%s253] sm:$0xff]
        %v9871 = vld [vmem:[%s253 + $0x8] sm:$0xff]
        %v9872 = vld [vmem:[%s253 + $0x10] sm:$0xff]
        %v9873 = vld [vmem:[%s253 + $0x18] sm:$0xff]
        %v9874 = vld [vmem:[%s253 + $0x20] sm:$0xff]
        %v9875 = vld [vmem:[%s253 + $0x28] sm:$0xff]
        %v9876 = vld [vmem:[%s253 + $0x30] sm:$0xff]
        %v9877 = vld [vmem:[%s253 + $0x38] sm:$0xff]
        %v9878 = vld [vmem:[%s253 + $0x40] sm:$0xff]
        %v9879 = vld [vmem:[%s253 + $0x48] sm:$0xff]
        %v9880 = vld [vmem:[%s253 + $0x50] sm:$0xff]
        %v9881 = vld [vmem:[%s253 + $0x58] sm:$0xff]
        %v9882 = vld [vmem:[%s253 + $0x60] sm:$0xff]
        %v9883 = vld [vmem:[%s253 + $0x68] sm:$0xff]
        %v9884 = vld [vmem:[%s253 + $0x70] sm:$0xff]
        %v9885 = vld [vmem:[%s253 + $0x78] sm:$0xff]
        %v9886 = vld [vmem:[%s253 + $0x80] sm:$0xff]
        %v9887 = vld [vmem:[%s253 + $0x88] sm:$0xff]
        %v9888 = vld [vmem:[%s253 + $0x90] sm:$0xff]
        %v9889 = vld [vmem:[%s253 + $0x98] sm:$0xff]
        %v9890 = vld [vmem:[%s253 + $0xa0] sm:$0xff]
        %v9891 = vld [vmem:[%s253 + $0xa8] sm:$0xff]
        %v9892 = vld [vmem:[%s253 + $0xb0] sm:$0xff]
        %v9893 = vld [vmem:[%s253 + $0xb8] sm:$0xff]
        %v9894 = vld [vmem:[%s253 + $0xc0] sm:$0xff]
        %v9895 = vld [vmem:[%s253 + $0xc8] sm:$0xff]
        %v9896 = vld [vmem:[%s253 + $0xd0] sm:$0xff]
        %v9897 = vld [vmem:[%s253 + $0xd8] sm:$0xff]
        %v9898 = vld [vmem:[%s253 + $0xe0] sm:$0xff]
        %v9899 = vld [vmem:[%s253 + $0xe8] sm:$0xff]
        %v9900 = vld [vmem:[%s253 + $0xf0] sm:$0xff]
        %v9901 = vld [vmem:[%s253 + $0xf8] sm:$0xff]
        %v9902 = vld [vmem:[%s253 + $0x100] sm:$0xff]
        %v9903 = vld [vmem:[%s253 + $0x108] sm:$0xff]
        %v9904 = vld [vmem:[%s253 + $0x110] sm:$0xff]
        %v9905 = vld [vmem:[%s253 + $0x118] sm:$0xff]
        %v9906 = vld [vmem:[%s253 + $0x120] sm:$0xff]
        %v9907 = vld [vmem:[%s253 + $0x128] sm:$0xff]
        %v9908 = vld [vmem:[%s253 + $0x130] sm:$0xff]
        %v9909 = vld [vmem:[%s253 + $0x138] sm:$0xff]
        %v9910 = vld [vmem:[%s253 + $0x140] sm:$0xff]
        %v9911 = vld [vmem:[%s253 + $0x148] sm:$0xff]
        %v9912 = vld [vmem:[%s253 + $0x150] sm:$0xff]
        %v9913 = vld [vmem:[%s253 + $0x158] sm:$0xff]
        %v9914 = vld [vmem:[%s253 + $0x160] sm:$0xff]
        %v9915 = vld [vmem:[%s253 + $0x168] sm:$0xff]
        %v9916 = vld [vmem:[%s253 + $0x170] sm:$0xff]
        %v9917 = vld [vmem:[%s253 + $0x178] sm:$0xff]
        %v9918 = vld [vmem:[%s253 + $0x180] sm:$0xff]
        %v9919 = vld [vmem:[%s253 + $0x188] sm:$0xff]
        %v9920 = vld [vmem:[%s253 + $0x190] sm:$0xff]
        %v9921 = vld [vmem:[%s253 + $0x198] sm:$0xff]
        %v9922 = vld [vmem:[%s253 + $0x1a0] sm:$0xff]
        %v9923 = vld [vmem:[%s253 + $0x1a8] sm:$0xff]
        %v9924 = vld [vmem:[%s253 + $0x1b0] sm:$0xff]
        %v9925 = vld [vmem:[%s253 + $0x1b8] sm:$0xff]
        %v9926 = vld [vmem:[%s253 + $0x1c0] sm:$0xff]
        %v9927 = vld [vmem:[%s253 + $0x1c8] sm:$0xff]
        %v9928 = vld [vmem:[%s253 + $0x1d0] sm:$0xff]
        %v9929 = vld [vmem:[%s253 + $0x1d8] sm:$0xff]
        %v9930 = vld [vmem:[%s253 + $0x1e0] sm:$0xff]
        %v9931 = vld [vmem:[%s253 + $0x1e8] sm:$0xff]
        %v9932 = vld [vmem:[%s253 + $0x1f0] sm:$0xff]
        %v9933 = vld [vmem:[%s253 + $0x1f8] sm:$0xff]
        %v9934 = vld [vmem:[%s253 + $0x200] sm:$0xff]
        %v9935 = vld [vmem:[%s253 + $0x208] sm:$0xff]
        %v9936 = vld [vmem:[%s253 + $0x210] sm:$0xff]
        %v9937 = vld [vmem:[%s253 + $0x218] sm:$0xff]
        %v9938 = vld [vmem:[%s253 + $0x220] sm:$0xff]
        %v9939 = vld [vmem:[%s253 + $0x228] sm:$0xff]
        %v9940 = vld [vmem:[%s253 + $0x230] sm:$0xff]
        %v9941 = vld [vmem:[%s253 + $0x238] sm:$0xff]
        %v9942 = vld [vmem:[%s253 + $0x240] sm:$0xff]
        %v9943 = vld [vmem:[%s253 + $0x248] sm:$0xff]
        %v9944 = vld [vmem:[%s253 + $0x250] sm:$0xff]
        %v9945 = vld [vmem:[%s253 + $0x258] sm:$0xff]
        %v9946 = vld [vmem:[%s253 + $0x260] sm:$0xff]
        %v9947 = vld [vmem:[%s253 + $0x268] sm:$0xff]
        %v9948 = vld [vmem:[%s253 + $0x270] sm:$0xff]
        %v9949 = vld [vmem:[%s253 + $0x278] sm:$0xff]
        %v9950 = vld [vmem:[%s253 + $0x280] sm:$0xff]
        %v9951 = vld [vmem:[%s253 + $0x288] sm:$0xff]
        %v9952 = vld [vmem:[%s253 + $0x290] sm:$0xff]
        %v9953 = vld [vmem:[%s253 + $0x298] sm:$0xff]
        %v9954 = vld [vmem:[%s253 + $0x2a0] sm:$0xff]
        %v9955 = vld [vmem:[%s253 + $0x2a8] sm:$0xff]
        %v9956 = vld [vmem:[%s253 + $0x2b0] sm:$0xff]
        %v9957 = vld [vmem:[%s253 + $0x2b8] sm:$0xff]
        %v9958 = vld [vmem:[%s253 + $0x2c0] sm:$0xff]
        %v9959 = vld [vmem:[%s253 + $0x2c8] sm:$0xff]
        %v9960 = vld [vmem:[%s253 + $0x2d0] sm:$0xff]
        %v9961 = vld [vmem:[%s253 + $0x2d8] sm:$0xff]
        %v9962 = vld [vmem:[%s253 + $0x2e0] sm:$0xff]
        %v9963 = vld [vmem:[%s253 + $0x2e8] sm:$0xff]
        %v9964 = vld [vmem:[%s253 + $0x2f0] sm:$0xff]
        %v9965 = vld [vmem:[%s253 + $0x2f8] sm:$0xff]
        %v9966 = vld [vmem:[%s253 + $0x300] sm:$0xff]
        %v9967 = vld [vmem:[%s253 + $0x308] sm:$0xff]
        %v9968 = vld [vmem:[%s253 + $0x310] sm:$0xff]
        %v9969 = vld [vmem:[%s253 + $0x318] sm:$0xff]
        %v9970 = vld [vmem:[%s253 + $0x320] sm:$0xff]
        %v9971 = vld [vmem:[%s253 + $0x328] sm:$0xff]
        %v9972 = vld [vmem:[%s253 + $0x330] sm:$0xff]
        %v9973 = vld [vmem:[%s253 + $0x338] sm:$0xff]
        %v9974 = vld [vmem:[%s253 + $0x340] sm:$0xff]
        %v9975 = vld [vmem:[%s253 + $0x348] sm:$0xff]
        %v9976 = vld [vmem:[%s253 + $0x350] sm:$0xff]
        %v9977 = vld [vmem:[%s253 + $0x358] sm:$0xff]
        %v9978 = vld [vmem:[%s253 + $0x360] sm:$0xff]
        %v9979 = vld [vmem:[%s253 + $0x368] sm:$0xff]
        %v9980 = vld [vmem:[%s253 + $0x370] sm:$0xff]
        %v9981 = vld [vmem:[%s253 + $0x378] sm:$0xff]
        %v9982 = vld [vmem:[%s253 + $0x380] sm:$0xff]
        %v9983 = vld [vmem:[%s253 + $0x388] sm:$0xff]
        %v9984 = vld [vmem:[%s253 + $0x390] sm:$0xff]
        %v9985 = vld [vmem:[%s253 + $0x398] sm:$0xff]
        %v9986 = vld [vmem:[%s253 + $0x3a0] sm:$0xff]
        %v9987 = vld [vmem:[%s253 + $0x3a8] sm:$0xff]
        %v9988 = vld [vmem:[%s253 + $0x3b0] sm:$0xff]
        %v9989 = vld [vmem:[%s253 + $0x3b8] sm:$0xff]
        %v9990 = vld [vmem:[%s253 + $0x3c0] sm:$0xff]
        %v9991 = vld [vmem:[%s253 + $0x3c8] sm:$0xff]
        %v9992 = vld [vmem:[%s253 + $0x3d0] sm:$0xff]
        %v9993 = vld [vmem:[%s253 + $0x3d8] sm:$0xff]
        %v9994 = vld [vmem:[%s253 + $0x3e0] sm:$0xff]
        %v9995 = vld [vmem:[%s253 + $0x3e8] sm:$0xff]
        %v9996 = vld [vmem:[%s253 + $0x3f0] sm:$0xff]
        %v9997 = vld [vmem:[%s253 + $0x3f8] sm:$0xff]
        %v9998 = vsub.f32 1.0, %v9870
        %v9999 = vsub.f32 1.0, %v9871
        %v10000 = vsub.f32 1.0, %v9872
        %v10001 = vsub.f32 1.0, %v9873
        %v10002 = vsub.f32 1.0, %v9874
        %v10003 = vsub.f32 1.0, %v9875
        %v10004 = vsub.f32 1.0, %v9876
        %v10005 = vsub.f32 1.0, %v9877
        %v10006 = vsub.f32 1.0, %v9878
        %v10007 = vsub.f32 1.0, %v9879
        %v10008 = vsub.f32 1.0, %v9880
        %v10009 = vsub.f32 1.0, %v9881
        %v10010 = vsub.f32 1.0, %v9882
        %v10011 = vsub.f32 1.0, %v9883
        %v10012 = vsub.f32 1.0, %v9884
        %v10013 = vsub.f32 1.0, %v9885
        %v10014 = vsub.f32 1.0, %v9886
        %v10015 = vsub.f32 1.0, %v9887
        %v10016 = vsub.f32 1.0, %v9888
        %v10017 = vsub.f32 1.0, %v9889
        %v10018 = vsub.f32 1.0, %v9890
        %v10019 = vsub.f32 1.0, %v9891
        %v10020 = vsub.f32 1.0, %v9892
        %v10021 = vsub.f32 1.0, %v9893
        %v10022 = vsub.f32 1.0, %v9894
        %v10023 = vsub.f32 1.0, %v9895
        %v10024 = vsub.f32 1.0, %v9896
        %v10025 = vsub.f32 1.0, %v9897
        %v10026 = vsub.f32 1.0, %v9898
        %v10027 = vsub.f32 1.0, %v9899
        %v10028 = vsub.f32 1.0, %v9900
        %v10029 = vsub.f32 1.0, %v9901
        %v10030 = vsub.f32 1.0, %v9902
        %v10031 = vsub.f32 1.0, %v9903
        %v10032 = vsub.f32 1.0, %v9904
        %v10033 = vsub.f32 1.0, %v9905
        %v10034 = vsub.f32 1.0, %v9906
        %v10035 = vsub.f32 1.0, %v9907
        %v10036 = vsub.f32 1.0, %v9908
        %v10037 = vsub.f32 1.0, %v9909
        %v10038 = vsub.f32 1.0, %v9910
        %v10039 = vsub.f32 1.0, %v9911
        %v10040 = vsub.f32 1.0, %v9912
        %v10041 = vsub.f32 1.0, %v9913
        %v10042 = vsub.f32 1.0, %v9914
        %v10043 = vsub.f32 1.0, %v9915
        %v10044 = vsub.f32 1.0, %v9916
        %v10045 = vsub.f32 1.0, %v9917
        %v10046 = vsub.f32 1.0, %v9918
        %v10047 = vsub.f32 1.0, %v9919
        %v10048 = vsub.f32 1.0, %v9920
        %v10049 = vsub.f32 1.0, %v9921
        %v10050 = vsub.f32 1.0, %v9922
        %v10051 = vsub.f32 1.0, %v9923
        %v10052 = vsub.f32 1.0, %v9924
        %v10053 = vsub.f32 1.0, %v9925
        %v10054 = vsub.f32 1.0, %v9926
        %v10055 = vsub.f32 1.0, %v9927
        %v10056 = vsub.f32 1.0, %v9928
        %v10057 = vsub.f32 1.0, %v9929
        %v10058 = vsub.f32 1.0, %v9930
        %v10059 = vsub.f32 1.0, %v9931
        %v10060 = vsub.f32 1.0, %v9932
        %v10061 = vsub.f32 1.0, %v9933
        %v10062 = vsub.f32 1.0, %v9934
        %v10063 = vsub.f32 1.0, %v9935
        %v10064 = vsub.f32 1.0, %v9936
        %v10065 = vsub.f32 1.0, %v9937
        %v10066 = vsub.f32 1.0, %v9938
        %v10067 = vsub.f32 1.0, %v9939
        %v10068 = vsub.f32 1.0, %v9940
        %v10069 = vsub.f32 1.0, %v9941
        %v10070 = vsub.f32 1.0, %v9942
        %v10071 = vsub.f32 1.0, %v9943
        %v10072 = vsub.f32 1.0, %v9944
        %v10073 = vsub.f32 1.0, %v9945
        %v10074 = vsub.f32 1.0, %v9946
        %v10075 = vsub.f32 1.0, %v9947
        %v10076 = vsub.f32 1.0, %v9948
        %v10077 = vsub.f32 1.0, %v9949
        %v10078 = vsub.f32 1.0, %v9950
        %v10079 = vsub.f32 1.0, %v9951
        %v10080 = vsub.f32 1.0, %v9952
        %v10081 = vsub.f32 1.0, %v9953
        %v10082 = vsub.f32 1.0, %v9954
        %v10083 = vsub.f32 1.0, %v9955
        %v10084 = vsub.f32 1.0, %v9956
        %v10085 = vsub.f32 1.0, %v9957
        %v10086 = vsub.f32 1.0, %v9958
        %v10087 = vsub.f32 1.0, %v9959
        %v10088 = vsub.f32 1.0, %v9960
        %v10089 = vsub.f32 1.0, %v9961
        %v10090 = vsub.f32 1.0, %v9962
        %v10091 = vsub.f32 1.0, %v9963
        %v10092 = vsub.f32 1.0, %v9964
        %v10093 = vsub.f32 1.0, %v9965
        %v10094 = vsub.f32 1.0, %v9966
        %v10095 = vsub.f32 1.0, %v9967
        %v10096 = vsub.f32 1.0, %v9968
        %v10097 = vsub.f32 1.0, %v9969
        %v10098 = vsub.f32 1.0, %v9970
        %v10099 = vsub.f32 1.0, %v9971
        %v10100 = vsub.f32 1.0, %v9972
        %v10101 = vsub.f32 1.0, %v9973
        %v10102 = vsub.f32 1.0, %v9974
        %v10103 = vsub.f32 1.0, %v9975
        %v10104 = vsub.f32 1.0, %v9976
        %v10105 = vsub.f32 1.0, %v9977
        %v10106 = vsub.f32 1.0, %v9978
        %v10107 = vsub.f32 1.0, %v9979
        %v10108 = vsub.f32 1.0, %v9980
        %v10109 = vsub.f32 1.0, %v9981
        %v10110 = vsub.f32 1.0, %v9982
        %v10111 = vsub.f32 1.0, %v9983
        %v10112 = vsub.f32 1.0, %v9984
        %v10113 = vsub.f32 1.0, %v9985
        %v10114 = vsub.f32 1.0, %v9986
        %v10115 = vsub.f32 1.0, %v9987
        %v10116 = vsub.f32 1.0, %v9988
        %v10117 = vsub.f32 1.0, %v9989
        %v10118 = vsub.f32 1.0, %v9990
        %v10119 = vsub.f32 1.0, %v9991
        %v10120 = vsub.f32 1.0, %v9992
        %v10121 = vsub.f32 1.0, %v9993
        %v10122 = vsub.f32 1.0, %v9994
        %v10123 = vsub.f32 1.0, %v9995
        %v10124 = vsub.f32 1.0, %v9996
        %v10125 = vsub.f32 1.0, %v9997
        %v10126 = vsub.f32 %v9614, %v7388
        %v10127 = vsub.f32 %v9615, %v7501
        %v10128 = vsub.f32 %v9616, %v7614
        %v10129 = vsub.f32 %v9617, %v7727
        %v10130 = vsub.f32 %v9618, %v7391
        %v10131 = vsub.f32 %v9619, %v7504
        %v10132 = vsub.f32 %v9620, %v7617
        %v10133 = vsub.f32 %v9621, %v7730
        %v10134 = vsub.f32 %v9622, %v7394
        %v10135 = vsub.f32 %v9623, %v7507
        %v10136 = vsub.f32 %v9624, %v7620
        %v10137 = vsub.f32 %v9625, %v7733
        %v10138 = vsub.f32 %v9626, %v7397
        %v10139 = vsub.f32 %v9627, %v7510
        %v10140 = vsub.f32 %v9628, %v7623
        %v10141 = vsub.f32 %v9629, %v7736
        %v10142 = vsub.f32 %v9630, %v7400
        %v10143 = vsub.f32 %v9631, %v7513
        %v10144 = vsub.f32 %v9632, %v7626
        %v10145 = vsub.f32 %v9633, %v7739
        %v10146 = vsub.f32 %v9634, %v7403
        %v10147 = vsub.f32 %v9635, %v7516
        %v10148 = vsub.f32 %v9636, %v7629
        %v10149 = vsub.f32 %v9637, %v7742
        %v10150 = vsub.f32 %v9638, %v7406
        %v10151 = vsub.f32 %v9639, %v7519
        %v10152 = vsub.f32 %v9640, %v7632
        %v10153 = vsub.f32 %v9641, %v7745
        %v10154 = vsub.f32 %v9642, %v7409
        %v10155 = vsub.f32 %v9643, %v7522
        %v10156 = vsub.f32 %v9644, %v7635
        %v10157 = vsub.f32 %v9645, %v7748
        %v10158 = vsub.f32 %v9646, %v7412
        %v10159 = vsub.f32 %v9647, %v7525
        %v10160 = vsub.f32 %v9648, %v7638
        %v10161 = vsub.f32 %v9649, %v7751
        %v10162 = vsub.f32 %v9650, %v7415
        %v10163 = vsub.f32 %v9651, %v7528
        %v10164 = vsub.f32 %v9652, %v7641
        %v10165 = vsub.f32 %v9653, %v7754
        %v10166 = vsub.f32 %v9654, %v7418
        %v10167 = vsub.f32 %v9655, %v7531
        %v10168 = vsub.f32 %v9656, %v7644
        %v10169 = vsub.f32 %v9657, %v7757
        %v10170 = vsub.f32 %v9658, %v7421
        %v10171 = vsub.f32 %v9659, %v7534
        %v10172 = vsub.f32 %v9660, %v7647
        %v10173 = vsub.f32 %v9661, %v7760
        %v10174 = vsub.f32 %v9662, %v7424
        %v10175 = vsub.f32 %v9663, %v7537
        %v10176 = vsub.f32 %v9664, %v7650
        %v10177 = vsub.f32 %v9665, %v7763
        %v10178 = vsub.f32 %v9666, %v7427
        %v10179 = vsub.f32 %v9667, %v7540
        %v10180 = vsub.f32 %v9668, %v7653
        %v10181 = vsub.f32 %v9669, %v7766
        %v10182 = vsub.f32 %v9670, %v7430
        %v10183 = vsub.f32 %v9671, %v7543
        %v10184 = vsub.f32 %v9672, %v7656
        %v10185 = vsub.f32 %v9673, %v7769
        %v10186 = vsub.f32 %v9674, %v7433
        %v10187 = vsub.f32 %v9675, %v7546
        %v10188 = vsub.f32 %v9676, %v7659
        %v10189 = vsub.f32 %v9677, %v7772
        %v10190 = vsub.f32 %v9678, %v7436
        %v10191 = vsub.f32 %v9679, %v7549
        %v10192 = vsub.f32 %v9680, %v7662
        %v10193 = vsub.f32 %v9681, %v7775
        %v10194 = vsub.f32 %v9682, %v7439
        %v10195 = vsub.f32 %v9683, %v7552
        %v10196 = vsub.f32 %v9684, %v7665
        %v10197 = vsub.f32 %v9685, %v7778
        %v10198 = vsub.f32 %v9686, %v7442
        %v10199 = vsub.f32 %v9687, %v7555
        %v10200 = vsub.f32 %v9688, %v7668
        %v10201 = vsub.f32 %v9689, %v7781
        %v10202 = vsub.f32 %v9690, %v7445
        %v10203 = vsub.f32 %v9691, %v7558
        %v10204 = vsub.f32 %v9692, %v7671
        %v10205 = vsub.f32 %v9693, %v7784
        %v10206 = vsub.f32 %v9694, %v7448
        %v10207 = vsub.f32 %v9695, %v7561
        %v10208 = vsub.f32 %v9696, %v7674
        %v10209 = vsub.f32 %v9697, %v7787
        %v10210 = vsub.f32 %v9698, %v7451
        %v10211 = vsub.f32 %v9699, %v7564
        %v10212 = vsub.f32 %v9700, %v7677
        %v10213 = vsub.f32 %v9701, %v7790
        %v10214 = vsub.f32 %v9702, %v7454
        %v10215 = vsub.f32 %v9703, %v7567
        %v10216 = vsub.f32 %v9704, %v7680
        %v10217 = vsub.f32 %v9705, %v7793
        %v10218 = vsub.f32 %v9706, %v7457
        %v10219 = vsub.f32 %v9707, %v7570
        %v10220 = vsub.f32 %v9708, %v7683
        %v10221 = vsub.f32 %v9709, %v7796
        %v10222 = vsub.f32 %v9710, %v7460
        %v10223 = vsub.f32 %v9711, %v7573
        %v10224 = vsub.f32 %v9712, %v7686
        %v10225 = vsub.f32 %v9713, %v7799
        %v10226 = vsub.f32 %v9714, %v7463
        %v10227 = vsub.f32 %v9715, %v7576
        %v10228 = vsub.f32 %v9716, %v7689
        %v10229 = vsub.f32 %v9717, %v7802
        %v10230 = vsub.f32 %v9718, %v7466
        %v10231 = vsub.f32 %v9719, %v7579
        %v10232 = vsub.f32 %v9720, %v7692
        %v10233 = vsub.f32 %v9721, %v7805
        %v10234 = vsub.f32 %v9722, %v7469
        %v10235 = vsub.f32 %v9723, %v7582
        %v10236 = vsub.f32 %v9724, %v7695
        %v10237 = vsub.f32 %v9725, %v7808
        %v10238 = vsub.f32 %v9726, %v7472
        %v10239 = vsub.f32 %v9727, %v7585
        %v10240 = vsub.f32 %v9728, %v7698
        %v10241 = vsub.f32 %v9729, %v7811
        %v10242 = vsub.f32 %v9730, %v7475
        %v10243 = vsub.f32 %v9731, %v7588
        %v10244 = vsub.f32 %v9732, %v7701
        %v10245 = vsub.f32 %v9733, %v7814
        %v10246 = vsub.f32 %v9734, %v7478
        %v10247 = vsub.f32 %v9735, %v7591
        %v10248 = vsub.f32 %v9736, %v7704
        %v10249 = vsub.f32 %v9737, %v7817
        %v10250 = vsub.f32 %v9738, %v7481
        %v10251 = vsub.f32 %v9739, %v7594
        %v10252 = vsub.f32 %v9740, %v7707
        %v10253 = vsub.f32 %v9741, %v7820
        %v10254 = vmul.f32 %v9998, %v10126
        %v10255 = vmul.f32 %v9999, %v10127
        %v10256 = vmul.f32 %v10000, %v10128
        %v10257 = vmul.f32 %v10001, %v10129
        %v10258 = vmul.f32 %v10002, %v10130
        %v10259 = vmul.f32 %v10003, %v10131
        %v10260 = vmul.f32 %v10004, %v10132
        %v10261 = vmul.f32 %v10005, %v10133
        %v10262 = vmul.f32 %v10006, %v10134
        %v10263 = vmul.f32 %v10007, %v10135
        %v10264 = vmul.f32 %v10008, %v10136
        %v10265 = vmul.f32 %v10009, %v10137
        %v10266 = vmul.f32 %v10010, %v10138
        %v10267 = vmul.f32 %v10011, %v10139
        %v10268 = vmul.f32 %v10012, %v10140
        %v10269 = vmul.f32 %v10013, %v10141
        %v10270 = vmul.f32 %v10014, %v10142
        %v10271 = vmul.f32 %v10015, %v10143
        %v10272 = vmul.f32 %v10016, %v10144
        %v10273 = vmul.f32 %v10017, %v10145
        %v10274 = vmul.f32 %v10018, %v10146
        %v10275 = vmul.f32 %v10019, %v10147
        %v10276 = vmul.f32 %v10020, %v10148
        %v10277 = vmul.f32 %v10021, %v10149
        %v10278 = vmul.f32 %v10022, %v10150
        %v10279 = vmul.f32 %v10023, %v10151
        %v10280 = vmul.f32 %v10024, %v10152
        %v10281 = vmul.f32 %v10025, %v10153
        %v10282 = vmul.f32 %v10026, %v10154
        %v10283 = vmul.f32 %v10027, %v10155
        %v10284 = vmul.f32 %v10028, %v10156
        %v10285 = vmul.f32 %v10029, %v10157
        %v10286 = vmul.f32 %v10030, %v10158
        %v10287 = vmul.f32 %v10031, %v10159
        %v10288 = vmul.f32 %v10032, %v10160
        %v10289 = vmul.f32 %v10033, %v10161
        %v10290 = vmul.f32 %v10034, %v10162
        %v10291 = vmul.f32 %v10035, %v10163
        %v10292 = vmul.f32 %v10036, %v10164
        %v10293 = vmul.f32 %v10037, %v10165
        %v10294 = vmul.f32 %v10038, %v10166
        %v10295 = vmul.f32 %v10039, %v10167
        %v10296 = vmul.f32 %v10040, %v10168
        %v10297 = vmul.f32 %v10041, %v10169
        %v10298 = vmul.f32 %v10042, %v10170
        %v10299 = vmul.f32 %v10043, %v10171
        %v10300 = vmul.f32 %v10044, %v10172
        %v10301 = vmul.f32 %v10045, %v10173
        %v10302 = vmul.f32 %v10046, %v10174
        %v10303 = vmul.f32 %v10047, %v10175
        %v10304 = vmul.f32 %v10048, %v10176
        %v10305 = vmul.f32 %v10049, %v10177
        %v10306 = vmul.f32 %v10050, %v10178
        %v10307 = vmul.f32 %v10051, %v10179
        %v10308 = vmul.f32 %v10052, %v10180
        %v10309 = vmul.f32 %v10053, %v10181
        %v10310 = vmul.f32 %v10054, %v10182
        %v10311 = vmul.f32 %v10055, %v10183
        %v10312 = vmul.f32 %v10056, %v10184
        %v10313 = vmul.f32 %v10057, %v10185
        %v10314 = vmul.f32 %v10058, %v10186
        %v10315 = vmul.f32 %v10059, %v10187
        %v10316 = vmul.f32 %v10060, %v10188
        %v10317 = vmul.f32 %v10061, %v10189
        %v10318 = vmul.f32 %v10062, %v10190
        %v10319 = vmul.f32 %v10063, %v10191
        %v10320 = vmul.f32 %v10064, %v10192
        %v10321 = vmul.f32 %v10065, %v10193
        %v10322 = vmul.f32 %v10066, %v10194
        %v10323 = vmul.f32 %v10067, %v10195
        %v10324 = vmul.f32 %v10068, %v10196
        %v10325 = vmul.f32 %v10069, %v10197
        %v10326 = vmul.f32 %v10070, %v10198
        %v10327 = vmul.f32 %v10071, %v10199
        %v10328 = vmul.f32 %v10072, %v10200
        %v10329 = vmul.f32 %v10073, %v10201
        %v10330 = vmul.f32 %v10074, %v10202
        %v10331 = vmul.f32 %v10075, %v10203
        %v10332 = vmul.f32 %v10076, %v10204
        %v10333 = vmul.f32 %v10077, %v10205
        %v10334 = vmul.f32 %v10078, %v10206
        %v10335 = vmul.f32 %v10079, %v10207
        %v10336 = vmul.f32 %v10080, %v10208
        %v10337 = vmul.f32 %v10081, %v10209
        %v10338 = vmul.f32 %v10082, %v10210
        %v10339 = vmul.f32 %v10083, %v10211
        %v10340 = vmul.f32 %v10084, %v10212
        %v10341 = vmul.f32 %v10085, %v10213
        %v10342 = vmul.f32 %v10086, %v10214
        %v10343 = vmul.f32 %v10087, %v10215
        %v10344 = vmul.f32 %v10088, %v10216
        %v10345 = vmul.f32 %v10089, %v10217
        %v10346 = vmul.f32 %v10090, %v10218
        %v10347 = vmul.f32 %v10091, %v10219
        %v10348 = vmul.f32 %v10092, %v10220
        %v10349 = vmul.f32 %v10093, %v10221
        %v10350 = vmul.f32 %v10094, %v10222
        %v10351 = vmul.f32 %v10095, %v10223
        %v10352 = vmul.f32 %v10096, %v10224
        %v10353 = vmul.f32 %v10097, %v10225
        %v10354 = vmul.f32 %v10098, %v10226
        %v10355 = vmul.f32 %v10099, %v10227
        %v10356 = vmul.f32 %v10100, %v10228
        %v10357 = vmul.f32 %v10101, %v10229
        %v10358 = vmul.f32 %v10102, %v10230
        %v10359 = vmul.f32 %v10103, %v10231
        %v10360 = vmul.f32 %v10104, %v10232
        %v10361 = vmul.f32 %v10105, %v10233
        %v10362 = vmul.f32 %v10106, %v10234
        %v10363 = vmul.f32 %v10107, %v10235
        %v10364 = vmul.f32 %v10108, %v10236
        %v10365 = vmul.f32 %v10109, %v10237
        %v10366 = vmul.f32 %v10110, %v10238
        %v10367 = vmul.f32 %v10111, %v10239
        %v10368 = vmul.f32 %v10112, %v10240
        %v10369 = vmul.f32 %v10113, %v10241
        %v10370 = vmul.f32 %v10114, %v10242
        %v10371 = vmul.f32 %v10115, %v10243
        %v10372 = vmul.f32 %v10116, %v10244
        %v10373 = vmul.f32 %v10117, %v10245
        %v10374 = vmul.f32 %v10118, %v10246
        %v10375 = vmul.f32 %v10119, %v10247
        %v10376 = vmul.f32 %v10120, %v10248
        %v10377 = vmul.f32 %v10121, %v10249
        %v10378 = vmul.f32 %v10122, %v10250
        %v10379 = vmul.f32 %v10123, %v10251
        %v10380 = vmul.f32 %v10124, %v10252
        %v10381 = vmul.f32 %v10125, %v10253
        %v10382 = vadd.f32 %v9742, %v10254
        %v10383 = vadd.f32 %v9743, %v10255
        %v10384 = vadd.f32 %v9744, %v10256
        %v10385 = vadd.f32 %v9745, %v10257
        %v10386 = vadd.f32 %v9746, %v10258
        %v10387 = vadd.f32 %v9747, %v10259
        %v10388 = vadd.f32 %v9748, %v10260
        %v10389 = vadd.f32 %v9749, %v10261
        %v10390 = vadd.f32 %v9750, %v10262
        %v10391 = vadd.f32 %v9751, %v10263
        %v10392 = vadd.f32 %v9752, %v10264
        %v10393 = vadd.f32 %v9753, %v10265
        %v10394 = vadd.f32 %v9754, %v10266
        %v10395 = vadd.f32 %v9755, %v10267
        %v10396 = vadd.f32 %v9756, %v10268
        %v10397 = vadd.f32 %v9757, %v10269
        %v10398 = vadd.f32 %v9758, %v10270
        %v10399 = vadd.f32 %v9759, %v10271
        %v10400 = vadd.f32 %v9760, %v10272
        %v10401 = vadd.f32 %v9761, %v10273
        %v10402 = vadd.f32 %v9762, %v10274
        %v10403 = vadd.f32 %v9763, %v10275
        %v10404 = vadd.f32 %v9764, %v10276
        %v10405 = vadd.f32 %v9765, %v10277
        %v10406 = vadd.f32 %v9766, %v10278
        %v10407 = vadd.f32 %v9767, %v10279
        %v10408 = vadd.f32 %v9768, %v10280
        %v10409 = vadd.f32 %v9769, %v10281
        %v10410 = vadd.f32 %v9770, %v10282
        %v10411 = vadd.f32 %v9771, %v10283
        %v10412 = vadd.f32 %v9772, %v10284
        %v10413 = vadd.f32 %v9773, %v10285
        %v10414 = vadd.f32 %v9774, %v10286
        %v10415 = vadd.f32 %v9775, %v10287
        %v10416 = vadd.f32 %v9776, %v10288
        %v10417 = vadd.f32 %v9777, %v10289
        %v10418 = vadd.f32 %v9778, %v10290
        %v10419 = vadd.f32 %v9779, %v10291
        %v10420 = vadd.f32 %v9780, %v10292
        %v10421 = vadd.f32 %v9781, %v10293
        %v10422 = vadd.f32 %v9782, %v10294
        %v10423 = vadd.f32 %v9783, %v10295
        %v10424 = vadd.f32 %v9784, %v10296
        %v10425 = vadd.f32 %v9785, %v10297
        %v10426 = vadd.f32 %v9786, %v10298
        %v10427 = vadd.f32 %v9787, %v10299
        %v10428 = vadd.f32 %v9788, %v10300
        %v10429 = vadd.f32 %v9789, %v10301
        %v10430 = vadd.f32 %v9790, %v10302
        %v10431 = vadd.f32 %v9791, %v10303
        %v10432 = vadd.f32 %v9792, %v10304
        %v10433 = vadd.f32 %v9793, %v10305
        %v10434 = vadd.f32 %v9794, %v10306
        %v10435 = vadd.f32 %v9795, %v10307
        %v10436 = vadd.f32 %v9796, %v10308
        %v10437 = vadd.f32 %v9797, %v10309
        %v10438 = vadd.f32 %v9798, %v10310
        %v10439 = vadd.f32 %v9799, %v10311
        %v10440 = vadd.f32 %v9800, %v10312
        %v10441 = vadd.f32 %v9801, %v10313
        %v10442 = vadd.f32 %v9802, %v10314
        %v10443 = vadd.f32 %v9803, %v10315
        %v10444 = vadd.f32 %v9804, %v10316
        %v10445 = vadd.f32 %v9805, %v10317
        %v10446 = vadd.f32 %v9806, %v10318
        %v10447 = vadd.f32 %v9807, %v10319
        %v10448 = vadd.f32 %v9808, %v10320
        %v10449 = vadd.f32 %v9809, %v10321
        %v10450 = vadd.f32 %v9810, %v10322
        %v10451 = vadd.f32 %v9811, %v10323
        %v10452 = vadd.f32 %v9812, %v10324
        %v10453 = vadd.f32 %v9813, %v10325
        %v10454 = vadd.f32 %v9814, %v10326
        %v10455 = vadd.f32 %v9815, %v10327
        %v10456 = vadd.f32 %v9816, %v10328
        %v10457 = vadd.f32 %v9817, %v10329
        %v10458 = vadd.f32 %v9818, %v10330
        %v10459 = vadd.f32 %v9819, %v10331
        %v10460 = vadd.f32 %v9820, %v10332
        %v10461 = vadd.f32 %v9821, %v10333
        %v10462 = vadd.f32 %v9822, %v10334
        %v10463 = vadd.f32 %v9823, %v10335
        %v10464 = vadd.f32 %v9824, %v10336
        %v10465 = vadd.f32 %v9825, %v10337
        %v10466 = vadd.f32 %v9826, %v10338
        %v10467 = vadd.f32 %v9827, %v10339
        %v10468 = vadd.f32 %v9828, %v10340
        %v10469 = vadd.f32 %v9829, %v10341
        %v10470 = vadd.f32 %v9830, %v10342
        %v10471 = vadd.f32 %v9831, %v10343
        %v10472 = vadd.f32 %v9832, %v10344
        %v10473 = vadd.f32 %v9833, %v10345
        %v10474 = vadd.f32 %v9834, %v10346
        %v10475 = vadd.f32 %v9835, %v10347
        %v10476 = vadd.f32 %v9836, %v10348
        %v10477 = vadd.f32 %v9837, %v10349
        %v10478 = vadd.f32 %v9838, %v10350
        %v10479 = vadd.f32 %v9839, %v10351
        %v10480 = vadd.f32 %v9840, %v10352
        %v10481 = vadd.f32 %v9841, %v10353
        %v10482 = vadd.f32 %v9842, %v10354
        %v10483 = vadd.f32 %v9843, %v10355
        %v10484 = vadd.f32 %v9844, %v10356
        %v10485 = vadd.f32 %v9845, %v10357
        %v10486 = vadd.f32 %v9846, %v10358
        %v10487 = vadd.f32 %v9847, %v10359
        %v10488 = vadd.f32 %v9848, %v10360
        %v10489 = vadd.f32 %v9849, %v10361
        %v10490 = vadd.f32 %v9850, %v10362
        %v10491 = vadd.f32 %v9851, %v10363
        %v10492 = vadd.f32 %v9852, %v10364
        %v10493 = vadd.f32 %v9853, %v10365
        %v10494 = vadd.f32 %v9854, %v10366
        %v10495 = vadd.f32 %v9855, %v10367
        %v10496 = vadd.f32 %v9856, %v10368
        %v10497 = vadd.f32 %v9857, %v10369
        %v10498 = vadd.f32 %v9858, %v10370
        %v10499 = vadd.f32 %v9859, %v10371
        %v10500 = vadd.f32 %v9860, %v10372
        %v10501 = vadd.f32 %v9861, %v10373
        %v10502 = vadd.f32 %v9862, %v10374
        %v10503 = vadd.f32 %v9863, %v10375
        %v10504 = vadd.f32 %v9864, %v10376
        %v10505 = vadd.f32 %v9865, %v10377
        %v10506 = vadd.f32 %v9866, %v10378
        %v10507 = vadd.f32 %v9867, %v10379
        %v10508 = vadd.f32 %v9868, %v10380
        %v10509 = vadd.f32 %v9869, %v10381
        %v10510 = vand.u32 2147483647, %v10382
        %v10511 = vand.u32 2147483647, %v10383
        %v10512 = vand.u32 2147483647, %v10384
        %v10513 = vand.u32 2147483647, %v10385
        %v10514 = vand.u32 2147483647, %v10386
        %v10515 = vand.u32 2147483647, %v10387
        %v10516 = vand.u32 2147483647, %v10388
        %v10517 = vand.u32 2147483647, %v10389
        %v10518 = vand.u32 2147483647, %v10390
        %v10519 = vand.u32 2147483647, %v10391
        %v10520 = vand.u32 2147483647, %v10392
        %v10521 = vand.u32 2147483647, %v10393
        %v10522 = vand.u32 2147483647, %v10394
        %v10523 = vand.u32 2147483647, %v10395
        %v10524 = vand.u32 2147483647, %v10396
        %v10525 = vand.u32 2147483647, %v10397
        %v10526 = vand.u32 2147483647, %v10398
        %v10527 = vand.u32 2147483647, %v10399
        %v10528 = vand.u32 2147483647, %v10400
        %v10529 = vand.u32 2147483647, %v10401
        %v10530 = vand.u32 2147483647, %v10402
        %v10531 = vand.u32 2147483647, %v10403
        %v10532 = vand.u32 2147483647, %v10404
        %v10533 = vand.u32 2147483647, %v10405
        %v10534 = vand.u32 2147483647, %v10406
        %v10535 = vand.u32 2147483647, %v10407
        %v10536 = vand.u32 2147483647, %v10408
        %v10537 = vand.u32 2147483647, %v10409
        %v10538 = vand.u32 2147483647, %v10410
        %v10539 = vand.u32 2147483647, %v10411
        %v10540 = vand.u32 2147483647, %v10412
        %v10541 = vand.u32 2147483647, %v10413
        %v10542 = vand.u32 2147483647, %v10414
        %v10543 = vand.u32 2147483647, %v10415
        %v10544 = vand.u32 2147483647, %v10416
        %v10545 = vand.u32 2147483647, %v10417
        %v10546 = vand.u32 2147483647, %v10418
        %v10547 = vand.u32 2147483647, %v10419
        %v10548 = vand.u32 2147483647, %v10420
        %v10549 = vand.u32 2147483647, %v10421
        %v10550 = vand.u32 2147483647, %v10422
        %v10551 = vand.u32 2147483647, %v10423
        %v10552 = vand.u32 2147483647, %v10424
        %v10553 = vand.u32 2147483647, %v10425
        %v10554 = vand.u32 2147483647, %v10426
        %v10555 = vand.u32 2147483647, %v10427
        %v10556 = vand.u32 2147483647, %v10428
        %v10557 = vand.u32 2147483647, %v10429
        %v10558 = vand.u32 2147483647, %v10430
        %v10559 = vand.u32 2147483647, %v10431
        %v10560 = vand.u32 2147483647, %v10432
        %v10561 = vand.u32 2147483647, %v10433
        %v10562 = vand.u32 2147483647, %v10434
        %v10563 = vand.u32 2147483647, %v10435
        %v10564 = vand.u32 2147483647, %v10436
        %v10565 = vand.u32 2147483647, %v10437
        %v10566 = vand.u32 2147483647, %v10438
        %v10567 = vand.u32 2147483647, %v10439
        %v10568 = vand.u32 2147483647, %v10440
        %v10569 = vand.u32 2147483647, %v10441
        %v10570 = vand.u32 2147483647, %v10442
        %v10571 = vand.u32 2147483647, %v10443
        %v10572 = vand.u32 2147483647, %v10444
        %v10573 = vand.u32 2147483647, %v10445
        %v10574 = vand.u32 2147483647, %v10446
        %v10575 = vand.u32 2147483647, %v10447
        %v10576 = vand.u32 2147483647, %v10448
        %v10577 = vand.u32 2147483647, %v10449
        %v10578 = vand.u32 2147483647, %v10450
        %v10579 = vand.u32 2147483647, %v10451
        %v10580 = vand.u32 2147483647, %v10452
        %v10581 = vand.u32 2147483647, %v10453
        %v10582 = vand.u32 2147483647, %v10454
        %v10583 = vand.u32 2147483647, %v10455
        %v10584 = vand.u32 2147483647, %v10456
        %v10585 = vand.u32 2147483647, %v10457
        %v10586 = vand.u32 2147483647, %v10458
        %v10587 = vand.u32 2147483647, %v10459
        %v10588 = vand.u32 2147483647, %v10460
        %v10589 = vand.u32 2147483647, %v10461
        %v10590 = vand.u32 2147483647, %v10462
        %v10591 = vand.u32 2147483647, %v10463
        %v10592 = vand.u32 2147483647, %v10464
        %v10593 = vand.u32 2147483647, %v10465
        %v10594 = vand.u32 2147483647, %v10466
        %v10595 = vand.u32 2147483647, %v10467
        %v10596 = vand.u32 2147483647, %v10468
        %v10597 = vand.u32 2147483647, %v10469
        %v10598 = vand.u32 2147483647, %v10470
        %v10599 = vand.u32 2147483647, %v10471
        %v10600 = vand.u32 2147483647, %v10472
        %v10601 = vand.u32 2147483647, %v10473
        %v10602 = vand.u32 2147483647, %v10474
        %v10603 = vand.u32 2147483647, %v10475
        %v10604 = vand.u32 2147483647, %v10476
        %v10605 = vand.u32 2147483647, %v10477
        %v10606 = vand.u32 2147483647, %v10478
        %v10607 = vand.u32 2147483647, %v10479
        %v10608 = vand.u32 2147483647, %v10480
        %v10609 = vand.u32 2147483647, %v10481
        %v10610 = vand.u32 2147483647, %v10482
        %v10611 = vand.u32 2147483647, %v10483
        %v10612 = vand.u32 2147483647, %v10484
        %v10613 = vand.u32 2147483647, %v10485
        %v10614 = vand.u32 2147483647, %v10486
        %v10615 = vand.u32 2147483647, %v10487
        %v10616 = vand.u32 2147483647, %v10488
        %v10617 = vand.u32 2147483647, %v10489
        %v10618 = vand.u32 2147483647, %v10490
        %v10619 = vand.u32 2147483647, %v10491
        %v10620 = vand.u32 2147483647, %v10492
        %v10621 = vand.u32 2147483647, %v10493
        %v10622 = vand.u32 2147483647, %v10494
        %v10623 = vand.u32 2147483647, %v10495
        %v10624 = vand.u32 2147483647, %v10496
        %v10625 = vand.u32 2147483647, %v10497
        %v10626 = vand.u32 2147483647, %v10498
        %v10627 = vand.u32 2147483647, %v10499
        %v10628 = vand.u32 2147483647, %v10500
        %v10629 = vand.u32 2147483647, %v10501
        %v10630 = vand.u32 2147483647, %v10502
        %v10631 = vand.u32 2147483647, %v10503
        %v10632 = vand.u32 2147483647, %v10504
        %v10633 = vand.u32 2147483647, %v10505
        %v10634 = vand.u32 2147483647, %v10506
        %v10635 = vand.u32 2147483647, %v10507
        %v10636 = vand.u32 2147483647, %v10508
        %v10637 = vand.u32 2147483647, %v10509
        %v10638 = vadd.f32 %v10510, %v10511
        %v10639 = vadd.f32 %v10638, %v10512
        %v10640 = vadd.f32 %v10639, %v10513
        %10641 = vadd.xlane.f32.xlu0 %v10640
        %v10642 = vpop.xlane.xlu0 %10641
        %v10643 = vadd.f32 %v10514, %v10515
        %v10644 = vadd.f32 %v10643, %v10516
        %v10645 = vadd.f32 %v10644, %v10517
        %10646 = vadd.xlane.f32.xlu0 %v10645
        %v10647 = vpop.xlane.xlu0 %10646
        %v10648 = vadd.f32 %v10518, %v10519
        %v10649 = vadd.f32 %v10648, %v10520
        %v10650 = vadd.f32 %v10649, %v10521
        %10651 = vadd.xlane.f32.xlu0 %v10650
        %v10652 = vpop.xlane.xlu0 %10651
        %v10653 = vadd.f32 %v10522, %v10523
        %v10654 = vadd.f32 %v10653, %v10524
        %v10655 = vadd.f32 %v10654, %v10525
        %10656 = vadd.xlane.f32.xlu0 %v10655
        %v10657 = vpop.xlane.xlu0 %10656
        %v10658 = vadd.f32 %v10526, %v10527
        %v10659 = vadd.f32 %v10658, %v10528
        %v10660 = vadd.f32 %v10659, %v10529
        %10661 = vadd.xlane.f32.xlu0 %v10660
        %v10662 = vpop.xlane.xlu0 %10661
        %v10663 = vadd.f32 %v10530, %v10531
        %v10664 = vadd.f32 %v10663, %v10532
        %v10665 = vadd.f32 %v10664, %v10533
        %10666 = vadd.xlane.f32.xlu0 %v10665
        %v10667 = vpop.xlane.xlu0 %10666
        %v10668 = vadd.f32 %v10534, %v10535
        %v10669 = vadd.f32 %v10668, %v10536
        %v10670 = vadd.f32 %v10669, %v10537
        %10671 = vadd.xlane.f32.xlu0 %v10670
        %v10672 = vpop.xlane.xlu0 %10671
        %v10673 = vadd.f32 %v10538, %v10539
        %v10674 = vadd.f32 %v10673, %v10540
        %v10675 = vadd.f32 %v10674, %v10541
        %10676 = vadd.xlane.f32.xlu0 %v10675
        %v10677 = vpop.xlane.xlu0 %10676
        %v10678 = vadd.f32 %v10542, %v10543
        %v10679 = vadd.f32 %v10678, %v10544
        %v10680 = vadd.f32 %v10679, %v10545
        %10681 = vadd.xlane.f32.xlu0 %v10680
        %v10682 = vpop.xlane.xlu0 %10681
        %v10683 = vadd.f32 %v10546, %v10547
        %v10684 = vadd.f32 %v10683, %v10548
        %v10685 = vadd.f32 %v10684, %v10549
        %10686 = vadd.xlane.f32.xlu0 %v10685
        %v10687 = vpop.xlane.xlu0 %10686
        %v10688 = vadd.f32 %v10550, %v10551
        %v10689 = vadd.f32 %v10688, %v10552
        %v10690 = vadd.f32 %v10689, %v10553
        %10691 = vadd.xlane.f32.xlu0 %v10690
        %v10692 = vpop.xlane.xlu0 %10691
        %v10693 = vadd.f32 %v10554, %v10555
        %v10694 = vadd.f32 %v10693, %v10556
        %v10695 = vadd.f32 %v10694, %v10557
        %10696 = vadd.xlane.f32.xlu0 %v10695
        %v10697 = vpop.xlane.xlu0 %10696
        %v10698 = vadd.f32 %v10558, %v10559
        %v10699 = vadd.f32 %v10698, %v10560
        %v10700 = vadd.f32 %v10699, %v10561
        %10701 = vadd.xlane.f32.xlu0 %v10700
        %v10702 = vpop.xlane.xlu0 %10701
        %v10703 = vadd.f32 %v10562, %v10563
        %v10704 = vadd.f32 %v10703, %v10564
        %v10705 = vadd.f32 %v10704, %v10565
        %10706 = vadd.xlane.f32.xlu0 %v10705
        %v10707 = vpop.xlane.xlu0 %10706
        %v10708 = vadd.f32 %v10566, %v10567
        %v10709 = vadd.f32 %v10708, %v10568
        %v10710 = vadd.f32 %v10709, %v10569
        %10711 = vadd.xlane.f32.xlu0 %v10710
        %v10712 = vpop.xlane.xlu0 %10711
        %v10713 = vadd.f32 %v10570, %v10571
        %v10714 = vadd.f32 %v10713, %v10572
        %v10715 = vadd.f32 %v10714, %v10573
        %10716 = vadd.xlane.f32.xlu0 %v10715
        %v10717 = vpop.xlane.xlu0 %10716
        %v10718 = vadd.f32 %v10574, %v10575
        %v10719 = vadd.f32 %v10718, %v10576
        %v10720 = vadd.f32 %v10719, %v10577
        %10721 = vadd.xlane.f32.xlu0 %v10720
        %v10722 = vpop.xlane.xlu0 %10721
        %v10723 = vadd.f32 %v10578, %v10579
        %v10724 = vadd.f32 %v10723, %v10580
        %v10725 = vadd.f32 %v10724, %v10581
        %10726 = vadd.xlane.f32.xlu0 %v10725
        %v10727 = vpop.xlane.xlu0 %10726
        %v10728 = vadd.f32 %v10582, %v10583
        %v10729 = vadd.f32 %v10728, %v10584
        %v10730 = vadd.f32 %v10729, %v10585
        %10731 = vadd.xlane.f32.xlu0 %v10730
        %v10732 = vpop.xlane.xlu0 %10731
        %v10733 = vadd.f32 %v10586, %v10587
        %v10734 = vadd.f32 %v10733, %v10588
        %v10735 = vadd.f32 %v10734, %v10589
        %10736 = vadd.xlane.f32.xlu0 %v10735
        %v10737 = vpop.xlane.xlu0 %10736
        %v10738 = vadd.f32 %v10590, %v10591
        %v10739 = vadd.f32 %v10738, %v10592
        %v10740 = vadd.f32 %v10739, %v10593
        %10741 = vadd.xlane.f32.xlu0 %v10740
        %v10742 = vpop.xlane.xlu0 %10741
        %v10743 = vadd.f32 %v10594, %v10595
        %v10744 = vadd.f32 %v10743, %v10596
        %v10745 = vadd.f32 %v10744, %v10597
        %10746 = vadd.xlane.f32.xlu0 %v10745
        %v10747 = vpop.xlane.xlu0 %10746
        %v10748 = vadd.f32 %v10598, %v10599
        %v10749 = vadd.f32 %v10748, %v10600
        %v10750 = vadd.f32 %v10749, %v10601
        %10751 = vadd.xlane.f32.xlu0 %v10750
        %v10752 = vpop.xlane.xlu0 %10751
        %v10753 = vadd.f32 %v10602, %v10603
        %v10754 = vadd.f32 %v10753, %v10604
        %v10755 = vadd.f32 %v10754, %v10605
        %10756 = vadd.xlane.f32.xlu0 %v10755
        %v10757 = vpop.xlane.xlu0 %10756
        %v10758 = vadd.f32 %v10606, %v10607
        %v10759 = vadd.f32 %v10758, %v10608
        %v10760 = vadd.f32 %v10759, %v10609
        %10761 = vadd.xlane.f32.xlu0 %v10760
        %v10762 = vpop.xlane.xlu0 %10761
        %v10763 = vadd.f32 %v10610, %v10611
        %v10764 = vadd.f32 %v10763, %v10612
        %v10765 = vadd.f32 %v10764, %v10613
        %10766 = vadd.xlane.f32.xlu0 %v10765
        %v10767 = vpop.xlane.xlu0 %10766
        %v10768 = vadd.f32 %v10614, %v10615
        %v10769 = vadd.f32 %v10768, %v10616
        %v10770 = vadd.f32 %v10769, %v10617
        %10771 = vadd.xlane.f32.xlu0 %v10770
        %v10772 = vpop.xlane.xlu0 %10771
        %v10773 = vadd.f32 %v10618, %v10619
        %v10774 = vadd.f32 %v10773, %v10620
        %v10775 = vadd.f32 %v10774, %v10621
        %10776 = vadd.xlane.f32.xlu0 %v10775
        %v10777 = vpop.xlane.xlu0 %10776
        %v10778 = vadd.f32 %v10622, %v10623
        %v10779 = vadd.f32 %v10778, %v10624
        %v10780 = vadd.f32 %v10779, %v10625
        %10781 = vadd.xlane.f32.xlu0 %v10780
        %v10782 = vpop.xlane.xlu0 %10781
        %v10783 = vadd.f32 %v10626, %v10627
        %v10784 = vadd.f32 %v10783, %v10628
        %v10785 = vadd.f32 %v10784, %v10629
        %10786 = vadd.xlane.f32.xlu0 %v10785
        %v10787 = vpop.xlane.xlu0 %10786
        %v10788 = vadd.f32 %v10630, %v10631
        %v10789 = vadd.f32 %v10788, %v10632
        %v10790 = vadd.f32 %v10789, %v10633
        %10791 = vadd.xlane.f32.xlu0 %v10790
        %v10792 = vpop.xlane.xlu0 %10791
        %v10793 = vadd.f32 %v10634, %v10635
        %v10794 = vadd.f32 %v10793, %v10636
        %v10795 = vadd.f32 %v10794, %v10637
        %10796 = vadd.xlane.f32.xlu0 %v10795
        %v10797 = vpop.xlane.xlu0 %10796
        %vm10798 = vcmask 7168
        %10799 = vst.msk [vmem:[%s265] sm:$0xff] %vm10798, %v10642
        %10800 = vst.msk [vmem:[%s265 + $0x8] sm:$0xff] %vm10798, %v10647
        %10801 = vst.msk [vmem:[%s265 + $0x10] sm:$0xff] %vm10798, %v10652
        %10802 = vst.msk [vmem:[%s265 + $0x18] sm:$0xff] %vm10798, %v10657
        %10803 = vst.msk [vmem:[%s265 + $0x20] sm:$0xff] %vm10798, %v10662
        %10804 = vst.msk [vmem:[%s265 + $0x28] sm:$0xff] %vm10798, %v10667
        %10805 = vst.msk [vmem:[%s265 + $0x30] sm:$0xff] %vm10798, %v10672
        %10806 = vst.msk [vmem:[%s265 + $0x38] sm:$0xff] %vm10798, %v10677
        %10807 = vst.msk [vmem:[%s265 + $0x40] sm:$0xff] %vm10798, %v10682
        %10808 = vst.msk [vmem:[%s265 + $0x48] sm:$0xff] %vm10798, %v10687
        %10809 = vst.msk [vmem:[%s265 + $0x50] sm:$0xff] %vm10798, %v10692
        %10810 = vst.msk [vmem:[%s265 + $0x58] sm:$0xff] %vm10798, %v10697
        %10811 = vst.msk [vmem:[%s265 + $0x60] sm:$0xff] %vm10798, %v10702
        %10812 = vst.msk [vmem:[%s265 + $0x68] sm:$0xff] %vm10798, %v10707
        %10813 = vst.msk [vmem:[%s265 + $0x70] sm:$0xff] %vm10798, %v10712
        %10814 = vst.msk [vmem:[%s265 + $0x78] sm:$0xff] %vm10798, %v10717
        %10815 = vst.msk [vmem:[%s265 + $0x80] sm:$0xff] %vm10798, %v10722
        %10816 = vst.msk [vmem:[%s265 + $0x88] sm:$0xff] %vm10798, %v10727
        %10817 = vst.msk [vmem:[%s265 + $0x90] sm:$0xff] %vm10798, %v10732
        %10818 = vst.msk [vmem:[%s265 + $0x98] sm:$0xff] %vm10798, %v10737
        %10819 = vst.msk [vmem:[%s265 + $0xa0] sm:$0xff] %vm10798, %v10742
        %10820 = vst.msk [vmem:[%s265 + $0xa8] sm:$0xff] %vm10798, %v10747
        %10821 = vst.msk [vmem:[%s265 + $0xb0] sm:$0xff] %vm10798, %v10752
        %10822 = vst.msk [vmem:[%s265 + $0xb8] sm:$0xff] %vm10798, %v10757
        %10823 = vst.msk [vmem:[%s265 + $0xc0] sm:$0xff] %vm10798, %v10762
        %10824 = vst.msk [vmem:[%s265 + $0xc8] sm:$0xff] %vm10798, %v10767
        %10825 = vst.msk [vmem:[%s265 + $0xd0] sm:$0xff] %vm10798, %v10772
        %10826 = vst.msk [vmem:[%s265 + $0xd8] sm:$0xff] %vm10798, %v10777
        %10827 = vst.msk [vmem:[%s265 + $0xe0] sm:$0xff] %vm10798, %v10782
        %10828 = vst.msk [vmem:[%s265 + $0xe8] sm:$0xff] %vm10798, %v10787
        %10829 = vst.msk [vmem:[%s265 + $0xf0] sm:$0xff] %vm10798, %v10792
        %10830 = vst.msk [vmem:[%s265 + $0xf8] sm:$0xff] %vm10798, %v10797
        %s10831 = smul.u32 32, %s17
        %p10832 = scmp.lt.s32.totalorder %s10831, 63
        %s10833 = scalar_select %p10832, %s10831, 63
        %s10834 = smul.addr %s10833, 8
        %s10835 = scalar_lea.vmem %s5, %s10834
        // Predicated region
        $region45: #{attention_walk_forward.1} parent=39 // pred_check
          %p10836 = pneg %p150
        $region46: #{attention_walk_forward.1} parent=39 // pred_check_branch
          %10838 = sbr.rel (%p10836) target = $region48
        $region47: #{attention_walk_forward.1} parent=39 // pred_region
          %s10839 = smul.u32 32, %s17
        $region48: #{attention_walk_forward.1} parent=39 // pred_fallthru
          _
      $region40: #{attention_walk_forward.1} parent=5 // pred_fallthru
        _
      %p10840 = scmp.le.s32.totalorder 2, %s12
      // Predicated region
      $region49: #{attention_walk_forward.1} parent=5 // pred_check
        %p10841 = pneg %p10840
      $region50: #{attention_walk_forward.1} parent=5 // pred_check_branch
        %10843 = sbr.rel (%p10841) target = $region52
      $region51: #{attention_walk_forward.1} parent=5 // pred_region
        %s10844 = ssub.s32 %s12, 2
        // Predicated region
        $region53: #{attention_walk_forward.1} parent=51 // pred_check
          %p10845 = pneg %p156
        $region54: #{attention_walk_forward.1} parent=51 // pred_check_branch
          %10847 = sbr.rel (%p10845) target = $region56
        $region55: #{attention_walk_forward.1} parent=51 // pred_region
          %s10848 = smul.u32 32, %s18
          %p10849 = scmp.lt.s32.totalorder %s10848, 63
          %s10850 = scalar_select %p10849, %s10848, 63
          %s10851 = smul.addr %s10850, 8
          %s10852 = scalar_lea.vmem %s5, %s10851
        $region56: #{attention_walk_forward.1} parent=51 // pred_fallthru
          _
      $region52: #{attention_walk_forward.1} parent=5 // pred_fallthru
        _
    $region6: #{attention_walk_forward.1} parent=1 // loop_footer
      %s16 = sadd.s32 1, %s12
    $region7: #{attention_walk_forward.1} parent=1 // loop_footer_branch
      %11 = sbr.rel target = $region3
    $region8: #{attention_walk_forward.1} parent=1 // loop_exit
      _
    %10853 = vsyncpa [#allocation3], 1
    %s10854 = scalar_lea.sflag [#allocation3], 1
    %10855 = vsyncpa %s10854, 1

</llo_original>
